<compile_context>
chip_gen: v7x
topology: tpu7x:2x2x1
jax: 0.10.0
libtpu: 0.0.40
codegen_flags: <defaults>
</compile_context>

<pallas_src>
import jax
import jax.numpy as jnp
from jax import lax
from jax.experimental import pallas as pl
from jax.experimental.pallas import tpu as pltpu

K = 3  # kernel_size; padding = K // 2 ("same" conv)


def _upscale_kernel(x_ref, w_ref, b_ref, o_ref):
    """Fused 3x3 same-conv + bias + leaky_relu(0.1) + pixel_shuffle(2).

    x_ref: (1, Cin, H+2, W+2)    zero-padded image for batch n (block index is
                                 constant along h -> DMA'd from HBM once per n)
    w_ref: (Cout4*Cin*K*K,)      conv weights, flat, in SMEM (scalar reads)
    b_ref: (Cout4,)              bias, in SMEM
    o_ref: (1, Cout, 2*TH, 2*W)  final NCHW output rows [2*TH*h, 2*TH*(h+1))
    """
    cin = x_ref.shape[1]
    _, cout, th2, w2 = o_ref.shape
    TH = th2 // 2
    W = w2 // 2
    cout4 = 4 * cout

    ht = pl.program_id(1)
    row0 = ht * TH                       # first padded row of this tile's window
    if TH % 8 == 0:
        row0 = pl.multiple_of(row0, 8)

    # ---- 3x3 conv: Cin*K*K shifted (TH, W) windows, Cout4 scalar FMAs each.
    acc = [jnp.zeros((TH, W), jnp.float32) for _ in range(cout4)]
    for ci in range(cin):
        win = x_ref[0, ci, pl.ds(row0, TH + 2), :].astype(jnp.float32)  # (TH+2, W+2)
        for kh in range(K):
            for kw in range(K):
                sl = win[kh:kh + TH, kw:kw + W]                          # (TH, W)
                base = (ci * K + kh) * K + kw
                for co in range(cout4):
                    acc[co] = acc[co] + sl * w_ref[co * cin * K * K + base]

    # ---- bias + leaky_relu(0.1), in f32 on the accumulators.
    for co in range(cout4):
        v = acc[co] + b_ref[co]
        acc[co] = jnp.where(v >= 0, v, 0.1 * v)

    # ---- pixel_shuffle(2), fused into the store:
    #        out[c, 2r+i, 2w+j] = acc[4c + 2i + j][r, w]
    # Implemented with exact 0/1 scatter matrices on the MXU so every store is
    # a dense (2TH sublanes x 2W lanes) unmasked write.
    lane = lax.broadcasted_iota(jnp.int32, (W, 2 * W), 1)
    src_w = lax.broadcasted_iota(jnp.int32, (W, 2 * W), 0)
    col_even = (lane == 2 * src_w).astype(jnp.float32)        # (W, 2W)
    col_odd = (lane == 2 * src_w + 1).astype(jnp.float32)
    drow = lax.broadcasted_iota(jnp.int32, (2 * TH, TH), 0)
    src_r = lax.broadcasted_iota(jnp.int32, (2 * TH, TH), 1)
    row_even = (drow == 2 * src_r).astype(jnp.float32)        # (2TH, TH)
    row_odd = (drow == 2 * src_r + 1).astype(jnp.float32)

    for c in range(cout):
        top = (jnp.dot(acc[4 * c + 0], col_even, preferred_element_type=jnp.float32)
               + jnp.dot(acc[4 * c + 1], col_odd, preferred_element_type=jnp.float32))
        bot = (jnp.dot(acc[4 * c + 2], col_even, preferred_element_type=jnp.float32)
               + jnp.dot(acc[4 * c + 3], col_odd, preferred_element_type=jnp.float32))
        blk = (jnp.dot(row_even, top, preferred_element_type=jnp.float32)
               + jnp.dot(row_odd, bot, preferred_element_type=jnp.float32))
        o_ref[0, c, :, :] = blk.astype(o_ref.dtype)


def _pick_tile_h(H):
    # Largest H tile in {16, 8} that divides H and still yields >= 2 grid
    # steps (for pipelining / bounded accumulator vregs); else whole image.
    for th in (16, 8):
        if H % th == 0 and H // th >= 2:
            return th
    return H


def simple_upscale(x, weight, bias):
    """x: (N, Cin, H, W); weight: (Cout*4, Cin, K, K); bias: (Cout*4,).

    Returns (N, Cout, 2H, 2W) = pixel_shuffle(leaky_relu(conv2d(x), 0.1), 2),
    identical layout/semantics to the PyTorch module (NCHW in / NCHW out).
    """
    N, Cin, H, W = x.shape
    Cout4 = weight.shape[0]
    Cout = Cout4 // 4
    pad = K // 2

    TH = _pick_tile_h(H)
    nH = H // TH

    # Only remaining host-side prep: one cheap halo pad of the small input.
    x_pad = jnp.pad(x, ((0, 0), (0, 0), (pad, pad), (pad, pad)))
    w_flat = weight.reshape(-1).astype(jnp.float32)   # (Cout4*Cin*K*K,) -> SMEM
    b_flat = bias.reshape(-1).astype(jnp.float32)     # (Cout4,)         -> SMEM

    ebytes = x.dtype.itemsize
    need = (2 * Cin * (H + 2 * pad) * (W + 2 * pad)        # double-buffered input
            + 2 * Cout * (2 * TH) * (2 * W)) * ebytes      # double-buffered output
    vmem_limit = int(min(max(2 * need + (8 << 20), 16 << 20), 48 << 20))

    return pl.pallas_call(
        _upscale_kernel,
        out_shape=jax.ShapeDtypeStruct((N, Cout, 2 * H, 2 * W), x.dtype),
        grid=(N, nH),
        in_specs=[
            pl.BlockSpec((1, Cin, H + 2 * pad, W + 2 * pad),
                         lambda n, h: (n, 0, 0, 0)),
            pl.BlockSpec(memory_space=pltpu.MemorySpace.SMEM),
            pl.BlockSpec(memory_space=pltpu.MemorySpace.SMEM),
        ],
        out_specs=pl.BlockSpec((1, Cout, 2 * TH, 2 * W),
                               lambda n, h: (n, 0, h, 0)),
        compiler_params=pltpu.CompilerParams(
            dimension_semantics=("parallel", "parallel"),
            vmem_limit_bytes=vmem_limit,
        ),
    )(x_pad, w_flat, b_flat)


def _reference(x_nchw, weight, bias):
    """Pure-JAX reference matching the PyTorch forward (for verification)."""
    y = lax.conv_general_dilated(
        x_nchw, weight, window_strides=(1, 1), padding="SAME",
        dimension_numbers=("NCHW", "OIHW", "NCHW"))
    y = y + bias.reshape(1, -1, 1, 1)
    y = jnp.where(y >= 0, y, 0.1 * y)
    N, C4, H, W = y.shape
    C = C4 // 4
    y = y.reshape(N, C, 2, 2, H, W)
    y = jnp.transpose(y, (0, 1, 4, 2, 5, 3)).reshape(N, C, 2 * H, 2 * W)
    return y


if __name__ == "__main__":
    # Small shapes consistent with the module: in_channels=4, out_channels=4.
    N, Cin, H, W = 2, 4, 16, 16
    Cout = 4
    Cout4 = Cout * 4

    key = jax.random.PRNGKey(0)
    kx, kw, kb = jax.random.split(key, 3)
    x = jax.random.normal(kx, (N, Cin, H, W), dtype=jnp.float32)
    fan_in = Cin * K * K
    weight = jax.random.normal(kw, (Cout4, Cin, K, K), dtype=jnp.float32) / jnp.sqrt(fan_in)
    bias = jax.random.normal(kb, (Cout4,), dtype=jnp.float32) * 0.01

    out = jax.block_until_ready(simple_upscale(x, weight, bias))
    ref = jax.block_until_ready(_reference(x, weight, bias))

    assert out.shape == (N, Cout, 2 * H, 2 * W)
    assert jnp.allclose(out, ref, atol=1e-4, rtol=1e-4), \
        float(jnp.max(jnp.abs(out - ref)))

    print("KERNEL_OK")
</pallas_src>

<mosaic_0001>
module attributes {stable_mosaic.version = 11 : i64} {
  func.func @_upscale_kernel(%arg0: i32, %arg1: i32, %arg2: memref<1x4x18x18xf32, #tpu.memory_space<vmem>>, %arg3: memref<576xf32, #tpu.memory_space<smem>>, %arg4: memref<16xf32, #tpu.memory_space<smem>>, %arg5: memref<1x4x16x32xf32, #tpu.memory_space<vmem>>) attributes {dimension_semantics = [#tpu.dimension_semantics<parallel>, #tpu.dimension_semantics<parallel>], iteration_bounds = array<i64: 2, 2>, scalar_prefetch = 0 : i64, scratch_operands = 0 : i64, tpu.core_type = #tpu.core_type<tc>, window_params = [{transform_indices = @transform_0, window_bounds = array<i64: 1, 4, 18, 18>}, {transform_indices = @transform_1, window_bounds = array<i64: 576>}, {transform_indices = @transform_2, window_bounds = array<i64: 16>}, {transform_indices = @transform_3, window_bounds = array<i64: 1, 4, 16, 32>}]} {
    %c8_i32 = arith.constant 8 : i32
    %0 = arith.muli %arg1, %c8_i32 : i32
    %1 = tpu.assume_multiple %0, 8 : i32
    %cst = arith.constant 0.000000e+00 : f32
    %2 = vector.broadcast %cst : f32 to vector<8x16xf32>
    %cst_0 = arith.constant 0.000000e+00 : f32
    %3 = vector.broadcast %cst_0 : f32 to vector<8x16xf32>
    %cst_1 = arith.constant 0.000000e+00 : f32
    %4 = vector.broadcast %cst_1 : f32 to vector<8x16xf32>
    %cst_2 = arith.constant 0.000000e+00 : f32
    %5 = vector.broadcast %cst_2 : f32 to vector<8x16xf32>
    %cst_3 = arith.constant 0.000000e+00 : f32
    %6 = vector.broadcast %cst_3 : f32 to vector<8x16xf32>
    %cst_4 = arith.constant 0.000000e+00 : f32
    %7 = vector.broadcast %cst_4 : f32 to vector<8x16xf32>
    %cst_5 = arith.constant 0.000000e+00 : f32
    %8 = vector.broadcast %cst_5 : f32 to vector<8x16xf32>
    %cst_6 = arith.constant 0.000000e+00 : f32
    %9 = vector.broadcast %cst_6 : f32 to vector<8x16xf32>
    %cst_7 = arith.constant 0.000000e+00 : f32
    %10 = vector.broadcast %cst_7 : f32 to vector<8x16xf32>
    %cst_8 = arith.constant 0.000000e+00 : f32
    %11 = vector.broadcast %cst_8 : f32 to vector<8x16xf32>
    %cst_9 = arith.constant 0.000000e+00 : f32
    %12 = vector.broadcast %cst_9 : f32 to vector<8x16xf32>
    %cst_10 = arith.constant 0.000000e+00 : f32
    %13 = vector.broadcast %cst_10 : f32 to vector<8x16xf32>
    %cst_11 = arith.constant 0.000000e+00 : f32
    %14 = vector.broadcast %cst_11 : f32 to vector<8x16xf32>
    %cst_12 = arith.constant 0.000000e+00 : f32
    %15 = vector.broadcast %cst_12 : f32 to vector<8x16xf32>
    %cst_13 = arith.constant 0.000000e+00 : f32
    %16 = vector.broadcast %cst_13 : f32 to vector<8x16xf32>
    %cst_14 = arith.constant 0.000000e+00 : f32
    %17 = vector.broadcast %cst_14 : f32 to vector<8x16xf32>
    %c0 = arith.constant 0 : index
    %c0_15 = arith.constant 0 : index
    %18 = arith.index_cast %1 : i32 to index
    %c0_16 = arith.constant 0 : index
    %19 = vector.load %arg2[%c0, %c0_15, %18, %c0_16] : memref<1x4x18x18xf32, #tpu.memory_space<vmem>>, vector<1x1x10x18xf32>
    %20 = vector.shape_cast %19 : vector<1x1x10x18xf32> to vector<10x18xf32>
    %21 = vector.extract_strided_slice %20 {offsets = [0, 0], sizes = [8, 16], strides = [1, 1]} : vector<10x18xf32> to vector<8x16xf32>
    %c0_17 = arith.constant 0 : index
    %22 = memref.load %arg3[%c0_17] : memref<576xf32, #tpu.memory_space<smem>>
    %23 = vector.broadcast %22 : f32 to vector<8x16xf32>
    %24 = arith.mulf %21, %23 : vector<8x16xf32>
    %25 = arith.addf %2, %24 : vector<8x16xf32>
    %c36 = arith.constant 36 : index
    %26 = memref.load %arg3[%c36] : memref<576xf32, #tpu.memory_space<smem>>
    %27 = vector.broadcast %26 : f32 to vector<8x16xf32>
    %28 = arith.mulf %21, %27 : vector<8x16xf32>
    %29 = arith.addf %3, %28 : vector<8x16xf32>
    %c72 = arith.constant 72 : index
    %30 = memref.load %arg3[%c72] : memref<576xf32, #tpu.memory_space<smem>>
    %31 = vector.broadcast %30 : f32 to vector<8x16xf32>
    %32 = arith.mulf %21, %31 : vector<8x16xf32>
    %33 = arith.addf %4, %32 : vector<8x16xf32>
    %c108 = arith.constant 108 : index
    %34 = memref.load %arg3[%c108] : memref<576xf32, #tpu.memory_space<smem>>
    %35 = vector.broadcast %34 : f32 to vector<8x16xf32>
    %36 = arith.mulf %21, %35 : vector<8x16xf32>
    %37 = arith.addf %5, %36 : vector<8x16xf32>
    %c144 = arith.constant 144 : index
    %38 = memref.load %arg3[%c144] : memref<576xf32, #tpu.memory_space<smem>>
    %39 = vector.broadcast %38 : f32 to vector<8x16xf32>
    %40 = arith.mulf %21, %39 : vector<8x16xf32>
    %41 = arith.addf %6, %40 : vector<8x16xf32>
    %c180 = arith.constant 180 : index
    %42 = memref.load %arg3[%c180] : memref<576xf32, #tpu.memory_space<smem>>
    %43 = vector.broadcast %42 : f32 to vector<8x16xf32>
    %44 = arith.mulf %21, %43 : vector<8x16xf32>
    %45 = arith.addf %7, %44 : vector<8x16xf32>
    %c216 = arith.constant 216 : index
    %46 = memref.load %arg3[%c216] : memref<576xf32, #tpu.memory_space<smem>>
    %47 = vector.broadcast %46 : f32 to vector<8x16xf32>
    %48 = arith.mulf %21, %47 : vector<8x16xf32>
    %49 = arith.addf %8, %48 : vector<8x16xf32>
    %c252 = arith.constant 252 : index
    %50 = memref.load %arg3[%c252] : memref<576xf32, #tpu.memory_space<smem>>
    %51 = vector.broadcast %50 : f32 to vector<8x16xf32>
    %52 = arith.mulf %21, %51 : vector<8x16xf32>
    %53 = arith.addf %9, %52 : vector<8x16xf32>
    %c288 = arith.constant 288 : index
    %54 = memref.load %arg3[%c288] : memref<576xf32, #tpu.memory_space<smem>>
    %55 = vector.broadcast %54 : f32 to vector<8x16xf32>
    %56 = arith.mulf %21, %55 : vector<8x16xf32>
    %57 = arith.addf %10, %56 : vector<8x16xf32>
    %c324 = arith.constant 324 : index
    %58 = memref.load %arg3[%c324] : memref<576xf32, #tpu.memory_space<smem>>
    %59 = vector.broadcast %58 : f32 to vector<8x16xf32>
    %60 = arith.mulf %21, %59 : vector<8x16xf32>
    %61 = arith.addf %11, %60 : vector<8x16xf32>
    %c360 = arith.constant 360 : index
    %62 = memref.load %arg3[%c360] : memref<576xf32, #tpu.memory_space<smem>>
    %63 = vector.broadcast %62 : f32 to vector<8x16xf32>
    %64 = arith.mulf %21, %63 : vector<8x16xf32>
    %65 = arith.addf %12, %64 : vector<8x16xf32>
    %c396 = arith.constant 396 : index
    %66 = memref.load %arg3[%c396] : memref<576xf32, #tpu.memory_space<smem>>
    %67 = vector.broadcast %66 : f32 to vector<8x16xf32>
    %68 = arith.mulf %21, %67 : vector<8x16xf32>
    %69 = arith.addf %13, %68 : vector<8x16xf32>
    %c432 = arith.constant 432 : index
    %70 = memref.load %arg3[%c432] : memref<576xf32, #tpu.memory_space<smem>>
    %71 = vector.broadcast %70 : f32 to vector<8x16xf32>
    %72 = arith.mulf %21, %71 : vector<8x16xf32>
    %73 = arith.addf %14, %72 : vector<8x16xf32>
    %c468 = arith.constant 468 : index
    %74 = memref.load %arg3[%c468] : memref<576xf32, #tpu.memory_space<smem>>
    %75 = vector.broadcast %74 : f32 to vector<8x16xf32>
    %76 = arith.mulf %21, %75 : vector<8x16xf32>
    %77 = arith.addf %15, %76 : vector<8x16xf32>
    %c504 = arith.constant 504 : index
    %78 = memref.load %arg3[%c504] : memref<576xf32, #tpu.memory_space<smem>>
    %79 = vector.broadcast %78 : f32 to vector<8x16xf32>
    %80 = arith.mulf %21, %79 : vector<8x16xf32>
    %81 = arith.addf %16, %80 : vector<8x16xf32>
    %c540 = arith.constant 540 : index
    %82 = memref.load %arg3[%c540] : memref<576xf32, #tpu.memory_space<smem>>
    %83 = vector.broadcast %82 : f32 to vector<8x16xf32>
    %84 = arith.mulf %21, %83 : vector<8x16xf32>
    %85 = arith.addf %17, %84 : vector<8x16xf32>
    %86 = vector.extract_strided_slice %20 {offsets = [0, 1], sizes = [8, 16], strides = [1, 1]} : vector<10x18xf32> to vector<8x16xf32>
    %c1 = arith.constant 1 : index
    %87 = memref.load %arg3[%c1] : memref<576xf32, #tpu.memory_space<smem>>
    %88 = vector.broadcast %87 : f32 to vector<8x16xf32>
    %89 = arith.mulf %86, %88 : vector<8x16xf32>
    %90 = arith.addf %25, %89 : vector<8x16xf32>
    %c37 = arith.constant 37 : index
    %91 = memref.load %arg3[%c37] : memref<576xf32, #tpu.memory_space<smem>>
    %92 = vector.broadcast %91 : f32 to vector<8x16xf32>
    %93 = arith.mulf %86, %92 : vector<8x16xf32>
    %94 = arith.addf %29, %93 : vector<8x16xf32>
    %c73 = arith.constant 73 : index
    %95 = memref.load %arg3[%c73] : memref<576xf32, #tpu.memory_space<smem>>
    %96 = vector.broadcast %95 : f32 to vector<8x16xf32>
    %97 = arith.mulf %86, %96 : vector<8x16xf32>
    %98 = arith.addf %33, %97 : vector<8x16xf32>
    %c109 = arith.constant 109 : index
    %99 = memref.load %arg3[%c109] : memref<576xf32, #tpu.memory_space<smem>>
    %100 = vector.broadcast %99 : f32 to vector<8x16xf32>
    %101 = arith.mulf %86, %100 : vector<8x16xf32>
    %102 = arith.addf %37, %101 : vector<8x16xf32>
    %c145 = arith.constant 145 : index
    %103 = memref.load %arg3[%c145] : memref<576xf32, #tpu.memory_space<smem>>
    %104 = vector.broadcast %103 : f32 to vector<8x16xf32>
    %105 = arith.mulf %86, %104 : vector<8x16xf32>
    %106 = arith.addf %41, %105 : vector<8x16xf32>
    %c181 = arith.constant 181 : index
    %107 = memref.load %arg3[%c181] : memref<576xf32, #tpu.memory_space<smem>>
    %108 = vector.broadcast %107 : f32 to vector<8x16xf32>
    %109 = arith.mulf %86, %108 : vector<8x16xf32>
    %110 = arith.addf %45, %109 : vector<8x16xf32>
    %c217 = arith.constant 217 : index
    %111 = memref.load %arg3[%c217] : memref<576xf32, #tpu.memory_space<smem>>
    %112 = vector.broadcast %111 : f32 to vector<8x16xf32>
    %113 = arith.mulf %86, %112 : vector<8x16xf32>
    %114 = arith.addf %49, %113 : vector<8x16xf32>
    %c253 = arith.constant 253 : index
    %115 = memref.load %arg3[%c253] : memref<576xf32, #tpu.memory_space<smem>>
    %116 = vector.broadcast %115 : f32 to vector<8x16xf32>
    %117 = arith.mulf %86, %116 : vector<8x16xf32>
    %118 = arith.addf %53, %117 : vector<8x16xf32>
    %c289 = arith.constant 289 : index
    %119 = memref.load %arg3[%c289] : memref<576xf32, #tpu.memory_space<smem>>
    %120 = vector.broadcast %119 : f32 to vector<8x16xf32>
    %121 = arith.mulf %86, %120 : vector<8x16xf32>
    %122 = arith.addf %57, %121 : vector<8x16xf32>
    %c325 = arith.constant 325 : index
    %123 = memref.load %arg3[%c325] : memref<576xf32, #tpu.memory_space<smem>>
    %124 = vector.broadcast %123 : f32 to vector<8x16xf32>
    %125 = arith.mulf %86, %124 : vector<8x16xf32>
    %126 = arith.addf %61, %125 : vector<8x16xf32>
    %c361 = arith.constant 361 : index
    %127 = memref.load %arg3[%c361] : memref<576xf32, #tpu.memory_space<smem>>
    %128 = vector.broadcast %127 : f32 to vector<8x16xf32>
    %129 = arith.mulf %86, %128 : vector<8x16xf32>
    %130 = arith.addf %65, %129 : vector<8x16xf32>
    %c397 = arith.constant 397 : index
    %131 = memref.load %arg3[%c397] : memref<576xf32, #tpu.memory_space<smem>>
    %132 = vector.broadcast %131 : f32 to vector<8x16xf32>
    %133 = arith.mulf %86, %132 : vector<8x16xf32>
    %134 = arith.addf %69, %133 : vector<8x16xf32>
    %c433 = arith.constant 433 : index
    %135 = memref.load %arg3[%c433] : memref<576xf32, #tpu.memory_space<smem>>
    %136 = vector.broadcast %135 : f32 to vector<8x16xf32>
    %137 = arith.mulf %86, %136 : vector<8x16xf32>
    %138 = arith.addf %73, %137 : vector<8x16xf32>
    %c469 = arith.constant 469 : index
    %139 = memref.load %arg3[%c469] : memref<576xf32, #tpu.memory_space<smem>>
    %140 = vector.broadcast %139 : f32 to vector<8x16xf32>
    %141 = arith.mulf %86, %140 : vector<8x16xf32>
    %142 = arith.addf %77, %141 : vector<8x16xf32>
    %c505 = arith.constant 505 : index
    %143 = memref.load %arg3[%c505] : memref<576xf32, #tpu.memory_space<smem>>
    %144 = vector.broadcast %143 : f32 to vector<8x16xf32>
    %145 = arith.mulf %86, %144 : vector<8x16xf32>
    %146 = arith.addf %81, %145 : vector<8x16xf32>
    %c541 = arith.constant 541 : index
    %147 = memref.load %arg3[%c541] : memref<576xf32, #tpu.memory_space<smem>>
    %148 = vector.broadcast %147 : f32 to vector<8x16xf32>
    %149 = arith.mulf %86, %148 : vector<8x16xf32>
    %150 = arith.addf %85, %149 : vector<8x16xf32>
    %151 = vector.extract_strided_slice %20 {offsets = [0, 2], sizes = [8, 16], strides = [1, 1]} : vector<10x18xf32> to vector<8x16xf32>
    %c2 = arith.constant 2 : index
    %152 = memref.load %arg3[%c2] : memref<576xf32, #tpu.memory_space<smem>>
    %153 = vector.broadcast %152 : f32 to vector<8x16xf32>
    %154 = arith.mulf %151, %153 : vector<8x16xf32>
    %155 = arith.addf %90, %154 : vector<8x16xf32>
    %c38 = arith.constant 38 : index
    %156 = memref.load %arg3[%c38] : memref<576xf32, #tpu.memory_space<smem>>
    %157 = vector.broadcast %156 : f32 to vector<8x16xf32>
    %158 = arith.mulf %151, %157 : vector<8x16xf32>
    %159 = arith.addf %94, %158 : vector<8x16xf32>
    %c74 = arith.constant 74 : index
    %160 = memref.load %arg3[%c74] : memref<576xf32, #tpu.memory_space<smem>>
    %161 = vector.broadcast %160 : f32 to vector<8x16xf32>
    %162 = arith.mulf %151, %161 : vector<8x16xf32>
    %163 = arith.addf %98, %162 : vector<8x16xf32>
    %c110 = arith.constant 110 : index
    %164 = memref.load %arg3[%c110] : memref<576xf32, #tpu.memory_space<smem>>
    %165 = vector.broadcast %164 : f32 to vector<8x16xf32>
    %166 = arith.mulf %151, %165 : vector<8x16xf32>
    %167 = arith.addf %102, %166 : vector<8x16xf32>
    %c146 = arith.constant 146 : index
    %168 = memref.load %arg3[%c146] : memref<576xf32, #tpu.memory_space<smem>>
    %169 = vector.broadcast %168 : f32 to vector<8x16xf32>
    %170 = arith.mulf %151, %169 : vector<8x16xf32>
    %171 = arith.addf %106, %170 : vector<8x16xf32>
    %c182 = arith.constant 182 : index
    %172 = memref.load %arg3[%c182] : memref<576xf32, #tpu.memory_space<smem>>
    %173 = vector.broadcast %172 : f32 to vector<8x16xf32>
    %174 = arith.mulf %151, %173 : vector<8x16xf32>
    %175 = arith.addf %110, %174 : vector<8x16xf32>
    %c218 = arith.constant 218 : index
    %176 = memref.load %arg3[%c218] : memref<576xf32, #tpu.memory_space<smem>>
    %177 = vector.broadcast %176 : f32 to vector<8x16xf32>
    %178 = arith.mulf %151, %177 : vector<8x16xf32>
    %179 = arith.addf %114, %178 : vector<8x16xf32>
    %c254 = arith.constant 254 : index
    %180 = memref.load %arg3[%c254] : memref<576xf32, #tpu.memory_space<smem>>
    %181 = vector.broadcast %180 : f32 to vector<8x16xf32>
    %182 = arith.mulf %151, %181 : vector<8x16xf32>
    %183 = arith.addf %118, %182 : vector<8x16xf32>
    %c290 = arith.constant 290 : index
    %184 = memref.load %arg3[%c290] : memref<576xf32, #tpu.memory_space<smem>>
    %185 = vector.broadcast %184 : f32 to vector<8x16xf32>
    %186 = arith.mulf %151, %185 : vector<8x16xf32>
    %187 = arith.addf %122, %186 : vector<8x16xf32>
    %c326 = arith.constant 326 : index
    %188 = memref.load %arg3[%c326] : memref<576xf32, #tpu.memory_space<smem>>
    %189 = vector.broadcast %188 : f32 to vector<8x16xf32>
    %190 = arith.mulf %151, %189 : vector<8x16xf32>
    %191 = arith.addf %126, %190 : vector<8x16xf32>
    %c362 = arith.constant 362 : index
    %192 = memref.load %arg3[%c362] : memref<576xf32, #tpu.memory_space<smem>>
    %193 = vector.broadcast %192 : f32 to vector<8x16xf32>
    %194 = arith.mulf %151, %193 : vector<8x16xf32>
    %195 = arith.addf %130, %194 : vector<8x16xf32>
    %c398 = arith.constant 398 : index
    %196 = memref.load %arg3[%c398] : memref<576xf32, #tpu.memory_space<smem>>
    %197 = vector.broadcast %196 : f32 to vector<8x16xf32>
    %198 = arith.mulf %151, %197 : vector<8x16xf32>
    %199 = arith.addf %134, %198 : vector<8x16xf32>
    %c434 = arith.constant 434 : index
    %200 = memref.load %arg3[%c434] : memref<576xf32, #tpu.memory_space<smem>>
    %201 = vector.broadcast %200 : f32 to vector<8x16xf32>
    %202 = arith.mulf %151, %201 : vector<8x16xf32>
    %203 = arith.addf %138, %202 : vector<8x16xf32>
    %c470 = arith.constant 470 : index
    %204 = memref.load %arg3[%c470] : memref<576xf32, #tpu.memory_space<smem>>
    %205 = vector.broadcast %204 : f32 to vector<8x16xf32>
    %206 = arith.mulf %151, %205 : vector<8x16xf32>
    %207 = arith.addf %142, %206 : vector<8x16xf32>
    %c506 = arith.constant 506 : index
    %208 = memref.load %arg3[%c506] : memref<576xf32, #tpu.memory_space<smem>>
    %209 = vector.broadcast %208 : f32 to vector<8x16xf32>
    %210 = arith.mulf %151, %209 : vector<8x16xf32>
    %211 = arith.addf %146, %210 : vector<8x16xf32>
    %c542 = arith.constant 542 : index
    %212 = memref.load %arg3[%c542] : memref<576xf32, #tpu.memory_space<smem>>
    %213 = vector.broadcast %212 : f32 to vector<8x16xf32>
    %214 = arith.mulf %151, %213 : vector<8x16xf32>
    %215 = arith.addf %150, %214 : vector<8x16xf32>
    %216 = vector.extract_strided_slice %20 {offsets = [1, 0], sizes = [8, 16], strides = [1, 1]} : vector<10x18xf32> to vector<8x16xf32>
    %c3 = arith.constant 3 : index
    %217 = memref.load %arg3[%c3] : memref<576xf32, #tpu.memory_space<smem>>
    %218 = vector.broadcast %217 : f32 to vector<8x16xf32>
    %219 = arith.mulf %216, %218 : vector<8x16xf32>
    %220 = arith.addf %155, %219 : vector<8x16xf32>
    %c39 = arith.constant 39 : index
    %221 = memref.load %arg3[%c39] : memref<576xf32, #tpu.memory_space<smem>>
    %222 = vector.broadcast %221 : f32 to vector<8x16xf32>
    %223 = arith.mulf %216, %222 : vector<8x16xf32>
    %224 = arith.addf %159, %223 : vector<8x16xf32>
    %c75 = arith.constant 75 : index
    %225 = memref.load %arg3[%c75] : memref<576xf32, #tpu.memory_space<smem>>
    %226 = vector.broadcast %225 : f32 to vector<8x16xf32>
    %227 = arith.mulf %216, %226 : vector<8x16xf32>
    %228 = arith.addf %163, %227 : vector<8x16xf32>
    %c111 = arith.constant 111 : index
    %229 = memref.load %arg3[%c111] : memref<576xf32, #tpu.memory_space<smem>>
    %230 = vector.broadcast %229 : f32 to vector<8x16xf32>
    %231 = arith.mulf %216, %230 : vector<8x16xf32>
    %232 = arith.addf %167, %231 : vector<8x16xf32>
    %c147 = arith.constant 147 : index
    %233 = memref.load %arg3[%c147] : memref<576xf32, #tpu.memory_space<smem>>
    %234 = vector.broadcast %233 : f32 to vector<8x16xf32>
    %235 = arith.mulf %216, %234 : vector<8x16xf32>
    %236 = arith.addf %171, %235 : vector<8x16xf32>
    %c183 = arith.constant 183 : index
    %237 = memref.load %arg3[%c183] : memref<576xf32, #tpu.memory_space<smem>>
    %238 = vector.broadcast %237 : f32 to vector<8x16xf32>
    %239 = arith.mulf %216, %238 : vector<8x16xf32>
    %240 = arith.addf %175, %239 : vector<8x16xf32>
    %c219 = arith.constant 219 : index
    %241 = memref.load %arg3[%c219] : memref<576xf32, #tpu.memory_space<smem>>
    %242 = vector.broadcast %241 : f32 to vector<8x16xf32>
    %243 = arith.mulf %216, %242 : vector<8x16xf32>
    %244 = arith.addf %179, %243 : vector<8x16xf32>
    %c255 = arith.constant 255 : index
    %245 = memref.load %arg3[%c255] : memref<576xf32, #tpu.memory_space<smem>>
    %246 = vector.broadcast %245 : f32 to vector<8x16xf32>
    %247 = arith.mulf %216, %246 : vector<8x16xf32>
    %248 = arith.addf %183, %247 : vector<8x16xf32>
    %c291 = arith.constant 291 : index
    %249 = memref.load %arg3[%c291] : memref<576xf32, #tpu.memory_space<smem>>
    %250 = vector.broadcast %249 : f32 to vector<8x16xf32>
    %251 = arith.mulf %216, %250 : vector<8x16xf32>
    %252 = arith.addf %187, %251 : vector<8x16xf32>
    %c327 = arith.constant 327 : index
    %253 = memref.load %arg3[%c327] : memref<576xf32, #tpu.memory_space<smem>>
    %254 = vector.broadcast %253 : f32 to vector<8x16xf32>
    %255 = arith.mulf %216, %254 : vector<8x16xf32>
    %256 = arith.addf %191, %255 : vector<8x16xf32>
    %c363 = arith.constant 363 : index
    %257 = memref.load %arg3[%c363] : memref<576xf32, #tpu.memory_space<smem>>
    %258 = vector.broadcast %257 : f32 to vector<8x16xf32>
    %259 = arith.mulf %216, %258 : vector<8x16xf32>
    %260 = arith.addf %195, %259 : vector<8x16xf32>
    %c399 = arith.constant 399 : index
    %261 = memref.load %arg3[%c399] : memref<576xf32, #tpu.memory_space<smem>>
    %262 = vector.broadcast %261 : f32 to vector<8x16xf32>
    %263 = arith.mulf %216, %262 : vector<8x16xf32>
    %264 = arith.addf %199, %263 : vector<8x16xf32>
    %c435 = arith.constant 435 : index
    %265 = memref.load %arg3[%c435] : memref<576xf32, #tpu.memory_space<smem>>
    %266 = vector.broadcast %265 : f32 to vector<8x16xf32>
    %267 = arith.mulf %216, %266 : vector<8x16xf32>
    %268 = arith.addf %203, %267 : vector<8x16xf32>
    %c471 = arith.constant 471 : index
    %269 = memref.load %arg3[%c471] : memref<576xf32, #tpu.memory_space<smem>>
    %270 = vector.broadcast %269 : f32 to vector<8x16xf32>
    %271 = arith.mulf %216, %270 : vector<8x16xf32>
    %272 = arith.addf %207, %271 : vector<8x16xf32>
    %c507 = arith.constant 507 : index
    %273 = memref.load %arg3[%c507] : memref<576xf32, #tpu.memory_space<smem>>
    %274 = vector.broadcast %273 : f32 to vector<8x16xf32>
    %275 = arith.mulf %216, %274 : vector<8x16xf32>
    %276 = arith.addf %211, %275 : vector<8x16xf32>
    %c543 = arith.constant 543 : index
    %277 = memref.load %arg3[%c543] : memref<576xf32, #tpu.memory_space<smem>>
    %278 = vector.broadcast %277 : f32 to vector<8x16xf32>
    %279 = arith.mulf %216, %278 : vector<8x16xf32>
    %280 = arith.addf %215, %279 : vector<8x16xf32>
    %281 = vector.extract_strided_slice %20 {offsets = [1, 1], sizes = [8, 16], strides = [1, 1]} : vector<10x18xf32> to vector<8x16xf32>
    %c4 = arith.constant 4 : index
    %282 = memref.load %arg3[%c4] : memref<576xf32, #tpu.memory_space<smem>>
    %283 = vector.broadcast %282 : f32 to vector<8x16xf32>
    %284 = arith.mulf %281, %283 : vector<8x16xf32>
    %285 = arith.addf %220, %284 : vector<8x16xf32>
    %c40 = arith.constant 40 : index
    %286 = memref.load %arg3[%c40] : memref<576xf32, #tpu.memory_space<smem>>
    %287 = vector.broadcast %286 : f32 to vector<8x16xf32>
    %288 = arith.mulf %281, %287 : vector<8x16xf32>
    %289 = arith.addf %224, %288 : vector<8x16xf32>
    %c76 = arith.constant 76 : index
    %290 = memref.load %arg3[%c76] : memref<576xf32, #tpu.memory_space<smem>>
    %291 = vector.broadcast %290 : f32 to vector<8x16xf32>
    %292 = arith.mulf %281, %291 : vector<8x16xf32>
    %293 = arith.addf %228, %292 : vector<8x16xf32>
    %c112 = arith.constant 112 : index
    %294 = memref.load %arg3[%c112] : memref<576xf32, #tpu.memory_space<smem>>
    %295 = vector.broadcast %294 : f32 to vector<8x16xf32>
    %296 = arith.mulf %281, %295 : vector<8x16xf32>
    %297 = arith.addf %232, %296 : vector<8x16xf32>
    %c148 = arith.constant 148 : index
    %298 = memref.load %arg3[%c148] : memref<576xf32, #tpu.memory_space<smem>>
    %299 = vector.broadcast %298 : f32 to vector<8x16xf32>
    %300 = arith.mulf %281, %299 : vector<8x16xf32>
    %301 = arith.addf %236, %300 : vector<8x16xf32>
    %c184 = arith.constant 184 : index
    %302 = memref.load %arg3[%c184] : memref<576xf32, #tpu.memory_space<smem>>
    %303 = vector.broadcast %302 : f32 to vector<8x16xf32>
    %304 = arith.mulf %281, %303 : vector<8x16xf32>
    %305 = arith.addf %240, %304 : vector<8x16xf32>
    %c220 = arith.constant 220 : index
    %306 = memref.load %arg3[%c220] : memref<576xf32, #tpu.memory_space<smem>>
    %307 = vector.broadcast %306 : f32 to vector<8x16xf32>
    %308 = arith.mulf %281, %307 : vector<8x16xf32>
    %309 = arith.addf %244, %308 : vector<8x16xf32>
    %c256 = arith.constant 256 : index
    %310 = memref.load %arg3[%c256] : memref<576xf32, #tpu.memory_space<smem>>
    %311 = vector.broadcast %310 : f32 to vector<8x16xf32>
    %312 = arith.mulf %281, %311 : vector<8x16xf32>
    %313 = arith.addf %248, %312 : vector<8x16xf32>
    %c292 = arith.constant 292 : index
    %314 = memref.load %arg3[%c292] : memref<576xf32, #tpu.memory_space<smem>>
    %315 = vector.broadcast %314 : f32 to vector<8x16xf32>
    %316 = arith.mulf %281, %315 : vector<8x16xf32>
    %317 = arith.addf %252, %316 : vector<8x16xf32>
    %c328 = arith.constant 328 : index
    %318 = memref.load %arg3[%c328] : memref<576xf32, #tpu.memory_space<smem>>
    %319 = vector.broadcast %318 : f32 to vector<8x16xf32>
    %320 = arith.mulf %281, %319 : vector<8x16xf32>
    %321 = arith.addf %256, %320 : vector<8x16xf32>
    %c364 = arith.constant 364 : index
    %322 = memref.load %arg3[%c364] : memref<576xf32, #tpu.memory_space<smem>>
    %323 = vector.broadcast %322 : f32 to vector<8x16xf32>
    %324 = arith.mulf %281, %323 : vector<8x16xf32>
    %325 = arith.addf %260, %324 : vector<8x16xf32>
    %c400 = arith.constant 400 : index
    %326 = memref.load %arg3[%c400] : memref<576xf32, #tpu.memory_space<smem>>
    %327 = vector.broadcast %326 : f32 to vector<8x16xf32>
    %328 = arith.mulf %281, %327 : vector<8x16xf32>
    %329 = arith.addf %264, %328 : vector<8x16xf32>
    %c436 = arith.constant 436 : index
    %330 = memref.load %arg3[%c436] : memref<576xf32, #tpu.memory_space<smem>>
    %331 = vector.broadcast %330 : f32 to vector<8x16xf32>
    %332 = arith.mulf %281, %331 : vector<8x16xf32>
    %333 = arith.addf %268, %332 : vector<8x16xf32>
    %c472 = arith.constant 472 : index
    %334 = memref.load %arg3[%c472] : memref<576xf32, #tpu.memory_space<smem>>
    %335 = vector.broadcast %334 : f32 to vector<8x16xf32>
    %336 = arith.mulf %281, %335 : vector<8x16xf32>
    %337 = arith.addf %272, %336 : vector<8x16xf32>
    %c508 = arith.constant 508 : index
    %338 = memref.load %arg3[%c508] : memref<576xf32, #tpu.memory_space<smem>>
    %339 = vector.broadcast %338 : f32 to vector<8x16xf32>
    %340 = arith.mulf %281, %339 : vector<8x16xf32>
    %341 = arith.addf %276, %340 : vector<8x16xf32>
    %c544 = arith.constant 544 : index
    %342 = memref.load %arg3[%c544] : memref<576xf32, #tpu.memory_space<smem>>
    %343 = vector.broadcast %342 : f32 to vector<8x16xf32>
    %344 = arith.mulf %281, %343 : vector<8x16xf32>
    %345 = arith.addf %280, %344 : vector<8x16xf32>
    %346 = vector.extract_strided_slice %20 {offsets = [1, 2], sizes = [8, 16], strides = [1, 1]} : vector<10x18xf32> to vector<8x16xf32>
    %c5 = arith.constant 5 : index
    %347 = memref.load %arg3[%c5] : memref<576xf32, #tpu.memory_space<smem>>
    %348 = vector.broadcast %347 : f32 to vector<8x16xf32>
    %349 = arith.mulf %346, %348 : vector<8x16xf32>
    %350 = arith.addf %285, %349 : vector<8x16xf32>
    %c41 = arith.constant 41 : index
    %351 = memref.load %arg3[%c41] : memref<576xf32, #tpu.memory_space<smem>>
    %352 = vector.broadcast %351 : f32 to vector<8x16xf32>
    %353 = arith.mulf %346, %352 : vector<8x16xf32>
    %354 = arith.addf %289, %353 : vector<8x16xf32>
    %c77 = arith.constant 77 : index
    %355 = memref.load %arg3[%c77] : memref<576xf32, #tpu.memory_space<smem>>
    %356 = vector.broadcast %355 : f32 to vector<8x16xf32>
    %357 = arith.mulf %346, %356 : vector<8x16xf32>
    %358 = arith.addf %293, %357 : vector<8x16xf32>
    %c113 = arith.constant 113 : index
    %359 = memref.load %arg3[%c113] : memref<576xf32, #tpu.memory_space<smem>>
    %360 = vector.broadcast %359 : f32 to vector<8x16xf32>
    %361 = arith.mulf %346, %360 : vector<8x16xf32>
    %362 = arith.addf %297, %361 : vector<8x16xf32>
    %c149 = arith.constant 149 : index
    %363 = memref.load %arg3[%c149] : memref<576xf32, #tpu.memory_space<smem>>
    %364 = vector.broadcast %363 : f32 to vector<8x16xf32>
    %365 = arith.mulf %346, %364 : vector<8x16xf32>
    %366 = arith.addf %301, %365 : vector<8x16xf32>
    %c185 = arith.constant 185 : index
    %367 = memref.load %arg3[%c185] : memref<576xf32, #tpu.memory_space<smem>>
    %368 = vector.broadcast %367 : f32 to vector<8x16xf32>
    %369 = arith.mulf %346, %368 : vector<8x16xf32>
    %370 = arith.addf %305, %369 : vector<8x16xf32>
    %c221 = arith.constant 221 : index
    %371 = memref.load %arg3[%c221] : memref<576xf32, #tpu.memory_space<smem>>
    %372 = vector.broadcast %371 : f32 to vector<8x16xf32>
    %373 = arith.mulf %346, %372 : vector<8x16xf32>
    %374 = arith.addf %309, %373 : vector<8x16xf32>
    %c257 = arith.constant 257 : index
    %375 = memref.load %arg3[%c257] : memref<576xf32, #tpu.memory_space<smem>>
    %376 = vector.broadcast %375 : f32 to vector<8x16xf32>
    %377 = arith.mulf %346, %376 : vector<8x16xf32>
    %378 = arith.addf %313, %377 : vector<8x16xf32>
    %c293 = arith.constant 293 : index
    %379 = memref.load %arg3[%c293] : memref<576xf32, #tpu.memory_space<smem>>
    %380 = vector.broadcast %379 : f32 to vector<8x16xf32>
    %381 = arith.mulf %346, %380 : vector<8x16xf32>
    %382 = arith.addf %317, %381 : vector<8x16xf32>
    %c329 = arith.constant 329 : index
    %383 = memref.load %arg3[%c329] : memref<576xf32, #tpu.memory_space<smem>>
    %384 = vector.broadcast %383 : f32 to vector<8x16xf32>
    %385 = arith.mulf %346, %384 : vector<8x16xf32>
    %386 = arith.addf %321, %385 : vector<8x16xf32>
    %c365 = arith.constant 365 : index
    %387 = memref.load %arg3[%c365] : memref<576xf32, #tpu.memory_space<smem>>
    %388 = vector.broadcast %387 : f32 to vector<8x16xf32>
    %389 = arith.mulf %346, %388 : vector<8x16xf32>
    %390 = arith.addf %325, %389 : vector<8x16xf32>
    %c401 = arith.constant 401 : index
    %391 = memref.load %arg3[%c401] : memref<576xf32, #tpu.memory_space<smem>>
    %392 = vector.broadcast %391 : f32 to vector<8x16xf32>
    %393 = arith.mulf %346, %392 : vector<8x16xf32>
    %394 = arith.addf %329, %393 : vector<8x16xf32>
    %c437 = arith.constant 437 : index
    %395 = memref.load %arg3[%c437] : memref<576xf32, #tpu.memory_space<smem>>
    %396 = vector.broadcast %395 : f32 to vector<8x16xf32>
    %397 = arith.mulf %346, %396 : vector<8x16xf32>
    %398 = arith.addf %333, %397 : vector<8x16xf32>
    %c473 = arith.constant 473 : index
    %399 = memref.load %arg3[%c473] : memref<576xf32, #tpu.memory_space<smem>>
    %400 = vector.broadcast %399 : f32 to vector<8x16xf32>
    %401 = arith.mulf %346, %400 : vector<8x16xf32>
    %402 = arith.addf %337, %401 : vector<8x16xf32>
    %c509 = arith.constant 509 : index
    %403 = memref.load %arg3[%c509] : memref<576xf32, #tpu.memory_space<smem>>
    %404 = vector.broadcast %403 : f32 to vector<8x16xf32>
    %405 = arith.mulf %346, %404 : vector<8x16xf32>
    %406 = arith.addf %341, %405 : vector<8x16xf32>
    %c545 = arith.constant 545 : index
    %407 = memref.load %arg3[%c545] : memref<576xf32, #tpu.memory_space<smem>>
    %408 = vector.broadcast %407 : f32 to vector<8x16xf32>
    %409 = arith.mulf %346, %408 : vector<8x16xf32>
    %410 = arith.addf %345, %409 : vector<8x16xf32>
    %411 = vector.extract_strided_slice %20 {offsets = [2, 0], sizes = [8, 16], strides = [1, 1]} : vector<10x18xf32> to vector<8x16xf32>
    %c6 = arith.constant 6 : index
    %412 = memref.load %arg3[%c6] : memref<576xf32, #tpu.memory_space<smem>>
    %413 = vector.broadcast %412 : f32 to vector<8x16xf32>
    %414 = arith.mulf %411, %413 : vector<8x16xf32>
    %415 = arith.addf %350, %414 : vector<8x16xf32>
    %c42 = arith.constant 42 : index
    %416 = memref.load %arg3[%c42] : memref<576xf32, #tpu.memory_space<smem>>
    %417 = vector.broadcast %416 : f32 to vector<8x16xf32>
    %418 = arith.mulf %411, %417 : vector<8x16xf32>
    %419 = arith.addf %354, %418 : vector<8x16xf32>
    %c78 = arith.constant 78 : index
    %420 = memref.load %arg3[%c78] : memref<576xf32, #tpu.memory_space<smem>>
    %421 = vector.broadcast %420 : f32 to vector<8x16xf32>
    %422 = arith.mulf %411, %421 : vector<8x16xf32>
    %423 = arith.addf %358, %422 : vector<8x16xf32>
    %c114 = arith.constant 114 : index
    %424 = memref.load %arg3[%c114] : memref<576xf32, #tpu.memory_space<smem>>
    %425 = vector.broadcast %424 : f32 to vector<8x16xf32>
    %426 = arith.mulf %411, %425 : vector<8x16xf32>
    %427 = arith.addf %362, %426 : vector<8x16xf32>
    %c150 = arith.constant 150 : index
    %428 = memref.load %arg3[%c150] : memref<576xf32, #tpu.memory_space<smem>>
    %429 = vector.broadcast %428 : f32 to vector<8x16xf32>
    %430 = arith.mulf %411, %429 : vector<8x16xf32>
    %431 = arith.addf %366, %430 : vector<8x16xf32>
    %c186 = arith.constant 186 : index
    %432 = memref.load %arg3[%c186] : memref<576xf32, #tpu.memory_space<smem>>
    %433 = vector.broadcast %432 : f32 to vector<8x16xf32>
    %434 = arith.mulf %411, %433 : vector<8x16xf32>
    %435 = arith.addf %370, %434 : vector<8x16xf32>
    %c222 = arith.constant 222 : index
    %436 = memref.load %arg3[%c222] : memref<576xf32, #tpu.memory_space<smem>>
    %437 = vector.broadcast %436 : f32 to vector<8x16xf32>
    %438 = arith.mulf %411, %437 : vector<8x16xf32>
    %439 = arith.addf %374, %438 : vector<8x16xf32>
    %c258 = arith.constant 258 : index
    %440 = memref.load %arg3[%c258] : memref<576xf32, #tpu.memory_space<smem>>
    %441 = vector.broadcast %440 : f32 to vector<8x16xf32>
    %442 = arith.mulf %411, %441 : vector<8x16xf32>
    %443 = arith.addf %378, %442 : vector<8x16xf32>
    %c294 = arith.constant 294 : index
    %444 = memref.load %arg3[%c294] : memref<576xf32, #tpu.memory_space<smem>>
    %445 = vector.broadcast %444 : f32 to vector<8x16xf32>
    %446 = arith.mulf %411, %445 : vector<8x16xf32>
    %447 = arith.addf %382, %446 : vector<8x16xf32>
    %c330 = arith.constant 330 : index
    %448 = memref.load %arg3[%c330] : memref<576xf32, #tpu.memory_space<smem>>
    %449 = vector.broadcast %448 : f32 to vector<8x16xf32>
    %450 = arith.mulf %411, %449 : vector<8x16xf32>
    %451 = arith.addf %386, %450 : vector<8x16xf32>
    %c366 = arith.constant 366 : index
    %452 = memref.load %arg3[%c366] : memref<576xf32, #tpu.memory_space<smem>>
    %453 = vector.broadcast %452 : f32 to vector<8x16xf32>
    %454 = arith.mulf %411, %453 : vector<8x16xf32>
    %455 = arith.addf %390, %454 : vector<8x16xf32>
    %c402 = arith.constant 402 : index
    %456 = memref.load %arg3[%c402] : memref<576xf32, #tpu.memory_space<smem>>
    %457 = vector.broadcast %456 : f32 to vector<8x16xf32>
    %458 = arith.mulf %411, %457 : vector<8x16xf32>
    %459 = arith.addf %394, %458 : vector<8x16xf32>
    %c438 = arith.constant 438 : index
    %460 = memref.load %arg3[%c438] : memref<576xf32, #tpu.memory_space<smem>>
    %461 = vector.broadcast %460 : f32 to vector<8x16xf32>
    %462 = arith.mulf %411, %461 : vector<8x16xf32>
    %463 = arith.addf %398, %462 : vector<8x16xf32>
    %c474 = arith.constant 474 : index
    %464 = memref.load %arg3[%c474] : memref<576xf32, #tpu.memory_space<smem>>
    %465 = vector.broadcast %464 : f32 to vector<8x16xf32>
    %466 = arith.mulf %411, %465 : vector<8x16xf32>
    %467 = arith.addf %402, %466 : vector<8x16xf32>
    %c510 = arith.constant 510 : index
    %468 = memref.load %arg3[%c510] : memref<576xf32, #tpu.memory_space<smem>>
    %469 = vector.broadcast %468 : f32 to vector<8x16xf32>
    %470 = arith.mulf %411, %469 : vector<8x16xf32>
    %471 = arith.addf %406, %470 : vector<8x16xf32>
    %c546 = arith.constant 546 : index
    %472 = memref.load %arg3[%c546] : memref<576xf32, #tpu.memory_space<smem>>
    %473 = vector.broadcast %472 : f32 to vector<8x16xf32>
    %474 = arith.mulf %411, %473 : vector<8x16xf32>
    %475 = arith.addf %410, %474 : vector<8x16xf32>
    %476 = vector.extract_strided_slice %20 {offsets = [2, 1], sizes = [8, 16], strides = [1, 1]} : vector<10x18xf32> to vector<8x16xf32>
    %c7 = arith.constant 7 : index
    %477 = memref.load %arg3[%c7] : memref<576xf32, #tpu.memory_space<smem>>
    %478 = vector.broadcast %477 : f32 to vector<8x16xf32>
    %479 = arith.mulf %476, %478 : vector<8x16xf32>
    %480 = arith.addf %415, %479 : vector<8x16xf32>
    %c43 = arith.constant 43 : index
    %481 = memref.load %arg3[%c43] : memref<576xf32, #tpu.memory_space<smem>>
    %482 = vector.broadcast %481 : f32 to vector<8x16xf32>
    %483 = arith.mulf %476, %482 : vector<8x16xf32>
    %484 = arith.addf %419, %483 : vector<8x16xf32>
    %c79 = arith.constant 79 : index
    %485 = memref.load %arg3[%c79] : memref<576xf32, #tpu.memory_space<smem>>
    %486 = vector.broadcast %485 : f32 to vector<8x16xf32>
    %487 = arith.mulf %476, %486 : vector<8x16xf32>
    %488 = arith.addf %423, %487 : vector<8x16xf32>
    %c115 = arith.constant 115 : index
    %489 = memref.load %arg3[%c115] : memref<576xf32, #tpu.memory_space<smem>>
    %490 = vector.broadcast %489 : f32 to vector<8x16xf32>
    %491 = arith.mulf %476, %490 : vector<8x16xf32>
    %492 = arith.addf %427, %491 : vector<8x16xf32>
    %c151 = arith.constant 151 : index
    %493 = memref.load %arg3[%c151] : memref<576xf32, #tpu.memory_space<smem>>
    %494 = vector.broadcast %493 : f32 to vector<8x16xf32>
    %495 = arith.mulf %476, %494 : vector<8x16xf32>
    %496 = arith.addf %431, %495 : vector<8x16xf32>
    %c187 = arith.constant 187 : index
    %497 = memref.load %arg3[%c187] : memref<576xf32, #tpu.memory_space<smem>>
    %498 = vector.broadcast %497 : f32 to vector<8x16xf32>
    %499 = arith.mulf %476, %498 : vector<8x16xf32>
    %500 = arith.addf %435, %499 : vector<8x16xf32>
    %c223 = arith.constant 223 : index
    %501 = memref.load %arg3[%c223] : memref<576xf32, #tpu.memory_space<smem>>
    %502 = vector.broadcast %501 : f32 to vector<8x16xf32>
    %503 = arith.mulf %476, %502 : vector<8x16xf32>
    %504 = arith.addf %439, %503 : vector<8x16xf32>
    %c259 = arith.constant 259 : index
    %505 = memref.load %arg3[%c259] : memref<576xf32, #tpu.memory_space<smem>>
    %506 = vector.broadcast %505 : f32 to vector<8x16xf32>
    %507 = arith.mulf %476, %506 : vector<8x16xf32>
    %508 = arith.addf %443, %507 : vector<8x16xf32>
    %c295 = arith.constant 295 : index
    %509 = memref.load %arg3[%c295] : memref<576xf32, #tpu.memory_space<smem>>
    %510 = vector.broadcast %509 : f32 to vector<8x16xf32>
    %511 = arith.mulf %476, %510 : vector<8x16xf32>
    %512 = arith.addf %447, %511 : vector<8x16xf32>
    %c331 = arith.constant 331 : index
    %513 = memref.load %arg3[%c331] : memref<576xf32, #tpu.memory_space<smem>>
    %514 = vector.broadcast %513 : f32 to vector<8x16xf32>
    %515 = arith.mulf %476, %514 : vector<8x16xf32>
    %516 = arith.addf %451, %515 : vector<8x16xf32>
    %c367 = arith.constant 367 : index
    %517 = memref.load %arg3[%c367] : memref<576xf32, #tpu.memory_space<smem>>
    %518 = vector.broadcast %517 : f32 to vector<8x16xf32>
    %519 = arith.mulf %476, %518 : vector<8x16xf32>
    %520 = arith.addf %455, %519 : vector<8x16xf32>
    %c403 = arith.constant 403 : index
    %521 = memref.load %arg3[%c403] : memref<576xf32, #tpu.memory_space<smem>>
    %522 = vector.broadcast %521 : f32 to vector<8x16xf32>
    %523 = arith.mulf %476, %522 : vector<8x16xf32>
    %524 = arith.addf %459, %523 : vector<8x16xf32>
    %c439 = arith.constant 439 : index
    %525 = memref.load %arg3[%c439] : memref<576xf32, #tpu.memory_space<smem>>
    %526 = vector.broadcast %525 : f32 to vector<8x16xf32>
    %527 = arith.mulf %476, %526 : vector<8x16xf32>
    %528 = arith.addf %463, %527 : vector<8x16xf32>
    %c475 = arith.constant 475 : index
    %529 = memref.load %arg3[%c475] : memref<576xf32, #tpu.memory_space<smem>>
    %530 = vector.broadcast %529 : f32 to vector<8x16xf32>
    %531 = arith.mulf %476, %530 : vector<8x16xf32>
    %532 = arith.addf %467, %531 : vector<8x16xf32>
    %c511 = arith.constant 511 : index
    %533 = memref.load %arg3[%c511] : memref<576xf32, #tpu.memory_space<smem>>
    %534 = vector.broadcast %533 : f32 to vector<8x16xf32>
    %535 = arith.mulf %476, %534 : vector<8x16xf32>
    %536 = arith.addf %471, %535 : vector<8x16xf32>
    %c547 = arith.constant 547 : index
    %537 = memref.load %arg3[%c547] : memref<576xf32, #tpu.memory_space<smem>>
    %538 = vector.broadcast %537 : f32 to vector<8x16xf32>
    %539 = arith.mulf %476, %538 : vector<8x16xf32>
    %540 = arith.addf %475, %539 : vector<8x16xf32>
    %541 = vector.extract_strided_slice %20 {offsets = [2, 2], sizes = [8, 16], strides = [1, 1]} : vector<10x18xf32> to vector<8x16xf32>
    %c8 = arith.constant 8 : index
    %542 = memref.load %arg3[%c8] : memref<576xf32, #tpu.memory_space<smem>>
    %543 = vector.broadcast %542 : f32 to vector<8x16xf32>
    %544 = arith.mulf %541, %543 : vector<8x16xf32>
    %545 = arith.addf %480, %544 : vector<8x16xf32>
    %c44 = arith.constant 44 : index
    %546 = memref.load %arg3[%c44] : memref<576xf32, #tpu.memory_space<smem>>
    %547 = vector.broadcast %546 : f32 to vector<8x16xf32>
    %548 = arith.mulf %541, %547 : vector<8x16xf32>
    %549 = arith.addf %484, %548 : vector<8x16xf32>
    %c80 = arith.constant 80 : index
    %550 = memref.load %arg3[%c80] : memref<576xf32, #tpu.memory_space<smem>>
    %551 = vector.broadcast %550 : f32 to vector<8x16xf32>
    %552 = arith.mulf %541, %551 : vector<8x16xf32>
    %553 = arith.addf %488, %552 : vector<8x16xf32>
    %c116 = arith.constant 116 : index
    %554 = memref.load %arg3[%c116] : memref<576xf32, #tpu.memory_space<smem>>
    %555 = vector.broadcast %554 : f32 to vector<8x16xf32>
    %556 = arith.mulf %541, %555 : vector<8x16xf32>
    %557 = arith.addf %492, %556 : vector<8x16xf32>
    %c152 = arith.constant 152 : index
    %558 = memref.load %arg3[%c152] : memref<576xf32, #tpu.memory_space<smem>>
    %559 = vector.broadcast %558 : f32 to vector<8x16xf32>
    %560 = arith.mulf %541, %559 : vector<8x16xf32>
    %561 = arith.addf %496, %560 : vector<8x16xf32>
    %c188 = arith.constant 188 : index
    %562 = memref.load %arg3[%c188] : memref<576xf32, #tpu.memory_space<smem>>
    %563 = vector.broadcast %562 : f32 to vector<8x16xf32>
    %564 = arith.mulf %541, %563 : vector<8x16xf32>
    %565 = arith.addf %500, %564 : vector<8x16xf32>
    %c224 = arith.constant 224 : index
    %566 = memref.load %arg3[%c224] : memref<576xf32, #tpu.memory_space<smem>>
    %567 = vector.broadcast %566 : f32 to vector<8x16xf32>
    %568 = arith.mulf %541, %567 : vector<8x16xf32>
    %569 = arith.addf %504, %568 : vector<8x16xf32>
    %c260 = arith.constant 260 : index
    %570 = memref.load %arg3[%c260] : memref<576xf32, #tpu.memory_space<smem>>
    %571 = vector.broadcast %570 : f32 to vector<8x16xf32>
    %572 = arith.mulf %541, %571 : vector<8x16xf32>
    %573 = arith.addf %508, %572 : vector<8x16xf32>
    %c296 = arith.constant 296 : index
    %574 = memref.load %arg3[%c296] : memref<576xf32, #tpu.memory_space<smem>>
    %575 = vector.broadcast %574 : f32 to vector<8x16xf32>
    %576 = arith.mulf %541, %575 : vector<8x16xf32>
    %577 = arith.addf %512, %576 : vector<8x16xf32>
    %c332 = arith.constant 332 : index
    %578 = memref.load %arg3[%c332] : memref<576xf32, #tpu.memory_space<smem>>
    %579 = vector.broadcast %578 : f32 to vector<8x16xf32>
    %580 = arith.mulf %541, %579 : vector<8x16xf32>
    %581 = arith.addf %516, %580 : vector<8x16xf32>
    %c368 = arith.constant 368 : index
    %582 = memref.load %arg3[%c368] : memref<576xf32, #tpu.memory_space<smem>>
    %583 = vector.broadcast %582 : f32 to vector<8x16xf32>
    %584 = arith.mulf %541, %583 : vector<8x16xf32>
    %585 = arith.addf %520, %584 : vector<8x16xf32>
    %c404 = arith.constant 404 : index
    %586 = memref.load %arg3[%c404] : memref<576xf32, #tpu.memory_space<smem>>
    %587 = vector.broadcast %586 : f32 to vector<8x16xf32>
    %588 = arith.mulf %541, %587 : vector<8x16xf32>
    %589 = arith.addf %524, %588 : vector<8x16xf32>
    %c440 = arith.constant 440 : index
    %590 = memref.load %arg3[%c440] : memref<576xf32, #tpu.memory_space<smem>>
    %591 = vector.broadcast %590 : f32 to vector<8x16xf32>
    %592 = arith.mulf %541, %591 : vector<8x16xf32>
    %593 = arith.addf %528, %592 : vector<8x16xf32>
    %c476 = arith.constant 476 : index
    %594 = memref.load %arg3[%c476] : memref<576xf32, #tpu.memory_space<smem>>
    %595 = vector.broadcast %594 : f32 to vector<8x16xf32>
    %596 = arith.mulf %541, %595 : vector<8x16xf32>
    %597 = arith.addf %532, %596 : vector<8x16xf32>
    %c512 = arith.constant 512 : index
    %598 = memref.load %arg3[%c512] : memref<576xf32, #tpu.memory_space<smem>>
    %599 = vector.broadcast %598 : f32 to vector<8x16xf32>
    %600 = arith.mulf %541, %599 : vector<8x16xf32>
    %601 = arith.addf %536, %600 : vector<8x16xf32>
    %c548 = arith.constant 548 : index
    %602 = memref.load %arg3[%c548] : memref<576xf32, #tpu.memory_space<smem>>
    %603 = vector.broadcast %602 : f32 to vector<8x16xf32>
    %604 = arith.mulf %541, %603 : vector<8x16xf32>
    %605 = arith.addf %540, %604 : vector<8x16xf32>
    %c0_18 = arith.constant 0 : index
    %c1_19 = arith.constant 1 : index
    %606 = arith.index_cast %1 : i32 to index
    %c0_20 = arith.constant 0 : index
    %607 = vector.load %arg2[%c0_18, %c1_19, %606, %c0_20] : memref<1x4x18x18xf32, #tpu.memory_space<vmem>>, vector<1x1x10x18xf32>
    %608 = vector.shape_cast %607 : vector<1x1x10x18xf32> to vector<10x18xf32>
    %609 = vector.extract_strided_slice %608 {offsets = [0, 0], sizes = [8, 16], strides = [1, 1]} : vector<10x18xf32> to vector<8x16xf32>
    %c9 = arith.constant 9 : index
    %610 = memref.load %arg3[%c9] : memref<576xf32, #tpu.memory_space<smem>>
    %611 = vector.broadcast %610 : f32 to vector<8x16xf32>
    %612 = arith.mulf %609, %611 : vector<8x16xf32>
    %613 = arith.addf %545, %612 : vector<8x16xf32>
    %c45 = arith.constant 45 : index
    %614 = memref.load %arg3[%c45] : memref<576xf32, #tpu.memory_space<smem>>
    %615 = vector.broadcast %614 : f32 to vector<8x16xf32>
    %616 = arith.mulf %609, %615 : vector<8x16xf32>
    %617 = arith.addf %549, %616 : vector<8x16xf32>
    %c81 = arith.constant 81 : index
    %618 = memref.load %arg3[%c81] : memref<576xf32, #tpu.memory_space<smem>>
    %619 = vector.broadcast %618 : f32 to vector<8x16xf32>
    %620 = arith.mulf %609, %619 : vector<8x16xf32>
    %621 = arith.addf %553, %620 : vector<8x16xf32>
    %c117 = arith.constant 117 : index
    %622 = memref.load %arg3[%c117] : memref<576xf32, #tpu.memory_space<smem>>
    %623 = vector.broadcast %622 : f32 to vector<8x16xf32>
    %624 = arith.mulf %609, %623 : vector<8x16xf32>
    %625 = arith.addf %557, %624 : vector<8x16xf32>
    %c153 = arith.constant 153 : index
    %626 = memref.load %arg3[%c153] : memref<576xf32, #tpu.memory_space<smem>>
    %627 = vector.broadcast %626 : f32 to vector<8x16xf32>
    %628 = arith.mulf %609, %627 : vector<8x16xf32>
    %629 = arith.addf %561, %628 : vector<8x16xf32>
    %c189 = arith.constant 189 : index
    %630 = memref.load %arg3[%c189] : memref<576xf32, #tpu.memory_space<smem>>
    %631 = vector.broadcast %630 : f32 to vector<8x16xf32>
    %632 = arith.mulf %609, %631 : vector<8x16xf32>
    %633 = arith.addf %565, %632 : vector<8x16xf32>
    %c225 = arith.constant 225 : index
    %634 = memref.load %arg3[%c225] : memref<576xf32, #tpu.memory_space<smem>>
    %635 = vector.broadcast %634 : f32 to vector<8x16xf32>
    %636 = arith.mulf %609, %635 : vector<8x16xf32>
    %637 = arith.addf %569, %636 : vector<8x16xf32>
    %c261 = arith.constant 261 : index
    %638 = memref.load %arg3[%c261] : memref<576xf32, #tpu.memory_space<smem>>
    %639 = vector.broadcast %638 : f32 to vector<8x16xf32>
    %640 = arith.mulf %609, %639 : vector<8x16xf32>
    %641 = arith.addf %573, %640 : vector<8x16xf32>
    %c297 = arith.constant 297 : index
    %642 = memref.load %arg3[%c297] : memref<576xf32, #tpu.memory_space<smem>>
    %643 = vector.broadcast %642 : f32 to vector<8x16xf32>
    %644 = arith.mulf %609, %643 : vector<8x16xf32>
    %645 = arith.addf %577, %644 : vector<8x16xf32>
    %c333 = arith.constant 333 : index
    %646 = memref.load %arg3[%c333] : memref<576xf32, #tpu.memory_space<smem>>
    %647 = vector.broadcast %646 : f32 to vector<8x16xf32>
    %648 = arith.mulf %609, %647 : vector<8x16xf32>
    %649 = arith.addf %581, %648 : vector<8x16xf32>
    %c369 = arith.constant 369 : index
    %650 = memref.load %arg3[%c369] : memref<576xf32, #tpu.memory_space<smem>>
    %651 = vector.broadcast %650 : f32 to vector<8x16xf32>
    %652 = arith.mulf %609, %651 : vector<8x16xf32>
    %653 = arith.addf %585, %652 : vector<8x16xf32>
    %c405 = arith.constant 405 : index
    %654 = memref.load %arg3[%c405] : memref<576xf32, #tpu.memory_space<smem>>
    %655 = vector.broadcast %654 : f32 to vector<8x16xf32>
    %656 = arith.mulf %609, %655 : vector<8x16xf32>
    %657 = arith.addf %589, %656 : vector<8x16xf32>
    %c441 = arith.constant 441 : index
    %658 = memref.load %arg3[%c441] : memref<576xf32, #tpu.memory_space<smem>>
    %659 = vector.broadcast %658 : f32 to vector<8x16xf32>
    %660 = arith.mulf %609, %659 : vector<8x16xf32>
    %661 = arith.addf %593, %660 : vector<8x16xf32>
    %c477 = arith.constant 477 : index
    %662 = memref.load %arg3[%c477] : memref<576xf32, #tpu.memory_space<smem>>
    %663 = vector.broadcast %662 : f32 to vector<8x16xf32>
    %664 = arith.mulf %609, %663 : vector<8x16xf32>
    %665 = arith.addf %597, %664 : vector<8x16xf32>
    %c513 = arith.constant 513 : index
    %666 = memref.load %arg3[%c513] : memref<576xf32, #tpu.memory_space<smem>>
    %667 = vector.broadcast %666 : f32 to vector<8x16xf32>
    %668 = arith.mulf %609, %667 : vector<8x16xf32>
    %669 = arith.addf %601, %668 : vector<8x16xf32>
    %c549 = arith.constant 549 : index
    %670 = memref.load %arg3[%c549] : memref<576xf32, #tpu.memory_space<smem>>
    %671 = vector.broadcast %670 : f32 to vector<8x16xf32>
    %672 = arith.mulf %609, %671 : vector<8x16xf32>
    %673 = arith.addf %605, %672 : vector<8x16xf32>
    %674 = vector.extract_strided_slice %608 {offsets = [0, 1], sizes = [8, 16], strides = [1, 1]} : vector<10x18xf32> to vector<8x16xf32>
    %c10 = arith.constant 10 : index
    %675 = memref.load %arg3[%c10] : memref<576xf32, #tpu.memory_space<smem>>
    %676 = vector.broadcast %675 : f32 to vector<8x16xf32>
    %677 = arith.mulf %674, %676 : vector<8x16xf32>
    %678 = arith.addf %613, %677 : vector<8x16xf32>
    %c46 = arith.constant 46 : index
    %679 = memref.load %arg3[%c46] : memref<576xf32, #tpu.memory_space<smem>>
    %680 = vector.broadcast %679 : f32 to vector<8x16xf32>
    %681 = arith.mulf %674, %680 : vector<8x16xf32>
    %682 = arith.addf %617, %681 : vector<8x16xf32>
    %c82 = arith.constant 82 : index
    %683 = memref.load %arg3[%c82] : memref<576xf32, #tpu.memory_space<smem>>
    %684 = vector.broadcast %683 : f32 to vector<8x16xf32>
    %685 = arith.mulf %674, %684 : vector<8x16xf32>
    %686 = arith.addf %621, %685 : vector<8x16xf32>
    %c118 = arith.constant 118 : index
    %687 = memref.load %arg3[%c118] : memref<576xf32, #tpu.memory_space<smem>>
    %688 = vector.broadcast %687 : f32 to vector<8x16xf32>
    %689 = arith.mulf %674, %688 : vector<8x16xf32>
    %690 = arith.addf %625, %689 : vector<8x16xf32>
    %c154 = arith.constant 154 : index
    %691 = memref.load %arg3[%c154] : memref<576xf32, #tpu.memory_space<smem>>
    %692 = vector.broadcast %691 : f32 to vector<8x16xf32>
    %693 = arith.mulf %674, %692 : vector<8x16xf32>
    %694 = arith.addf %629, %693 : vector<8x16xf32>
    %c190 = arith.constant 190 : index
    %695 = memref.load %arg3[%c190] : memref<576xf32, #tpu.memory_space<smem>>
    %696 = vector.broadcast %695 : f32 to vector<8x16xf32>
    %697 = arith.mulf %674, %696 : vector<8x16xf32>
    %698 = arith.addf %633, %697 : vector<8x16xf32>
    %c226 = arith.constant 226 : index
    %699 = memref.load %arg3[%c226] : memref<576xf32, #tpu.memory_space<smem>>
    %700 = vector.broadcast %699 : f32 to vector<8x16xf32>
    %701 = arith.mulf %674, %700 : vector<8x16xf32>
    %702 = arith.addf %637, %701 : vector<8x16xf32>
    %c262 = arith.constant 262 : index
    %703 = memref.load %arg3[%c262] : memref<576xf32, #tpu.memory_space<smem>>
    %704 = vector.broadcast %703 : f32 to vector<8x16xf32>
    %705 = arith.mulf %674, %704 : vector<8x16xf32>
    %706 = arith.addf %641, %705 : vector<8x16xf32>
    %c298 = arith.constant 298 : index
    %707 = memref.load %arg3[%c298] : memref<576xf32, #tpu.memory_space<smem>>
    %708 = vector.broadcast %707 : f32 to vector<8x16xf32>
    %709 = arith.mulf %674, %708 : vector<8x16xf32>
    %710 = arith.addf %645, %709 : vector<8x16xf32>
    %c334 = arith.constant 334 : index
    %711 = memref.load %arg3[%c334] : memref<576xf32, #tpu.memory_space<smem>>
    %712 = vector.broadcast %711 : f32 to vector<8x16xf32>
    %713 = arith.mulf %674, %712 : vector<8x16xf32>
    %714 = arith.addf %649, %713 : vector<8x16xf32>
    %c370 = arith.constant 370 : index
    %715 = memref.load %arg3[%c370] : memref<576xf32, #tpu.memory_space<smem>>
    %716 = vector.broadcast %715 : f32 to vector<8x16xf32>
    %717 = arith.mulf %674, %716 : vector<8x16xf32>
    %718 = arith.addf %653, %717 : vector<8x16xf32>
    %c406 = arith.constant 406 : index
    %719 = memref.load %arg3[%c406] : memref<576xf32, #tpu.memory_space<smem>>
    %720 = vector.broadcast %719 : f32 to vector<8x16xf32>
    %721 = arith.mulf %674, %720 : vector<8x16xf32>
    %722 = arith.addf %657, %721 : vector<8x16xf32>
    %c442 = arith.constant 442 : index
    %723 = memref.load %arg3[%c442] : memref<576xf32, #tpu.memory_space<smem>>
    %724 = vector.broadcast %723 : f32 to vector<8x16xf32>
    %725 = arith.mulf %674, %724 : vector<8x16xf32>
    %726 = arith.addf %661, %725 : vector<8x16xf32>
    %c478 = arith.constant 478 : index
    %727 = memref.load %arg3[%c478] : memref<576xf32, #tpu.memory_space<smem>>
    %728 = vector.broadcast %727 : f32 to vector<8x16xf32>
    %729 = arith.mulf %674, %728 : vector<8x16xf32>
    %730 = arith.addf %665, %729 : vector<8x16xf32>
    %c514 = arith.constant 514 : index
    %731 = memref.load %arg3[%c514] : memref<576xf32, #tpu.memory_space<smem>>
    %732 = vector.broadcast %731 : f32 to vector<8x16xf32>
    %733 = arith.mulf %674, %732 : vector<8x16xf32>
    %734 = arith.addf %669, %733 : vector<8x16xf32>
    %c550 = arith.constant 550 : index
    %735 = memref.load %arg3[%c550] : memref<576xf32, #tpu.memory_space<smem>>
    %736 = vector.broadcast %735 : f32 to vector<8x16xf32>
    %737 = arith.mulf %674, %736 : vector<8x16xf32>
    %738 = arith.addf %673, %737 : vector<8x16xf32>
    %739 = vector.extract_strided_slice %608 {offsets = [0, 2], sizes = [8, 16], strides = [1, 1]} : vector<10x18xf32> to vector<8x16xf32>
    %c11 = arith.constant 11 : index
    %740 = memref.load %arg3[%c11] : memref<576xf32, #tpu.memory_space<smem>>
    %741 = vector.broadcast %740 : f32 to vector<8x16xf32>
    %742 = arith.mulf %739, %741 : vector<8x16xf32>
    %743 = arith.addf %678, %742 : vector<8x16xf32>
    %c47 = arith.constant 47 : index
    %744 = memref.load %arg3[%c47] : memref<576xf32, #tpu.memory_space<smem>>
    %745 = vector.broadcast %744 : f32 to vector<8x16xf32>
    %746 = arith.mulf %739, %745 : vector<8x16xf32>
    %747 = arith.addf %682, %746 : vector<8x16xf32>
    %c83 = arith.constant 83 : index
    %748 = memref.load %arg3[%c83] : memref<576xf32, #tpu.memory_space<smem>>
    %749 = vector.broadcast %748 : f32 to vector<8x16xf32>
    %750 = arith.mulf %739, %749 : vector<8x16xf32>
    %751 = arith.addf %686, %750 : vector<8x16xf32>
    %c119 = arith.constant 119 : index
    %752 = memref.load %arg3[%c119] : memref<576xf32, #tpu.memory_space<smem>>
    %753 = vector.broadcast %752 : f32 to vector<8x16xf32>
    %754 = arith.mulf %739, %753 : vector<8x16xf32>
    %755 = arith.addf %690, %754 : vector<8x16xf32>
    %c155 = arith.constant 155 : index
    %756 = memref.load %arg3[%c155] : memref<576xf32, #tpu.memory_space<smem>>
    %757 = vector.broadcast %756 : f32 to vector<8x16xf32>
    %758 = arith.mulf %739, %757 : vector<8x16xf32>
    %759 = arith.addf %694, %758 : vector<8x16xf32>
    %c191 = arith.constant 191 : index
    %760 = memref.load %arg3[%c191] : memref<576xf32, #tpu.memory_space<smem>>
    %761 = vector.broadcast %760 : f32 to vector<8x16xf32>
    %762 = arith.mulf %739, %761 : vector<8x16xf32>
    %763 = arith.addf %698, %762 : vector<8x16xf32>
    %c227 = arith.constant 227 : index
    %764 = memref.load %arg3[%c227] : memref<576xf32, #tpu.memory_space<smem>>
    %765 = vector.broadcast %764 : f32 to vector<8x16xf32>
    %766 = arith.mulf %739, %765 : vector<8x16xf32>
    %767 = arith.addf %702, %766 : vector<8x16xf32>
    %c263 = arith.constant 263 : index
    %768 = memref.load %arg3[%c263] : memref<576xf32, #tpu.memory_space<smem>>
    %769 = vector.broadcast %768 : f32 to vector<8x16xf32>
    %770 = arith.mulf %739, %769 : vector<8x16xf32>
    %771 = arith.addf %706, %770 : vector<8x16xf32>
    %c299 = arith.constant 299 : index
    %772 = memref.load %arg3[%c299] : memref<576xf32, #tpu.memory_space<smem>>
    %773 = vector.broadcast %772 : f32 to vector<8x16xf32>
    %774 = arith.mulf %739, %773 : vector<8x16xf32>
    %775 = arith.addf %710, %774 : vector<8x16xf32>
    %c335 = arith.constant 335 : index
    %776 = memref.load %arg3[%c335] : memref<576xf32, #tpu.memory_space<smem>>
    %777 = vector.broadcast %776 : f32 to vector<8x16xf32>
    %778 = arith.mulf %739, %777 : vector<8x16xf32>
    %779 = arith.addf %714, %778 : vector<8x16xf32>
    %c371 = arith.constant 371 : index
    %780 = memref.load %arg3[%c371] : memref<576xf32, #tpu.memory_space<smem>>
    %781 = vector.broadcast %780 : f32 to vector<8x16xf32>
    %782 = arith.mulf %739, %781 : vector<8x16xf32>
    %783 = arith.addf %718, %782 : vector<8x16xf32>
    %c407 = arith.constant 407 : index
    %784 = memref.load %arg3[%c407] : memref<576xf32, #tpu.memory_space<smem>>
    %785 = vector.broadcast %784 : f32 to vector<8x16xf32>
    %786 = arith.mulf %739, %785 : vector<8x16xf32>
    %787 = arith.addf %722, %786 : vector<8x16xf32>
    %c443 = arith.constant 443 : index
    %788 = memref.load %arg3[%c443] : memref<576xf32, #tpu.memory_space<smem>>
    %789 = vector.broadcast %788 : f32 to vector<8x16xf32>
    %790 = arith.mulf %739, %789 : vector<8x16xf32>
    %791 = arith.addf %726, %790 : vector<8x16xf32>
    %c479 = arith.constant 479 : index
    %792 = memref.load %arg3[%c479] : memref<576xf32, #tpu.memory_space<smem>>
    %793 = vector.broadcast %792 : f32 to vector<8x16xf32>
    %794 = arith.mulf %739, %793 : vector<8x16xf32>
    %795 = arith.addf %730, %794 : vector<8x16xf32>
    %c515 = arith.constant 515 : index
    %796 = memref.load %arg3[%c515] : memref<576xf32, #tpu.memory_space<smem>>
    %797 = vector.broadcast %796 : f32 to vector<8x16xf32>
    %798 = arith.mulf %739, %797 : vector<8x16xf32>
    %799 = arith.addf %734, %798 : vector<8x16xf32>
    %c551 = arith.constant 551 : index
    %800 = memref.load %arg3[%c551] : memref<576xf32, #tpu.memory_space<smem>>
    %801 = vector.broadcast %800 : f32 to vector<8x16xf32>
    %802 = arith.mulf %739, %801 : vector<8x16xf32>
    %803 = arith.addf %738, %802 : vector<8x16xf32>
    %804 = vector.extract_strided_slice %608 {offsets = [1, 0], sizes = [8, 16], strides = [1, 1]} : vector<10x18xf32> to vector<8x16xf32>
    %c12 = arith.constant 12 : index
    %805 = memref.load %arg3[%c12] : memref<576xf32, #tpu.memory_space<smem>>
    %806 = vector.broadcast %805 : f32 to vector<8x16xf32>
    %807 = arith.mulf %804, %806 : vector<8x16xf32>
    %808 = arith.addf %743, %807 : vector<8x16xf32>
    %c48 = arith.constant 48 : index
    %809 = memref.load %arg3[%c48] : memref<576xf32, #tpu.memory_space<smem>>
    %810 = vector.broadcast %809 : f32 to vector<8x16xf32>
    %811 = arith.mulf %804, %810 : vector<8x16xf32>
    %812 = arith.addf %747, %811 : vector<8x16xf32>
    %c84 = arith.constant 84 : index
    %813 = memref.load %arg3[%c84] : memref<576xf32, #tpu.memory_space<smem>>
    %814 = vector.broadcast %813 : f32 to vector<8x16xf32>
    %815 = arith.mulf %804, %814 : vector<8x16xf32>
    %816 = arith.addf %751, %815 : vector<8x16xf32>
    %c120 = arith.constant 120 : index
    %817 = memref.load %arg3[%c120] : memref<576xf32, #tpu.memory_space<smem>>
    %818 = vector.broadcast %817 : f32 to vector<8x16xf32>
    %819 = arith.mulf %804, %818 : vector<8x16xf32>
    %820 = arith.addf %755, %819 : vector<8x16xf32>
    %c156 = arith.constant 156 : index
    %821 = memref.load %arg3[%c156] : memref<576xf32, #tpu.memory_space<smem>>
    %822 = vector.broadcast %821 : f32 to vector<8x16xf32>
    %823 = arith.mulf %804, %822 : vector<8x16xf32>
    %824 = arith.addf %759, %823 : vector<8x16xf32>
    %c192 = arith.constant 192 : index
    %825 = memref.load %arg3[%c192] : memref<576xf32, #tpu.memory_space<smem>>
    %826 = vector.broadcast %825 : f32 to vector<8x16xf32>
    %827 = arith.mulf %804, %826 : vector<8x16xf32>
    %828 = arith.addf %763, %827 : vector<8x16xf32>
    %c228 = arith.constant 228 : index
    %829 = memref.load %arg3[%c228] : memref<576xf32, #tpu.memory_space<smem>>
    %830 = vector.broadcast %829 : f32 to vector<8x16xf32>
    %831 = arith.mulf %804, %830 : vector<8x16xf32>
    %832 = arith.addf %767, %831 : vector<8x16xf32>
    %c264 = arith.constant 264 : index
    %833 = memref.load %arg3[%c264] : memref<576xf32, #tpu.memory_space<smem>>
    %834 = vector.broadcast %833 : f32 to vector<8x16xf32>
    %835 = arith.mulf %804, %834 : vector<8x16xf32>
    %836 = arith.addf %771, %835 : vector<8x16xf32>
    %c300 = arith.constant 300 : index
    %837 = memref.load %arg3[%c300] : memref<576xf32, #tpu.memory_space<smem>>
    %838 = vector.broadcast %837 : f32 to vector<8x16xf32>
    %839 = arith.mulf %804, %838 : vector<8x16xf32>
    %840 = arith.addf %775, %839 : vector<8x16xf32>
    %c336 = arith.constant 336 : index
    %841 = memref.load %arg3[%c336] : memref<576xf32, #tpu.memory_space<smem>>
    %842 = vector.broadcast %841 : f32 to vector<8x16xf32>
    %843 = arith.mulf %804, %842 : vector<8x16xf32>
    %844 = arith.addf %779, %843 : vector<8x16xf32>
    %c372 = arith.constant 372 : index
    %845 = memref.load %arg3[%c372] : memref<576xf32, #tpu.memory_space<smem>>
    %846 = vector.broadcast %845 : f32 to vector<8x16xf32>
    %847 = arith.mulf %804, %846 : vector<8x16xf32>
    %848 = arith.addf %783, %847 : vector<8x16xf32>
    %c408 = arith.constant 408 : index
    %849 = memref.load %arg3[%c408] : memref<576xf32, #tpu.memory_space<smem>>
    %850 = vector.broadcast %849 : f32 to vector<8x16xf32>
    %851 = arith.mulf %804, %850 : vector<8x16xf32>
    %852 = arith.addf %787, %851 : vector<8x16xf32>
    %c444 = arith.constant 444 : index
    %853 = memref.load %arg3[%c444] : memref<576xf32, #tpu.memory_space<smem>>
    %854 = vector.broadcast %853 : f32 to vector<8x16xf32>
    %855 = arith.mulf %804, %854 : vector<8x16xf32>
    %856 = arith.addf %791, %855 : vector<8x16xf32>
    %c480 = arith.constant 480 : index
    %857 = memref.load %arg3[%c480] : memref<576xf32, #tpu.memory_space<smem>>
    %858 = vector.broadcast %857 : f32 to vector<8x16xf32>
    %859 = arith.mulf %804, %858 : vector<8x16xf32>
    %860 = arith.addf %795, %859 : vector<8x16xf32>
    %c516 = arith.constant 516 : index
    %861 = memref.load %arg3[%c516] : memref<576xf32, #tpu.memory_space<smem>>
    %862 = vector.broadcast %861 : f32 to vector<8x16xf32>
    %863 = arith.mulf %804, %862 : vector<8x16xf32>
    %864 = arith.addf %799, %863 : vector<8x16xf32>
    %c552 = arith.constant 552 : index
    %865 = memref.load %arg3[%c552] : memref<576xf32, #tpu.memory_space<smem>>
    %866 = vector.broadcast %865 : f32 to vector<8x16xf32>
    %867 = arith.mulf %804, %866 : vector<8x16xf32>
    %868 = arith.addf %803, %867 : vector<8x16xf32>
    %869 = vector.extract_strided_slice %608 {offsets = [1, 1], sizes = [8, 16], strides = [1, 1]} : vector<10x18xf32> to vector<8x16xf32>
    %c13 = arith.constant 13 : index
    %870 = memref.load %arg3[%c13] : memref<576xf32, #tpu.memory_space<smem>>
    %871 = vector.broadcast %870 : f32 to vector<8x16xf32>
    %872 = arith.mulf %869, %871 : vector<8x16xf32>
    %873 = arith.addf %808, %872 : vector<8x16xf32>
    %c49 = arith.constant 49 : index
    %874 = memref.load %arg3[%c49] : memref<576xf32, #tpu.memory_space<smem>>
    %875 = vector.broadcast %874 : f32 to vector<8x16xf32>
    %876 = arith.mulf %869, %875 : vector<8x16xf32>
    %877 = arith.addf %812, %876 : vector<8x16xf32>
    %c85 = arith.constant 85 : index
    %878 = memref.load %arg3[%c85] : memref<576xf32, #tpu.memory_space<smem>>
    %879 = vector.broadcast %878 : f32 to vector<8x16xf32>
    %880 = arith.mulf %869, %879 : vector<8x16xf32>
    %881 = arith.addf %816, %880 : vector<8x16xf32>
    %c121 = arith.constant 121 : index
    %882 = memref.load %arg3[%c121] : memref<576xf32, #tpu.memory_space<smem>>
    %883 = vector.broadcast %882 : f32 to vector<8x16xf32>
    %884 = arith.mulf %869, %883 : vector<8x16xf32>
    %885 = arith.addf %820, %884 : vector<8x16xf32>
    %c157 = arith.constant 157 : index
    %886 = memref.load %arg3[%c157] : memref<576xf32, #tpu.memory_space<smem>>
    %887 = vector.broadcast %886 : f32 to vector<8x16xf32>
    %888 = arith.mulf %869, %887 : vector<8x16xf32>
    %889 = arith.addf %824, %888 : vector<8x16xf32>
    %c193 = arith.constant 193 : index
    %890 = memref.load %arg3[%c193] : memref<576xf32, #tpu.memory_space<smem>>
    %891 = vector.broadcast %890 : f32 to vector<8x16xf32>
    %892 = arith.mulf %869, %891 : vector<8x16xf32>
    %893 = arith.addf %828, %892 : vector<8x16xf32>
    %c229 = arith.constant 229 : index
    %894 = memref.load %arg3[%c229] : memref<576xf32, #tpu.memory_space<smem>>
    %895 = vector.broadcast %894 : f32 to vector<8x16xf32>
    %896 = arith.mulf %869, %895 : vector<8x16xf32>
    %897 = arith.addf %832, %896 : vector<8x16xf32>
    %c265 = arith.constant 265 : index
    %898 = memref.load %arg3[%c265] : memref<576xf32, #tpu.memory_space<smem>>
    %899 = vector.broadcast %898 : f32 to vector<8x16xf32>
    %900 = arith.mulf %869, %899 : vector<8x16xf32>
    %901 = arith.addf %836, %900 : vector<8x16xf32>
    %c301 = arith.constant 301 : index
    %902 = memref.load %arg3[%c301] : memref<576xf32, #tpu.memory_space<smem>>
    %903 = vector.broadcast %902 : f32 to vector<8x16xf32>
    %904 = arith.mulf %869, %903 : vector<8x16xf32>
    %905 = arith.addf %840, %904 : vector<8x16xf32>
    %c337 = arith.constant 337 : index
    %906 = memref.load %arg3[%c337] : memref<576xf32, #tpu.memory_space<smem>>
    %907 = vector.broadcast %906 : f32 to vector<8x16xf32>
    %908 = arith.mulf %869, %907 : vector<8x16xf32>
    %909 = arith.addf %844, %908 : vector<8x16xf32>
    %c373 = arith.constant 373 : index
    %910 = memref.load %arg3[%c373] : memref<576xf32, #tpu.memory_space<smem>>
    %911 = vector.broadcast %910 : f32 to vector<8x16xf32>
    %912 = arith.mulf %869, %911 : vector<8x16xf32>
    %913 = arith.addf %848, %912 : vector<8x16xf32>
    %c409 = arith.constant 409 : index
    %914 = memref.load %arg3[%c409] : memref<576xf32, #tpu.memory_space<smem>>
    %915 = vector.broadcast %914 : f32 to vector<8x16xf32>
    %916 = arith.mulf %869, %915 : vector<8x16xf32>
    %917 = arith.addf %852, %916 : vector<8x16xf32>
    %c445 = arith.constant 445 : index
    %918 = memref.load %arg3[%c445] : memref<576xf32, #tpu.memory_space<smem>>
    %919 = vector.broadcast %918 : f32 to vector<8x16xf32>
    %920 = arith.mulf %869, %919 : vector<8x16xf32>
    %921 = arith.addf %856, %920 : vector<8x16xf32>
    %c481 = arith.constant 481 : index
    %922 = memref.load %arg3[%c481] : memref<576xf32, #tpu.memory_space<smem>>
    %923 = vector.broadcast %922 : f32 to vector<8x16xf32>
    %924 = arith.mulf %869, %923 : vector<8x16xf32>
    %925 = arith.addf %860, %924 : vector<8x16xf32>
    %c517 = arith.constant 517 : index
    %926 = memref.load %arg3[%c517] : memref<576xf32, #tpu.memory_space<smem>>
    %927 = vector.broadcast %926 : f32 to vector<8x16xf32>
    %928 = arith.mulf %869, %927 : vector<8x16xf32>
    %929 = arith.addf %864, %928 : vector<8x16xf32>
    %c553 = arith.constant 553 : index
    %930 = memref.load %arg3[%c553] : memref<576xf32, #tpu.memory_space<smem>>
    %931 = vector.broadcast %930 : f32 to vector<8x16xf32>
    %932 = arith.mulf %869, %931 : vector<8x16xf32>
    %933 = arith.addf %868, %932 : vector<8x16xf32>
    %934 = vector.extract_strided_slice %608 {offsets = [1, 2], sizes = [8, 16], strides = [1, 1]} : vector<10x18xf32> to vector<8x16xf32>
    %c14 = arith.constant 14 : index
    %935 = memref.load %arg3[%c14] : memref<576xf32, #tpu.memory_space<smem>>
    %936 = vector.broadcast %935 : f32 to vector<8x16xf32>
    %937 = arith.mulf %934, %936 : vector<8x16xf32>
    %938 = arith.addf %873, %937 : vector<8x16xf32>
    %c50 = arith.constant 50 : index
    %939 = memref.load %arg3[%c50] : memref<576xf32, #tpu.memory_space<smem>>
    %940 = vector.broadcast %939 : f32 to vector<8x16xf32>
    %941 = arith.mulf %934, %940 : vector<8x16xf32>
    %942 = arith.addf %877, %941 : vector<8x16xf32>
    %c86 = arith.constant 86 : index
    %943 = memref.load %arg3[%c86] : memref<576xf32, #tpu.memory_space<smem>>
    %944 = vector.broadcast %943 : f32 to vector<8x16xf32>
    %945 = arith.mulf %934, %944 : vector<8x16xf32>
    %946 = arith.addf %881, %945 : vector<8x16xf32>
    %c122 = arith.constant 122 : index
    %947 = memref.load %arg3[%c122] : memref<576xf32, #tpu.memory_space<smem>>
    %948 = vector.broadcast %947 : f32 to vector<8x16xf32>
    %949 = arith.mulf %934, %948 : vector<8x16xf32>
    %950 = arith.addf %885, %949 : vector<8x16xf32>
    %c158 = arith.constant 158 : index
    %951 = memref.load %arg3[%c158] : memref<576xf32, #tpu.memory_space<smem>>
    %952 = vector.broadcast %951 : f32 to vector<8x16xf32>
    %953 = arith.mulf %934, %952 : vector<8x16xf32>
    %954 = arith.addf %889, %953 : vector<8x16xf32>
    %c194 = arith.constant 194 : index
    %955 = memref.load %arg3[%c194] : memref<576xf32, #tpu.memory_space<smem>>
    %956 = vector.broadcast %955 : f32 to vector<8x16xf32>
    %957 = arith.mulf %934, %956 : vector<8x16xf32>
    %958 = arith.addf %893, %957 : vector<8x16xf32>
    %c230 = arith.constant 230 : index
    %959 = memref.load %arg3[%c230] : memref<576xf32, #tpu.memory_space<smem>>
    %960 = vector.broadcast %959 : f32 to vector<8x16xf32>
    %961 = arith.mulf %934, %960 : vector<8x16xf32>
    %962 = arith.addf %897, %961 : vector<8x16xf32>
    %c266 = arith.constant 266 : index
    %963 = memref.load %arg3[%c266] : memref<576xf32, #tpu.memory_space<smem>>
    %964 = vector.broadcast %963 : f32 to vector<8x16xf32>
    %965 = arith.mulf %934, %964 : vector<8x16xf32>
    %966 = arith.addf %901, %965 : vector<8x16xf32>
    %c302 = arith.constant 302 : index
    %967 = memref.load %arg3[%c302] : memref<576xf32, #tpu.memory_space<smem>>
    %968 = vector.broadcast %967 : f32 to vector<8x16xf32>
    %969 = arith.mulf %934, %968 : vector<8x16xf32>
    %970 = arith.addf %905, %969 : vector<8x16xf32>
    %c338 = arith.constant 338 : index
    %971 = memref.load %arg3[%c338] : memref<576xf32, #tpu.memory_space<smem>>
    %972 = vector.broadcast %971 : f32 to vector<8x16xf32>
    %973 = arith.mulf %934, %972 : vector<8x16xf32>
    %974 = arith.addf %909, %973 : vector<8x16xf32>
    %c374 = arith.constant 374 : index
    %975 = memref.load %arg3[%c374] : memref<576xf32, #tpu.memory_space<smem>>
    %976 = vector.broadcast %975 : f32 to vector<8x16xf32>
    %977 = arith.mulf %934, %976 : vector<8x16xf32>
    %978 = arith.addf %913, %977 : vector<8x16xf32>
    %c410 = arith.constant 410 : index
    %979 = memref.load %arg3[%c410] : memref<576xf32, #tpu.memory_space<smem>>
    %980 = vector.broadcast %979 : f32 to vector<8x16xf32>
    %981 = arith.mulf %934, %980 : vector<8x16xf32>
    %982 = arith.addf %917, %981 : vector<8x16xf32>
    %c446 = arith.constant 446 : index
    %983 = memref.load %arg3[%c446] : memref<576xf32, #tpu.memory_space<smem>>
    %984 = vector.broadcast %983 : f32 to vector<8x16xf32>
    %985 = arith.mulf %934, %984 : vector<8x16xf32>
    %986 = arith.addf %921, %985 : vector<8x16xf32>
    %c482 = arith.constant 482 : index
    %987 = memref.load %arg3[%c482] : memref<576xf32, #tpu.memory_space<smem>>
    %988 = vector.broadcast %987 : f32 to vector<8x16xf32>
    %989 = arith.mulf %934, %988 : vector<8x16xf32>
    %990 = arith.addf %925, %989 : vector<8x16xf32>
    %c518 = arith.constant 518 : index
    %991 = memref.load %arg3[%c518] : memref<576xf32, #tpu.memory_space<smem>>
    %992 = vector.broadcast %991 : f32 to vector<8x16xf32>
    %993 = arith.mulf %934, %992 : vector<8x16xf32>
    %994 = arith.addf %929, %993 : vector<8x16xf32>
    %c554 = arith.constant 554 : index
    %995 = memref.load %arg3[%c554] : memref<576xf32, #tpu.memory_space<smem>>
    %996 = vector.broadcast %995 : f32 to vector<8x16xf32>
    %997 = arith.mulf %934, %996 : vector<8x16xf32>
    %998 = arith.addf %933, %997 : vector<8x16xf32>
    %999 = vector.extract_strided_slice %608 {offsets = [2, 0], sizes = [8, 16], strides = [1, 1]} : vector<10x18xf32> to vector<8x16xf32>
    %c15 = arith.constant 15 : index
    %1000 = memref.load %arg3[%c15] : memref<576xf32, #tpu.memory_space<smem>>
    %1001 = vector.broadcast %1000 : f32 to vector<8x16xf32>
    %1002 = arith.mulf %999, %1001 : vector<8x16xf32>
    %1003 = arith.addf %938, %1002 : vector<8x16xf32>
    %c51 = arith.constant 51 : index
    %1004 = memref.load %arg3[%c51] : memref<576xf32, #tpu.memory_space<smem>>
    %1005 = vector.broadcast %1004 : f32 to vector<8x16xf32>
    %1006 = arith.mulf %999, %1005 : vector<8x16xf32>
    %1007 = arith.addf %942, %1006 : vector<8x16xf32>
    %c87 = arith.constant 87 : index
    %1008 = memref.load %arg3[%c87] : memref<576xf32, #tpu.memory_space<smem>>
    %1009 = vector.broadcast %1008 : f32 to vector<8x16xf32>
    %1010 = arith.mulf %999, %1009 : vector<8x16xf32>
    %1011 = arith.addf %946, %1010 : vector<8x16xf32>
    %c123 = arith.constant 123 : index
    %1012 = memref.load %arg3[%c123] : memref<576xf32, #tpu.memory_space<smem>>
    %1013 = vector.broadcast %1012 : f32 to vector<8x16xf32>
    %1014 = arith.mulf %999, %1013 : vector<8x16xf32>
    %1015 = arith.addf %950, %1014 : vector<8x16xf32>
    %c159 = arith.constant 159 : index
    %1016 = memref.load %arg3[%c159] : memref<576xf32, #tpu.memory_space<smem>>
    %1017 = vector.broadcast %1016 : f32 to vector<8x16xf32>
    %1018 = arith.mulf %999, %1017 : vector<8x16xf32>
    %1019 = arith.addf %954, %1018 : vector<8x16xf32>
    %c195 = arith.constant 195 : index
    %1020 = memref.load %arg3[%c195] : memref<576xf32, #tpu.memory_space<smem>>
    %1021 = vector.broadcast %1020 : f32 to vector<8x16xf32>
    %1022 = arith.mulf %999, %1021 : vector<8x16xf32>
    %1023 = arith.addf %958, %1022 : vector<8x16xf32>
    %c231 = arith.constant 231 : index
    %1024 = memref.load %arg3[%c231] : memref<576xf32, #tpu.memory_space<smem>>
    %1025 = vector.broadcast %1024 : f32 to vector<8x16xf32>
    %1026 = arith.mulf %999, %1025 : vector<8x16xf32>
    %1027 = arith.addf %962, %1026 : vector<8x16xf32>
    %c267 = arith.constant 267 : index
    %1028 = memref.load %arg3[%c267] : memref<576xf32, #tpu.memory_space<smem>>
    %1029 = vector.broadcast %1028 : f32 to vector<8x16xf32>
    %1030 = arith.mulf %999, %1029 : vector<8x16xf32>
    %1031 = arith.addf %966, %1030 : vector<8x16xf32>
    %c303 = arith.constant 303 : index
    %1032 = memref.load %arg3[%c303] : memref<576xf32, #tpu.memory_space<smem>>
    %1033 = vector.broadcast %1032 : f32 to vector<8x16xf32>
    %1034 = arith.mulf %999, %1033 : vector<8x16xf32>
    %1035 = arith.addf %970, %1034 : vector<8x16xf32>
    %c339 = arith.constant 339 : index
    %1036 = memref.load %arg3[%c339] : memref<576xf32, #tpu.memory_space<smem>>
    %1037 = vector.broadcast %1036 : f32 to vector<8x16xf32>
    %1038 = arith.mulf %999, %1037 : vector<8x16xf32>
    %1039 = arith.addf %974, %1038 : vector<8x16xf32>
    %c375 = arith.constant 375 : index
    %1040 = memref.load %arg3[%c375] : memref<576xf32, #tpu.memory_space<smem>>
    %1041 = vector.broadcast %1040 : f32 to vector<8x16xf32>
    %1042 = arith.mulf %999, %1041 : vector<8x16xf32>
    %1043 = arith.addf %978, %1042 : vector<8x16xf32>
    %c411 = arith.constant 411 : index
    %1044 = memref.load %arg3[%c411] : memref<576xf32, #tpu.memory_space<smem>>
    %1045 = vector.broadcast %1044 : f32 to vector<8x16xf32>
    %1046 = arith.mulf %999, %1045 : vector<8x16xf32>
    %1047 = arith.addf %982, %1046 : vector<8x16xf32>
    %c447 = arith.constant 447 : index
    %1048 = memref.load %arg3[%c447] : memref<576xf32, #tpu.memory_space<smem>>
    %1049 = vector.broadcast %1048 : f32 to vector<8x16xf32>
    %1050 = arith.mulf %999, %1049 : vector<8x16xf32>
    %1051 = arith.addf %986, %1050 : vector<8x16xf32>
    %c483 = arith.constant 483 : index
    %1052 = memref.load %arg3[%c483] : memref<576xf32, #tpu.memory_space<smem>>
    %1053 = vector.broadcast %1052 : f32 to vector<8x16xf32>
    %1054 = arith.mulf %999, %1053 : vector<8x16xf32>
    %1055 = arith.addf %990, %1054 : vector<8x16xf32>
    %c519 = arith.constant 519 : index
    %1056 = memref.load %arg3[%c519] : memref<576xf32, #tpu.memory_space<smem>>
    %1057 = vector.broadcast %1056 : f32 to vector<8x16xf32>
    %1058 = arith.mulf %999, %1057 : vector<8x16xf32>
    %1059 = arith.addf %994, %1058 : vector<8x16xf32>
    %c555 = arith.constant 555 : index
    %1060 = memref.load %arg3[%c555] : memref<576xf32, #tpu.memory_space<smem>>
    %1061 = vector.broadcast %1060 : f32 to vector<8x16xf32>
    %1062 = arith.mulf %999, %1061 : vector<8x16xf32>
    %1063 = arith.addf %998, %1062 : vector<8x16xf32>
    %1064 = vector.extract_strided_slice %608 {offsets = [2, 1], sizes = [8, 16], strides = [1, 1]} : vector<10x18xf32> to vector<8x16xf32>
    %c16 = arith.constant 16 : index
    %1065 = memref.load %arg3[%c16] : memref<576xf32, #tpu.memory_space<smem>>
    %1066 = vector.broadcast %1065 : f32 to vector<8x16xf32>
    %1067 = arith.mulf %1064, %1066 : vector<8x16xf32>
    %1068 = arith.addf %1003, %1067 : vector<8x16xf32>
    %c52 = arith.constant 52 : index
    %1069 = memref.load %arg3[%c52] : memref<576xf32, #tpu.memory_space<smem>>
    %1070 = vector.broadcast %1069 : f32 to vector<8x16xf32>
    %1071 = arith.mulf %1064, %1070 : vector<8x16xf32>
    %1072 = arith.addf %1007, %1071 : vector<8x16xf32>
    %c88 = arith.constant 88 : index
    %1073 = memref.load %arg3[%c88] : memref<576xf32, #tpu.memory_space<smem>>
    %1074 = vector.broadcast %1073 : f32 to vector<8x16xf32>
    %1075 = arith.mulf %1064, %1074 : vector<8x16xf32>
    %1076 = arith.addf %1011, %1075 : vector<8x16xf32>
    %c124 = arith.constant 124 : index
    %1077 = memref.load %arg3[%c124] : memref<576xf32, #tpu.memory_space<smem>>
    %1078 = vector.broadcast %1077 : f32 to vector<8x16xf32>
    %1079 = arith.mulf %1064, %1078 : vector<8x16xf32>
    %1080 = arith.addf %1015, %1079 : vector<8x16xf32>
    %c160 = arith.constant 160 : index
    %1081 = memref.load %arg3[%c160] : memref<576xf32, #tpu.memory_space<smem>>
    %1082 = vector.broadcast %1081 : f32 to vector<8x16xf32>
    %1083 = arith.mulf %1064, %1082 : vector<8x16xf32>
    %1084 = arith.addf %1019, %1083 : vector<8x16xf32>
    %c196 = arith.constant 196 : index
    %1085 = memref.load %arg3[%c196] : memref<576xf32, #tpu.memory_space<smem>>
    %1086 = vector.broadcast %1085 : f32 to vector<8x16xf32>
    %1087 = arith.mulf %1064, %1086 : vector<8x16xf32>
    %1088 = arith.addf %1023, %1087 : vector<8x16xf32>
    %c232 = arith.constant 232 : index
    %1089 = memref.load %arg3[%c232] : memref<576xf32, #tpu.memory_space<smem>>
    %1090 = vector.broadcast %1089 : f32 to vector<8x16xf32>
    %1091 = arith.mulf %1064, %1090 : vector<8x16xf32>
    %1092 = arith.addf %1027, %1091 : vector<8x16xf32>
    %c268 = arith.constant 268 : index
    %1093 = memref.load %arg3[%c268] : memref<576xf32, #tpu.memory_space<smem>>
    %1094 = vector.broadcast %1093 : f32 to vector<8x16xf32>
    %1095 = arith.mulf %1064, %1094 : vector<8x16xf32>
    %1096 = arith.addf %1031, %1095 : vector<8x16xf32>
    %c304 = arith.constant 304 : index
    %1097 = memref.load %arg3[%c304] : memref<576xf32, #tpu.memory_space<smem>>
    %1098 = vector.broadcast %1097 : f32 to vector<8x16xf32>
    %1099 = arith.mulf %1064, %1098 : vector<8x16xf32>
    %1100 = arith.addf %1035, %1099 : vector<8x16xf32>
    %c340 = arith.constant 340 : index
    %1101 = memref.load %arg3[%c340] : memref<576xf32, #tpu.memory_space<smem>>
    %1102 = vector.broadcast %1101 : f32 to vector<8x16xf32>
    %1103 = arith.mulf %1064, %1102 : vector<8x16xf32>
    %1104 = arith.addf %1039, %1103 : vector<8x16xf32>
    %c376 = arith.constant 376 : index
    %1105 = memref.load %arg3[%c376] : memref<576xf32, #tpu.memory_space<smem>>
    %1106 = vector.broadcast %1105 : f32 to vector<8x16xf32>
    %1107 = arith.mulf %1064, %1106 : vector<8x16xf32>
    %1108 = arith.addf %1043, %1107 : vector<8x16xf32>
    %c412 = arith.constant 412 : index
    %1109 = memref.load %arg3[%c412] : memref<576xf32, #tpu.memory_space<smem>>
    %1110 = vector.broadcast %1109 : f32 to vector<8x16xf32>
    %1111 = arith.mulf %1064, %1110 : vector<8x16xf32>
    %1112 = arith.addf %1047, %1111 : vector<8x16xf32>
    %c448 = arith.constant 448 : index
    %1113 = memref.load %arg3[%c448] : memref<576xf32, #tpu.memory_space<smem>>
    %1114 = vector.broadcast %1113 : f32 to vector<8x16xf32>
    %1115 = arith.mulf %1064, %1114 : vector<8x16xf32>
    %1116 = arith.addf %1051, %1115 : vector<8x16xf32>
    %c484 = arith.constant 484 : index
    %1117 = memref.load %arg3[%c484] : memref<576xf32, #tpu.memory_space<smem>>
    %1118 = vector.broadcast %1117 : f32 to vector<8x16xf32>
    %1119 = arith.mulf %1064, %1118 : vector<8x16xf32>
    %1120 = arith.addf %1055, %1119 : vector<8x16xf32>
    %c520 = arith.constant 520 : index
    %1121 = memref.load %arg3[%c520] : memref<576xf32, #tpu.memory_space<smem>>
    %1122 = vector.broadcast %1121 : f32 to vector<8x16xf32>
    %1123 = arith.mulf %1064, %1122 : vector<8x16xf32>
    %1124 = arith.addf %1059, %1123 : vector<8x16xf32>
    %c556 = arith.constant 556 : index
    %1125 = memref.load %arg3[%c556] : memref<576xf32, #tpu.memory_space<smem>>
    %1126 = vector.broadcast %1125 : f32 to vector<8x16xf32>
    %1127 = arith.mulf %1064, %1126 : vector<8x16xf32>
    %1128 = arith.addf %1063, %1127 : vector<8x16xf32>
    %1129 = vector.extract_strided_slice %608 {offsets = [2, 2], sizes = [8, 16], strides = [1, 1]} : vector<10x18xf32> to vector<8x16xf32>
    %c17 = arith.constant 17 : index
    %1130 = memref.load %arg3[%c17] : memref<576xf32, #tpu.memory_space<smem>>
    %1131 = vector.broadcast %1130 : f32 to vector<8x16xf32>
    %1132 = arith.mulf %1129, %1131 : vector<8x16xf32>
    %1133 = arith.addf %1068, %1132 : vector<8x16xf32>
    %c53 = arith.constant 53 : index
    %1134 = memref.load %arg3[%c53] : memref<576xf32, #tpu.memory_space<smem>>
    %1135 = vector.broadcast %1134 : f32 to vector<8x16xf32>
    %1136 = arith.mulf %1129, %1135 : vector<8x16xf32>
    %1137 = arith.addf %1072, %1136 : vector<8x16xf32>
    %c89 = arith.constant 89 : index
    %1138 = memref.load %arg3[%c89] : memref<576xf32, #tpu.memory_space<smem>>
    %1139 = vector.broadcast %1138 : f32 to vector<8x16xf32>
    %1140 = arith.mulf %1129, %1139 : vector<8x16xf32>
    %1141 = arith.addf %1076, %1140 : vector<8x16xf32>
    %c125 = arith.constant 125 : index
    %1142 = memref.load %arg3[%c125] : memref<576xf32, #tpu.memory_space<smem>>
    %1143 = vector.broadcast %1142 : f32 to vector<8x16xf32>
    %1144 = arith.mulf %1129, %1143 : vector<8x16xf32>
    %1145 = arith.addf %1080, %1144 : vector<8x16xf32>
    %c161 = arith.constant 161 : index
    %1146 = memref.load %arg3[%c161] : memref<576xf32, #tpu.memory_space<smem>>
    %1147 = vector.broadcast %1146 : f32 to vector<8x16xf32>
    %1148 = arith.mulf %1129, %1147 : vector<8x16xf32>
    %1149 = arith.addf %1084, %1148 : vector<8x16xf32>
    %c197 = arith.constant 197 : index
    %1150 = memref.load %arg3[%c197] : memref<576xf32, #tpu.memory_space<smem>>
    %1151 = vector.broadcast %1150 : f32 to vector<8x16xf32>
    %1152 = arith.mulf %1129, %1151 : vector<8x16xf32>
    %1153 = arith.addf %1088, %1152 : vector<8x16xf32>
    %c233 = arith.constant 233 : index
    %1154 = memref.load %arg3[%c233] : memref<576xf32, #tpu.memory_space<smem>>
    %1155 = vector.broadcast %1154 : f32 to vector<8x16xf32>
    %1156 = arith.mulf %1129, %1155 : vector<8x16xf32>
    %1157 = arith.addf %1092, %1156 : vector<8x16xf32>
    %c269 = arith.constant 269 : index
    %1158 = memref.load %arg3[%c269] : memref<576xf32, #tpu.memory_space<smem>>
    %1159 = vector.broadcast %1158 : f32 to vector<8x16xf32>
    %1160 = arith.mulf %1129, %1159 : vector<8x16xf32>
    %1161 = arith.addf %1096, %1160 : vector<8x16xf32>
    %c305 = arith.constant 305 : index
    %1162 = memref.load %arg3[%c305] : memref<576xf32, #tpu.memory_space<smem>>
    %1163 = vector.broadcast %1162 : f32 to vector<8x16xf32>
    %1164 = arith.mulf %1129, %1163 : vector<8x16xf32>
    %1165 = arith.addf %1100, %1164 : vector<8x16xf32>
    %c341 = arith.constant 341 : index
    %1166 = memref.load %arg3[%c341] : memref<576xf32, #tpu.memory_space<smem>>
    %1167 = vector.broadcast %1166 : f32 to vector<8x16xf32>
    %1168 = arith.mulf %1129, %1167 : vector<8x16xf32>
    %1169 = arith.addf %1104, %1168 : vector<8x16xf32>
    %c377 = arith.constant 377 : index
    %1170 = memref.load %arg3[%c377] : memref<576xf32, #tpu.memory_space<smem>>
    %1171 = vector.broadcast %1170 : f32 to vector<8x16xf32>
    %1172 = arith.mulf %1129, %1171 : vector<8x16xf32>
    %1173 = arith.addf %1108, %1172 : vector<8x16xf32>
    %c413 = arith.constant 413 : index
    %1174 = memref.load %arg3[%c413] : memref<576xf32, #tpu.memory_space<smem>>
    %1175 = vector.broadcast %1174 : f32 to vector<8x16xf32>
    %1176 = arith.mulf %1129, %1175 : vector<8x16xf32>
    %1177 = arith.addf %1112, %1176 : vector<8x16xf32>
    %c449 = arith.constant 449 : index
    %1178 = memref.load %arg3[%c449] : memref<576xf32, #tpu.memory_space<smem>>
    %1179 = vector.broadcast %1178 : f32 to vector<8x16xf32>
    %1180 = arith.mulf %1129, %1179 : vector<8x16xf32>
    %1181 = arith.addf %1116, %1180 : vector<8x16xf32>
    %c485 = arith.constant 485 : index
    %1182 = memref.load %arg3[%c485] : memref<576xf32, #tpu.memory_space<smem>>
    %1183 = vector.broadcast %1182 : f32 to vector<8x16xf32>
    %1184 = arith.mulf %1129, %1183 : vector<8x16xf32>
    %1185 = arith.addf %1120, %1184 : vector<8x16xf32>
    %c521 = arith.constant 521 : index
    %1186 = memref.load %arg3[%c521] : memref<576xf32, #tpu.memory_space<smem>>
    %1187 = vector.broadcast %1186 : f32 to vector<8x16xf32>
    %1188 = arith.mulf %1129, %1187 : vector<8x16xf32>
    %1189 = arith.addf %1124, %1188 : vector<8x16xf32>
    %c557 = arith.constant 557 : index
    %1190 = memref.load %arg3[%c557] : memref<576xf32, #tpu.memory_space<smem>>
    %1191 = vector.broadcast %1190 : f32 to vector<8x16xf32>
    %1192 = arith.mulf %1129, %1191 : vector<8x16xf32>
    %1193 = arith.addf %1128, %1192 : vector<8x16xf32>
    %c0_21 = arith.constant 0 : index
    %c2_22 = arith.constant 2 : index
    %1194 = arith.index_cast %1 : i32 to index
    %c0_23 = arith.constant 0 : index
    %1195 = vector.load %arg2[%c0_21, %c2_22, %1194, %c0_23] : memref<1x4x18x18xf32, #tpu.memory_space<vmem>>, vector<1x1x10x18xf32>
    %1196 = vector.shape_cast %1195 : vector<1x1x10x18xf32> to vector<10x18xf32>
    %1197 = vector.extract_strided_slice %1196 {offsets = [0, 0], sizes = [8, 16], strides = [1, 1]} : vector<10x18xf32> to vector<8x16xf32>
    %c18 = arith.constant 18 : index
    %1198 = memref.load %arg3[%c18] : memref<576xf32, #tpu.memory_space<smem>>
    %1199 = vector.broadcast %1198 : f32 to vector<8x16xf32>
    %1200 = arith.mulf %1197, %1199 : vector<8x16xf32>
    %1201 = arith.addf %1133, %1200 : vector<8x16xf32>
    %c54 = arith.constant 54 : index
    %1202 = memref.load %arg3[%c54] : memref<576xf32, #tpu.memory_space<smem>>
    %1203 = vector.broadcast %1202 : f32 to vector<8x16xf32>
    %1204 = arith.mulf %1197, %1203 : vector<8x16xf32>
    %1205 = arith.addf %1137, %1204 : vector<8x16xf32>
    %c90 = arith.constant 90 : index
    %1206 = memref.load %arg3[%c90] : memref<576xf32, #tpu.memory_space<smem>>
    %1207 = vector.broadcast %1206 : f32 to vector<8x16xf32>
    %1208 = arith.mulf %1197, %1207 : vector<8x16xf32>
    %1209 = arith.addf %1141, %1208 : vector<8x16xf32>
    %c126 = arith.constant 126 : index
    %1210 = memref.load %arg3[%c126] : memref<576xf32, #tpu.memory_space<smem>>
    %1211 = vector.broadcast %1210 : f32 to vector<8x16xf32>
    %1212 = arith.mulf %1197, %1211 : vector<8x16xf32>
    %1213 = arith.addf %1145, %1212 : vector<8x16xf32>
    %c162 = arith.constant 162 : index
    %1214 = memref.load %arg3[%c162] : memref<576xf32, #tpu.memory_space<smem>>
    %1215 = vector.broadcast %1214 : f32 to vector<8x16xf32>
    %1216 = arith.mulf %1197, %1215 : vector<8x16xf32>
    %1217 = arith.addf %1149, %1216 : vector<8x16xf32>
    %c198 = arith.constant 198 : index
    %1218 = memref.load %arg3[%c198] : memref<576xf32, #tpu.memory_space<smem>>
    %1219 = vector.broadcast %1218 : f32 to vector<8x16xf32>
    %1220 = arith.mulf %1197, %1219 : vector<8x16xf32>
    %1221 = arith.addf %1153, %1220 : vector<8x16xf32>
    %c234 = arith.constant 234 : index
    %1222 = memref.load %arg3[%c234] : memref<576xf32, #tpu.memory_space<smem>>
    %1223 = vector.broadcast %1222 : f32 to vector<8x16xf32>
    %1224 = arith.mulf %1197, %1223 : vector<8x16xf32>
    %1225 = arith.addf %1157, %1224 : vector<8x16xf32>
    %c270 = arith.constant 270 : index
    %1226 = memref.load %arg3[%c270] : memref<576xf32, #tpu.memory_space<smem>>
    %1227 = vector.broadcast %1226 : f32 to vector<8x16xf32>
    %1228 = arith.mulf %1197, %1227 : vector<8x16xf32>
    %1229 = arith.addf %1161, %1228 : vector<8x16xf32>
    %c306 = arith.constant 306 : index
    %1230 = memref.load %arg3[%c306] : memref<576xf32, #tpu.memory_space<smem>>
    %1231 = vector.broadcast %1230 : f32 to vector<8x16xf32>
    %1232 = arith.mulf %1197, %1231 : vector<8x16xf32>
    %1233 = arith.addf %1165, %1232 : vector<8x16xf32>
    %c342 = arith.constant 342 : index
    %1234 = memref.load %arg3[%c342] : memref<576xf32, #tpu.memory_space<smem>>
    %1235 = vector.broadcast %1234 : f32 to vector<8x16xf32>
    %1236 = arith.mulf %1197, %1235 : vector<8x16xf32>
    %1237 = arith.addf %1169, %1236 : vector<8x16xf32>
    %c378 = arith.constant 378 : index
    %1238 = memref.load %arg3[%c378] : memref<576xf32, #tpu.memory_space<smem>>
    %1239 = vector.broadcast %1238 : f32 to vector<8x16xf32>
    %1240 = arith.mulf %1197, %1239 : vector<8x16xf32>
    %1241 = arith.addf %1173, %1240 : vector<8x16xf32>
    %c414 = arith.constant 414 : index
    %1242 = memref.load %arg3[%c414] : memref<576xf32, #tpu.memory_space<smem>>
    %1243 = vector.broadcast %1242 : f32 to vector<8x16xf32>
    %1244 = arith.mulf %1197, %1243 : vector<8x16xf32>
    %1245 = arith.addf %1177, %1244 : vector<8x16xf32>
    %c450 = arith.constant 450 : index
    %1246 = memref.load %arg3[%c450] : memref<576xf32, #tpu.memory_space<smem>>
    %1247 = vector.broadcast %1246 : f32 to vector<8x16xf32>
    %1248 = arith.mulf %1197, %1247 : vector<8x16xf32>
    %1249 = arith.addf %1181, %1248 : vector<8x16xf32>
    %c486 = arith.constant 486 : index
    %1250 = memref.load %arg3[%c486] : memref<576xf32, #tpu.memory_space<smem>>
    %1251 = vector.broadcast %1250 : f32 to vector<8x16xf32>
    %1252 = arith.mulf %1197, %1251 : vector<8x16xf32>
    %1253 = arith.addf %1185, %1252 : vector<8x16xf32>
    %c522 = arith.constant 522 : index
    %1254 = memref.load %arg3[%c522] : memref<576xf32, #tpu.memory_space<smem>>
    %1255 = vector.broadcast %1254 : f32 to vector<8x16xf32>
    %1256 = arith.mulf %1197, %1255 : vector<8x16xf32>
    %1257 = arith.addf %1189, %1256 : vector<8x16xf32>
    %c558 = arith.constant 558 : index
    %1258 = memref.load %arg3[%c558] : memref<576xf32, #tpu.memory_space<smem>>
    %1259 = vector.broadcast %1258 : f32 to vector<8x16xf32>
    %1260 = arith.mulf %1197, %1259 : vector<8x16xf32>
    %1261 = arith.addf %1193, %1260 : vector<8x16xf32>
    %1262 = vector.extract_strided_slice %1196 {offsets = [0, 1], sizes = [8, 16], strides = [1, 1]} : vector<10x18xf32> to vector<8x16xf32>
    %c19 = arith.constant 19 : index
    %1263 = memref.load %arg3[%c19] : memref<576xf32, #tpu.memory_space<smem>>
    %1264 = vector.broadcast %1263 : f32 to vector<8x16xf32>
    %1265 = arith.mulf %1262, %1264 : vector<8x16xf32>
    %1266 = arith.addf %1201, %1265 : vector<8x16xf32>
    %c55 = arith.constant 55 : index
    %1267 = memref.load %arg3[%c55] : memref<576xf32, #tpu.memory_space<smem>>
    %1268 = vector.broadcast %1267 : f32 to vector<8x16xf32>
    %1269 = arith.mulf %1262, %1268 : vector<8x16xf32>
    %1270 = arith.addf %1205, %1269 : vector<8x16xf32>
    %c91 = arith.constant 91 : index
    %1271 = memref.load %arg3[%c91] : memref<576xf32, #tpu.memory_space<smem>>
    %1272 = vector.broadcast %1271 : f32 to vector<8x16xf32>
    %1273 = arith.mulf %1262, %1272 : vector<8x16xf32>
    %1274 = arith.addf %1209, %1273 : vector<8x16xf32>
    %c127 = arith.constant 127 : index
    %1275 = memref.load %arg3[%c127] : memref<576xf32, #tpu.memory_space<smem>>
    %1276 = vector.broadcast %1275 : f32 to vector<8x16xf32>
    %1277 = arith.mulf %1262, %1276 : vector<8x16xf32>
    %1278 = arith.addf %1213, %1277 : vector<8x16xf32>
    %c163 = arith.constant 163 : index
    %1279 = memref.load %arg3[%c163] : memref<576xf32, #tpu.memory_space<smem>>
    %1280 = vector.broadcast %1279 : f32 to vector<8x16xf32>
    %1281 = arith.mulf %1262, %1280 : vector<8x16xf32>
    %1282 = arith.addf %1217, %1281 : vector<8x16xf32>
    %c199 = arith.constant 199 : index
    %1283 = memref.load %arg3[%c199] : memref<576xf32, #tpu.memory_space<smem>>
    %1284 = vector.broadcast %1283 : f32 to vector<8x16xf32>
    %1285 = arith.mulf %1262, %1284 : vector<8x16xf32>
    %1286 = arith.addf %1221, %1285 : vector<8x16xf32>
    %c235 = arith.constant 235 : index
    %1287 = memref.load %arg3[%c235] : memref<576xf32, #tpu.memory_space<smem>>
    %1288 = vector.broadcast %1287 : f32 to vector<8x16xf32>
    %1289 = arith.mulf %1262, %1288 : vector<8x16xf32>
    %1290 = arith.addf %1225, %1289 : vector<8x16xf32>
    %c271 = arith.constant 271 : index
    %1291 = memref.load %arg3[%c271] : memref<576xf32, #tpu.memory_space<smem>>
    %1292 = vector.broadcast %1291 : f32 to vector<8x16xf32>
    %1293 = arith.mulf %1262, %1292 : vector<8x16xf32>
    %1294 = arith.addf %1229, %1293 : vector<8x16xf32>
    %c307 = arith.constant 307 : index
    %1295 = memref.load %arg3[%c307] : memref<576xf32, #tpu.memory_space<smem>>
    %1296 = vector.broadcast %1295 : f32 to vector<8x16xf32>
    %1297 = arith.mulf %1262, %1296 : vector<8x16xf32>
    %1298 = arith.addf %1233, %1297 : vector<8x16xf32>
    %c343 = arith.constant 343 : index
    %1299 = memref.load %arg3[%c343] : memref<576xf32, #tpu.memory_space<smem>>
    %1300 = vector.broadcast %1299 : f32 to vector<8x16xf32>
    %1301 = arith.mulf %1262, %1300 : vector<8x16xf32>
    %1302 = arith.addf %1237, %1301 : vector<8x16xf32>
    %c379 = arith.constant 379 : index
    %1303 = memref.load %arg3[%c379] : memref<576xf32, #tpu.memory_space<smem>>
    %1304 = vector.broadcast %1303 : f32 to vector<8x16xf32>
    %1305 = arith.mulf %1262, %1304 : vector<8x16xf32>
    %1306 = arith.addf %1241, %1305 : vector<8x16xf32>
    %c415 = arith.constant 415 : index
    %1307 = memref.load %arg3[%c415] : memref<576xf32, #tpu.memory_space<smem>>
    %1308 = vector.broadcast %1307 : f32 to vector<8x16xf32>
    %1309 = arith.mulf %1262, %1308 : vector<8x16xf32>
    %1310 = arith.addf %1245, %1309 : vector<8x16xf32>
    %c451 = arith.constant 451 : index
    %1311 = memref.load %arg3[%c451] : memref<576xf32, #tpu.memory_space<smem>>
    %1312 = vector.broadcast %1311 : f32 to vector<8x16xf32>
    %1313 = arith.mulf %1262, %1312 : vector<8x16xf32>
    %1314 = arith.addf %1249, %1313 : vector<8x16xf32>
    %c487 = arith.constant 487 : index
    %1315 = memref.load %arg3[%c487] : memref<576xf32, #tpu.memory_space<smem>>
    %1316 = vector.broadcast %1315 : f32 to vector<8x16xf32>
    %1317 = arith.mulf %1262, %1316 : vector<8x16xf32>
    %1318 = arith.addf %1253, %1317 : vector<8x16xf32>
    %c523 = arith.constant 523 : index
    %1319 = memref.load %arg3[%c523] : memref<576xf32, #tpu.memory_space<smem>>
    %1320 = vector.broadcast %1319 : f32 to vector<8x16xf32>
    %1321 = arith.mulf %1262, %1320 : vector<8x16xf32>
    %1322 = arith.addf %1257, %1321 : vector<8x16xf32>
    %c559 = arith.constant 559 : index
    %1323 = memref.load %arg3[%c559] : memref<576xf32, #tpu.memory_space<smem>>
    %1324 = vector.broadcast %1323 : f32 to vector<8x16xf32>
    %1325 = arith.mulf %1262, %1324 : vector<8x16xf32>
    %1326 = arith.addf %1261, %1325 : vector<8x16xf32>
    %1327 = vector.extract_strided_slice %1196 {offsets = [0, 2], sizes = [8, 16], strides = [1, 1]} : vector<10x18xf32> to vector<8x16xf32>
    %c20 = arith.constant 20 : index
    %1328 = memref.load %arg3[%c20] : memref<576xf32, #tpu.memory_space<smem>>
    %1329 = vector.broadcast %1328 : f32 to vector<8x16xf32>
    %1330 = arith.mulf %1327, %1329 : vector<8x16xf32>
    %1331 = arith.addf %1266, %1330 : vector<8x16xf32>
    %c56 = arith.constant 56 : index
    %1332 = memref.load %arg3[%c56] : memref<576xf32, #tpu.memory_space<smem>>
    %1333 = vector.broadcast %1332 : f32 to vector<8x16xf32>
    %1334 = arith.mulf %1327, %1333 : vector<8x16xf32>
    %1335 = arith.addf %1270, %1334 : vector<8x16xf32>
    %c92 = arith.constant 92 : index
    %1336 = memref.load %arg3[%c92] : memref<576xf32, #tpu.memory_space<smem>>
    %1337 = vector.broadcast %1336 : f32 to vector<8x16xf32>
    %1338 = arith.mulf %1327, %1337 : vector<8x16xf32>
    %1339 = arith.addf %1274, %1338 : vector<8x16xf32>
    %c128 = arith.constant 128 : index
    %1340 = memref.load %arg3[%c128] : memref<576xf32, #tpu.memory_space<smem>>
    %1341 = vector.broadcast %1340 : f32 to vector<8x16xf32>
    %1342 = arith.mulf %1327, %1341 : vector<8x16xf32>
    %1343 = arith.addf %1278, %1342 : vector<8x16xf32>
    %c164 = arith.constant 164 : index
    %1344 = memref.load %arg3[%c164] : memref<576xf32, #tpu.memory_space<smem>>
    %1345 = vector.broadcast %1344 : f32 to vector<8x16xf32>
    %1346 = arith.mulf %1327, %1345 : vector<8x16xf32>
    %1347 = arith.addf %1282, %1346 : vector<8x16xf32>
    %c200 = arith.constant 200 : index
    %1348 = memref.load %arg3[%c200] : memref<576xf32, #tpu.memory_space<smem>>
    %1349 = vector.broadcast %1348 : f32 to vector<8x16xf32>
    %1350 = arith.mulf %1327, %1349 : vector<8x16xf32>
    %1351 = arith.addf %1286, %1350 : vector<8x16xf32>
    %c236 = arith.constant 236 : index
    %1352 = memref.load %arg3[%c236] : memref<576xf32, #tpu.memory_space<smem>>
    %1353 = vector.broadcast %1352 : f32 to vector<8x16xf32>
    %1354 = arith.mulf %1327, %1353 : vector<8x16xf32>
    %1355 = arith.addf %1290, %1354 : vector<8x16xf32>
    %c272 = arith.constant 272 : index
    %1356 = memref.load %arg3[%c272] : memref<576xf32, #tpu.memory_space<smem>>
    %1357 = vector.broadcast %1356 : f32 to vector<8x16xf32>
    %1358 = arith.mulf %1327, %1357 : vector<8x16xf32>
    %1359 = arith.addf %1294, %1358 : vector<8x16xf32>
    %c308 = arith.constant 308 : index
    %1360 = memref.load %arg3[%c308] : memref<576xf32, #tpu.memory_space<smem>>
    %1361 = vector.broadcast %1360 : f32 to vector<8x16xf32>
    %1362 = arith.mulf %1327, %1361 : vector<8x16xf32>
    %1363 = arith.addf %1298, %1362 : vector<8x16xf32>
    %c344 = arith.constant 344 : index
    %1364 = memref.load %arg3[%c344] : memref<576xf32, #tpu.memory_space<smem>>
    %1365 = vector.broadcast %1364 : f32 to vector<8x16xf32>
    %1366 = arith.mulf %1327, %1365 : vector<8x16xf32>
    %1367 = arith.addf %1302, %1366 : vector<8x16xf32>
    %c380 = arith.constant 380 : index
    %1368 = memref.load %arg3[%c380] : memref<576xf32, #tpu.memory_space<smem>>
    %1369 = vector.broadcast %1368 : f32 to vector<8x16xf32>
    %1370 = arith.mulf %1327, %1369 : vector<8x16xf32>
    %1371 = arith.addf %1306, %1370 : vector<8x16xf32>
    %c416 = arith.constant 416 : index
    %1372 = memref.load %arg3[%c416] : memref<576xf32, #tpu.memory_space<smem>>
    %1373 = vector.broadcast %1372 : f32 to vector<8x16xf32>
    %1374 = arith.mulf %1327, %1373 : vector<8x16xf32>
    %1375 = arith.addf %1310, %1374 : vector<8x16xf32>
    %c452 = arith.constant 452 : index
    %1376 = memref.load %arg3[%c452] : memref<576xf32, #tpu.memory_space<smem>>
    %1377 = vector.broadcast %1376 : f32 to vector<8x16xf32>
    %1378 = arith.mulf %1327, %1377 : vector<8x16xf32>
    %1379 = arith.addf %1314, %1378 : vector<8x16xf32>
    %c488 = arith.constant 488 : index
    %1380 = memref.load %arg3[%c488] : memref<576xf32, #tpu.memory_space<smem>>
    %1381 = vector.broadcast %1380 : f32 to vector<8x16xf32>
    %1382 = arith.mulf %1327, %1381 : vector<8x16xf32>
    %1383 = arith.addf %1318, %1382 : vector<8x16xf32>
    %c524 = arith.constant 524 : index
    %1384 = memref.load %arg3[%c524] : memref<576xf32, #tpu.memory_space<smem>>
    %1385 = vector.broadcast %1384 : f32 to vector<8x16xf32>
    %1386 = arith.mulf %1327, %1385 : vector<8x16xf32>
    %1387 = arith.addf %1322, %1386 : vector<8x16xf32>
    %c560 = arith.constant 560 : index
    %1388 = memref.load %arg3[%c560] : memref<576xf32, #tpu.memory_space<smem>>
    %1389 = vector.broadcast %1388 : f32 to vector<8x16xf32>
    %1390 = arith.mulf %1327, %1389 : vector<8x16xf32>
    %1391 = arith.addf %1326, %1390 : vector<8x16xf32>
    %1392 = vector.extract_strided_slice %1196 {offsets = [1, 0], sizes = [8, 16], strides = [1, 1]} : vector<10x18xf32> to vector<8x16xf32>
    %c21 = arith.constant 21 : index
    %1393 = memref.load %arg3[%c21] : memref<576xf32, #tpu.memory_space<smem>>
    %1394 = vector.broadcast %1393 : f32 to vector<8x16xf32>
    %1395 = arith.mulf %1392, %1394 : vector<8x16xf32>
    %1396 = arith.addf %1331, %1395 : vector<8x16xf32>
    %c57 = arith.constant 57 : index
    %1397 = memref.load %arg3[%c57] : memref<576xf32, #tpu.memory_space<smem>>
    %1398 = vector.broadcast %1397 : f32 to vector<8x16xf32>
    %1399 = arith.mulf %1392, %1398 : vector<8x16xf32>
    %1400 = arith.addf %1335, %1399 : vector<8x16xf32>
    %c93 = arith.constant 93 : index
    %1401 = memref.load %arg3[%c93] : memref<576xf32, #tpu.memory_space<smem>>
    %1402 = vector.broadcast %1401 : f32 to vector<8x16xf32>
    %1403 = arith.mulf %1392, %1402 : vector<8x16xf32>
    %1404 = arith.addf %1339, %1403 : vector<8x16xf32>
    %c129 = arith.constant 129 : index
    %1405 = memref.load %arg3[%c129] : memref<576xf32, #tpu.memory_space<smem>>
    %1406 = vector.broadcast %1405 : f32 to vector<8x16xf32>
    %1407 = arith.mulf %1392, %1406 : vector<8x16xf32>
    %1408 = arith.addf %1343, %1407 : vector<8x16xf32>
    %c165 = arith.constant 165 : index
    %1409 = memref.load %arg3[%c165] : memref<576xf32, #tpu.memory_space<smem>>
    %1410 = vector.broadcast %1409 : f32 to vector<8x16xf32>
    %1411 = arith.mulf %1392, %1410 : vector<8x16xf32>
    %1412 = arith.addf %1347, %1411 : vector<8x16xf32>
    %c201 = arith.constant 201 : index
    %1413 = memref.load %arg3[%c201] : memref<576xf32, #tpu.memory_space<smem>>
    %1414 = vector.broadcast %1413 : f32 to vector<8x16xf32>
    %1415 = arith.mulf %1392, %1414 : vector<8x16xf32>
    %1416 = arith.addf %1351, %1415 : vector<8x16xf32>
    %c237 = arith.constant 237 : index
    %1417 = memref.load %arg3[%c237] : memref<576xf32, #tpu.memory_space<smem>>
    %1418 = vector.broadcast %1417 : f32 to vector<8x16xf32>
    %1419 = arith.mulf %1392, %1418 : vector<8x16xf32>
    %1420 = arith.addf %1355, %1419 : vector<8x16xf32>
    %c273 = arith.constant 273 : index
    %1421 = memref.load %arg3[%c273] : memref<576xf32, #tpu.memory_space<smem>>
    %1422 = vector.broadcast %1421 : f32 to vector<8x16xf32>
    %1423 = arith.mulf %1392, %1422 : vector<8x16xf32>
    %1424 = arith.addf %1359, %1423 : vector<8x16xf32>
    %c309 = arith.constant 309 : index
    %1425 = memref.load %arg3[%c309] : memref<576xf32, #tpu.memory_space<smem>>
    %1426 = vector.broadcast %1425 : f32 to vector<8x16xf32>
    %1427 = arith.mulf %1392, %1426 : vector<8x16xf32>
    %1428 = arith.addf %1363, %1427 : vector<8x16xf32>
    %c345 = arith.constant 345 : index
    %1429 = memref.load %arg3[%c345] : memref<576xf32, #tpu.memory_space<smem>>
    %1430 = vector.broadcast %1429 : f32 to vector<8x16xf32>
    %1431 = arith.mulf %1392, %1430 : vector<8x16xf32>
    %1432 = arith.addf %1367, %1431 : vector<8x16xf32>
    %c381 = arith.constant 381 : index
    %1433 = memref.load %arg3[%c381] : memref<576xf32, #tpu.memory_space<smem>>
    %1434 = vector.broadcast %1433 : f32 to vector<8x16xf32>
    %1435 = arith.mulf %1392, %1434 : vector<8x16xf32>
    %1436 = arith.addf %1371, %1435 : vector<8x16xf32>
    %c417 = arith.constant 417 : index
    %1437 = memref.load %arg3[%c417] : memref<576xf32, #tpu.memory_space<smem>>
    %1438 = vector.broadcast %1437 : f32 to vector<8x16xf32>
    %1439 = arith.mulf %1392, %1438 : vector<8x16xf32>
    %1440 = arith.addf %1375, %1439 : vector<8x16xf32>
    %c453 = arith.constant 453 : index
    %1441 = memref.load %arg3[%c453] : memref<576xf32, #tpu.memory_space<smem>>
    %1442 = vector.broadcast %1441 : f32 to vector<8x16xf32>
    %1443 = arith.mulf %1392, %1442 : vector<8x16xf32>
    %1444 = arith.addf %1379, %1443 : vector<8x16xf32>
    %c489 = arith.constant 489 : index
    %1445 = memref.load %arg3[%c489] : memref<576xf32, #tpu.memory_space<smem>>
    %1446 = vector.broadcast %1445 : f32 to vector<8x16xf32>
    %1447 = arith.mulf %1392, %1446 : vector<8x16xf32>
    %1448 = arith.addf %1383, %1447 : vector<8x16xf32>
    %c525 = arith.constant 525 : index
    %1449 = memref.load %arg3[%c525] : memref<576xf32, #tpu.memory_space<smem>>
    %1450 = vector.broadcast %1449 : f32 to vector<8x16xf32>
    %1451 = arith.mulf %1392, %1450 : vector<8x16xf32>
    %1452 = arith.addf %1387, %1451 : vector<8x16xf32>
    %c561 = arith.constant 561 : index
    %1453 = memref.load %arg3[%c561] : memref<576xf32, #tpu.memory_space<smem>>
    %1454 = vector.broadcast %1453 : f32 to vector<8x16xf32>
    %1455 = arith.mulf %1392, %1454 : vector<8x16xf32>
    %1456 = arith.addf %1391, %1455 : vector<8x16xf32>
    %1457 = vector.extract_strided_slice %1196 {offsets = [1, 1], sizes = [8, 16], strides = [1, 1]} : vector<10x18xf32> to vector<8x16xf32>
    %c22 = arith.constant 22 : index
    %1458 = memref.load %arg3[%c22] : memref<576xf32, #tpu.memory_space<smem>>
    %1459 = vector.broadcast %1458 : f32 to vector<8x16xf32>
    %1460 = arith.mulf %1457, %1459 : vector<8x16xf32>
    %1461 = arith.addf %1396, %1460 : vector<8x16xf32>
    %c58 = arith.constant 58 : index
    %1462 = memref.load %arg3[%c58] : memref<576xf32, #tpu.memory_space<smem>>
    %1463 = vector.broadcast %1462 : f32 to vector<8x16xf32>
    %1464 = arith.mulf %1457, %1463 : vector<8x16xf32>
    %1465 = arith.addf %1400, %1464 : vector<8x16xf32>
    %c94 = arith.constant 94 : index
    %1466 = memref.load %arg3[%c94] : memref<576xf32, #tpu.memory_space<smem>>
    %1467 = vector.broadcast %1466 : f32 to vector<8x16xf32>
    %1468 = arith.mulf %1457, %1467 : vector<8x16xf32>
    %1469 = arith.addf %1404, %1468 : vector<8x16xf32>
    %c130 = arith.constant 130 : index
    %1470 = memref.load %arg3[%c130] : memref<576xf32, #tpu.memory_space<smem>>
    %1471 = vector.broadcast %1470 : f32 to vector<8x16xf32>
    %1472 = arith.mulf %1457, %1471 : vector<8x16xf32>
    %1473 = arith.addf %1408, %1472 : vector<8x16xf32>
    %c166 = arith.constant 166 : index
    %1474 = memref.load %arg3[%c166] : memref<576xf32, #tpu.memory_space<smem>>
    %1475 = vector.broadcast %1474 : f32 to vector<8x16xf32>
    %1476 = arith.mulf %1457, %1475 : vector<8x16xf32>
    %1477 = arith.addf %1412, %1476 : vector<8x16xf32>
    %c202 = arith.constant 202 : index
    %1478 = memref.load %arg3[%c202] : memref<576xf32, #tpu.memory_space<smem>>
    %1479 = vector.broadcast %1478 : f32 to vector<8x16xf32>
    %1480 = arith.mulf %1457, %1479 : vector<8x16xf32>
    %1481 = arith.addf %1416, %1480 : vector<8x16xf32>
    %c238 = arith.constant 238 : index
    %1482 = memref.load %arg3[%c238] : memref<576xf32, #tpu.memory_space<smem>>
    %1483 = vector.broadcast %1482 : f32 to vector<8x16xf32>
    %1484 = arith.mulf %1457, %1483 : vector<8x16xf32>
    %1485 = arith.addf %1420, %1484 : vector<8x16xf32>
    %c274 = arith.constant 274 : index
    %1486 = memref.load %arg3[%c274] : memref<576xf32, #tpu.memory_space<smem>>
    %1487 = vector.broadcast %1486 : f32 to vector<8x16xf32>
    %1488 = arith.mulf %1457, %1487 : vector<8x16xf32>
    %1489 = arith.addf %1424, %1488 : vector<8x16xf32>
    %c310 = arith.constant 310 : index
    %1490 = memref.load %arg3[%c310] : memref<576xf32, #tpu.memory_space<smem>>
    %1491 = vector.broadcast %1490 : f32 to vector<8x16xf32>
    %1492 = arith.mulf %1457, %1491 : vector<8x16xf32>
    %1493 = arith.addf %1428, %1492 : vector<8x16xf32>
    %c346 = arith.constant 346 : index
    %1494 = memref.load %arg3[%c346] : memref<576xf32, #tpu.memory_space<smem>>
    %1495 = vector.broadcast %1494 : f32 to vector<8x16xf32>
    %1496 = arith.mulf %1457, %1495 : vector<8x16xf32>
    %1497 = arith.addf %1432, %1496 : vector<8x16xf32>
    %c382 = arith.constant 382 : index
    %1498 = memref.load %arg3[%c382] : memref<576xf32, #tpu.memory_space<smem>>
    %1499 = vector.broadcast %1498 : f32 to vector<8x16xf32>
    %1500 = arith.mulf %1457, %1499 : vector<8x16xf32>
    %1501 = arith.addf %1436, %1500 : vector<8x16xf32>
    %c418 = arith.constant 418 : index
    %1502 = memref.load %arg3[%c418] : memref<576xf32, #tpu.memory_space<smem>>
    %1503 = vector.broadcast %1502 : f32 to vector<8x16xf32>
    %1504 = arith.mulf %1457, %1503 : vector<8x16xf32>
    %1505 = arith.addf %1440, %1504 : vector<8x16xf32>
    %c454 = arith.constant 454 : index
    %1506 = memref.load %arg3[%c454] : memref<576xf32, #tpu.memory_space<smem>>
    %1507 = vector.broadcast %1506 : f32 to vector<8x16xf32>
    %1508 = arith.mulf %1457, %1507 : vector<8x16xf32>
    %1509 = arith.addf %1444, %1508 : vector<8x16xf32>
    %c490 = arith.constant 490 : index
    %1510 = memref.load %arg3[%c490] : memref<576xf32, #tpu.memory_space<smem>>
    %1511 = vector.broadcast %1510 : f32 to vector<8x16xf32>
    %1512 = arith.mulf %1457, %1511 : vector<8x16xf32>
    %1513 = arith.addf %1448, %1512 : vector<8x16xf32>
    %c526 = arith.constant 526 : index
    %1514 = memref.load %arg3[%c526] : memref<576xf32, #tpu.memory_space<smem>>
    %1515 = vector.broadcast %1514 : f32 to vector<8x16xf32>
    %1516 = arith.mulf %1457, %1515 : vector<8x16xf32>
    %1517 = arith.addf %1452, %1516 : vector<8x16xf32>
    %c562 = arith.constant 562 : index
    %1518 = memref.load %arg3[%c562] : memref<576xf32, #tpu.memory_space<smem>>
    %1519 = vector.broadcast %1518 : f32 to vector<8x16xf32>
    %1520 = arith.mulf %1457, %1519 : vector<8x16xf32>
    %1521 = arith.addf %1456, %1520 : vector<8x16xf32>
    %1522 = vector.extract_strided_slice %1196 {offsets = [1, 2], sizes = [8, 16], strides = [1, 1]} : vector<10x18xf32> to vector<8x16xf32>
    %c23 = arith.constant 23 : index
    %1523 = memref.load %arg3[%c23] : memref<576xf32, #tpu.memory_space<smem>>
    %1524 = vector.broadcast %1523 : f32 to vector<8x16xf32>
    %1525 = arith.mulf %1522, %1524 : vector<8x16xf32>
    %1526 = arith.addf %1461, %1525 : vector<8x16xf32>
    %c59 = arith.constant 59 : index
    %1527 = memref.load %arg3[%c59] : memref<576xf32, #tpu.memory_space<smem>>
    %1528 = vector.broadcast %1527 : f32 to vector<8x16xf32>
    %1529 = arith.mulf %1522, %1528 : vector<8x16xf32>
    %1530 = arith.addf %1465, %1529 : vector<8x16xf32>
    %c95 = arith.constant 95 : index
    %1531 = memref.load %arg3[%c95] : memref<576xf32, #tpu.memory_space<smem>>
    %1532 = vector.broadcast %1531 : f32 to vector<8x16xf32>
    %1533 = arith.mulf %1522, %1532 : vector<8x16xf32>
    %1534 = arith.addf %1469, %1533 : vector<8x16xf32>
    %c131 = arith.constant 131 : index
    %1535 = memref.load %arg3[%c131] : memref<576xf32, #tpu.memory_space<smem>>
    %1536 = vector.broadcast %1535 : f32 to vector<8x16xf32>
    %1537 = arith.mulf %1522, %1536 : vector<8x16xf32>
    %1538 = arith.addf %1473, %1537 : vector<8x16xf32>
    %c167 = arith.constant 167 : index
    %1539 = memref.load %arg3[%c167] : memref<576xf32, #tpu.memory_space<smem>>
    %1540 = vector.broadcast %1539 : f32 to vector<8x16xf32>
    %1541 = arith.mulf %1522, %1540 : vector<8x16xf32>
    %1542 = arith.addf %1477, %1541 : vector<8x16xf32>
    %c203 = arith.constant 203 : index
    %1543 = memref.load %arg3[%c203] : memref<576xf32, #tpu.memory_space<smem>>
    %1544 = vector.broadcast %1543 : f32 to vector<8x16xf32>
    %1545 = arith.mulf %1522, %1544 : vector<8x16xf32>
    %1546 = arith.addf %1481, %1545 : vector<8x16xf32>
    %c239 = arith.constant 239 : index
    %1547 = memref.load %arg3[%c239] : memref<576xf32, #tpu.memory_space<smem>>
    %1548 = vector.broadcast %1547 : f32 to vector<8x16xf32>
    %1549 = arith.mulf %1522, %1548 : vector<8x16xf32>
    %1550 = arith.addf %1485, %1549 : vector<8x16xf32>
    %c275 = arith.constant 275 : index
    %1551 = memref.load %arg3[%c275] : memref<576xf32, #tpu.memory_space<smem>>
    %1552 = vector.broadcast %1551 : f32 to vector<8x16xf32>
    %1553 = arith.mulf %1522, %1552 : vector<8x16xf32>
    %1554 = arith.addf %1489, %1553 : vector<8x16xf32>
    %c311 = arith.constant 311 : index
    %1555 = memref.load %arg3[%c311] : memref<576xf32, #tpu.memory_space<smem>>
    %1556 = vector.broadcast %1555 : f32 to vector<8x16xf32>
    %1557 = arith.mulf %1522, %1556 : vector<8x16xf32>
    %1558 = arith.addf %1493, %1557 : vector<8x16xf32>
    %c347 = arith.constant 347 : index
    %1559 = memref.load %arg3[%c347] : memref<576xf32, #tpu.memory_space<smem>>
    %1560 = vector.broadcast %1559 : f32 to vector<8x16xf32>
    %1561 = arith.mulf %1522, %1560 : vector<8x16xf32>
    %1562 = arith.addf %1497, %1561 : vector<8x16xf32>
    %c383 = arith.constant 383 : index
    %1563 = memref.load %arg3[%c383] : memref<576xf32, #tpu.memory_space<smem>>
    %1564 = vector.broadcast %1563 : f32 to vector<8x16xf32>
    %1565 = arith.mulf %1522, %1564 : vector<8x16xf32>
    %1566 = arith.addf %1501, %1565 : vector<8x16xf32>
    %c419 = arith.constant 419 : index
    %1567 = memref.load %arg3[%c419] : memref<576xf32, #tpu.memory_space<smem>>
    %1568 = vector.broadcast %1567 : f32 to vector<8x16xf32>
    %1569 = arith.mulf %1522, %1568 : vector<8x16xf32>
    %1570 = arith.addf %1505, %1569 : vector<8x16xf32>
    %c455 = arith.constant 455 : index
    %1571 = memref.load %arg3[%c455] : memref<576xf32, #tpu.memory_space<smem>>
    %1572 = vector.broadcast %1571 : f32 to vector<8x16xf32>
    %1573 = arith.mulf %1522, %1572 : vector<8x16xf32>
    %1574 = arith.addf %1509, %1573 : vector<8x16xf32>
    %c491 = arith.constant 491 : index
    %1575 = memref.load %arg3[%c491] : memref<576xf32, #tpu.memory_space<smem>>
    %1576 = vector.broadcast %1575 : f32 to vector<8x16xf32>
    %1577 = arith.mulf %1522, %1576 : vector<8x16xf32>
    %1578 = arith.addf %1513, %1577 : vector<8x16xf32>
    %c527 = arith.constant 527 : index
    %1579 = memref.load %arg3[%c527] : memref<576xf32, #tpu.memory_space<smem>>
    %1580 = vector.broadcast %1579 : f32 to vector<8x16xf32>
    %1581 = arith.mulf %1522, %1580 : vector<8x16xf32>
    %1582 = arith.addf %1517, %1581 : vector<8x16xf32>
    %c563 = arith.constant 563 : index
    %1583 = memref.load %arg3[%c563] : memref<576xf32, #tpu.memory_space<smem>>
    %1584 = vector.broadcast %1583 : f32 to vector<8x16xf32>
    %1585 = arith.mulf %1522, %1584 : vector<8x16xf32>
    %1586 = arith.addf %1521, %1585 : vector<8x16xf32>
    %1587 = vector.extract_strided_slice %1196 {offsets = [2, 0], sizes = [8, 16], strides = [1, 1]} : vector<10x18xf32> to vector<8x16xf32>
    %c24 = arith.constant 24 : index
    %1588 = memref.load %arg3[%c24] : memref<576xf32, #tpu.memory_space<smem>>
    %1589 = vector.broadcast %1588 : f32 to vector<8x16xf32>
    %1590 = arith.mulf %1587, %1589 : vector<8x16xf32>
    %1591 = arith.addf %1526, %1590 : vector<8x16xf32>
    %c60 = arith.constant 60 : index
    %1592 = memref.load %arg3[%c60] : memref<576xf32, #tpu.memory_space<smem>>
    %1593 = vector.broadcast %1592 : f32 to vector<8x16xf32>
    %1594 = arith.mulf %1587, %1593 : vector<8x16xf32>
    %1595 = arith.addf %1530, %1594 : vector<8x16xf32>
    %c96 = arith.constant 96 : index
    %1596 = memref.load %arg3[%c96] : memref<576xf32, #tpu.memory_space<smem>>
    %1597 = vector.broadcast %1596 : f32 to vector<8x16xf32>
    %1598 = arith.mulf %1587, %1597 : vector<8x16xf32>
    %1599 = arith.addf %1534, %1598 : vector<8x16xf32>
    %c132 = arith.constant 132 : index
    %1600 = memref.load %arg3[%c132] : memref<576xf32, #tpu.memory_space<smem>>
    %1601 = vector.broadcast %1600 : f32 to vector<8x16xf32>
    %1602 = arith.mulf %1587, %1601 : vector<8x16xf32>
    %1603 = arith.addf %1538, %1602 : vector<8x16xf32>
    %c168 = arith.constant 168 : index
    %1604 = memref.load %arg3[%c168] : memref<576xf32, #tpu.memory_space<smem>>
    %1605 = vector.broadcast %1604 : f32 to vector<8x16xf32>
    %1606 = arith.mulf %1587, %1605 : vector<8x16xf32>
    %1607 = arith.addf %1542, %1606 : vector<8x16xf32>
    %c204 = arith.constant 204 : index
    %1608 = memref.load %arg3[%c204] : memref<576xf32, #tpu.memory_space<smem>>
    %1609 = vector.broadcast %1608 : f32 to vector<8x16xf32>
    %1610 = arith.mulf %1587, %1609 : vector<8x16xf32>
    %1611 = arith.addf %1546, %1610 : vector<8x16xf32>
    %c240 = arith.constant 240 : index
    %1612 = memref.load %arg3[%c240] : memref<576xf32, #tpu.memory_space<smem>>
    %1613 = vector.broadcast %1612 : f32 to vector<8x16xf32>
    %1614 = arith.mulf %1587, %1613 : vector<8x16xf32>
    %1615 = arith.addf %1550, %1614 : vector<8x16xf32>
    %c276 = arith.constant 276 : index
    %1616 = memref.load %arg3[%c276] : memref<576xf32, #tpu.memory_space<smem>>
    %1617 = vector.broadcast %1616 : f32 to vector<8x16xf32>
    %1618 = arith.mulf %1587, %1617 : vector<8x16xf32>
    %1619 = arith.addf %1554, %1618 : vector<8x16xf32>
    %c312 = arith.constant 312 : index
    %1620 = memref.load %arg3[%c312] : memref<576xf32, #tpu.memory_space<smem>>
    %1621 = vector.broadcast %1620 : f32 to vector<8x16xf32>
    %1622 = arith.mulf %1587, %1621 : vector<8x16xf32>
    %1623 = arith.addf %1558, %1622 : vector<8x16xf32>
    %c348 = arith.constant 348 : index
    %1624 = memref.load %arg3[%c348] : memref<576xf32, #tpu.memory_space<smem>>
    %1625 = vector.broadcast %1624 : f32 to vector<8x16xf32>
    %1626 = arith.mulf %1587, %1625 : vector<8x16xf32>
    %1627 = arith.addf %1562, %1626 : vector<8x16xf32>
    %c384 = arith.constant 384 : index
    %1628 = memref.load %arg3[%c384] : memref<576xf32, #tpu.memory_space<smem>>
    %1629 = vector.broadcast %1628 : f32 to vector<8x16xf32>
    %1630 = arith.mulf %1587, %1629 : vector<8x16xf32>
    %1631 = arith.addf %1566, %1630 : vector<8x16xf32>
    %c420 = arith.constant 420 : index
    %1632 = memref.load %arg3[%c420] : memref<576xf32, #tpu.memory_space<smem>>
    %1633 = vector.broadcast %1632 : f32 to vector<8x16xf32>
    %1634 = arith.mulf %1587, %1633 : vector<8x16xf32>
    %1635 = arith.addf %1570, %1634 : vector<8x16xf32>
    %c456 = arith.constant 456 : index
    %1636 = memref.load %arg3[%c456] : memref<576xf32, #tpu.memory_space<smem>>
    %1637 = vector.broadcast %1636 : f32 to vector<8x16xf32>
    %1638 = arith.mulf %1587, %1637 : vector<8x16xf32>
    %1639 = arith.addf %1574, %1638 : vector<8x16xf32>
    %c492 = arith.constant 492 : index
    %1640 = memref.load %arg3[%c492] : memref<576xf32, #tpu.memory_space<smem>>
    %1641 = vector.broadcast %1640 : f32 to vector<8x16xf32>
    %1642 = arith.mulf %1587, %1641 : vector<8x16xf32>
    %1643 = arith.addf %1578, %1642 : vector<8x16xf32>
    %c528 = arith.constant 528 : index
    %1644 = memref.load %arg3[%c528] : memref<576xf32, #tpu.memory_space<smem>>
    %1645 = vector.broadcast %1644 : f32 to vector<8x16xf32>
    %1646 = arith.mulf %1587, %1645 : vector<8x16xf32>
    %1647 = arith.addf %1582, %1646 : vector<8x16xf32>
    %c564 = arith.constant 564 : index
    %1648 = memref.load %arg3[%c564] : memref<576xf32, #tpu.memory_space<smem>>
    %1649 = vector.broadcast %1648 : f32 to vector<8x16xf32>
    %1650 = arith.mulf %1587, %1649 : vector<8x16xf32>
    %1651 = arith.addf %1586, %1650 : vector<8x16xf32>
    %1652 = vector.extract_strided_slice %1196 {offsets = [2, 1], sizes = [8, 16], strides = [1, 1]} : vector<10x18xf32> to vector<8x16xf32>
    %c25 = arith.constant 25 : index
    %1653 = memref.load %arg3[%c25] : memref<576xf32, #tpu.memory_space<smem>>
    %1654 = vector.broadcast %1653 : f32 to vector<8x16xf32>
    %1655 = arith.mulf %1652, %1654 : vector<8x16xf32>
    %1656 = arith.addf %1591, %1655 : vector<8x16xf32>
    %c61 = arith.constant 61 : index
    %1657 = memref.load %arg3[%c61] : memref<576xf32, #tpu.memory_space<smem>>
    %1658 = vector.broadcast %1657 : f32 to vector<8x16xf32>
    %1659 = arith.mulf %1652, %1658 : vector<8x16xf32>
    %1660 = arith.addf %1595, %1659 : vector<8x16xf32>
    %c97 = arith.constant 97 : index
    %1661 = memref.load %arg3[%c97] : memref<576xf32, #tpu.memory_space<smem>>
    %1662 = vector.broadcast %1661 : f32 to vector<8x16xf32>
    %1663 = arith.mulf %1652, %1662 : vector<8x16xf32>
    %1664 = arith.addf %1599, %1663 : vector<8x16xf32>
    %c133 = arith.constant 133 : index
    %1665 = memref.load %arg3[%c133] : memref<576xf32, #tpu.memory_space<smem>>
    %1666 = vector.broadcast %1665 : f32 to vector<8x16xf32>
    %1667 = arith.mulf %1652, %1666 : vector<8x16xf32>
    %1668 = arith.addf %1603, %1667 : vector<8x16xf32>
    %c169 = arith.constant 169 : index
    %1669 = memref.load %arg3[%c169] : memref<576xf32, #tpu.memory_space<smem>>
    %1670 = vector.broadcast %1669 : f32 to vector<8x16xf32>
    %1671 = arith.mulf %1652, %1670 : vector<8x16xf32>
    %1672 = arith.addf %1607, %1671 : vector<8x16xf32>
    %c205 = arith.constant 205 : index
    %1673 = memref.load %arg3[%c205] : memref<576xf32, #tpu.memory_space<smem>>
    %1674 = vector.broadcast %1673 : f32 to vector<8x16xf32>
    %1675 = arith.mulf %1652, %1674 : vector<8x16xf32>
    %1676 = arith.addf %1611, %1675 : vector<8x16xf32>
    %c241 = arith.constant 241 : index
    %1677 = memref.load %arg3[%c241] : memref<576xf32, #tpu.memory_space<smem>>
    %1678 = vector.broadcast %1677 : f32 to vector<8x16xf32>
    %1679 = arith.mulf %1652, %1678 : vector<8x16xf32>
    %1680 = arith.addf %1615, %1679 : vector<8x16xf32>
    %c277 = arith.constant 277 : index
    %1681 = memref.load %arg3[%c277] : memref<576xf32, #tpu.memory_space<smem>>
    %1682 = vector.broadcast %1681 : f32 to vector<8x16xf32>
    %1683 = arith.mulf %1652, %1682 : vector<8x16xf32>
    %1684 = arith.addf %1619, %1683 : vector<8x16xf32>
    %c313 = arith.constant 313 : index
    %1685 = memref.load %arg3[%c313] : memref<576xf32, #tpu.memory_space<smem>>
    %1686 = vector.broadcast %1685 : f32 to vector<8x16xf32>
    %1687 = arith.mulf %1652, %1686 : vector<8x16xf32>
    %1688 = arith.addf %1623, %1687 : vector<8x16xf32>
    %c349 = arith.constant 349 : index
    %1689 = memref.load %arg3[%c349] : memref<576xf32, #tpu.memory_space<smem>>
    %1690 = vector.broadcast %1689 : f32 to vector<8x16xf32>
    %1691 = arith.mulf %1652, %1690 : vector<8x16xf32>
    %1692 = arith.addf %1627, %1691 : vector<8x16xf32>
    %c385 = arith.constant 385 : index
    %1693 = memref.load %arg3[%c385] : memref<576xf32, #tpu.memory_space<smem>>
    %1694 = vector.broadcast %1693 : f32 to vector<8x16xf32>
    %1695 = arith.mulf %1652, %1694 : vector<8x16xf32>
    %1696 = arith.addf %1631, %1695 : vector<8x16xf32>
    %c421 = arith.constant 421 : index
    %1697 = memref.load %arg3[%c421] : memref<576xf32, #tpu.memory_space<smem>>
    %1698 = vector.broadcast %1697 : f32 to vector<8x16xf32>
    %1699 = arith.mulf %1652, %1698 : vector<8x16xf32>
    %1700 = arith.addf %1635, %1699 : vector<8x16xf32>
    %c457 = arith.constant 457 : index
    %1701 = memref.load %arg3[%c457] : memref<576xf32, #tpu.memory_space<smem>>
    %1702 = vector.broadcast %1701 : f32 to vector<8x16xf32>
    %1703 = arith.mulf %1652, %1702 : vector<8x16xf32>
    %1704 = arith.addf %1639, %1703 : vector<8x16xf32>
    %c493 = arith.constant 493 : index
    %1705 = memref.load %arg3[%c493] : memref<576xf32, #tpu.memory_space<smem>>
    %1706 = vector.broadcast %1705 : f32 to vector<8x16xf32>
    %1707 = arith.mulf %1652, %1706 : vector<8x16xf32>
    %1708 = arith.addf %1643, %1707 : vector<8x16xf32>
    %c529 = arith.constant 529 : index
    %1709 = memref.load %arg3[%c529] : memref<576xf32, #tpu.memory_space<smem>>
    %1710 = vector.broadcast %1709 : f32 to vector<8x16xf32>
    %1711 = arith.mulf %1652, %1710 : vector<8x16xf32>
    %1712 = arith.addf %1647, %1711 : vector<8x16xf32>
    %c565 = arith.constant 565 : index
    %1713 = memref.load %arg3[%c565] : memref<576xf32, #tpu.memory_space<smem>>
    %1714 = vector.broadcast %1713 : f32 to vector<8x16xf32>
    %1715 = arith.mulf %1652, %1714 : vector<8x16xf32>
    %1716 = arith.addf %1651, %1715 : vector<8x16xf32>
    %1717 = vector.extract_strided_slice %1196 {offsets = [2, 2], sizes = [8, 16], strides = [1, 1]} : vector<10x18xf32> to vector<8x16xf32>
    %c26 = arith.constant 26 : index
    %1718 = memref.load %arg3[%c26] : memref<576xf32, #tpu.memory_space<smem>>
    %1719 = vector.broadcast %1718 : f32 to vector<8x16xf32>
    %1720 = arith.mulf %1717, %1719 : vector<8x16xf32>
    %1721 = arith.addf %1656, %1720 : vector<8x16xf32>
    %c62 = arith.constant 62 : index
    %1722 = memref.load %arg3[%c62] : memref<576xf32, #tpu.memory_space<smem>>
    %1723 = vector.broadcast %1722 : f32 to vector<8x16xf32>
    %1724 = arith.mulf %1717, %1723 : vector<8x16xf32>
    %1725 = arith.addf %1660, %1724 : vector<8x16xf32>
    %c98 = arith.constant 98 : index
    %1726 = memref.load %arg3[%c98] : memref<576xf32, #tpu.memory_space<smem>>
    %1727 = vector.broadcast %1726 : f32 to vector<8x16xf32>
    %1728 = arith.mulf %1717, %1727 : vector<8x16xf32>
    %1729 = arith.addf %1664, %1728 : vector<8x16xf32>
    %c134 = arith.constant 134 : index
    %1730 = memref.load %arg3[%c134] : memref<576xf32, #tpu.memory_space<smem>>
    %1731 = vector.broadcast %1730 : f32 to vector<8x16xf32>
    %1732 = arith.mulf %1717, %1731 : vector<8x16xf32>
    %1733 = arith.addf %1668, %1732 : vector<8x16xf32>
    %c170 = arith.constant 170 : index
    %1734 = memref.load %arg3[%c170] : memref<576xf32, #tpu.memory_space<smem>>
    %1735 = vector.broadcast %1734 : f32 to vector<8x16xf32>
    %1736 = arith.mulf %1717, %1735 : vector<8x16xf32>
    %1737 = arith.addf %1672, %1736 : vector<8x16xf32>
    %c206 = arith.constant 206 : index
    %1738 = memref.load %arg3[%c206] : memref<576xf32, #tpu.memory_space<smem>>
    %1739 = vector.broadcast %1738 : f32 to vector<8x16xf32>
    %1740 = arith.mulf %1717, %1739 : vector<8x16xf32>
    %1741 = arith.addf %1676, %1740 : vector<8x16xf32>
    %c242 = arith.constant 242 : index
    %1742 = memref.load %arg3[%c242] : memref<576xf32, #tpu.memory_space<smem>>
    %1743 = vector.broadcast %1742 : f32 to vector<8x16xf32>
    %1744 = arith.mulf %1717, %1743 : vector<8x16xf32>
    %1745 = arith.addf %1680, %1744 : vector<8x16xf32>
    %c278 = arith.constant 278 : index
    %1746 = memref.load %arg3[%c278] : memref<576xf32, #tpu.memory_space<smem>>
    %1747 = vector.broadcast %1746 : f32 to vector<8x16xf32>
    %1748 = arith.mulf %1717, %1747 : vector<8x16xf32>
    %1749 = arith.addf %1684, %1748 : vector<8x16xf32>
    %c314 = arith.constant 314 : index
    %1750 = memref.load %arg3[%c314] : memref<576xf32, #tpu.memory_space<smem>>
    %1751 = vector.broadcast %1750 : f32 to vector<8x16xf32>
    %1752 = arith.mulf %1717, %1751 : vector<8x16xf32>
    %1753 = arith.addf %1688, %1752 : vector<8x16xf32>
    %c350 = arith.constant 350 : index
    %1754 = memref.load %arg3[%c350] : memref<576xf32, #tpu.memory_space<smem>>
    %1755 = vector.broadcast %1754 : f32 to vector<8x16xf32>
    %1756 = arith.mulf %1717, %1755 : vector<8x16xf32>
    %1757 = arith.addf %1692, %1756 : vector<8x16xf32>
    %c386 = arith.constant 386 : index
    %1758 = memref.load %arg3[%c386] : memref<576xf32, #tpu.memory_space<smem>>
    %1759 = vector.broadcast %1758 : f32 to vector<8x16xf32>
    %1760 = arith.mulf %1717, %1759 : vector<8x16xf32>
    %1761 = arith.addf %1696, %1760 : vector<8x16xf32>
    %c422 = arith.constant 422 : index
    %1762 = memref.load %arg3[%c422] : memref<576xf32, #tpu.memory_space<smem>>
    %1763 = vector.broadcast %1762 : f32 to vector<8x16xf32>
    %1764 = arith.mulf %1717, %1763 : vector<8x16xf32>
    %1765 = arith.addf %1700, %1764 : vector<8x16xf32>
    %c458 = arith.constant 458 : index
    %1766 = memref.load %arg3[%c458] : memref<576xf32, #tpu.memory_space<smem>>
    %1767 = vector.broadcast %1766 : f32 to vector<8x16xf32>
    %1768 = arith.mulf %1717, %1767 : vector<8x16xf32>
    %1769 = arith.addf %1704, %1768 : vector<8x16xf32>
    %c494 = arith.constant 494 : index
    %1770 = memref.load %arg3[%c494] : memref<576xf32, #tpu.memory_space<smem>>
    %1771 = vector.broadcast %1770 : f32 to vector<8x16xf32>
    %1772 = arith.mulf %1717, %1771 : vector<8x16xf32>
    %1773 = arith.addf %1708, %1772 : vector<8x16xf32>
    %c530 = arith.constant 530 : index
    %1774 = memref.load %arg3[%c530] : memref<576xf32, #tpu.memory_space<smem>>
    %1775 = vector.broadcast %1774 : f32 to vector<8x16xf32>
    %1776 = arith.mulf %1717, %1775 : vector<8x16xf32>
    %1777 = arith.addf %1712, %1776 : vector<8x16xf32>
    %c566 = arith.constant 566 : index
    %1778 = memref.load %arg3[%c566] : memref<576xf32, #tpu.memory_space<smem>>
    %1779 = vector.broadcast %1778 : f32 to vector<8x16xf32>
    %1780 = arith.mulf %1717, %1779 : vector<8x16xf32>
    %1781 = arith.addf %1716, %1780 : vector<8x16xf32>
    %c0_24 = arith.constant 0 : index
    %c3_25 = arith.constant 3 : index
    %1782 = arith.index_cast %1 : i32 to index
    %c0_26 = arith.constant 0 : index
    %1783 = vector.load %arg2[%c0_24, %c3_25, %1782, %c0_26] : memref<1x4x18x18xf32, #tpu.memory_space<vmem>>, vector<1x1x10x18xf32>
    %1784 = vector.shape_cast %1783 : vector<1x1x10x18xf32> to vector<10x18xf32>
    %1785 = vector.extract_strided_slice %1784 {offsets = [0, 0], sizes = [8, 16], strides = [1, 1]} : vector<10x18xf32> to vector<8x16xf32>
    %c27 = arith.constant 27 : index
    %1786 = memref.load %arg3[%c27] : memref<576xf32, #tpu.memory_space<smem>>
    %1787 = vector.broadcast %1786 : f32 to vector<8x16xf32>
    %1788 = arith.mulf %1785, %1787 : vector<8x16xf32>
    %1789 = arith.addf %1721, %1788 : vector<8x16xf32>
    %c63 = arith.constant 63 : index
    %1790 = memref.load %arg3[%c63] : memref<576xf32, #tpu.memory_space<smem>>
    %1791 = vector.broadcast %1790 : f32 to vector<8x16xf32>
    %1792 = arith.mulf %1785, %1791 : vector<8x16xf32>
    %1793 = arith.addf %1725, %1792 : vector<8x16xf32>
    %c99 = arith.constant 99 : index
    %1794 = memref.load %arg3[%c99] : memref<576xf32, #tpu.memory_space<smem>>
    %1795 = vector.broadcast %1794 : f32 to vector<8x16xf32>
    %1796 = arith.mulf %1785, %1795 : vector<8x16xf32>
    %1797 = arith.addf %1729, %1796 : vector<8x16xf32>
    %c135 = arith.constant 135 : index
    %1798 = memref.load %arg3[%c135] : memref<576xf32, #tpu.memory_space<smem>>
    %1799 = vector.broadcast %1798 : f32 to vector<8x16xf32>
    %1800 = arith.mulf %1785, %1799 : vector<8x16xf32>
    %1801 = arith.addf %1733, %1800 : vector<8x16xf32>
    %c171 = arith.constant 171 : index
    %1802 = memref.load %arg3[%c171] : memref<576xf32, #tpu.memory_space<smem>>
    %1803 = vector.broadcast %1802 : f32 to vector<8x16xf32>
    %1804 = arith.mulf %1785, %1803 : vector<8x16xf32>
    %1805 = arith.addf %1737, %1804 : vector<8x16xf32>
    %c207 = arith.constant 207 : index
    %1806 = memref.load %arg3[%c207] : memref<576xf32, #tpu.memory_space<smem>>
    %1807 = vector.broadcast %1806 : f32 to vector<8x16xf32>
    %1808 = arith.mulf %1785, %1807 : vector<8x16xf32>
    %1809 = arith.addf %1741, %1808 : vector<8x16xf32>
    %c243 = arith.constant 243 : index
    %1810 = memref.load %arg3[%c243] : memref<576xf32, #tpu.memory_space<smem>>
    %1811 = vector.broadcast %1810 : f32 to vector<8x16xf32>
    %1812 = arith.mulf %1785, %1811 : vector<8x16xf32>
    %1813 = arith.addf %1745, %1812 : vector<8x16xf32>
    %c279 = arith.constant 279 : index
    %1814 = memref.load %arg3[%c279] : memref<576xf32, #tpu.memory_space<smem>>
    %1815 = vector.broadcast %1814 : f32 to vector<8x16xf32>
    %1816 = arith.mulf %1785, %1815 : vector<8x16xf32>
    %1817 = arith.addf %1749, %1816 : vector<8x16xf32>
    %c315 = arith.constant 315 : index
    %1818 = memref.load %arg3[%c315] : memref<576xf32, #tpu.memory_space<smem>>
    %1819 = vector.broadcast %1818 : f32 to vector<8x16xf32>
    %1820 = arith.mulf %1785, %1819 : vector<8x16xf32>
    %1821 = arith.addf %1753, %1820 : vector<8x16xf32>
    %c351 = arith.constant 351 : index
    %1822 = memref.load %arg3[%c351] : memref<576xf32, #tpu.memory_space<smem>>
    %1823 = vector.broadcast %1822 : f32 to vector<8x16xf32>
    %1824 = arith.mulf %1785, %1823 : vector<8x16xf32>
    %1825 = arith.addf %1757, %1824 : vector<8x16xf32>
    %c387 = arith.constant 387 : index
    %1826 = memref.load %arg3[%c387] : memref<576xf32, #tpu.memory_space<smem>>
    %1827 = vector.broadcast %1826 : f32 to vector<8x16xf32>
    %1828 = arith.mulf %1785, %1827 : vector<8x16xf32>
    %1829 = arith.addf %1761, %1828 : vector<8x16xf32>
    %c423 = arith.constant 423 : index
    %1830 = memref.load %arg3[%c423] : memref<576xf32, #tpu.memory_space<smem>>
    %1831 = vector.broadcast %1830 : f32 to vector<8x16xf32>
    %1832 = arith.mulf %1785, %1831 : vector<8x16xf32>
    %1833 = arith.addf %1765, %1832 : vector<8x16xf32>
    %c459 = arith.constant 459 : index
    %1834 = memref.load %arg3[%c459] : memref<576xf32, #tpu.memory_space<smem>>
    %1835 = vector.broadcast %1834 : f32 to vector<8x16xf32>
    %1836 = arith.mulf %1785, %1835 : vector<8x16xf32>
    %1837 = arith.addf %1769, %1836 : vector<8x16xf32>
    %c495 = arith.constant 495 : index
    %1838 = memref.load %arg3[%c495] : memref<576xf32, #tpu.memory_space<smem>>
    %1839 = vector.broadcast %1838 : f32 to vector<8x16xf32>
    %1840 = arith.mulf %1785, %1839 : vector<8x16xf32>
    %1841 = arith.addf %1773, %1840 : vector<8x16xf32>
    %c531 = arith.constant 531 : index
    %1842 = memref.load %arg3[%c531] : memref<576xf32, #tpu.memory_space<smem>>
    %1843 = vector.broadcast %1842 : f32 to vector<8x16xf32>
    %1844 = arith.mulf %1785, %1843 : vector<8x16xf32>
    %1845 = arith.addf %1777, %1844 : vector<8x16xf32>
    %c567 = arith.constant 567 : index
    %1846 = memref.load %arg3[%c567] : memref<576xf32, #tpu.memory_space<smem>>
    %1847 = vector.broadcast %1846 : f32 to vector<8x16xf32>
    %1848 = arith.mulf %1785, %1847 : vector<8x16xf32>
    %1849 = arith.addf %1781, %1848 : vector<8x16xf32>
    %1850 = vector.extract_strided_slice %1784 {offsets = [0, 1], sizes = [8, 16], strides = [1, 1]} : vector<10x18xf32> to vector<8x16xf32>
    %c28 = arith.constant 28 : index
    %1851 = memref.load %arg3[%c28] : memref<576xf32, #tpu.memory_space<smem>>
    %1852 = vector.broadcast %1851 : f32 to vector<8x16xf32>
    %1853 = arith.mulf %1850, %1852 : vector<8x16xf32>
    %1854 = arith.addf %1789, %1853 : vector<8x16xf32>
    %c64 = arith.constant 64 : index
    %1855 = memref.load %arg3[%c64] : memref<576xf32, #tpu.memory_space<smem>>
    %1856 = vector.broadcast %1855 : f32 to vector<8x16xf32>
    %1857 = arith.mulf %1850, %1856 : vector<8x16xf32>
    %1858 = arith.addf %1793, %1857 : vector<8x16xf32>
    %c100 = arith.constant 100 : index
    %1859 = memref.load %arg3[%c100] : memref<576xf32, #tpu.memory_space<smem>>
    %1860 = vector.broadcast %1859 : f32 to vector<8x16xf32>
    %1861 = arith.mulf %1850, %1860 : vector<8x16xf32>
    %1862 = arith.addf %1797, %1861 : vector<8x16xf32>
    %c136 = arith.constant 136 : index
    %1863 = memref.load %arg3[%c136] : memref<576xf32, #tpu.memory_space<smem>>
    %1864 = vector.broadcast %1863 : f32 to vector<8x16xf32>
    %1865 = arith.mulf %1850, %1864 : vector<8x16xf32>
    %1866 = arith.addf %1801, %1865 : vector<8x16xf32>
    %c172 = arith.constant 172 : index
    %1867 = memref.load %arg3[%c172] : memref<576xf32, #tpu.memory_space<smem>>
    %1868 = vector.broadcast %1867 : f32 to vector<8x16xf32>
    %1869 = arith.mulf %1850, %1868 : vector<8x16xf32>
    %1870 = arith.addf %1805, %1869 : vector<8x16xf32>
    %c208 = arith.constant 208 : index
    %1871 = memref.load %arg3[%c208] : memref<576xf32, #tpu.memory_space<smem>>
    %1872 = vector.broadcast %1871 : f32 to vector<8x16xf32>
    %1873 = arith.mulf %1850, %1872 : vector<8x16xf32>
    %1874 = arith.addf %1809, %1873 : vector<8x16xf32>
    %c244 = arith.constant 244 : index
    %1875 = memref.load %arg3[%c244] : memref<576xf32, #tpu.memory_space<smem>>
    %1876 = vector.broadcast %1875 : f32 to vector<8x16xf32>
    %1877 = arith.mulf %1850, %1876 : vector<8x16xf32>
    %1878 = arith.addf %1813, %1877 : vector<8x16xf32>
    %c280 = arith.constant 280 : index
    %1879 = memref.load %arg3[%c280] : memref<576xf32, #tpu.memory_space<smem>>
    %1880 = vector.broadcast %1879 : f32 to vector<8x16xf32>
    %1881 = arith.mulf %1850, %1880 : vector<8x16xf32>
    %1882 = arith.addf %1817, %1881 : vector<8x16xf32>
    %c316 = arith.constant 316 : index
    %1883 = memref.load %arg3[%c316] : memref<576xf32, #tpu.memory_space<smem>>
    %1884 = vector.broadcast %1883 : f32 to vector<8x16xf32>
    %1885 = arith.mulf %1850, %1884 : vector<8x16xf32>
    %1886 = arith.addf %1821, %1885 : vector<8x16xf32>
    %c352 = arith.constant 352 : index
    %1887 = memref.load %arg3[%c352] : memref<576xf32, #tpu.memory_space<smem>>
    %1888 = vector.broadcast %1887 : f32 to vector<8x16xf32>
    %1889 = arith.mulf %1850, %1888 : vector<8x16xf32>
    %1890 = arith.addf %1825, %1889 : vector<8x16xf32>
    %c388 = arith.constant 388 : index
    %1891 = memref.load %arg3[%c388] : memref<576xf32, #tpu.memory_space<smem>>
    %1892 = vector.broadcast %1891 : f32 to vector<8x16xf32>
    %1893 = arith.mulf %1850, %1892 : vector<8x16xf32>
    %1894 = arith.addf %1829, %1893 : vector<8x16xf32>
    %c424 = arith.constant 424 : index
    %1895 = memref.load %arg3[%c424] : memref<576xf32, #tpu.memory_space<smem>>
    %1896 = vector.broadcast %1895 : f32 to vector<8x16xf32>
    %1897 = arith.mulf %1850, %1896 : vector<8x16xf32>
    %1898 = arith.addf %1833, %1897 : vector<8x16xf32>
    %c460 = arith.constant 460 : index
    %1899 = memref.load %arg3[%c460] : memref<576xf32, #tpu.memory_space<smem>>
    %1900 = vector.broadcast %1899 : f32 to vector<8x16xf32>
    %1901 = arith.mulf %1850, %1900 : vector<8x16xf32>
    %1902 = arith.addf %1837, %1901 : vector<8x16xf32>
    %c496 = arith.constant 496 : index
    %1903 = memref.load %arg3[%c496] : memref<576xf32, #tpu.memory_space<smem>>
    %1904 = vector.broadcast %1903 : f32 to vector<8x16xf32>
    %1905 = arith.mulf %1850, %1904 : vector<8x16xf32>
    %1906 = arith.addf %1841, %1905 : vector<8x16xf32>
    %c532 = arith.constant 532 : index
    %1907 = memref.load %arg3[%c532] : memref<576xf32, #tpu.memory_space<smem>>
    %1908 = vector.broadcast %1907 : f32 to vector<8x16xf32>
    %1909 = arith.mulf %1850, %1908 : vector<8x16xf32>
    %1910 = arith.addf %1845, %1909 : vector<8x16xf32>
    %c568 = arith.constant 568 : index
    %1911 = memref.load %arg3[%c568] : memref<576xf32, #tpu.memory_space<smem>>
    %1912 = vector.broadcast %1911 : f32 to vector<8x16xf32>
    %1913 = arith.mulf %1850, %1912 : vector<8x16xf32>
    %1914 = arith.addf %1849, %1913 : vector<8x16xf32>
    %1915 = vector.extract_strided_slice %1784 {offsets = [0, 2], sizes = [8, 16], strides = [1, 1]} : vector<10x18xf32> to vector<8x16xf32>
    %c29 = arith.constant 29 : index
    %1916 = memref.load %arg3[%c29] : memref<576xf32, #tpu.memory_space<smem>>
    %1917 = vector.broadcast %1916 : f32 to vector<8x16xf32>
    %1918 = arith.mulf %1915, %1917 : vector<8x16xf32>
    %1919 = arith.addf %1854, %1918 : vector<8x16xf32>
    %c65 = arith.constant 65 : index
    %1920 = memref.load %arg3[%c65] : memref<576xf32, #tpu.memory_space<smem>>
    %1921 = vector.broadcast %1920 : f32 to vector<8x16xf32>
    %1922 = arith.mulf %1915, %1921 : vector<8x16xf32>
    %1923 = arith.addf %1858, %1922 : vector<8x16xf32>
    %c101 = arith.constant 101 : index
    %1924 = memref.load %arg3[%c101] : memref<576xf32, #tpu.memory_space<smem>>
    %1925 = vector.broadcast %1924 : f32 to vector<8x16xf32>
    %1926 = arith.mulf %1915, %1925 : vector<8x16xf32>
    %1927 = arith.addf %1862, %1926 : vector<8x16xf32>
    %c137 = arith.constant 137 : index
    %1928 = memref.load %arg3[%c137] : memref<576xf32, #tpu.memory_space<smem>>
    %1929 = vector.broadcast %1928 : f32 to vector<8x16xf32>
    %1930 = arith.mulf %1915, %1929 : vector<8x16xf32>
    %1931 = arith.addf %1866, %1930 : vector<8x16xf32>
    %c173 = arith.constant 173 : index
    %1932 = memref.load %arg3[%c173] : memref<576xf32, #tpu.memory_space<smem>>
    %1933 = vector.broadcast %1932 : f32 to vector<8x16xf32>
    %1934 = arith.mulf %1915, %1933 : vector<8x16xf32>
    %1935 = arith.addf %1870, %1934 : vector<8x16xf32>
    %c209 = arith.constant 209 : index
    %1936 = memref.load %arg3[%c209] : memref<576xf32, #tpu.memory_space<smem>>
    %1937 = vector.broadcast %1936 : f32 to vector<8x16xf32>
    %1938 = arith.mulf %1915, %1937 : vector<8x16xf32>
    %1939 = arith.addf %1874, %1938 : vector<8x16xf32>
    %c245 = arith.constant 245 : index
    %1940 = memref.load %arg3[%c245] : memref<576xf32, #tpu.memory_space<smem>>
    %1941 = vector.broadcast %1940 : f32 to vector<8x16xf32>
    %1942 = arith.mulf %1915, %1941 : vector<8x16xf32>
    %1943 = arith.addf %1878, %1942 : vector<8x16xf32>
    %c281 = arith.constant 281 : index
    %1944 = memref.load %arg3[%c281] : memref<576xf32, #tpu.memory_space<smem>>
    %1945 = vector.broadcast %1944 : f32 to vector<8x16xf32>
    %1946 = arith.mulf %1915, %1945 : vector<8x16xf32>
    %1947 = arith.addf %1882, %1946 : vector<8x16xf32>
    %c317 = arith.constant 317 : index
    %1948 = memref.load %arg3[%c317] : memref<576xf32, #tpu.memory_space<smem>>
    %1949 = vector.broadcast %1948 : f32 to vector<8x16xf32>
    %1950 = arith.mulf %1915, %1949 : vector<8x16xf32>
    %1951 = arith.addf %1886, %1950 : vector<8x16xf32>
    %c353 = arith.constant 353 : index
    %1952 = memref.load %arg3[%c353] : memref<576xf32, #tpu.memory_space<smem>>
    %1953 = vector.broadcast %1952 : f32 to vector<8x16xf32>
    %1954 = arith.mulf %1915, %1953 : vector<8x16xf32>
    %1955 = arith.addf %1890, %1954 : vector<8x16xf32>
    %c389 = arith.constant 389 : index
    %1956 = memref.load %arg3[%c389] : memref<576xf32, #tpu.memory_space<smem>>
    %1957 = vector.broadcast %1956 : f32 to vector<8x16xf32>
    %1958 = arith.mulf %1915, %1957 : vector<8x16xf32>
    %1959 = arith.addf %1894, %1958 : vector<8x16xf32>
    %c425 = arith.constant 425 : index
    %1960 = memref.load %arg3[%c425] : memref<576xf32, #tpu.memory_space<smem>>
    %1961 = vector.broadcast %1960 : f32 to vector<8x16xf32>
    %1962 = arith.mulf %1915, %1961 : vector<8x16xf32>
    %1963 = arith.addf %1898, %1962 : vector<8x16xf32>
    %c461 = arith.constant 461 : index
    %1964 = memref.load %arg3[%c461] : memref<576xf32, #tpu.memory_space<smem>>
    %1965 = vector.broadcast %1964 : f32 to vector<8x16xf32>
    %1966 = arith.mulf %1915, %1965 : vector<8x16xf32>
    %1967 = arith.addf %1902, %1966 : vector<8x16xf32>
    %c497 = arith.constant 497 : index
    %1968 = memref.load %arg3[%c497] : memref<576xf32, #tpu.memory_space<smem>>
    %1969 = vector.broadcast %1968 : f32 to vector<8x16xf32>
    %1970 = arith.mulf %1915, %1969 : vector<8x16xf32>
    %1971 = arith.addf %1906, %1970 : vector<8x16xf32>
    %c533 = arith.constant 533 : index
    %1972 = memref.load %arg3[%c533] : memref<576xf32, #tpu.memory_space<smem>>
    %1973 = vector.broadcast %1972 : f32 to vector<8x16xf32>
    %1974 = arith.mulf %1915, %1973 : vector<8x16xf32>
    %1975 = arith.addf %1910, %1974 : vector<8x16xf32>
    %c569 = arith.constant 569 : index
    %1976 = memref.load %arg3[%c569] : memref<576xf32, #tpu.memory_space<smem>>
    %1977 = vector.broadcast %1976 : f32 to vector<8x16xf32>
    %1978 = arith.mulf %1915, %1977 : vector<8x16xf32>
    %1979 = arith.addf %1914, %1978 : vector<8x16xf32>
    %1980 = vector.extract_strided_slice %1784 {offsets = [1, 0], sizes = [8, 16], strides = [1, 1]} : vector<10x18xf32> to vector<8x16xf32>
    %c30 = arith.constant 30 : index
    %1981 = memref.load %arg3[%c30] : memref<576xf32, #tpu.memory_space<smem>>
    %1982 = vector.broadcast %1981 : f32 to vector<8x16xf32>
    %1983 = arith.mulf %1980, %1982 : vector<8x16xf32>
    %1984 = arith.addf %1919, %1983 : vector<8x16xf32>
    %c66 = arith.constant 66 : index
    %1985 = memref.load %arg3[%c66] : memref<576xf32, #tpu.memory_space<smem>>
    %1986 = vector.broadcast %1985 : f32 to vector<8x16xf32>
    %1987 = arith.mulf %1980, %1986 : vector<8x16xf32>
    %1988 = arith.addf %1923, %1987 : vector<8x16xf32>
    %c102 = arith.constant 102 : index
    %1989 = memref.load %arg3[%c102] : memref<576xf32, #tpu.memory_space<smem>>
    %1990 = vector.broadcast %1989 : f32 to vector<8x16xf32>
    %1991 = arith.mulf %1980, %1990 : vector<8x16xf32>
    %1992 = arith.addf %1927, %1991 : vector<8x16xf32>
    %c138 = arith.constant 138 : index
    %1993 = memref.load %arg3[%c138] : memref<576xf32, #tpu.memory_space<smem>>
    %1994 = vector.broadcast %1993 : f32 to vector<8x16xf32>
    %1995 = arith.mulf %1980, %1994 : vector<8x16xf32>
    %1996 = arith.addf %1931, %1995 : vector<8x16xf32>
    %c174 = arith.constant 174 : index
    %1997 = memref.load %arg3[%c174] : memref<576xf32, #tpu.memory_space<smem>>
    %1998 = vector.broadcast %1997 : f32 to vector<8x16xf32>
    %1999 = arith.mulf %1980, %1998 : vector<8x16xf32>
    %2000 = arith.addf %1935, %1999 : vector<8x16xf32>
    %c210 = arith.constant 210 : index
    %2001 = memref.load %arg3[%c210] : memref<576xf32, #tpu.memory_space<smem>>
    %2002 = vector.broadcast %2001 : f32 to vector<8x16xf32>
    %2003 = arith.mulf %1980, %2002 : vector<8x16xf32>
    %2004 = arith.addf %1939, %2003 : vector<8x16xf32>
    %c246 = arith.constant 246 : index
    %2005 = memref.load %arg3[%c246] : memref<576xf32, #tpu.memory_space<smem>>
    %2006 = vector.broadcast %2005 : f32 to vector<8x16xf32>
    %2007 = arith.mulf %1980, %2006 : vector<8x16xf32>
    %2008 = arith.addf %1943, %2007 : vector<8x16xf32>
    %c282 = arith.constant 282 : index
    %2009 = memref.load %arg3[%c282] : memref<576xf32, #tpu.memory_space<smem>>
    %2010 = vector.broadcast %2009 : f32 to vector<8x16xf32>
    %2011 = arith.mulf %1980, %2010 : vector<8x16xf32>
    %2012 = arith.addf %1947, %2011 : vector<8x16xf32>
    %c318 = arith.constant 318 : index
    %2013 = memref.load %arg3[%c318] : memref<576xf32, #tpu.memory_space<smem>>
    %2014 = vector.broadcast %2013 : f32 to vector<8x16xf32>
    %2015 = arith.mulf %1980, %2014 : vector<8x16xf32>
    %2016 = arith.addf %1951, %2015 : vector<8x16xf32>
    %c354 = arith.constant 354 : index
    %2017 = memref.load %arg3[%c354] : memref<576xf32, #tpu.memory_space<smem>>
    %2018 = vector.broadcast %2017 : f32 to vector<8x16xf32>
    %2019 = arith.mulf %1980, %2018 : vector<8x16xf32>
    %2020 = arith.addf %1955, %2019 : vector<8x16xf32>
    %c390 = arith.constant 390 : index
    %2021 = memref.load %arg3[%c390] : memref<576xf32, #tpu.memory_space<smem>>
    %2022 = vector.broadcast %2021 : f32 to vector<8x16xf32>
    %2023 = arith.mulf %1980, %2022 : vector<8x16xf32>
    %2024 = arith.addf %1959, %2023 : vector<8x16xf32>
    %c426 = arith.constant 426 : index
    %2025 = memref.load %arg3[%c426] : memref<576xf32, #tpu.memory_space<smem>>
    %2026 = vector.broadcast %2025 : f32 to vector<8x16xf32>
    %2027 = arith.mulf %1980, %2026 : vector<8x16xf32>
    %2028 = arith.addf %1963, %2027 : vector<8x16xf32>
    %c462 = arith.constant 462 : index
    %2029 = memref.load %arg3[%c462] : memref<576xf32, #tpu.memory_space<smem>>
    %2030 = vector.broadcast %2029 : f32 to vector<8x16xf32>
    %2031 = arith.mulf %1980, %2030 : vector<8x16xf32>
    %2032 = arith.addf %1967, %2031 : vector<8x16xf32>
    %c498 = arith.constant 498 : index
    %2033 = memref.load %arg3[%c498] : memref<576xf32, #tpu.memory_space<smem>>
    %2034 = vector.broadcast %2033 : f32 to vector<8x16xf32>
    %2035 = arith.mulf %1980, %2034 : vector<8x16xf32>
    %2036 = arith.addf %1971, %2035 : vector<8x16xf32>
    %c534 = arith.constant 534 : index
    %2037 = memref.load %arg3[%c534] : memref<576xf32, #tpu.memory_space<smem>>
    %2038 = vector.broadcast %2037 : f32 to vector<8x16xf32>
    %2039 = arith.mulf %1980, %2038 : vector<8x16xf32>
    %2040 = arith.addf %1975, %2039 : vector<8x16xf32>
    %c570 = arith.constant 570 : index
    %2041 = memref.load %arg3[%c570] : memref<576xf32, #tpu.memory_space<smem>>
    %2042 = vector.broadcast %2041 : f32 to vector<8x16xf32>
    %2043 = arith.mulf %1980, %2042 : vector<8x16xf32>
    %2044 = arith.addf %1979, %2043 : vector<8x16xf32>
    %2045 = vector.extract_strided_slice %1784 {offsets = [1, 1], sizes = [8, 16], strides = [1, 1]} : vector<10x18xf32> to vector<8x16xf32>
    %c31 = arith.constant 31 : index
    %2046 = memref.load %arg3[%c31] : memref<576xf32, #tpu.memory_space<smem>>
    %2047 = vector.broadcast %2046 : f32 to vector<8x16xf32>
    %2048 = arith.mulf %2045, %2047 : vector<8x16xf32>
    %2049 = arith.addf %1984, %2048 : vector<8x16xf32>
    %c67 = arith.constant 67 : index
    %2050 = memref.load %arg3[%c67] : memref<576xf32, #tpu.memory_space<smem>>
    %2051 = vector.broadcast %2050 : f32 to vector<8x16xf32>
    %2052 = arith.mulf %2045, %2051 : vector<8x16xf32>
    %2053 = arith.addf %1988, %2052 : vector<8x16xf32>
    %c103 = arith.constant 103 : index
    %2054 = memref.load %arg3[%c103] : memref<576xf32, #tpu.memory_space<smem>>
    %2055 = vector.broadcast %2054 : f32 to vector<8x16xf32>
    %2056 = arith.mulf %2045, %2055 : vector<8x16xf32>
    %2057 = arith.addf %1992, %2056 : vector<8x16xf32>
    %c139 = arith.constant 139 : index
    %2058 = memref.load %arg3[%c139] : memref<576xf32, #tpu.memory_space<smem>>
    %2059 = vector.broadcast %2058 : f32 to vector<8x16xf32>
    %2060 = arith.mulf %2045, %2059 : vector<8x16xf32>
    %2061 = arith.addf %1996, %2060 : vector<8x16xf32>
    %c175 = arith.constant 175 : index
    %2062 = memref.load %arg3[%c175] : memref<576xf32, #tpu.memory_space<smem>>
    %2063 = vector.broadcast %2062 : f32 to vector<8x16xf32>
    %2064 = arith.mulf %2045, %2063 : vector<8x16xf32>
    %2065 = arith.addf %2000, %2064 : vector<8x16xf32>
    %c211 = arith.constant 211 : index
    %2066 = memref.load %arg3[%c211] : memref<576xf32, #tpu.memory_space<smem>>
    %2067 = vector.broadcast %2066 : f32 to vector<8x16xf32>
    %2068 = arith.mulf %2045, %2067 : vector<8x16xf32>
    %2069 = arith.addf %2004, %2068 : vector<8x16xf32>
    %c247 = arith.constant 247 : index
    %2070 = memref.load %arg3[%c247] : memref<576xf32, #tpu.memory_space<smem>>
    %2071 = vector.broadcast %2070 : f32 to vector<8x16xf32>
    %2072 = arith.mulf %2045, %2071 : vector<8x16xf32>
    %2073 = arith.addf %2008, %2072 : vector<8x16xf32>
    %c283 = arith.constant 283 : index
    %2074 = memref.load %arg3[%c283] : memref<576xf32, #tpu.memory_space<smem>>
    %2075 = vector.broadcast %2074 : f32 to vector<8x16xf32>
    %2076 = arith.mulf %2045, %2075 : vector<8x16xf32>
    %2077 = arith.addf %2012, %2076 : vector<8x16xf32>
    %c319 = arith.constant 319 : index
    %2078 = memref.load %arg3[%c319] : memref<576xf32, #tpu.memory_space<smem>>
    %2079 = vector.broadcast %2078 : f32 to vector<8x16xf32>
    %2080 = arith.mulf %2045, %2079 : vector<8x16xf32>
    %2081 = arith.addf %2016, %2080 : vector<8x16xf32>
    %c355 = arith.constant 355 : index
    %2082 = memref.load %arg3[%c355] : memref<576xf32, #tpu.memory_space<smem>>
    %2083 = vector.broadcast %2082 : f32 to vector<8x16xf32>
    %2084 = arith.mulf %2045, %2083 : vector<8x16xf32>
    %2085 = arith.addf %2020, %2084 : vector<8x16xf32>
    %c391 = arith.constant 391 : index
    %2086 = memref.load %arg3[%c391] : memref<576xf32, #tpu.memory_space<smem>>
    %2087 = vector.broadcast %2086 : f32 to vector<8x16xf32>
    %2088 = arith.mulf %2045, %2087 : vector<8x16xf32>
    %2089 = arith.addf %2024, %2088 : vector<8x16xf32>
    %c427 = arith.constant 427 : index
    %2090 = memref.load %arg3[%c427] : memref<576xf32, #tpu.memory_space<smem>>
    %2091 = vector.broadcast %2090 : f32 to vector<8x16xf32>
    %2092 = arith.mulf %2045, %2091 : vector<8x16xf32>
    %2093 = arith.addf %2028, %2092 : vector<8x16xf32>
    %c463 = arith.constant 463 : index
    %2094 = memref.load %arg3[%c463] : memref<576xf32, #tpu.memory_space<smem>>
    %2095 = vector.broadcast %2094 : f32 to vector<8x16xf32>
    %2096 = arith.mulf %2045, %2095 : vector<8x16xf32>
    %2097 = arith.addf %2032, %2096 : vector<8x16xf32>
    %c499 = arith.constant 499 : index
    %2098 = memref.load %arg3[%c499] : memref<576xf32, #tpu.memory_space<smem>>
    %2099 = vector.broadcast %2098 : f32 to vector<8x16xf32>
    %2100 = arith.mulf %2045, %2099 : vector<8x16xf32>
    %2101 = arith.addf %2036, %2100 : vector<8x16xf32>
    %c535 = arith.constant 535 : index
    %2102 = memref.load %arg3[%c535] : memref<576xf32, #tpu.memory_space<smem>>
    %2103 = vector.broadcast %2102 : f32 to vector<8x16xf32>
    %2104 = arith.mulf %2045, %2103 : vector<8x16xf32>
    %2105 = arith.addf %2040, %2104 : vector<8x16xf32>
    %c571 = arith.constant 571 : index
    %2106 = memref.load %arg3[%c571] : memref<576xf32, #tpu.memory_space<smem>>
    %2107 = vector.broadcast %2106 : f32 to vector<8x16xf32>
    %2108 = arith.mulf %2045, %2107 : vector<8x16xf32>
    %2109 = arith.addf %2044, %2108 : vector<8x16xf32>
    %2110 = vector.extract_strided_slice %1784 {offsets = [1, 2], sizes = [8, 16], strides = [1, 1]} : vector<10x18xf32> to vector<8x16xf32>
    %c32 = arith.constant 32 : index
    %2111 = memref.load %arg3[%c32] : memref<576xf32, #tpu.memory_space<smem>>
    %2112 = vector.broadcast %2111 : f32 to vector<8x16xf32>
    %2113 = arith.mulf %2110, %2112 : vector<8x16xf32>
    %2114 = arith.addf %2049, %2113 : vector<8x16xf32>
    %c68 = arith.constant 68 : index
    %2115 = memref.load %arg3[%c68] : memref<576xf32, #tpu.memory_space<smem>>
    %2116 = vector.broadcast %2115 : f32 to vector<8x16xf32>
    %2117 = arith.mulf %2110, %2116 : vector<8x16xf32>
    %2118 = arith.addf %2053, %2117 : vector<8x16xf32>
    %c104 = arith.constant 104 : index
    %2119 = memref.load %arg3[%c104] : memref<576xf32, #tpu.memory_space<smem>>
    %2120 = vector.broadcast %2119 : f32 to vector<8x16xf32>
    %2121 = arith.mulf %2110, %2120 : vector<8x16xf32>
    %2122 = arith.addf %2057, %2121 : vector<8x16xf32>
    %c140 = arith.constant 140 : index
    %2123 = memref.load %arg3[%c140] : memref<576xf32, #tpu.memory_space<smem>>
    %2124 = vector.broadcast %2123 : f32 to vector<8x16xf32>
    %2125 = arith.mulf %2110, %2124 : vector<8x16xf32>
    %2126 = arith.addf %2061, %2125 : vector<8x16xf32>
    %c176 = arith.constant 176 : index
    %2127 = memref.load %arg3[%c176] : memref<576xf32, #tpu.memory_space<smem>>
    %2128 = vector.broadcast %2127 : f32 to vector<8x16xf32>
    %2129 = arith.mulf %2110, %2128 : vector<8x16xf32>
    %2130 = arith.addf %2065, %2129 : vector<8x16xf32>
    %c212 = arith.constant 212 : index
    %2131 = memref.load %arg3[%c212] : memref<576xf32, #tpu.memory_space<smem>>
    %2132 = vector.broadcast %2131 : f32 to vector<8x16xf32>
    %2133 = arith.mulf %2110, %2132 : vector<8x16xf32>
    %2134 = arith.addf %2069, %2133 : vector<8x16xf32>
    %c248 = arith.constant 248 : index
    %2135 = memref.load %arg3[%c248] : memref<576xf32, #tpu.memory_space<smem>>
    %2136 = vector.broadcast %2135 : f32 to vector<8x16xf32>
    %2137 = arith.mulf %2110, %2136 : vector<8x16xf32>
    %2138 = arith.addf %2073, %2137 : vector<8x16xf32>
    %c284 = arith.constant 284 : index
    %2139 = memref.load %arg3[%c284] : memref<576xf32, #tpu.memory_space<smem>>
    %2140 = vector.broadcast %2139 : f32 to vector<8x16xf32>
    %2141 = arith.mulf %2110, %2140 : vector<8x16xf32>
    %2142 = arith.addf %2077, %2141 : vector<8x16xf32>
    %c320 = arith.constant 320 : index
    %2143 = memref.load %arg3[%c320] : memref<576xf32, #tpu.memory_space<smem>>
    %2144 = vector.broadcast %2143 : f32 to vector<8x16xf32>
    %2145 = arith.mulf %2110, %2144 : vector<8x16xf32>
    %2146 = arith.addf %2081, %2145 : vector<8x16xf32>
    %c356 = arith.constant 356 : index
    %2147 = memref.load %arg3[%c356] : memref<576xf32, #tpu.memory_space<smem>>
    %2148 = vector.broadcast %2147 : f32 to vector<8x16xf32>
    %2149 = arith.mulf %2110, %2148 : vector<8x16xf32>
    %2150 = arith.addf %2085, %2149 : vector<8x16xf32>
    %c392 = arith.constant 392 : index
    %2151 = memref.load %arg3[%c392] : memref<576xf32, #tpu.memory_space<smem>>
    %2152 = vector.broadcast %2151 : f32 to vector<8x16xf32>
    %2153 = arith.mulf %2110, %2152 : vector<8x16xf32>
    %2154 = arith.addf %2089, %2153 : vector<8x16xf32>
    %c428 = arith.constant 428 : index
    %2155 = memref.load %arg3[%c428] : memref<576xf32, #tpu.memory_space<smem>>
    %2156 = vector.broadcast %2155 : f32 to vector<8x16xf32>
    %2157 = arith.mulf %2110, %2156 : vector<8x16xf32>
    %2158 = arith.addf %2093, %2157 : vector<8x16xf32>
    %c464 = arith.constant 464 : index
    %2159 = memref.load %arg3[%c464] : memref<576xf32, #tpu.memory_space<smem>>
    %2160 = vector.broadcast %2159 : f32 to vector<8x16xf32>
    %2161 = arith.mulf %2110, %2160 : vector<8x16xf32>
    %2162 = arith.addf %2097, %2161 : vector<8x16xf32>
    %c500 = arith.constant 500 : index
    %2163 = memref.load %arg3[%c500] : memref<576xf32, #tpu.memory_space<smem>>
    %2164 = vector.broadcast %2163 : f32 to vector<8x16xf32>
    %2165 = arith.mulf %2110, %2164 : vector<8x16xf32>
    %2166 = arith.addf %2101, %2165 : vector<8x16xf32>
    %c536 = arith.constant 536 : index
    %2167 = memref.load %arg3[%c536] : memref<576xf32, #tpu.memory_space<smem>>
    %2168 = vector.broadcast %2167 : f32 to vector<8x16xf32>
    %2169 = arith.mulf %2110, %2168 : vector<8x16xf32>
    %2170 = arith.addf %2105, %2169 : vector<8x16xf32>
    %c572 = arith.constant 572 : index
    %2171 = memref.load %arg3[%c572] : memref<576xf32, #tpu.memory_space<smem>>
    %2172 = vector.broadcast %2171 : f32 to vector<8x16xf32>
    %2173 = arith.mulf %2110, %2172 : vector<8x16xf32>
    %2174 = arith.addf %2109, %2173 : vector<8x16xf32>
    %2175 = vector.extract_strided_slice %1784 {offsets = [2, 0], sizes = [8, 16], strides = [1, 1]} : vector<10x18xf32> to vector<8x16xf32>
    %c33 = arith.constant 33 : index
    %2176 = memref.load %arg3[%c33] : memref<576xf32, #tpu.memory_space<smem>>
    %2177 = vector.broadcast %2176 : f32 to vector<8x16xf32>
    %2178 = arith.mulf %2175, %2177 : vector<8x16xf32>
    %2179 = arith.addf %2114, %2178 : vector<8x16xf32>
    %c69 = arith.constant 69 : index
    %2180 = memref.load %arg3[%c69] : memref<576xf32, #tpu.memory_space<smem>>
    %2181 = vector.broadcast %2180 : f32 to vector<8x16xf32>
    %2182 = arith.mulf %2175, %2181 : vector<8x16xf32>
    %2183 = arith.addf %2118, %2182 : vector<8x16xf32>
    %c105 = arith.constant 105 : index
    %2184 = memref.load %arg3[%c105] : memref<576xf32, #tpu.memory_space<smem>>
    %2185 = vector.broadcast %2184 : f32 to vector<8x16xf32>
    %2186 = arith.mulf %2175, %2185 : vector<8x16xf32>
    %2187 = arith.addf %2122, %2186 : vector<8x16xf32>
    %c141 = arith.constant 141 : index
    %2188 = memref.load %arg3[%c141] : memref<576xf32, #tpu.memory_space<smem>>
    %2189 = vector.broadcast %2188 : f32 to vector<8x16xf32>
    %2190 = arith.mulf %2175, %2189 : vector<8x16xf32>
    %2191 = arith.addf %2126, %2190 : vector<8x16xf32>
    %c177 = arith.constant 177 : index
    %2192 = memref.load %arg3[%c177] : memref<576xf32, #tpu.memory_space<smem>>
    %2193 = vector.broadcast %2192 : f32 to vector<8x16xf32>
    %2194 = arith.mulf %2175, %2193 : vector<8x16xf32>
    %2195 = arith.addf %2130, %2194 : vector<8x16xf32>
    %c213 = arith.constant 213 : index
    %2196 = memref.load %arg3[%c213] : memref<576xf32, #tpu.memory_space<smem>>
    %2197 = vector.broadcast %2196 : f32 to vector<8x16xf32>
    %2198 = arith.mulf %2175, %2197 : vector<8x16xf32>
    %2199 = arith.addf %2134, %2198 : vector<8x16xf32>
    %c249 = arith.constant 249 : index
    %2200 = memref.load %arg3[%c249] : memref<576xf32, #tpu.memory_space<smem>>
    %2201 = vector.broadcast %2200 : f32 to vector<8x16xf32>
    %2202 = arith.mulf %2175, %2201 : vector<8x16xf32>
    %2203 = arith.addf %2138, %2202 : vector<8x16xf32>
    %c285 = arith.constant 285 : index
    %2204 = memref.load %arg3[%c285] : memref<576xf32, #tpu.memory_space<smem>>
    %2205 = vector.broadcast %2204 : f32 to vector<8x16xf32>
    %2206 = arith.mulf %2175, %2205 : vector<8x16xf32>
    %2207 = arith.addf %2142, %2206 : vector<8x16xf32>
    %c321 = arith.constant 321 : index
    %2208 = memref.load %arg3[%c321] : memref<576xf32, #tpu.memory_space<smem>>
    %2209 = vector.broadcast %2208 : f32 to vector<8x16xf32>
    %2210 = arith.mulf %2175, %2209 : vector<8x16xf32>
    %2211 = arith.addf %2146, %2210 : vector<8x16xf32>
    %c357 = arith.constant 357 : index
    %2212 = memref.load %arg3[%c357] : memref<576xf32, #tpu.memory_space<smem>>
    %2213 = vector.broadcast %2212 : f32 to vector<8x16xf32>
    %2214 = arith.mulf %2175, %2213 : vector<8x16xf32>
    %2215 = arith.addf %2150, %2214 : vector<8x16xf32>
    %c393 = arith.constant 393 : index
    %2216 = memref.load %arg3[%c393] : memref<576xf32, #tpu.memory_space<smem>>
    %2217 = vector.broadcast %2216 : f32 to vector<8x16xf32>
    %2218 = arith.mulf %2175, %2217 : vector<8x16xf32>
    %2219 = arith.addf %2154, %2218 : vector<8x16xf32>
    %c429 = arith.constant 429 : index
    %2220 = memref.load %arg3[%c429] : memref<576xf32, #tpu.memory_space<smem>>
    %2221 = vector.broadcast %2220 : f32 to vector<8x16xf32>
    %2222 = arith.mulf %2175, %2221 : vector<8x16xf32>
    %2223 = arith.addf %2158, %2222 : vector<8x16xf32>
    %c465 = arith.constant 465 : index
    %2224 = memref.load %arg3[%c465] : memref<576xf32, #tpu.memory_space<smem>>
    %2225 = vector.broadcast %2224 : f32 to vector<8x16xf32>
    %2226 = arith.mulf %2175, %2225 : vector<8x16xf32>
    %2227 = arith.addf %2162, %2226 : vector<8x16xf32>
    %c501 = arith.constant 501 : index
    %2228 = memref.load %arg3[%c501] : memref<576xf32, #tpu.memory_space<smem>>
    %2229 = vector.broadcast %2228 : f32 to vector<8x16xf32>
    %2230 = arith.mulf %2175, %2229 : vector<8x16xf32>
    %2231 = arith.addf %2166, %2230 : vector<8x16xf32>
    %c537 = arith.constant 537 : index
    %2232 = memref.load %arg3[%c537] : memref<576xf32, #tpu.memory_space<smem>>
    %2233 = vector.broadcast %2232 : f32 to vector<8x16xf32>
    %2234 = arith.mulf %2175, %2233 : vector<8x16xf32>
    %2235 = arith.addf %2170, %2234 : vector<8x16xf32>
    %c573 = arith.constant 573 : index
    %2236 = memref.load %arg3[%c573] : memref<576xf32, #tpu.memory_space<smem>>
    %2237 = vector.broadcast %2236 : f32 to vector<8x16xf32>
    %2238 = arith.mulf %2175, %2237 : vector<8x16xf32>
    %2239 = arith.addf %2174, %2238 : vector<8x16xf32>
    %2240 = vector.extract_strided_slice %1784 {offsets = [2, 1], sizes = [8, 16], strides = [1, 1]} : vector<10x18xf32> to vector<8x16xf32>
    %c34 = arith.constant 34 : index
    %2241 = memref.load %arg3[%c34] : memref<576xf32, #tpu.memory_space<smem>>
    %2242 = vector.broadcast %2241 : f32 to vector<8x16xf32>
    %2243 = arith.mulf %2240, %2242 : vector<8x16xf32>
    %2244 = arith.addf %2179, %2243 : vector<8x16xf32>
    %c70 = arith.constant 70 : index
    %2245 = memref.load %arg3[%c70] : memref<576xf32, #tpu.memory_space<smem>>
    %2246 = vector.broadcast %2245 : f32 to vector<8x16xf32>
    %2247 = arith.mulf %2240, %2246 : vector<8x16xf32>
    %2248 = arith.addf %2183, %2247 : vector<8x16xf32>
    %c106 = arith.constant 106 : index
    %2249 = memref.load %arg3[%c106] : memref<576xf32, #tpu.memory_space<smem>>
    %2250 = vector.broadcast %2249 : f32 to vector<8x16xf32>
    %2251 = arith.mulf %2240, %2250 : vector<8x16xf32>
    %2252 = arith.addf %2187, %2251 : vector<8x16xf32>
    %c142 = arith.constant 142 : index
    %2253 = memref.load %arg3[%c142] : memref<576xf32, #tpu.memory_space<smem>>
    %2254 = vector.broadcast %2253 : f32 to vector<8x16xf32>
    %2255 = arith.mulf %2240, %2254 : vector<8x16xf32>
    %2256 = arith.addf %2191, %2255 : vector<8x16xf32>
    %c178 = arith.constant 178 : index
    %2257 = memref.load %arg3[%c178] : memref<576xf32, #tpu.memory_space<smem>>
    %2258 = vector.broadcast %2257 : f32 to vector<8x16xf32>
    %2259 = arith.mulf %2240, %2258 : vector<8x16xf32>
    %2260 = arith.addf %2195, %2259 : vector<8x16xf32>
    %c214 = arith.constant 214 : index
    %2261 = memref.load %arg3[%c214] : memref<576xf32, #tpu.memory_space<smem>>
    %2262 = vector.broadcast %2261 : f32 to vector<8x16xf32>
    %2263 = arith.mulf %2240, %2262 : vector<8x16xf32>
    %2264 = arith.addf %2199, %2263 : vector<8x16xf32>
    %c250 = arith.constant 250 : index
    %2265 = memref.load %arg3[%c250] : memref<576xf32, #tpu.memory_space<smem>>
    %2266 = vector.broadcast %2265 : f32 to vector<8x16xf32>
    %2267 = arith.mulf %2240, %2266 : vector<8x16xf32>
    %2268 = arith.addf %2203, %2267 : vector<8x16xf32>
    %c286 = arith.constant 286 : index
    %2269 = memref.load %arg3[%c286] : memref<576xf32, #tpu.memory_space<smem>>
    %2270 = vector.broadcast %2269 : f32 to vector<8x16xf32>
    %2271 = arith.mulf %2240, %2270 : vector<8x16xf32>
    %2272 = arith.addf %2207, %2271 : vector<8x16xf32>
    %c322 = arith.constant 322 : index
    %2273 = memref.load %arg3[%c322] : memref<576xf32, #tpu.memory_space<smem>>
    %2274 = vector.broadcast %2273 : f32 to vector<8x16xf32>
    %2275 = arith.mulf %2240, %2274 : vector<8x16xf32>
    %2276 = arith.addf %2211, %2275 : vector<8x16xf32>
    %c358 = arith.constant 358 : index
    %2277 = memref.load %arg3[%c358] : memref<576xf32, #tpu.memory_space<smem>>
    %2278 = vector.broadcast %2277 : f32 to vector<8x16xf32>
    %2279 = arith.mulf %2240, %2278 : vector<8x16xf32>
    %2280 = arith.addf %2215, %2279 : vector<8x16xf32>
    %c394 = arith.constant 394 : index
    %2281 = memref.load %arg3[%c394] : memref<576xf32, #tpu.memory_space<smem>>
    %2282 = vector.broadcast %2281 : f32 to vector<8x16xf32>
    %2283 = arith.mulf %2240, %2282 : vector<8x16xf32>
    %2284 = arith.addf %2219, %2283 : vector<8x16xf32>
    %c430 = arith.constant 430 : index
    %2285 = memref.load %arg3[%c430] : memref<576xf32, #tpu.memory_space<smem>>
    %2286 = vector.broadcast %2285 : f32 to vector<8x16xf32>
    %2287 = arith.mulf %2240, %2286 : vector<8x16xf32>
    %2288 = arith.addf %2223, %2287 : vector<8x16xf32>
    %c466 = arith.constant 466 : index
    %2289 = memref.load %arg3[%c466] : memref<576xf32, #tpu.memory_space<smem>>
    %2290 = vector.broadcast %2289 : f32 to vector<8x16xf32>
    %2291 = arith.mulf %2240, %2290 : vector<8x16xf32>
    %2292 = arith.addf %2227, %2291 : vector<8x16xf32>
    %c502 = arith.constant 502 : index
    %2293 = memref.load %arg3[%c502] : memref<576xf32, #tpu.memory_space<smem>>
    %2294 = vector.broadcast %2293 : f32 to vector<8x16xf32>
    %2295 = arith.mulf %2240, %2294 : vector<8x16xf32>
    %2296 = arith.addf %2231, %2295 : vector<8x16xf32>
    %c538 = arith.constant 538 : index
    %2297 = memref.load %arg3[%c538] : memref<576xf32, #tpu.memory_space<smem>>
    %2298 = vector.broadcast %2297 : f32 to vector<8x16xf32>
    %2299 = arith.mulf %2240, %2298 : vector<8x16xf32>
    %2300 = arith.addf %2235, %2299 : vector<8x16xf32>
    %c574 = arith.constant 574 : index
    %2301 = memref.load %arg3[%c574] : memref<576xf32, #tpu.memory_space<smem>>
    %2302 = vector.broadcast %2301 : f32 to vector<8x16xf32>
    %2303 = arith.mulf %2240, %2302 : vector<8x16xf32>
    %2304 = arith.addf %2239, %2303 : vector<8x16xf32>
    %2305 = vector.extract_strided_slice %1784 {offsets = [2, 2], sizes = [8, 16], strides = [1, 1]} : vector<10x18xf32> to vector<8x16xf32>
    %c35 = arith.constant 35 : index
    %2306 = memref.load %arg3[%c35] : memref<576xf32, #tpu.memory_space<smem>>
    %2307 = vector.broadcast %2306 : f32 to vector<8x16xf32>
    %2308 = arith.mulf %2305, %2307 : vector<8x16xf32>
    %2309 = arith.addf %2244, %2308 : vector<8x16xf32>
    %c71 = arith.constant 71 : index
    %2310 = memref.load %arg3[%c71] : memref<576xf32, #tpu.memory_space<smem>>
    %2311 = vector.broadcast %2310 : f32 to vector<8x16xf32>
    %2312 = arith.mulf %2305, %2311 : vector<8x16xf32>
    %2313 = arith.addf %2248, %2312 : vector<8x16xf32>
    %c107 = arith.constant 107 : index
    %2314 = memref.load %arg3[%c107] : memref<576xf32, #tpu.memory_space<smem>>
    %2315 = vector.broadcast %2314 : f32 to vector<8x16xf32>
    %2316 = arith.mulf %2305, %2315 : vector<8x16xf32>
    %2317 = arith.addf %2252, %2316 : vector<8x16xf32>
    %c143 = arith.constant 143 : index
    %2318 = memref.load %arg3[%c143] : memref<576xf32, #tpu.memory_space<smem>>
    %2319 = vector.broadcast %2318 : f32 to vector<8x16xf32>
    %2320 = arith.mulf %2305, %2319 : vector<8x16xf32>
    %2321 = arith.addf %2256, %2320 : vector<8x16xf32>
    %c179 = arith.constant 179 : index
    %2322 = memref.load %arg3[%c179] : memref<576xf32, #tpu.memory_space<smem>>
    %2323 = vector.broadcast %2322 : f32 to vector<8x16xf32>
    %2324 = arith.mulf %2305, %2323 : vector<8x16xf32>
    %2325 = arith.addf %2260, %2324 : vector<8x16xf32>
    %c215 = arith.constant 215 : index
    %2326 = memref.load %arg3[%c215] : memref<576xf32, #tpu.memory_space<smem>>
    %2327 = vector.broadcast %2326 : f32 to vector<8x16xf32>
    %2328 = arith.mulf %2305, %2327 : vector<8x16xf32>
    %2329 = arith.addf %2264, %2328 : vector<8x16xf32>
    %c251 = arith.constant 251 : index
    %2330 = memref.load %arg3[%c251] : memref<576xf32, #tpu.memory_space<smem>>
    %2331 = vector.broadcast %2330 : f32 to vector<8x16xf32>
    %2332 = arith.mulf %2305, %2331 : vector<8x16xf32>
    %2333 = arith.addf %2268, %2332 : vector<8x16xf32>
    %c287 = arith.constant 287 : index
    %2334 = memref.load %arg3[%c287] : memref<576xf32, #tpu.memory_space<smem>>
    %2335 = vector.broadcast %2334 : f32 to vector<8x16xf32>
    %2336 = arith.mulf %2305, %2335 : vector<8x16xf32>
    %2337 = arith.addf %2272, %2336 : vector<8x16xf32>
    %c323 = arith.constant 323 : index
    %2338 = memref.load %arg3[%c323] : memref<576xf32, #tpu.memory_space<smem>>
    %2339 = vector.broadcast %2338 : f32 to vector<8x16xf32>
    %2340 = arith.mulf %2305, %2339 : vector<8x16xf32>
    %2341 = arith.addf %2276, %2340 : vector<8x16xf32>
    %c359 = arith.constant 359 : index
    %2342 = memref.load %arg3[%c359] : memref<576xf32, #tpu.memory_space<smem>>
    %2343 = vector.broadcast %2342 : f32 to vector<8x16xf32>
    %2344 = arith.mulf %2305, %2343 : vector<8x16xf32>
    %2345 = arith.addf %2280, %2344 : vector<8x16xf32>
    %c395 = arith.constant 395 : index
    %2346 = memref.load %arg3[%c395] : memref<576xf32, #tpu.memory_space<smem>>
    %2347 = vector.broadcast %2346 : f32 to vector<8x16xf32>
    %2348 = arith.mulf %2305, %2347 : vector<8x16xf32>
    %2349 = arith.addf %2284, %2348 : vector<8x16xf32>
    %c431 = arith.constant 431 : index
    %2350 = memref.load %arg3[%c431] : memref<576xf32, #tpu.memory_space<smem>>
    %2351 = vector.broadcast %2350 : f32 to vector<8x16xf32>
    %2352 = arith.mulf %2305, %2351 : vector<8x16xf32>
    %2353 = arith.addf %2288, %2352 : vector<8x16xf32>
    %c467 = arith.constant 467 : index
    %2354 = memref.load %arg3[%c467] : memref<576xf32, #tpu.memory_space<smem>>
    %2355 = vector.broadcast %2354 : f32 to vector<8x16xf32>
    %2356 = arith.mulf %2305, %2355 : vector<8x16xf32>
    %2357 = arith.addf %2292, %2356 : vector<8x16xf32>
    %c503 = arith.constant 503 : index
    %2358 = memref.load %arg3[%c503] : memref<576xf32, #tpu.memory_space<smem>>
    %2359 = vector.broadcast %2358 : f32 to vector<8x16xf32>
    %2360 = arith.mulf %2305, %2359 : vector<8x16xf32>
    %2361 = arith.addf %2296, %2360 : vector<8x16xf32>
    %c539 = arith.constant 539 : index
    %2362 = memref.load %arg3[%c539] : memref<576xf32, #tpu.memory_space<smem>>
    %2363 = vector.broadcast %2362 : f32 to vector<8x16xf32>
    %2364 = arith.mulf %2305, %2363 : vector<8x16xf32>
    %2365 = arith.addf %2300, %2364 : vector<8x16xf32>
    %c575 = arith.constant 575 : index
    %2366 = memref.load %arg3[%c575] : memref<576xf32, #tpu.memory_space<smem>>
    %2367 = vector.broadcast %2366 : f32 to vector<8x16xf32>
    %2368 = arith.mulf %2305, %2367 : vector<8x16xf32>
    %2369 = arith.addf %2304, %2368 : vector<8x16xf32>
    %c0_27 = arith.constant 0 : index
    %2370 = memref.load %arg4[%c0_27] : memref<16xf32, #tpu.memory_space<smem>>
    %2371 = vector.broadcast %2370 : f32 to vector<8x16xf32>
    %2372 = arith.addf %2309, %2371 : vector<8x16xf32>
    %cst_28 = arith.constant 0.000000e+00 : f32
    %2373 = vector.broadcast %cst_28 : f32 to vector<8x16xf32>
    %2374 = arith.cmpf oge, %2372, %2373 : vector<8x16xf32>
    %cst_29 = arith.constant 1.000000e-01 : f32
    %2375 = vector.broadcast %cst_29 : f32 to vector<8x16xf32>
    %2376 = arith.mulf %2375, %2372 : vector<8x16xf32>
    %2377 = arith.select %2374, %2372, %2376 : vector<8x16xi1>, vector<8x16xf32>
    %c1_30 = arith.constant 1 : index
    %2378 = memref.load %arg4[%c1_30] : memref<16xf32, #tpu.memory_space<smem>>
    %2379 = vector.broadcast %2378 : f32 to vector<8x16xf32>
    %2380 = arith.addf %2313, %2379 : vector<8x16xf32>
    %cst_31 = arith.constant 0.000000e+00 : f32
    %2381 = vector.broadcast %cst_31 : f32 to vector<8x16xf32>
    %2382 = arith.cmpf oge, %2380, %2381 : vector<8x16xf32>
    %cst_32 = arith.constant 1.000000e-01 : f32
    %2383 = vector.broadcast %cst_32 : f32 to vector<8x16xf32>
    %2384 = arith.mulf %2383, %2380 : vector<8x16xf32>
    %2385 = arith.select %2382, %2380, %2384 : vector<8x16xi1>, vector<8x16xf32>
    %c2_33 = arith.constant 2 : index
    %2386 = memref.load %arg4[%c2_33] : memref<16xf32, #tpu.memory_space<smem>>
    %2387 = vector.broadcast %2386 : f32 to vector<8x16xf32>
    %2388 = arith.addf %2317, %2387 : vector<8x16xf32>
    %cst_34 = arith.constant 0.000000e+00 : f32
    %2389 = vector.broadcast %cst_34 : f32 to vector<8x16xf32>
    %2390 = arith.cmpf oge, %2388, %2389 : vector<8x16xf32>
    %cst_35 = arith.constant 1.000000e-01 : f32
    %2391 = vector.broadcast %cst_35 : f32 to vector<8x16xf32>
    %2392 = arith.mulf %2391, %2388 : vector<8x16xf32>
    %2393 = arith.select %2390, %2388, %2392 : vector<8x16xi1>, vector<8x16xf32>
    %c3_36 = arith.constant 3 : index
    %2394 = memref.load %arg4[%c3_36] : memref<16xf32, #tpu.memory_space<smem>>
    %2395 = vector.broadcast %2394 : f32 to vector<8x16xf32>
    %2396 = arith.addf %2321, %2395 : vector<8x16xf32>
    %cst_37 = arith.constant 0.000000e+00 : f32
    %2397 = vector.broadcast %cst_37 : f32 to vector<8x16xf32>
    %2398 = arith.cmpf oge, %2396, %2397 : vector<8x16xf32>
    %cst_38 = arith.constant 1.000000e-01 : f32
    %2399 = vector.broadcast %cst_38 : f32 to vector<8x16xf32>
    %2400 = arith.mulf %2399, %2396 : vector<8x16xf32>
    %2401 = arith.select %2398, %2396, %2400 : vector<8x16xi1>, vector<8x16xf32>
    %c4_39 = arith.constant 4 : index
    %2402 = memref.load %arg4[%c4_39] : memref<16xf32, #tpu.memory_space<smem>>
    %2403 = vector.broadcast %2402 : f32 to vector<8x16xf32>
    %2404 = arith.addf %2325, %2403 : vector<8x16xf32>
    %cst_40 = arith.constant 0.000000e+00 : f32
    %2405 = vector.broadcast %cst_40 : f32 to vector<8x16xf32>
    %2406 = arith.cmpf oge, %2404, %2405 : vector<8x16xf32>
    %cst_41 = arith.constant 1.000000e-01 : f32
    %2407 = vector.broadcast %cst_41 : f32 to vector<8x16xf32>
    %2408 = arith.mulf %2407, %2404 : vector<8x16xf32>
    %2409 = arith.select %2406, %2404, %2408 : vector<8x16xi1>, vector<8x16xf32>
    %c5_42 = arith.constant 5 : index
    %2410 = memref.load %arg4[%c5_42] : memref<16xf32, #tpu.memory_space<smem>>
    %2411 = vector.broadcast %2410 : f32 to vector<8x16xf32>
    %2412 = arith.addf %2329, %2411 : vector<8x16xf32>
    %cst_43 = arith.constant 0.000000e+00 : f32
    %2413 = vector.broadcast %cst_43 : f32 to vector<8x16xf32>
    %2414 = arith.cmpf oge, %2412, %2413 : vector<8x16xf32>
    %cst_44 = arith.constant 1.000000e-01 : f32
    %2415 = vector.broadcast %cst_44 : f32 to vector<8x16xf32>
    %2416 = arith.mulf %2415, %2412 : vector<8x16xf32>
    %2417 = arith.select %2414, %2412, %2416 : vector<8x16xi1>, vector<8x16xf32>
    %c6_45 = arith.constant 6 : index
    %2418 = memref.load %arg4[%c6_45] : memref<16xf32, #tpu.memory_space<smem>>
    %2419 = vector.broadcast %2418 : f32 to vector<8x16xf32>
    %2420 = arith.addf %2333, %2419 : vector<8x16xf32>
    %cst_46 = arith.constant 0.000000e+00 : f32
    %2421 = vector.broadcast %cst_46 : f32 to vector<8x16xf32>
    %2422 = arith.cmpf oge, %2420, %2421 : vector<8x16xf32>
    %cst_47 = arith.constant 1.000000e-01 : f32
    %2423 = vector.broadcast %cst_47 : f32 to vector<8x16xf32>
    %2424 = arith.mulf %2423, %2420 : vector<8x16xf32>
    %2425 = arith.select %2422, %2420, %2424 : vector<8x16xi1>, vector<8x16xf32>
    %c7_48 = arith.constant 7 : index
    %2426 = memref.load %arg4[%c7_48] : memref<16xf32, #tpu.memory_space<smem>>
    %2427 = vector.broadcast %2426 : f32 to vector<8x16xf32>
    %2428 = arith.addf %2337, %2427 : vector<8x16xf32>
    %cst_49 = arith.constant 0.000000e+00 : f32
    %2429 = vector.broadcast %cst_49 : f32 to vector<8x16xf32>
    %2430 = arith.cmpf oge, %2428, %2429 : vector<8x16xf32>
    %cst_50 = arith.constant 1.000000e-01 : f32
    %2431 = vector.broadcast %cst_50 : f32 to vector<8x16xf32>
    %2432 = arith.mulf %2431, %2428 : vector<8x16xf32>
    %2433 = arith.select %2430, %2428, %2432 : vector<8x16xi1>, vector<8x16xf32>
    %c8_51 = arith.constant 8 : index
    %2434 = memref.load %arg4[%c8_51] : memref<16xf32, #tpu.memory_space<smem>>
    %2435 = vector.broadcast %2434 : f32 to vector<8x16xf32>
    %2436 = arith.addf %2341, %2435 : vector<8x16xf32>
    %cst_52 = arith.constant 0.000000e+00 : f32
    %2437 = vector.broadcast %cst_52 : f32 to vector<8x16xf32>
    %2438 = arith.cmpf oge, %2436, %2437 : vector<8x16xf32>
    %cst_53 = arith.constant 1.000000e-01 : f32
    %2439 = vector.broadcast %cst_53 : f32 to vector<8x16xf32>
    %2440 = arith.mulf %2439, %2436 : vector<8x16xf32>
    %2441 = arith.select %2438, %2436, %2440 : vector<8x16xi1>, vector<8x16xf32>
    %c9_54 = arith.constant 9 : index
    %2442 = memref.load %arg4[%c9_54] : memref<16xf32, #tpu.memory_space<smem>>
    %2443 = vector.broadcast %2442 : f32 to vector<8x16xf32>
    %2444 = arith.addf %2345, %2443 : vector<8x16xf32>
    %cst_55 = arith.constant 0.000000e+00 : f32
    %2445 = vector.broadcast %cst_55 : f32 to vector<8x16xf32>
    %2446 = arith.cmpf oge, %2444, %2445 : vector<8x16xf32>
    %cst_56 = arith.constant 1.000000e-01 : f32
    %2447 = vector.broadcast %cst_56 : f32 to vector<8x16xf32>
    %2448 = arith.mulf %2447, %2444 : vector<8x16xf32>
    %2449 = arith.select %2446, %2444, %2448 : vector<8x16xi1>, vector<8x16xf32>
    %c10_57 = arith.constant 10 : index
    %2450 = memref.load %arg4[%c10_57] : memref<16xf32, #tpu.memory_space<smem>>
    %2451 = vector.broadcast %2450 : f32 to vector<8x16xf32>
    %2452 = arith.addf %2349, %2451 : vector<8x16xf32>
    %cst_58 = arith.constant 0.000000e+00 : f32
    %2453 = vector.broadcast %cst_58 : f32 to vector<8x16xf32>
    %2454 = arith.cmpf oge, %2452, %2453 : vector<8x16xf32>
    %cst_59 = arith.constant 1.000000e-01 : f32
    %2455 = vector.broadcast %cst_59 : f32 to vector<8x16xf32>
    %2456 = arith.mulf %2455, %2452 : vector<8x16xf32>
    %2457 = arith.select %2454, %2452, %2456 : vector<8x16xi1>, vector<8x16xf32>
    %c11_60 = arith.constant 11 : index
    %2458 = memref.load %arg4[%c11_60] : memref<16xf32, #tpu.memory_space<smem>>
    %2459 = vector.broadcast %2458 : f32 to vector<8x16xf32>
    %2460 = arith.addf %2353, %2459 : vector<8x16xf32>
    %cst_61 = arith.constant 0.000000e+00 : f32
    %2461 = vector.broadcast %cst_61 : f32 to vector<8x16xf32>
    %2462 = arith.cmpf oge, %2460, %2461 : vector<8x16xf32>
    %cst_62 = arith.constant 1.000000e-01 : f32
    %2463 = vector.broadcast %cst_62 : f32 to vector<8x16xf32>
    %2464 = arith.mulf %2463, %2460 : vector<8x16xf32>
    %2465 = arith.select %2462, %2460, %2464 : vector<8x16xi1>, vector<8x16xf32>
    %c12_63 = arith.constant 12 : index
    %2466 = memref.load %arg4[%c12_63] : memref<16xf32, #tpu.memory_space<smem>>
    %2467 = vector.broadcast %2466 : f32 to vector<8x16xf32>
    %2468 = arith.addf %2357, %2467 : vector<8x16xf32>
    %cst_64 = arith.constant 0.000000e+00 : f32
    %2469 = vector.broadcast %cst_64 : f32 to vector<8x16xf32>
    %2470 = arith.cmpf oge, %2468, %2469 : vector<8x16xf32>
    %cst_65 = arith.constant 1.000000e-01 : f32
    %2471 = vector.broadcast %cst_65 : f32 to vector<8x16xf32>
    %2472 = arith.mulf %2471, %2468 : vector<8x16xf32>
    %2473 = arith.select %2470, %2468, %2472 : vector<8x16xi1>, vector<8x16xf32>
    %c13_66 = arith.constant 13 : index
    %2474 = memref.load %arg4[%c13_66] : memref<16xf32, #tpu.memory_space<smem>>
    %2475 = vector.broadcast %2474 : f32 to vector<8x16xf32>
    %2476 = arith.addf %2361, %2475 : vector<8x16xf32>
    %cst_67 = arith.constant 0.000000e+00 : f32
    %2477 = vector.broadcast %cst_67 : f32 to vector<8x16xf32>
    %2478 = arith.cmpf oge, %2476, %2477 : vector<8x16xf32>
    %cst_68 = arith.constant 1.000000e-01 : f32
    %2479 = vector.broadcast %cst_68 : f32 to vector<8x16xf32>
    %2480 = arith.mulf %2479, %2476 : vector<8x16xf32>
    %2481 = arith.select %2478, %2476, %2480 : vector<8x16xi1>, vector<8x16xf32>
    %c14_69 = arith.constant 14 : index
    %2482 = memref.load %arg4[%c14_69] : memref<16xf32, #tpu.memory_space<smem>>
    %2483 = vector.broadcast %2482 : f32 to vector<8x16xf32>
    %2484 = arith.addf %2365, %2483 : vector<8x16xf32>
    %cst_70 = arith.constant 0.000000e+00 : f32
    %2485 = vector.broadcast %cst_70 : f32 to vector<8x16xf32>
    %2486 = arith.cmpf oge, %2484, %2485 : vector<8x16xf32>
    %cst_71 = arith.constant 1.000000e-01 : f32
    %2487 = vector.broadcast %cst_71 : f32 to vector<8x16xf32>
    %2488 = arith.mulf %2487, %2484 : vector<8x16xf32>
    %2489 = arith.select %2486, %2484, %2488 : vector<8x16xi1>, vector<8x16xf32>
    %c15_72 = arith.constant 15 : index
    %2490 = memref.load %arg4[%c15_72] : memref<16xf32, #tpu.memory_space<smem>>
    %2491 = vector.broadcast %2490 : f32 to vector<8x16xf32>
    %2492 = arith.addf %2369, %2491 : vector<8x16xf32>
    %cst_73 = arith.constant 0.000000e+00 : f32
    %2493 = vector.broadcast %cst_73 : f32 to vector<8x16xf32>
    %2494 = arith.cmpf oge, %2492, %2493 : vector<8x16xf32>
    %cst_74 = arith.constant 1.000000e-01 : f32
    %2495 = vector.broadcast %cst_74 : f32 to vector<8x16xf32>
    %2496 = arith.mulf %2495, %2492 : vector<8x16xf32>
    %2497 = arith.select %2494, %2492, %2496 : vector<8x16xi1>, vector<8x16xf32>
    %2498 = tpu.iota {dimensions = array<i32: 1>} : vector<16x32xi32>
    %2499 = tpu.iota {dimensions = array<i32: 0>} : vector<16x32xi32>
    %c2_i32 = arith.constant 2 : i32
    %2500 = vector.broadcast %c2_i32 : i32 to vector<16x32xi32>
    %2501 = arith.muli %2500, %2499 : vector<16x32xi32>
    %2502 = arith.cmpi eq, %2498, %2501 : vector<16x32xi32>
    %2503 = arith.extui %2502 : vector<16x32xi1> to vector<16x32xi32>
    %2504 = arith.sitofp %2503 : vector<16x32xi32> to vector<16x32xf32>
    %c2_i32_75 = arith.constant 2 : i32
    %2505 = vector.broadcast %c2_i32_75 : i32 to vector<16x32xi32>
    %2506 = arith.muli %2505, %2499 : vector<16x32xi32>
    %c1_i32 = arith.constant 1 : i32
    %2507 = vector.broadcast %c1_i32 : i32 to vector<16x32xi32>
    %2508 = arith.addi %2506, %2507 : vector<16x32xi32>
    %2509 = arith.cmpi eq, %2498, %2508 : vector<16x32xi32>
    %2510 = arith.extui %2509 : vector<16x32xi1> to vector<16x32xi32>
    %2511 = arith.sitofp %2510 : vector<16x32xi32> to vector<16x32xf32>
    %2512 = tpu.iota {dimensions = array<i32: 0>} : vector<16x8xi32>
    %2513 = tpu.iota {dimensions = array<i32: 1>} : vector<16x8xi32>
    %c2_i32_76 = arith.constant 2 : i32
    %2514 = vector.broadcast %c2_i32_76 : i32 to vector<16x8xi32>
    %2515 = arith.muli %2514, %2513 : vector<16x8xi32>
    %2516 = arith.cmpi eq, %2512, %2515 : vector<16x8xi32>
    %2517 = arith.extui %2516 : vector<16x8xi1> to vector<16x8xi32>
    %2518 = arith.sitofp %2517 : vector<16x8xi32> to vector<16x8xf32>
    %c2_i32_77 = arith.constant 2 : i32
    %2519 = vector.broadcast %c2_i32_77 : i32 to vector<16x8xi32>
    %2520 = arith.muli %2519, %2513 : vector<16x8xi32>
    %c1_i32_78 = arith.constant 1 : i32
    %2521 = vector.broadcast %c1_i32_78 : i32 to vector<16x8xi32>
    %2522 = arith.addi %2520, %2521 : vector<16x8xi32>
    %2523 = arith.cmpi eq, %2512, %2522 : vector<16x8xi32>
    %2524 = arith.extui %2523 : vector<16x8xi1> to vector<16x8xi32>
    %2525 = arith.sitofp %2524 : vector<16x8xi32> to vector<16x8xf32>
    %cst_79 = arith.constant dense<0.000000e+00> : vector<8x32xf32>
    %2526 = tpu.matmul %2377, %2504, %cst_79 {dimension_numbers = #tpu.dot_dimension_numbers<[1], [0], [0], [1], [0, 0, 1, 1], [], []>} : vector<8x16xf32>, vector<16x32xf32>, vector<8x32xf32> -> vector<8x32xf32>
    %cst_80 = arith.constant dense<0.000000e+00> : vector<8x32xf32>
    %2527 = tpu.matmul %2385, %2511, %cst_80 {dimension_numbers = #tpu.dot_dimension_numbers<[1], [0], [0], [1], [0, 0, 1, 1], [], []>} : vector<8x16xf32>, vector<16x32xf32>, vector<8x32xf32> -> vector<8x32xf32>
    %2528 = arith.addf %2526, %2527 : vector<8x32xf32>
    %cst_81 = arith.constant dense<0.000000e+00> : vector<8x32xf32>
    %2529 = tpu.matmul %2393, %2504, %cst_81 {dimension_numbers = #tpu.dot_dimension_numbers<[1], [0], [0], [1], [0, 0, 1, 1], [], []>} : vector<8x16xf32>, vector<16x32xf32>, vector<8x32xf32> -> vector<8x32xf32>
    %cst_82 = arith.constant dense<0.000000e+00> : vector<8x32xf32>
    %2530 = tpu.matmul %2401, %2511, %cst_82 {dimension_numbers = #tpu.dot_dimension_numbers<[1], [0], [0], [1], [0, 0, 1, 1], [], []>} : vector<8x16xf32>, vector<16x32xf32>, vector<8x32xf32> -> vector<8x32xf32>
    %2531 = arith.addf %2529, %2530 : vector<8x32xf32>
    %cst_83 = arith.constant dense<0.000000e+00> : vector<16x32xf32>
    %2532 = tpu.matmul %2518, %2528, %cst_83 {dimension_numbers = #tpu.dot_dimension_numbers<[1], [0], [0], [1], [0, 0, 1, 1], [], []>} : vector<16x8xf32>, vector<8x32xf32>, vector<16x32xf32> -> vector<16x32xf32>
    %cst_84 = arith.constant dense<0.000000e+00> : vector<16x32xf32>
    %2533 = tpu.matmul %2525, %2531, %cst_84 {dimension_numbers = #tpu.dot_dimension_numbers<[1], [0], [0], [1], [0, 0, 1, 1], [], []>} : vector<16x8xf32>, vector<8x32xf32>, vector<16x32xf32> -> vector<16x32xf32>
    %2534 = arith.addf %2532, %2533 : vector<16x32xf32>
    %c0_85 = arith.constant 0 : index
    %c0_86 = arith.constant 0 : index
    %c0_87 = arith.constant 0 : index
    %c0_88 = arith.constant 0 : index
    %2535 = vector.load %arg5[%c0_85, %c0_86, %c0_87, %c0_88] : memref<1x4x16x32xf32, #tpu.memory_space<vmem>>, vector<1x1x16x32xf32>
    %2536 = vector.shape_cast %2535 : vector<1x1x16x32xf32> to vector<16x32xf32>
    %2537 = vector.shape_cast %2534 : vector<16x32xf32> to vector<1x1x16x32xf32>
    tpu.vector_store %arg5[%c0_85, %c0_86, %c0_87, %c0_88], %2537 {strides = array<i32>} : memref<1x4x16x32xf32, #tpu.memory_space<vmem>>, vector<1x1x16x32xf32>,
    %cst_89 = arith.constant dense<0.000000e+00> : vector<8x32xf32>
    %2538 = tpu.matmul %2409, %2504, %cst_89 {dimension_numbers = #tpu.dot_dimension_numbers<[1], [0], [0], [1], [0, 0, 1, 1], [], []>} : vector<8x16xf32>, vector<16x32xf32>, vector<8x32xf32> -> vector<8x32xf32>
    %cst_90 = arith.constant dense<0.000000e+00> : vector<8x32xf32>
    %2539 = tpu.matmul %2417, %2511, %cst_90 {dimension_numbers = #tpu.dot_dimension_numbers<[1], [0], [0], [1], [0, 0, 1, 1], [], []>} : vector<8x16xf32>, vector<16x32xf32>, vector<8x32xf32> -> vector<8x32xf32>
    %2540 = arith.addf %2538, %2539 : vector<8x32xf32>
    %cst_91 = arith.constant dense<0.000000e+00> : vector<8x32xf32>
    %2541 = tpu.matmul %2425, %2504, %cst_91 {dimension_numbers = #tpu.dot_dimension_numbers<[1], [0], [0], [1], [0, 0, 1, 1], [], []>} : vector<8x16xf32>, vector<16x32xf32>, vector<8x32xf32> -> vector<8x32xf32>
    %cst_92 = arith.constant dense<0.000000e+00> : vector<8x32xf32>
    %2542 = tpu.matmul %2433, %2511, %cst_92 {dimension_numbers = #tpu.dot_dimension_numbers<[1], [0], [0], [1], [0, 0, 1, 1], [], []>} : vector<8x16xf32>, vector<16x32xf32>, vector<8x32xf32> -> vector<8x32xf32>
    %2543 = arith.addf %2541, %2542 : vector<8x32xf32>
    %cst_93 = arith.constant dense<0.000000e+00> : vector<16x32xf32>
    %2544 = tpu.matmul %2518, %2540, %cst_93 {dimension_numbers = #tpu.dot_dimension_numbers<[1], [0], [0], [1], [0, 0, 1, 1], [], []>} : vector<16x8xf32>, vector<8x32xf32>, vector<16x32xf32> -> vector<16x32xf32>
    %cst_94 = arith.constant dense<0.000000e+00> : vector<16x32xf32>
    %2545 = tpu.matmul %2525, %2543, %cst_94 {dimension_numbers = #tpu.dot_dimension_numbers<[1], [0], [0], [1], [0, 0, 1, 1], [], []>} : vector<16x8xf32>, vector<8x32xf32>, vector<16x32xf32> -> vector<16x32xf32>
    %2546 = arith.addf %2544, %2545 : vector<16x32xf32>
    %c0_95 = arith.constant 0 : index
    %c1_96 = arith.constant 1 : index
    %c0_97 = arith.constant 0 : index
    %c0_98 = arith.constant 0 : index
    %2547 = vector.load %arg5[%c0_95, %c1_96, %c0_97, %c0_98] : memref<1x4x16x32xf32, #tpu.memory_space<vmem>>, vector<1x1x16x32xf32>
    %2548 = vector.shape_cast %2547 : vector<1x1x16x32xf32> to vector<16x32xf32>
    %2549 = vector.shape_cast %2546 : vector<16x32xf32> to vector<1x1x16x32xf32>
    tpu.vector_store %arg5[%c0_95, %c1_96, %c0_97, %c0_98], %2549 {strides = array<i32>} : memref<1x4x16x32xf32, #tpu.memory_space<vmem>>, vector<1x1x16x32xf32>,
    %cst_99 = arith.constant dense<0.000000e+00> : vector<8x32xf32>
    %2550 = tpu.matmul %2441, %2504, %cst_99 {dimension_numbers = #tpu.dot_dimension_numbers<[1], [0], [0], [1], [0, 0, 1, 1], [], []>} : vector<8x16xf32>, vector<16x32xf32>, vector<8x32xf32> -> vector<8x32xf32>
    %cst_100 = arith.constant dense<0.000000e+00> : vector<8x32xf32>
    %2551 = tpu.matmul %2449, %2511, %cst_100 {dimension_numbers = #tpu.dot_dimension_numbers<[1], [0], [0], [1], [0, 0, 1, 1], [], []>} : vector<8x16xf32>, vector<16x32xf32>, vector<8x32xf32> -> vector<8x32xf32>
    %2552 = arith.addf %2550, %2551 : vector<8x32xf32>
    %cst_101 = arith.constant dense<0.000000e+00> : vector<8x32xf32>
    %2553 = tpu.matmul %2457, %2504, %cst_101 {dimension_numbers = #tpu.dot_dimension_numbers<[1], [0], [0], [1], [0, 0, 1, 1], [], []>} : vector<8x16xf32>, vector<16x32xf32>, vector<8x32xf32> -> vector<8x32xf32>
    %cst_102 = arith.constant dense<0.000000e+00> : vector<8x32xf32>
    %2554 = tpu.matmul %2465, %2511, %cst_102 {dimension_numbers = #tpu.dot_dimension_numbers<[1], [0], [0], [1], [0, 0, 1, 1], [], []>} : vector<8x16xf32>, vector<16x32xf32>, vector<8x32xf32> -> vector<8x32xf32>
    %2555 = arith.addf %2553, %2554 : vector<8x32xf32>
    %cst_103 = arith.constant dense<0.000000e+00> : vector<16x32xf32>
    %2556 = tpu.matmul %2518, %2552, %cst_103 {dimension_numbers = #tpu.dot_dimension_numbers<[1], [0], [0], [1], [0, 0, 1, 1], [], []>} : vector<16x8xf32>, vector<8x32xf32>, vector<16x32xf32> -> vector<16x32xf32>
    %cst_104 = arith.constant dense<0.000000e+00> : vector<16x32xf32>
    %2557 = tpu.matmul %2525, %2555, %cst_104 {dimension_numbers = #tpu.dot_dimension_numbers<[1], [0], [0], [1], [0, 0, 1, 1], [], []>} : vector<16x8xf32>, vector<8x32xf32>, vector<16x32xf32> -> vector<16x32xf32>
    %2558 = arith.addf %2556, %2557 : vector<16x32xf32>
    %c0_105 = arith.constant 0 : index
    %c2_106 = arith.constant 2 : index
    %c0_107 = arith.constant 0 : index
    %c0_108 = arith.constant 0 : index
    %2559 = vector.load %arg5[%c0_105, %c2_106, %c0_107, %c0_108] : memref<1x4x16x32xf32, #tpu.memory_space<vmem>>, vector<1x1x16x32xf32>
    %2560 = vector.shape_cast %2559 : vector<1x1x16x32xf32> to vector<16x32xf32>
    %2561 = vector.shape_cast %2558 : vector<16x32xf32> to vector<1x1x16x32xf32>
    tpu.vector_store %arg5[%c0_105, %c2_106, %c0_107, %c0_108], %2561 {strides = array<i32>} : memref<1x4x16x32xf32, #tpu.memory_space<vmem>>, vector<1x1x16x32xf32>,
    %cst_109 = arith.constant dense<0.000000e+00> : vector<8x32xf32>
    %2562 = tpu.matmul %2473, %2504, %cst_109 {dimension_numbers = #tpu.dot_dimension_numbers<[1], [0], [0], [1], [0, 0, 1, 1], [], []>} : vector<8x16xf32>, vector<16x32xf32>, vector<8x32xf32> -> vector<8x32xf32>
    %cst_110 = arith.constant dense<0.000000e+00> : vector<8x32xf32>
    %2563 = tpu.matmul %2481, %2511, %cst_110 {dimension_numbers = #tpu.dot_dimension_numbers<[1], [0], [0], [1], [0, 0, 1, 1], [], []>} : vector<8x16xf32>, vector<16x32xf32>, vector<8x32xf32> -> vector<8x32xf32>
    %2564 = arith.addf %2562, %2563 : vector<8x32xf32>
    %cst_111 = arith.constant dense<0.000000e+00> : vector<8x32xf32>
    %2565 = tpu.matmul %2489, %2504, %cst_111 {dimension_numbers = #tpu.dot_dimension_numbers<[1], [0], [0], [1], [0, 0, 1, 1], [], []>} : vector<8x16xf32>, vector<16x32xf32>, vector<8x32xf32> -> vector<8x32xf32>
    %cst_112 = arith.constant dense<0.000000e+00> : vector<8x32xf32>
    %2566 = tpu.matmul %2497, %2511, %cst_112 {dimension_numbers = #tpu.dot_dimension_numbers<[1], [0], [0], [1], [0, 0, 1, 1], [], []>} : vector<8x16xf32>, vector<16x32xf32>, vector<8x32xf32> -> vector<8x32xf32>
    %2567 = arith.addf %2565, %2566 : vector<8x32xf32>
    %cst_113 = arith.constant dense<0.000000e+00> : vector<16x32xf32>
    %2568 = tpu.matmul %2518, %2564, %cst_113 {dimension_numbers = #tpu.dot_dimension_numbers<[1], [0], [0], [1], [0, 0, 1, 1], [], []>} : vector<16x8xf32>, vector<8x32xf32>, vector<16x32xf32> -> vector<16x32xf32>
    %cst_114 = arith.constant dense<0.000000e+00> : vector<16x32xf32>
    %2569 = tpu.matmul %2525, %2567, %cst_114 {dimension_numbers = #tpu.dot_dimension_numbers<[1], [0], [0], [1], [0, 0, 1, 1], [], []>} : vector<16x8xf32>, vector<8x32xf32>, vector<16x32xf32> -> vector<16x32xf32>
    %2570 = arith.addf %2568, %2569 : vector<16x32xf32>
    %c0_115 = arith.constant 0 : index
    %c3_116 = arith.constant 3 : index
    %c0_117 = arith.constant 0 : index
    %c0_118 = arith.constant 0 : index
    %2571 = vector.load %arg5[%c0_115, %c3_116, %c0_117, %c0_118] : memref<1x4x16x32xf32, #tpu.memory_space<vmem>>, vector<1x1x16x32xf32>
    %2572 = vector.shape_cast %2571 : vector<1x1x16x32xf32> to vector<16x32xf32>
    %2573 = vector.shape_cast %2570 : vector<16x32xf32> to vector<1x1x16x32xf32>
    tpu.vector_store %arg5[%c0_115, %c3_116, %c0_117, %c0_118], %2573 {strides = array<i32>} : memref<1x4x16x32xf32, #tpu.memory_space<vmem>>, vector<1x1x16x32xf32>,
    return
  }
  func.func @transform_0(%arg0: i32, %arg1: i32) -> (i32, i32, i32, i32) {
    %c0_i32 = arith.constant 0 : i32
    %c0_i32_0 = arith.constant 0 : i32
    %c0_i32_1 = arith.constant 0 : i32
    %c0_i32_2 = arith.constant 0 : i32
    return %arg0, %c0_i32, %c0_i32_0, %c0_i32_1 : i32, i32, i32, i32
  }
  func.func @transform_1(%arg0: i32, %arg1: i32) -> i32 {
    %c0_i32 = arith.constant 0 : i32
    %c0_i32_0 = arith.constant 0 : i32
    return %c0_i32 : i32
  }
  func.func @transform_2(%arg0: i32, %arg1: i32) -> i32 {
    %c0_i32 = arith.constant 0 : i32
    %c0_i32_0 = arith.constant 0 : i32
    return %c0_i32 : i32
  }
  func.func @transform_3(%arg0: i32, %arg1: i32) -> (i32, i32, i32, i32) {
    %c0_i32 = arith.constant 0 : i32
    %c0_i32_0 = arith.constant 0 : i32
    %c0_i32_1 = arith.constant 0 : i32
    return %arg0, %c0_i32, %arg1, %c0_i32_0 : i32, i32, i32, i32
  }
}

</mosaic_0001>

<llo_original>
// kernel: tpu_custom_call.1
$region0: #{tpu_custom_call.1}
  #allocation0 [shape = 'u32[]', space=smem, size = 0x4, offset = 0x4, fixed_abs, tag = 'smem constant byte address 0x4 - core index']
  #allocation1 [shape = 'u32[144,128]{1,0:T(1,128)}', space=vmem, size = 0x12000, scoped, tag = 'internal scratch']
  #allocation8 [shape = 's32[]', space=sflag, size = 0x4, offset = 0, fixed_abs, tag = 'sflag constant byte address 0x0 - dummy sync flag']
  %s0 = inlined_call_operand.vmem [shape: f32[2,4,18,18], index: 0, kind: input, shape index: {}]
  %s1 = inlined_call_operand.vmem [shape: f32[576], index: 1, kind: input, shape index: {}]
  %s2 = inlined_call_operand.vmem [shape: f32[16], index: 2, kind: input, shape index: {}]
  %s3 = inlined_call_operand.hbm [shape: f32[2,4,32,32], index: 3, kind: output, shape index: {}]
  %s4 = sld [smem:[#allocation0]]
  $region53: #{tpu_custom_call.1} parent=0
    _
  %s6 = ssub.s32 1, %s4
  %s7 = scalar_select 0, %s6, %s4
  $region1: #{tpu_custom_call.1} parent=0
    #allocation2 [shape = 'u8[2560]{0}', space=smem, size = 0xa00, scoped, tag = 'input window, operand 1, single buffered']
    #allocation3 [shape = 's32[2]{0}', space=sflag, size = 0x8, scoped, tag = 'scoped memory for tpu_custom_call.1']
    #allocation4 [shape = 's32[2]{0}', space=sflag, size = 0x8, scoped, tag = 'scoped memory for tpu_custom_call.1']
    #allocation5 [shape = 'u8[512]{0}', space=smem, size = 0x200, scoped, tag = 'input window, operand 2, single buffered']
    #allocation6 [shape = 's32[1]{0}', space=sflag, size = 0x4, scoped, tag = 'scoped memory for tpu_custom_call.1']
    #allocation7 [shape = 'u8[65536]{0}', space=vmem, size = 0x10000, scoped, tag = 'output window, operand 0']
    %8 = vsyncpa [#allocation4], 0
    %9 = vsyncpa [#allocation6], 0
    %10 = vsyncpa [#allocation3], 0
    %s11 = scalar_lea.sflag [#allocation3], 1
    %12 = vsyncpa %s11, 0
    loop: start=0, step=1, limit=6
    $region2: #{tpu_custom_call.1} parent=1 // loop_pre_header
      _
    $region3: #{tpu_custom_call.1} parent=1 // loop_header
      %s14 = sphi 0, %s18
      %p15 = scmp.ge.s32.totalorder %s14, 6
      %s21 = sphi 0, %s33
      %s22 = sphi 0, %s29
      %s23 = sphi 0, %s21
      %s24 = sphi 0, %s22
      %s25 = sphi 0, %s23
      %s26 = sphi 0, %s24
      %s36 = sphi 0, %s38
      %s39 = sphi 0, %s36
      %s40 = sphi 0, %s39
      %s56 = sphi 0, %s40
      %s60 = sphi 0, %s60
      %s62 = sphi 0, %s60
      %s63 = sphi 0, %s62
      %s77 = sphi 0, %s63
      %s81 = sphi 0, %s81
      %s83 = sphi 0, %s81
      %s84 = sphi 0, %s83
      %s98 = sphi 0, %s84
      %s106 = sphi 0, %s108
      %s109 = sphi 0, %s106
      %s110 = sphi 0, %s109
      %s126 = sphi 0, %s110
    $region4: #{tpu_custom_call.1} parent=1 // loop_header_branch
      %17 = sbr.rel (%p15) target = $region8
    $region5: #{tpu_custom_call.1} parent=1 // loop_body
      %s19 = ssub.s32 %s14, 1
      %s20 = ssub.s32 %s14, 2
      %s27 = sadd.s32 1, %s22
      %p28 = scmp.ge.s32.totalorder %s27, 2
      %s29 = scalar_select %p28, 0, %s27
      %s30 = sadd.s32 1, %s21
      %s31 = scalar_select %p28, %s30, %s21
      %p32 = scmp.ge.s32.totalorder %s31, 2
      %s33 = scalar_select %p32, 0, %s31
      %s34 = ssub.s32 %s21, %s33
      %p35 = scmp.eq.s32.totalorder %s34, 0
      %s37 = sadd.s32 %s36, 1
      %s38 = scalar_select %p35, %s36, %s37
      %p41 = pneg %p35
      %p42 = scmp.eq.s32.totalorder %s14, 3
      %p43 = por %p41, %p42
      %p44 = scmp.ne.s32.totalorder %s36, %s39
      %p45 = scmp.eq.s32.totalorder %s14, 0
      %p46 = por %p44, %p45
      %p47 = scmp.ne.s32.totalorder %s36, %s39
      %p48 = scmp.eq.s32.totalorder %s19, 3
      %p49 = por %p47, %p48
      %p50 = scmp.ne.s32.totalorder %s39, %s40
      %p51 = scmp.eq.s32.totalorder %s19, 0
      %p52 = por %p50, %p51
      %p53 = scmp.ne.s32.totalorder %s39, %s40
      %p54 = scmp.eq.s32.totalorder %s20, 3
      %p55 = por %p53, %p54
      %p57 = scmp.ne.s32.totalorder %s40, %s56
      %p58 = scmp.eq.s32.totalorder %s20, 0
      %p59 = por %p57, %p58
      %s61 = sadd.s32 %s60, 1
      %p64 = scmp.eq.s32.totalorder %s14, 3
      %p65 = scmp.ne.s32.totalorder %s60, %s62
      %p66 = scmp.eq.s32.totalorder %s14, 0
      %p67 = por %p65, %p66
      %p68 = scmp.ne.s32.totalorder %s60, %s62
      %p69 = scmp.eq.s32.totalorder %s19, 3
      %p70 = por %p68, %p69
      %p71 = scmp.ne.s32.totalorder %s62, %s63
      %p72 = scmp.eq.s32.totalorder %s19, 0
      %p73 = por %p71, %p72
      %p74 = scmp.ne.s32.totalorder %s62, %s63
      %p75 = scmp.eq.s32.totalorder %s20, 3
      %p76 = por %p74, %p75
      %p78 = scmp.ne.s32.totalorder %s63, %s77
      %p79 = scmp.eq.s32.totalorder %s20, 0
      %p80 = por %p78, %p79
      %s82 = sadd.s32 %s81, 1
      %p85 = scmp.eq.s32.totalorder %s14, 3
      %p86 = scmp.ne.s32.totalorder %s81, %s83
      %p87 = scmp.eq.s32.totalorder %s14, 0
      %p88 = por %p86, %p87
      %p89 = scmp.ne.s32.totalorder %s81, %s83
      %p90 = scmp.eq.s32.totalorder %s19, 3
      %p91 = por %p89, %p90
      %p92 = scmp.ne.s32.totalorder %s83, %s84
      %p93 = scmp.eq.s32.totalorder %s19, 0
      %p94 = por %p92, %p93
      %p95 = scmp.ne.s32.totalorder %s83, %s84
      %p96 = scmp.eq.s32.totalorder %s20, 3
      %p97 = por %p95, %p96
      %p99 = scmp.ne.s32.totalorder %s84, %s98
      %p100 = scmp.eq.s32.totalorder %s20, 0
      %p101 = por %p99, %p100
      %s102 = ssub.s32 %s21, %s33
      %s103 = ssub.s32 %s22, %s29
      %s104 = sor.u32 %s102, %s103
      %p105 = scmp.eq.s32.totalorder %s104, 0
      %s107 = sadd.s32 %s106, 1
      %s108 = scalar_select %p105, %s106, %s107
      %p111 = pneg %p105
      %p112 = scmp.eq.s32.totalorder %s14, 3
      %p113 = por %p111, %p112
      %p114 = scmp.ne.s32.totalorder %s106, %s109
      %p115 = scmp.eq.s32.totalorder %s14, 0
      %p116 = por %p114, %p115
      %p117 = scmp.ne.s32.totalorder %s106, %s109
      %p118 = scmp.eq.s32.totalorder %s19, 3
      %p119 = por %p117, %p118
      %p120 = scmp.ne.s32.totalorder %s109, %s110
      %p121 = scmp.eq.s32.totalorder %s19, 0
      %p122 = por %p120, %p121
      %p123 = scmp.ne.s32.totalorder %s109, %s110
      %p124 = scmp.eq.s32.totalorder %s20, 3
      %p125 = por %p123, %p124
      %p127 = scmp.ne.s32.totalorder %s110, %s126
      %p128 = scmp.eq.s32.totalorder %s20, 0
      %p129 = por %p127, %p128
      %p130 = scmp.le.s32.totalorder 1, %s14
      %p131 = scmp.lt.s32.totalorder %s14, 5
      %p132 = pnand %p130, %p131
      %p133 = pneg %p132
      // Predicated region
      $region9: #{tpu_custom_call.1} parent=5 // pred_check
        _
      $region10: #{tpu_custom_call.1} parent=5 // pred_check_branch
        %135 = sbr.rel (%p132) target = $region12
      $region11: #{tpu_custom_call.1} parent=5 // pred_region
        %s136 = ssub.s32 %s14, 1
        // Predicated region
        $region13: #{tpu_custom_call.1} parent=11 // pred_check
          %p137 = pneg %p73
        $region14: #{tpu_custom_call.1} parent=11 // pred_check_branch
          %139 = sbr.rel (%p137) target = $region16
        $region15: #{tpu_custom_call.1} parent=11 // pred_region
          %s141 = ssub.s32 80, 80
          %142 = vsyncadd [#allocation4], %s141
          %s144 = sshll.u32 %s1, 4
          %s145 = int_to_ptr.vmem [resolvable:$true] %s144
          %147 = dma.vmem_to_smem %s145, 80, [#allocation2], [#allocation4]
        $region16: #{tpu_custom_call.1} parent=11 // pred_fallthru
          _
        // Predicated region
        $region17: #{tpu_custom_call.1} parent=11 // pred_check
          %p148 = pneg %p94
        $region18: #{tpu_custom_call.1} parent=11 // pred_check_branch
          %150 = sbr.rel (%p148) target = $region20
        $region19: #{tpu_custom_call.1} parent=11 // pred_region
          %s152 = ssub.s32 16, 16
          %153 = vsyncadd [#allocation6], %s152
          %s155 = sshll.u32 %s2, 4
          %s156 = int_to_ptr.vmem [resolvable:$true] %s155
          %158 = dma.vmem_to_smem %s156, 16, [#allocation5], [#allocation6]
        $region20: #{tpu_custom_call.1} parent=11 // pred_fallthru
          _
      $region12: #{tpu_custom_call.1} parent=5 // pred_fallthru
        _
      %p159 = scmp.lt.s32.totalorder %s14, 4
      // Predicated region
      $region21: #{tpu_custom_call.1} parent=5 // pred_check
        %p160 = pneg %p159
      $region22: #{tpu_custom_call.1} parent=5 // pred_check_branch
        %162 = sbr.rel (%p160) target = $region24
      $region23: #{tpu_custom_call.1} parent=5 // pred_region
        // Predicated region
        $region25: #{tpu_custom_call.1} parent=23 // pred_check
          %p163 = pneg %p46
        $region26: #{tpu_custom_call.1} parent=23 // pred_check_branch
          %165 = sbr.rel (%p163) target = $region28
        $region27: #{tpu_custom_call.1} parent=23 // pred_region
          %p166 = scmp.lt.s32.totalorder %s21, 1
          %s167 = scalar_select %p166, %s21, 1
          %s168 = smul.addr %s167, 12
          %s169 = smul.addr %s168, 8
          %s170 = scalar_lea.vmem %s0, %s169
        $region28: #{tpu_custom_call.1} parent=23 // pred_fallthru
          _
      $region24: #{tpu_custom_call.1} parent=5 // pred_fallthru
        _
      %p171 = scmp.le.s32.totalorder 1, %s14
      %p172 = scmp.lt.s32.totalorder %s14, 5
      %p173 = pnand %p171, %p172
      %p174 = pneg %p173
      // Predicated region
      $region29: #{tpu_custom_call.1} parent=5 // pred_check
        _
      $region30: #{tpu_custom_call.1} parent=5 // pred_check_branch
        %176 = sbr.rel (%p173) target = $region32
      $region31: #{tpu_custom_call.1} parent=5 // pred_region
        %s177 = ssub.s32 %s14, 1
        // Predicated region
        $region33: #{tpu_custom_call.1} parent=31 // pred_check
          %p178 = pneg %p73
        $region34: #{tpu_custom_call.1} parent=31 // pred_check_branch
          %180 = sbr.rel (%p178) target = $region36
        $region35: #{tpu_custom_call.1} parent=31 // pred_region
          %181 = dma.done [#allocation4], 80
        $region36: #{tpu_custom_call.1} parent=31 // pred_fallthru
          _
        // Predicated region
        $region37: #{tpu_custom_call.1} parent=31 // pred_check
          %p182 = pneg %p94
        $region38: #{tpu_custom_call.1} parent=31 // pred_check_branch
          %184 = sbr.rel (%p182) target = $region40
        $region39: #{tpu_custom_call.1} parent=31 // pred_region
          %185 = dma.done [#allocation6], 16
        $region40: #{tpu_custom_call.1} parent=31 // pred_fallthru
          _
        %186 = sfence
        %p187 = scmp.lt.s32.totalorder %s23, 1
        %s188 = scalar_select %p187, %s23, 1
        %s189 = smul.addr %s188, 12
        %s190 = smul.addr %s189, 8
        %s191 = scalar_lea.vmem %s0, %s190
        %p192 = pneg %p52
        %p193 = pneg %p49
        %p194 = pneg %p73
        %p195 = pneg %p70
        %p196 = pneg %p94
        %p197 = pneg %p91
        %p198 = pneg %p122
        %p199 = pneg %p119
        %s200 = sand.u32 %s109, 1
        %s201 = scalar_lea.sflag [#allocation3], %s200
        %s202 = sand.u32 %s109, 1
        %s203 = smul.addr %s202, 64
        %s204 = scalar_lea.vmem [#allocation7], %s203
        %p205 = scmp.lt.s32.totalorder %s23, 1
        %s206 = scalar_select %p205, %s23, 1
        %s207 = smul.addr %s206, 12
        %s208 = smul.addr %s207, 8
        %s209 = scalar_lea.vmem %s0, %s208
        %s210 = smul.u32 2, %s24
        %s211 = smul.u32 %s24, 8
        %s212 = scalar_lea.vmem %s209, %s211
        %v213 = vld [vmem:[%s212] sm:$0xff]
        %v214 = vld [vmem:[%s212 + $0x8] sm:$0x3]
        %s215 = sld [smem:[#allocation2]]
        %v216 = vstv %s215
        %v217 = vmul.f32 %v213, %v216
        %v218 = vadd.f32 %v217, 0.0
        %s219 = sld [smem:[#allocation2 + $0x24]]
        %v220 = vstv %s219
        %v221 = vmul.f32 %v213, %v220
        %v222 = vadd.f32 %v221, 0.0
        %s223 = sld [smem:[#allocation2 + $0x48]]
        %v224 = vstv %s223
        %v225 = vmul.f32 %v213, %v224
        %v226 = vadd.f32 %v225, 0.0
        %s227 = sld [smem:[#allocation2 + $0x6c]]
        %v228 = vstv %s227
        %v229 = vmul.f32 %v213, %v228
        %v230 = vadd.f32 %v229, 0.0
        %s231 = sld [smem:[#allocation2 + $0x90]]
        %v232 = vstv %s231
        %v233 = vmul.f32 %v213, %v232
        %v234 = vadd.f32 %v233, 0.0
        %s235 = sld [smem:[#allocation2 + $0xb4]]
        %v236 = vstv %s235
        %v237 = vmul.f32 %v213, %v236
        %v238 = vadd.f32 %v237, 0.0
        %s239 = sld [smem:[#allocation2 + $0xd8]]
        %v240 = vstv %s239
        %v241 = vmul.f32 %v213, %v240
        %v242 = vadd.f32 %v241, 0.0
        %s243 = sld [smem:[#allocation2 + $0xfc]]
        %v244 = vstv %s243
        %v245 = vmul.f32 %v213, %v244
        %v246 = vadd.f32 %v245, 0.0
        %s247 = sld [smem:[#allocation2 + $0x120]]
        %v248 = vstv %s247
        %v249 = vmul.f32 %v213, %v248
        %v250 = vadd.f32 %v249, 0.0
        %s251 = sld [smem:[#allocation2 + $0x144]]
        %v252 = vstv %s251
        %v253 = vmul.f32 %v213, %v252
        %v254 = vadd.f32 %v253, 0.0
        %s255 = sld [smem:[#allocation2 + $0x168]]
        %v256 = vstv %s255
        %v257 = vmul.f32 %v213, %v256
        %v258 = vadd.f32 %v257, 0.0
        %s259 = sld [smem:[#allocation2 + $0x18c]]
        %v260 = vstv %s259
        %v261 = vmul.f32 %v213, %v260
        %v262 = vadd.f32 %v261, 0.0
        %s263 = sld [smem:[#allocation2 + $0x1b0]]
        %v264 = vstv %s263
        %v265 = vmul.f32 %v213, %v264
        %v266 = vadd.f32 %v265, 0.0
        %s267 = sld [smem:[#allocation2 + $0x1d4]]
        %v268 = vstv %s267
        %v269 = vmul.f32 %v213, %v268
        %v270 = vadd.f32 %v269, 0.0
        %s271 = sld [smem:[#allocation2 + $0x1f8]]
        %v272 = vstv %s271
        %v273 = vmul.f32 %v213, %v272
        %v274 = vadd.f32 %v273, 0.0
        %s275 = sld [smem:[#allocation2 + $0x21c]]
        %v276 = vstv %s275
        %v277 = vmul.f32 %v213, %v276
        %v278 = vadd.f32 %v277, 0.0
        %s279 = sld [smem:[#allocation2 + $0x1]]
        %v280 = vstv %s279
        %v281 = vmul.f32 %v213, %v280
        %283 = vrot.lane.b32.xlu0 %v281, 127
        %v284 = vpop.permute.xlu0 %283
        %v286 = vadd.f32 %v218, %v284
        %s287 = sld [smem:[#allocation2 + $0x25]]
        %v288 = vstv %s287
        %v289 = vmul.f32 %v213, %v288
        %291 = vrot.lane.b32.xlu0 %v289, 127
        %v292 = vpop.permute.xlu0 %291
        %v294 = vadd.f32 %v222, %v292
        %s295 = sld [smem:[#allocation2 + $0x49]]
        %v296 = vstv %s295
        %v297 = vmul.f32 %v213, %v296
        %299 = vrot.lane.b32.xlu0 %v297, 127
        %v300 = vpop.permute.xlu0 %299
        %v302 = vadd.f32 %v226, %v300
        %s303 = sld [smem:[#allocation2 + $0x6d]]
        %v304 = vstv %s303
        %v305 = vmul.f32 %v213, %v304
        %307 = vrot.lane.b32.xlu0 %v305, 127
        %v308 = vpop.permute.xlu0 %307
        %v310 = vadd.f32 %v230, %v308
        %s311 = sld [smem:[#allocation2 + $0x91]]
        %v312 = vstv %s311
        %v313 = vmul.f32 %v213, %v312
        %315 = vrot.lane.b32.xlu0 %v313, 127
        %v316 = vpop.permute.xlu0 %315
        %v318 = vadd.f32 %v234, %v316
        %s319 = sld [smem:[#allocation2 + $0xb5]]
        %v320 = vstv %s319
        %v321 = vmul.f32 %v213, %v320
        %323 = vrot.lane.b32.xlu0 %v321, 127
        %v324 = vpop.permute.xlu0 %323
        %v326 = vadd.f32 %v238, %v324
        %s327 = sld [smem:[#allocation2 + $0xd9]]
        %v328 = vstv %s327
        %v329 = vmul.f32 %v213, %v328
        %331 = vrot.lane.b32.xlu0 %v329, 127
        %v332 = vpop.permute.xlu0 %331
        %v334 = vadd.f32 %v242, %v332
        %s335 = sld [smem:[#allocation2 + $0xfd]]
        %v336 = vstv %s335
        %v337 = vmul.f32 %v213, %v336
        %339 = vrot.lane.b32.xlu0 %v337, 127
        %v340 = vpop.permute.xlu0 %339
        %v342 = vadd.f32 %v246, %v340
        %s343 = sld [smem:[#allocation2 + $0x121]]
        %v344 = vstv %s343
        %v345 = vmul.f32 %v213, %v344
        %347 = vrot.lane.b32.xlu0 %v345, 127
        %v348 = vpop.permute.xlu0 %347
        %v350 = vadd.f32 %v250, %v348
        %s351 = sld [smem:[#allocation2 + $0x145]]
        %v352 = vstv %s351
        %v353 = vmul.f32 %v213, %v352
        %355 = vrot.lane.b32.xlu0 %v353, 127
        %v356 = vpop.permute.xlu0 %355
        %v358 = vadd.f32 %v254, %v356
        %s359 = sld [smem:[#allocation2 + $0x169]]
        %v360 = vstv %s359
        %v361 = vmul.f32 %v213, %v360
        %363 = vrot.lane.b32.xlu0 %v361, 127
        %v364 = vpop.permute.xlu0 %363
        %v366 = vadd.f32 %v258, %v364
        %s367 = sld [smem:[#allocation2 + $0x18d]]
        %v368 = vstv %s367
        %v369 = vmul.f32 %v213, %v368
        %371 = vrot.lane.b32.xlu0 %v369, 127
        %v372 = vpop.permute.xlu0 %371
        %v374 = vadd.f32 %v262, %v372
        %s375 = sld [smem:[#allocation2 + $0x1b1]]
        %v376 = vstv %s375
        %v377 = vmul.f32 %v213, %v376
        %379 = vrot.lane.b32.xlu0 %v377, 127
        %v380 = vpop.permute.xlu0 %379
        %v382 = vadd.f32 %v266, %v380
        %s383 = sld [smem:[#allocation2 + $0x1d5]]
        %v384 = vstv %s383
        %v385 = vmul.f32 %v213, %v384
        %387 = vrot.lane.b32.xlu0 %v385, 127
        %v388 = vpop.permute.xlu0 %387
        %v390 = vadd.f32 %v270, %v388
        %s391 = sld [smem:[#allocation2 + $0x1f9]]
        %v392 = vstv %s391
        %v393 = vmul.f32 %v213, %v392
        %395 = vrot.lane.b32.xlu0 %v393, 127
        %v396 = vpop.permute.xlu0 %395
        %v398 = vadd.f32 %v274, %v396
        %s399 = sld [smem:[#allocation2 + $0x21d]]
        %v400 = vstv %s399
        %v401 = vmul.f32 %v213, %v400
        %403 = vrot.lane.b32.xlu0 %v401, 127
        %v404 = vpop.permute.xlu0 %403
        %v406 = vadd.f32 %v278, %v404
        %s407 = sld [smem:[#allocation2 + $0x2]]
        %v408 = vstv %s407
        %v409 = vmul.f32 %v213, %v408
        %411 = vrot.lane.b32.xlu0 %v409, 126
        %v412 = vpop.permute.xlu0 %411
        %v414 = vadd.f32 %v286, %v412
        %s415 = sld [smem:[#allocation2 + $0x26]]
        %v416 = vstv %s415
        %v417 = vmul.f32 %v213, %v416
        %419 = vrot.lane.b32.xlu0 %v417, 126
        %v420 = vpop.permute.xlu0 %419
        %v422 = vadd.f32 %v294, %v420
        %s423 = sld [smem:[#allocation2 + $0x4a]]
        %v424 = vstv %s423
        %v425 = vmul.f32 %v213, %v424
        %427 = vrot.lane.b32.xlu0 %v425, 126
        %v428 = vpop.permute.xlu0 %427
        %v430 = vadd.f32 %v302, %v428
        %s431 = sld [smem:[#allocation2 + $0x6e]]
        %v432 = vstv %s431
        %v433 = vmul.f32 %v213, %v432
        %435 = vrot.lane.b32.xlu0 %v433, 126
        %v436 = vpop.permute.xlu0 %435
        %v438 = vadd.f32 %v310, %v436
        %s439 = sld [smem:[#allocation2 + $0x92]]
        %v440 = vstv %s439
        %v441 = vmul.f32 %v213, %v440
        %443 = vrot.lane.b32.xlu0 %v441, 126
        %v444 = vpop.permute.xlu0 %443
        %v446 = vadd.f32 %v318, %v444
        %s447 = sld [smem:[#allocation2 + $0xb6]]
        %v448 = vstv %s447
        %v449 = vmul.f32 %v213, %v448
        %451 = vrot.lane.b32.xlu0 %v449, 126
        %v452 = vpop.permute.xlu0 %451
        %v454 = vadd.f32 %v326, %v452
        %s455 = sld [smem:[#allocation2 + $0xda]]
        %v456 = vstv %s455
        %v457 = vmul.f32 %v213, %v456
        %459 = vrot.lane.b32.xlu0 %v457, 126
        %v460 = vpop.permute.xlu0 %459
        %v462 = vadd.f32 %v334, %v460
        %s463 = sld [smem:[#allocation2 + $0xfe]]
        %v464 = vstv %s463
        %v465 = vmul.f32 %v213, %v464
        %467 = vrot.lane.b32.xlu0 %v465, 126
        %v468 = vpop.permute.xlu0 %467
        %v470 = vadd.f32 %v342, %v468
        %s471 = sld [smem:[#allocation2 + $0x122]]
        %v472 = vstv %s471
        %v473 = vmul.f32 %v213, %v472
        %475 = vrot.lane.b32.xlu0 %v473, 126
        %v476 = vpop.permute.xlu0 %475
        %v478 = vadd.f32 %v350, %v476
        %s479 = sld [smem:[#allocation2 + $0x146]]
        %v480 = vstv %s479
        %v481 = vmul.f32 %v213, %v480
        %483 = vrot.lane.b32.xlu0 %v481, 126
        %v484 = vpop.permute.xlu0 %483
        %v486 = vadd.f32 %v358, %v484
        %s487 = sld [smem:[#allocation2 + $0x16a]]
        %v488 = vstv %s487
        %v489 = vmul.f32 %v213, %v488
        %491 = vrot.lane.b32.xlu0 %v489, 126
        %v492 = vpop.permute.xlu0 %491
        %v494 = vadd.f32 %v366, %v492
        %s495 = sld [smem:[#allocation2 + $0x18e]]
        %v496 = vstv %s495
        %v497 = vmul.f32 %v213, %v496
        %499 = vrot.lane.b32.xlu0 %v497, 126
        %v500 = vpop.permute.xlu0 %499
        %v502 = vadd.f32 %v374, %v500
        %s503 = sld [smem:[#allocation2 + $0x1b2]]
        %v504 = vstv %s503
        %v505 = vmul.f32 %v213, %v504
        %507 = vrot.lane.b32.xlu0 %v505, 126
        %v508 = vpop.permute.xlu0 %507
        %v510 = vadd.f32 %v382, %v508
        %s511 = sld [smem:[#allocation2 + $0x1d6]]
        %v512 = vstv %s511
        %v513 = vmul.f32 %v213, %v512
        %515 = vrot.lane.b32.xlu0 %v513, 126
        %v516 = vpop.permute.xlu0 %515
        %v518 = vadd.f32 %v390, %v516
        %s519 = sld [smem:[#allocation2 + $0x1fa]]
        %v520 = vstv %s519
        %v521 = vmul.f32 %v213, %v520
        %523 = vrot.lane.b32.xlu0 %v521, 126
        %v524 = vpop.permute.xlu0 %523
        %v526 = vadd.f32 %v398, %v524
        %s527 = sld [smem:[#allocation2 + $0x21e]]
        %v528 = vstv %s527
        %v529 = vmul.f32 %v213, %v528
        %531 = vrot.lane.b32.xlu0 %v529, 126
        %v532 = vpop.permute.xlu0 %531
        %v534 = vadd.f32 %v406, %v532
        %s535 = sld [smem:[#allocation2 + $0x3]]
        %v536 = vstv %s535
        %v537 = vmul.f32 %v213, %v536
        %v538 = vmul.f32 %v214, %v536
        %vm541 = vcmask 1046528
        %v542 = vrot.slane %v537, 1
        %v543 = vrot.slane %v538, 1
        %v544 = vsel %vm541, %v542, %v543
        %v546 = vadd.f32 %v414, %v544
        %s547 = sld [smem:[#allocation2 + $0x27]]
        %v548 = vstv %s547
        %v549 = vmul.f32 %v213, %v548
        %v550 = vmul.f32 %v214, %v548
        %v553 = vrot.slane %v549, 1
        %v554 = vrot.slane %v550, 1
        %v555 = vsel %vm541, %v553, %v554
        %v557 = vadd.f32 %v422, %v555
        %s558 = sld [smem:[#allocation2 + $0x4b]]
        %v559 = vstv %s558
        %v560 = vmul.f32 %v213, %v559
        %v561 = vmul.f32 %v214, %v559
        %v564 = vrot.slane %v560, 1
        %v565 = vrot.slane %v561, 1
        %v566 = vsel %vm541, %v564, %v565
        %v568 = vadd.f32 %v430, %v566
        %s569 = sld [smem:[#allocation2 + $0x6f]]
        %v570 = vstv %s569
        %v571 = vmul.f32 %v213, %v570
        %v572 = vmul.f32 %v214, %v570
        %v575 = vrot.slane %v571, 1
        %v576 = vrot.slane %v572, 1
        %v577 = vsel %vm541, %v575, %v576
        %v579 = vadd.f32 %v438, %v577
        %s580 = sld [smem:[#allocation2 + $0x93]]
        %v581 = vstv %s580
        %v582 = vmul.f32 %v213, %v581
        %v583 = vmul.f32 %v214, %v581
        %v586 = vrot.slane %v582, 1
        %v587 = vrot.slane %v583, 1
        %v588 = vsel %vm541, %v586, %v587
        %v590 = vadd.f32 %v446, %v588
        %s591 = sld [smem:[#allocation2 + $0xb7]]
        %v592 = vstv %s591
        %v593 = vmul.f32 %v213, %v592
        %v594 = vmul.f32 %v214, %v592
        %v597 = vrot.slane %v593, 1
        %v598 = vrot.slane %v594, 1
        %v599 = vsel %vm541, %v597, %v598
        %v601 = vadd.f32 %v454, %v599
        %s602 = sld [smem:[#allocation2 + $0xdb]]
        %v603 = vstv %s602
        %v604 = vmul.f32 %v213, %v603
        %v605 = vmul.f32 %v214, %v603
        %v608 = vrot.slane %v604, 1
        %v609 = vrot.slane %v605, 1
        %v610 = vsel %vm541, %v608, %v609
        %v612 = vadd.f32 %v462, %v610
        %s613 = sld [smem:[#allocation2 + $0xff]]
        %v614 = vstv %s613
        %v615 = vmul.f32 %v213, %v614
        %v616 = vmul.f32 %v214, %v614
        %v619 = vrot.slane %v615, 1
        %v620 = vrot.slane %v616, 1
        %v621 = vsel %vm541, %v619, %v620
        %v623 = vadd.f32 %v470, %v621
        %s624 = sld [smem:[#allocation2 + $0x123]]
        %v625 = vstv %s624
        %v626 = vmul.f32 %v213, %v625
        %v627 = vmul.f32 %v214, %v625
        %v630 = vrot.slane %v626, 1
        %v631 = vrot.slane %v627, 1
        %v632 = vsel %vm541, %v630, %v631
        %v634 = vadd.f32 %v478, %v632
        %s635 = sld [smem:[#allocation2 + $0x147]]
        %v636 = vstv %s635
        %v637 = vmul.f32 %v213, %v636
        %v638 = vmul.f32 %v214, %v636
        %v641 = vrot.slane %v637, 1
        %v642 = vrot.slane %v638, 1
        %v643 = vsel %vm541, %v641, %v642
        %v645 = vadd.f32 %v486, %v643
        %s646 = sld [smem:[#allocation2 + $0x16b]]
        %v647 = vstv %s646
        %v648 = vmul.f32 %v213, %v647
        %v649 = vmul.f32 %v214, %v647
        %v652 = vrot.slane %v648, 1
        %v653 = vrot.slane %v649, 1
        %v654 = vsel %vm541, %v652, %v653
        %v656 = vadd.f32 %v494, %v654
        %s657 = sld [smem:[#allocation2 + $0x18f]]
        %v658 = vstv %s657
        %v659 = vmul.f32 %v213, %v658
        %v660 = vmul.f32 %v214, %v658
        %v663 = vrot.slane %v659, 1
        %v664 = vrot.slane %v660, 1
        %v665 = vsel %vm541, %v663, %v664
        %v667 = vadd.f32 %v502, %v665
        %s668 = sld [smem:[#allocation2 + $0x1b3]]
        %v669 = vstv %s668
        %v670 = vmul.f32 %v213, %v669
        %v671 = vmul.f32 %v214, %v669
        %v674 = vrot.slane %v670, 1
        %v675 = vrot.slane %v671, 1
        %v676 = vsel %vm541, %v674, %v675
        %v678 = vadd.f32 %v510, %v676
        %s679 = sld [smem:[#allocation2 + $0x1d7]]
        %v680 = vstv %s679
        %v681 = vmul.f32 %v213, %v680
        %v682 = vmul.f32 %v214, %v680
        %v685 = vrot.slane %v681, 1
        %v686 = vrot.slane %v682, 1
        %v687 = vsel %vm541, %v685, %v686
        %v689 = vadd.f32 %v518, %v687
        %s690 = sld [smem:[#allocation2 + $0x1fb]]
        %v691 = vstv %s690
        %v692 = vmul.f32 %v213, %v691
        %v693 = vmul.f32 %v214, %v691
        %v696 = vrot.slane %v692, 1
        %v697 = vrot.slane %v693, 1
        %v698 = vsel %vm541, %v696, %v697
        %v700 = vadd.f32 %v526, %v698
        %s701 = sld [smem:[#allocation2 + $0x21f]]
        %v702 = vstv %s701
        %v703 = vmul.f32 %v213, %v702
        %v704 = vmul.f32 %v214, %v702
        %v707 = vrot.slane %v703, 1
        %v708 = vrot.slane %v704, 1
        %v709 = vsel %vm541, %v707, %v708
        %v711 = vadd.f32 %v534, %v709
        %s712 = sld [smem:[#allocation2 + $0x4]]
        %v713 = vstv %s712
        %v714 = vmul.f32 %v213, %v713
        %v715 = vmul.f32 %v214, %v713
        %v718 = vrot.slane %v714, 1
        %v719 = vrot.slane %v715, 1
        %v720 = vsel %vm541, %v718, %v719
        %721 = vrot.lane.b32.xlu0 %v720, 127
        %v722 = vpop.permute.xlu0 %721
        %v724 = vadd.f32 %v546, %v722
        %s725 = sld [smem:[#allocation2 + $0x28]]
        %v726 = vstv %s725
        %v727 = vmul.f32 %v213, %v726
        %v728 = vmul.f32 %v214, %v726
        %v731 = vrot.slane %v727, 1
        %v732 = vrot.slane %v728, 1
        %v733 = vsel %vm541, %v731, %v732
        %734 = vrot.lane.b32.xlu0 %v733, 127
        %v735 = vpop.permute.xlu0 %734
        %v737 = vadd.f32 %v557, %v735
        %s738 = sld [smem:[#allocation2 + $0x4c]]
        %v739 = vstv %s738
        %v740 = vmul.f32 %v213, %v739
        %v741 = vmul.f32 %v214, %v739
        %v744 = vrot.slane %v740, 1
        %v745 = vrot.slane %v741, 1
        %v746 = vsel %vm541, %v744, %v745
        %747 = vrot.lane.b32.xlu0 %v746, 127
        %v748 = vpop.permute.xlu0 %747
        %v750 = vadd.f32 %v568, %v748
        %s751 = sld [smem:[#allocation2 + $0x70]]
        %v752 = vstv %s751
        %v753 = vmul.f32 %v213, %v752
        %v754 = vmul.f32 %v214, %v752
        %v757 = vrot.slane %v753, 1
        %v758 = vrot.slane %v754, 1
        %v759 = vsel %vm541, %v757, %v758
        %760 = vrot.lane.b32.xlu0 %v759, 127
        %v761 = vpop.permute.xlu0 %760
        %v763 = vadd.f32 %v579, %v761
        %s764 = sld [smem:[#allocation2 + $0x94]]
        %v765 = vstv %s764
        %v766 = vmul.f32 %v213, %v765
        %v767 = vmul.f32 %v214, %v765
        %v770 = vrot.slane %v766, 1
        %v771 = vrot.slane %v767, 1
        %v772 = vsel %vm541, %v770, %v771
        %773 = vrot.lane.b32.xlu0 %v772, 127
        %v774 = vpop.permute.xlu0 %773
        %v776 = vadd.f32 %v590, %v774
        %s777 = sld [smem:[#allocation2 + $0xb8]]
        %v778 = vstv %s777
        %v779 = vmul.f32 %v213, %v778
        %v780 = vmul.f32 %v214, %v778
        %v783 = vrot.slane %v779, 1
        %v784 = vrot.slane %v780, 1
        %v785 = vsel %vm541, %v783, %v784
        %786 = vrot.lane.b32.xlu0 %v785, 127
        %v787 = vpop.permute.xlu0 %786
        %v789 = vadd.f32 %v601, %v787
        %s790 = sld [smem:[#allocation2 + $0xdc]]
        %v791 = vstv %s790
        %v792 = vmul.f32 %v213, %v791
        %v793 = vmul.f32 %v214, %v791
        %v796 = vrot.slane %v792, 1
        %v797 = vrot.slane %v793, 1
        %v798 = vsel %vm541, %v796, %v797
        %799 = vrot.lane.b32.xlu0 %v798, 127
        %v800 = vpop.permute.xlu0 %799
        %v802 = vadd.f32 %v612, %v800
        %s803 = sld [smem:[#allocation2 + $0x100]]
        %v804 = vstv %s803
        %v805 = vmul.f32 %v213, %v804
        %v806 = vmul.f32 %v214, %v804
        %v809 = vrot.slane %v805, 1
        %v810 = vrot.slane %v806, 1
        %v811 = vsel %vm541, %v809, %v810
        %812 = vrot.lane.b32.xlu0 %v811, 127
        %v813 = vpop.permute.xlu0 %812
        %v815 = vadd.f32 %v623, %v813
        %s816 = sld [smem:[#allocation2 + $0x124]]
        %v817 = vstv %s816
        %v818 = vmul.f32 %v213, %v817
        %v819 = vmul.f32 %v214, %v817
        %v822 = vrot.slane %v818, 1
        %v823 = vrot.slane %v819, 1
        %v824 = vsel %vm541, %v822, %v823
        %825 = vrot.lane.b32.xlu0 %v824, 127
        %v826 = vpop.permute.xlu0 %825
        %v828 = vadd.f32 %v634, %v826
        %s829 = sld [smem:[#allocation2 + $0x148]]
        %v830 = vstv %s829
        %v831 = vmul.f32 %v213, %v830
        %v832 = vmul.f32 %v214, %v830
        %v835 = vrot.slane %v831, 1
        %v836 = vrot.slane %v832, 1
        %v837 = vsel %vm541, %v835, %v836
        %838 = vrot.lane.b32.xlu0 %v837, 127
        %v839 = vpop.permute.xlu0 %838
        %v841 = vadd.f32 %v645, %v839
        %s842 = sld [smem:[#allocation2 + $0x16c]]
        %v843 = vstv %s842
        %v844 = vmul.f32 %v213, %v843
        %v845 = vmul.f32 %v214, %v843
        %v848 = vrot.slane %v844, 1
        %v849 = vrot.slane %v845, 1
        %v850 = vsel %vm541, %v848, %v849
        %851 = vrot.lane.b32.xlu0 %v850, 127
        %v852 = vpop.permute.xlu0 %851
        %v854 = vadd.f32 %v656, %v852
        %s855 = sld [smem:[#allocation2 + $0x190]]
        %v856 = vstv %s855
        %v857 = vmul.f32 %v213, %v856
        %v858 = vmul.f32 %v214, %v856
        %v861 = vrot.slane %v857, 1
        %v862 = vrot.slane %v858, 1
        %v863 = vsel %vm541, %v861, %v862
        %864 = vrot.lane.b32.xlu0 %v863, 127
        %v865 = vpop.permute.xlu0 %864
        %v867 = vadd.f32 %v667, %v865
        %s868 = sld [smem:[#allocation2 + $0x1b4]]
        %v869 = vstv %s868
        %v870 = vmul.f32 %v213, %v869
        %v871 = vmul.f32 %v214, %v869
        %v874 = vrot.slane %v870, 1
        %v875 = vrot.slane %v871, 1
        %v876 = vsel %vm541, %v874, %v875
        %877 = vrot.lane.b32.xlu0 %v876, 127
        %v878 = vpop.permute.xlu0 %877
        %v880 = vadd.f32 %v678, %v878
        %s881 = sld [smem:[#allocation2 + $0x1d8]]
        %v882 = vstv %s881
        %v883 = vmul.f32 %v213, %v882
        %v884 = vmul.f32 %v214, %v882
        %v887 = vrot.slane %v883, 1
        %v888 = vrot.slane %v884, 1
        %v889 = vsel %vm541, %v887, %v888
        %890 = vrot.lane.b32.xlu0 %v889, 127
        %v891 = vpop.permute.xlu0 %890
        %v893 = vadd.f32 %v689, %v891
        %s894 = sld [smem:[#allocation2 + $0x1fc]]
        %v895 = vstv %s894
        %v896 = vmul.f32 %v213, %v895
        %v897 = vmul.f32 %v214, %v895
        %v900 = vrot.slane %v896, 1
        %v901 = vrot.slane %v897, 1
        %v902 = vsel %vm541, %v900, %v901
        %903 = vrot.lane.b32.xlu0 %v902, 127
        %v904 = vpop.permute.xlu0 %903
        %v906 = vadd.f32 %v700, %v904
        %s907 = sld [smem:[#allocation2 + $0x220]]
        %v908 = vstv %s907
        %v909 = vmul.f32 %v213, %v908
        %v910 = vmul.f32 %v214, %v908
        %v913 = vrot.slane %v909, 1
        %v914 = vrot.slane %v910, 1
        %v915 = vsel %vm541, %v913, %v914
        %916 = vrot.lane.b32.xlu0 %v915, 127
        %v917 = vpop.permute.xlu0 %916
        %v919 = vadd.f32 %v711, %v917
        %s920 = sld [smem:[#allocation2 + $0x5]]
        %v921 = vstv %s920
        %v922 = vmul.f32 %v213, %v921
        %v923 = vmul.f32 %v214, %v921
        %v926 = vrot.slane %v922, 1
        %v927 = vrot.slane %v923, 1
        %v928 = vsel %vm541, %v926, %v927
        %929 = vrot.lane.b32.xlu0 %v928, 126
        %v930 = vpop.permute.xlu0 %929
        %v932 = vadd.f32 %v724, %v930
        %s933 = sld [smem:[#allocation2 + $0x29]]
        %v934 = vstv %s933
        %v935 = vmul.f32 %v213, %v934
        %v936 = vmul.f32 %v214, %v934
        %v939 = vrot.slane %v935, 1
        %v940 = vrot.slane %v936, 1
        %v941 = vsel %vm541, %v939, %v940
        %942 = vrot.lane.b32.xlu0 %v941, 126
        %v943 = vpop.permute.xlu0 %942
        %v945 = vadd.f32 %v737, %v943
        %s946 = sld [smem:[#allocation2 + $0x4d]]
        %v947 = vstv %s946
        %v948 = vmul.f32 %v213, %v947
        %v949 = vmul.f32 %v214, %v947
        %v952 = vrot.slane %v948, 1
        %v953 = vrot.slane %v949, 1
        %v954 = vsel %vm541, %v952, %v953
        %955 = vrot.lane.b32.xlu0 %v954, 126
        %v956 = vpop.permute.xlu0 %955
        %v958 = vadd.f32 %v750, %v956
        %s959 = sld [smem:[#allocation2 + $0x71]]
        %v960 = vstv %s959
        %v961 = vmul.f32 %v213, %v960
        %v962 = vmul.f32 %v214, %v960
        %v965 = vrot.slane %v961, 1
        %v966 = vrot.slane %v962, 1
        %v967 = vsel %vm541, %v965, %v966
        %968 = vrot.lane.b32.xlu0 %v967, 126
        %v969 = vpop.permute.xlu0 %968
        %v971 = vadd.f32 %v763, %v969
        %s972 = sld [smem:[#allocation2 + $0x95]]
        %v973 = vstv %s972
        %v974 = vmul.f32 %v213, %v973
        %v975 = vmul.f32 %v214, %v973
        %v978 = vrot.slane %v974, 1
        %v979 = vrot.slane %v975, 1
        %v980 = vsel %vm541, %v978, %v979
        %981 = vrot.lane.b32.xlu0 %v980, 126
        %v982 = vpop.permute.xlu0 %981
        %v984 = vadd.f32 %v776, %v982
        %s985 = sld [smem:[#allocation2 + $0xb9]]
        %v986 = vstv %s985
        %v987 = vmul.f32 %v213, %v986
        %v988 = vmul.f32 %v214, %v986
        %v991 = vrot.slane %v987, 1
        %v992 = vrot.slane %v988, 1
        %v993 = vsel %vm541, %v991, %v992
        %994 = vrot.lane.b32.xlu0 %v993, 126
        %v995 = vpop.permute.xlu0 %994
        %v997 = vadd.f32 %v789, %v995
        %s998 = sld [smem:[#allocation2 + $0xdd]]
        %v999 = vstv %s998
        %v1000 = vmul.f32 %v213, %v999
        %v1001 = vmul.f32 %v214, %v999
        %v1004 = vrot.slane %v1000, 1
        %v1005 = vrot.slane %v1001, 1
        %v1006 = vsel %vm541, %v1004, %v1005
        %1007 = vrot.lane.b32.xlu0 %v1006, 126
        %v1008 = vpop.permute.xlu0 %1007
        %v1010 = vadd.f32 %v802, %v1008
        %s1011 = sld [smem:[#allocation2 + $0x101]]
        %v1012 = vstv %s1011
        %v1013 = vmul.f32 %v213, %v1012
        %v1014 = vmul.f32 %v214, %v1012
        %v1017 = vrot.slane %v1013, 1
        %v1018 = vrot.slane %v1014, 1
        %v1019 = vsel %vm541, %v1017, %v1018
        %1020 = vrot.lane.b32.xlu0 %v1019, 126
        %v1021 = vpop.permute.xlu0 %1020
        %v1023 = vadd.f32 %v815, %v1021
        %s1024 = sld [smem:[#allocation2 + $0x125]]
        %v1025 = vstv %s1024
        %v1026 = vmul.f32 %v213, %v1025
        %v1027 = vmul.f32 %v214, %v1025
        %v1030 = vrot.slane %v1026, 1
        %v1031 = vrot.slane %v1027, 1
        %v1032 = vsel %vm541, %v1030, %v1031
        %1033 = vrot.lane.b32.xlu0 %v1032, 126
        %v1034 = vpop.permute.xlu0 %1033
        %v1036 = vadd.f32 %v828, %v1034
        %s1037 = sld [smem:[#allocation2 + $0x149]]
        %v1038 = vstv %s1037
        %v1039 = vmul.f32 %v213, %v1038
        %v1040 = vmul.f32 %v214, %v1038
        %v1043 = vrot.slane %v1039, 1
        %v1044 = vrot.slane %v1040, 1
        %v1045 = vsel %vm541, %v1043, %v1044
        %1046 = vrot.lane.b32.xlu0 %v1045, 126
        %v1047 = vpop.permute.xlu0 %1046
        %v1049 = vadd.f32 %v841, %v1047
        %s1050 = sld [smem:[#allocation2 + $0x16d]]
        %v1051 = vstv %s1050
        %v1052 = vmul.f32 %v213, %v1051
        %v1053 = vmul.f32 %v214, %v1051
        %v1056 = vrot.slane %v1052, 1
        %v1057 = vrot.slane %v1053, 1
        %v1058 = vsel %vm541, %v1056, %v1057
        %1059 = vrot.lane.b32.xlu0 %v1058, 126
        %v1060 = vpop.permute.xlu0 %1059
        %v1062 = vadd.f32 %v854, %v1060
        %s1063 = sld [smem:[#allocation2 + $0x191]]
        %v1064 = vstv %s1063
        %v1065 = vmul.f32 %v213, %v1064
        %v1066 = vmul.f32 %v214, %v1064
        %v1069 = vrot.slane %v1065, 1
        %v1070 = vrot.slane %v1066, 1
        %v1071 = vsel %vm541, %v1069, %v1070
        %1072 = vrot.lane.b32.xlu0 %v1071, 126
        %v1073 = vpop.permute.xlu0 %1072
        %v1075 = vadd.f32 %v867, %v1073
        %s1076 = sld [smem:[#allocation2 + $0x1b5]]
        %v1077 = vstv %s1076
        %v1078 = vmul.f32 %v213, %v1077
        %v1079 = vmul.f32 %v214, %v1077
        %v1082 = vrot.slane %v1078, 1
        %v1083 = vrot.slane %v1079, 1
        %v1084 = vsel %vm541, %v1082, %v1083
        %1085 = vrot.lane.b32.xlu0 %v1084, 126
        %v1086 = vpop.permute.xlu0 %1085
        %v1088 = vadd.f32 %v880, %v1086
        %s1089 = sld [smem:[#allocation2 + $0x1d9]]
        %v1090 = vstv %s1089
        %v1091 = vmul.f32 %v213, %v1090
        %v1092 = vmul.f32 %v214, %v1090
        %v1095 = vrot.slane %v1091, 1
        %v1096 = vrot.slane %v1092, 1
        %v1097 = vsel %vm541, %v1095, %v1096
        %1098 = vrot.lane.b32.xlu0 %v1097, 126
        %v1099 = vpop.permute.xlu0 %1098
        %v1101 = vadd.f32 %v893, %v1099
        %s1102 = sld [smem:[#allocation2 + $0x1fd]]
        %v1103 = vstv %s1102
        %v1104 = vmul.f32 %v213, %v1103
        %v1105 = vmul.f32 %v214, %v1103
        %v1108 = vrot.slane %v1104, 1
        %v1109 = vrot.slane %v1105, 1
        %v1110 = vsel %vm541, %v1108, %v1109
        %1111 = vrot.lane.b32.xlu0 %v1110, 126
        %v1112 = vpop.permute.xlu0 %1111
        %v1114 = vadd.f32 %v906, %v1112
        %s1115 = sld [smem:[#allocation2 + $0x221]]
        %v1116 = vstv %s1115
        %v1117 = vmul.f32 %v213, %v1116
        %v1118 = vmul.f32 %v214, %v1116
        %v1121 = vrot.slane %v1117, 1
        %v1122 = vrot.slane %v1118, 1
        %v1123 = vsel %vm541, %v1121, %v1122
        %1124 = vrot.lane.b32.xlu0 %v1123, 126
        %v1125 = vpop.permute.xlu0 %1124
        %v1127 = vadd.f32 %v919, %v1125
        %s1128 = sld [smem:[#allocation2 + $0x6]]
        %v1129 = vstv %s1128
        %v1130 = vmul.f32 %v213, %v1129
        %v1131 = vmul.f32 %v214, %v1129
        %vm1134 = vcmask 1045504
        %v1135 = vrot.slane %v1130, 2
        %v1136 = vrot.slane %v1131, 2
        %v1137 = vsel %vm1134, %v1135, %v1136
        %v1139 = vadd.f32 %v932, %v1137
        %s1140 = sld [smem:[#allocation2 + $0x2a]]
        %v1141 = vstv %s1140
        %v1142 = vmul.f32 %v213, %v1141
        %v1143 = vmul.f32 %v214, %v1141
        %v1146 = vrot.slane %v1142, 2
        %v1147 = vrot.slane %v1143, 2
        %v1148 = vsel %vm1134, %v1146, %v1147
        %v1150 = vadd.f32 %v945, %v1148
        %s1151 = sld [smem:[#allocation2 + $0x4e]]
        %v1152 = vstv %s1151
        %v1153 = vmul.f32 %v213, %v1152
        %v1154 = vmul.f32 %v214, %v1152
        %v1157 = vrot.slane %v1153, 2
        %v1158 = vrot.slane %v1154, 2
        %v1159 = vsel %vm1134, %v1157, %v1158
        %v1161 = vadd.f32 %v958, %v1159
        %s1162 = sld [smem:[#allocation2 + $0x72]]
        %v1163 = vstv %s1162
        %v1164 = vmul.f32 %v213, %v1163
        %v1165 = vmul.f32 %v214, %v1163
        %v1168 = vrot.slane %v1164, 2
        %v1169 = vrot.slane %v1165, 2
        %v1170 = vsel %vm1134, %v1168, %v1169
        %v1172 = vadd.f32 %v971, %v1170
        %s1173 = sld [smem:[#allocation2 + $0x96]]
        %v1174 = vstv %s1173
        %v1175 = vmul.f32 %v213, %v1174
        %v1176 = vmul.f32 %v214, %v1174
        %v1179 = vrot.slane %v1175, 2
        %v1180 = vrot.slane %v1176, 2
        %v1181 = vsel %vm1134, %v1179, %v1180
        %v1183 = vadd.f32 %v984, %v1181
        %s1184 = sld [smem:[#allocation2 + $0xba]]
        %v1185 = vstv %s1184
        %v1186 = vmul.f32 %v213, %v1185
        %v1187 = vmul.f32 %v214, %v1185
        %v1190 = vrot.slane %v1186, 2
        %v1191 = vrot.slane %v1187, 2
        %v1192 = vsel %vm1134, %v1190, %v1191
        %v1194 = vadd.f32 %v997, %v1192
        %s1195 = sld [smem:[#allocation2 + $0xde]]
        %v1196 = vstv %s1195
        %v1197 = vmul.f32 %v213, %v1196
        %v1198 = vmul.f32 %v214, %v1196
        %v1201 = vrot.slane %v1197, 2
        %v1202 = vrot.slane %v1198, 2
        %v1203 = vsel %vm1134, %v1201, %v1202
        %v1205 = vadd.f32 %v1010, %v1203
        %s1206 = sld [smem:[#allocation2 + $0x102]]
        %v1207 = vstv %s1206
        %v1208 = vmul.f32 %v213, %v1207
        %v1209 = vmul.f32 %v214, %v1207
        %v1212 = vrot.slane %v1208, 2
        %v1213 = vrot.slane %v1209, 2
        %v1214 = vsel %vm1134, %v1212, %v1213
        %v1216 = vadd.f32 %v1023, %v1214
        %s1217 = sld [smem:[#allocation2 + $0x126]]
        %v1218 = vstv %s1217
        %v1219 = vmul.f32 %v213, %v1218
        %v1220 = vmul.f32 %v214, %v1218
        %v1223 = vrot.slane %v1219, 2
        %v1224 = vrot.slane %v1220, 2
        %v1225 = vsel %vm1134, %v1223, %v1224
        %v1227 = vadd.f32 %v1036, %v1225
        %s1228 = sld [smem:[#allocation2 + $0x14a]]
        %v1229 = vstv %s1228
        %v1230 = vmul.f32 %v213, %v1229
        %v1231 = vmul.f32 %v214, %v1229
        %v1234 = vrot.slane %v1230, 2
        %v1235 = vrot.slane %v1231, 2
        %v1236 = vsel %vm1134, %v1234, %v1235
        %v1238 = vadd.f32 %v1049, %v1236
        %s1239 = sld [smem:[#allocation2 + $0x16e]]
        %v1240 = vstv %s1239
        %v1241 = vmul.f32 %v213, %v1240
        %v1242 = vmul.f32 %v214, %v1240
        %v1245 = vrot.slane %v1241, 2
        %v1246 = vrot.slane %v1242, 2
        %v1247 = vsel %vm1134, %v1245, %v1246
        %v1249 = vadd.f32 %v1062, %v1247
        %s1250 = sld [smem:[#allocation2 + $0x192]]
        %v1251 = vstv %s1250
        %v1252 = vmul.f32 %v213, %v1251
        %v1253 = vmul.f32 %v214, %v1251
        %v1256 = vrot.slane %v1252, 2
        %v1257 = vrot.slane %v1253, 2
        %v1258 = vsel %vm1134, %v1256, %v1257
        %v1260 = vadd.f32 %v1075, %v1258
        %s1261 = sld [smem:[#allocation2 + $0x1b6]]
        %v1262 = vstv %s1261
        %v1263 = vmul.f32 %v213, %v1262
        %v1264 = vmul.f32 %v214, %v1262
        %v1267 = vrot.slane %v1263, 2
        %v1268 = vrot.slane %v1264, 2
        %v1269 = vsel %vm1134, %v1267, %v1268
        %v1271 = vadd.f32 %v1088, %v1269
        %s1272 = sld [smem:[#allocation2 + $0x1da]]
        %v1273 = vstv %s1272
        %v1274 = vmul.f32 %v213, %v1273
        %v1275 = vmul.f32 %v214, %v1273
        %v1278 = vrot.slane %v1274, 2
        %v1279 = vrot.slane %v1275, 2
        %v1280 = vsel %vm1134, %v1278, %v1279
        %v1282 = vadd.f32 %v1101, %v1280
        %s1283 = sld [smem:[#allocation2 + $0x1fe]]
        %v1284 = vstv %s1283
        %v1285 = vmul.f32 %v213, %v1284
        %v1286 = vmul.f32 %v214, %v1284
        %v1289 = vrot.slane %v1285, 2
        %v1290 = vrot.slane %v1286, 2
        %v1291 = vsel %vm1134, %v1289, %v1290
        %v1293 = vadd.f32 %v1114, %v1291
        %s1294 = sld [smem:[#allocation2 + $0x222]]
        %v1295 = vstv %s1294
        %v1296 = vmul.f32 %v213, %v1295
        %v1297 = vmul.f32 %v214, %v1295
        %v1300 = vrot.slane %v1296, 2
        %v1301 = vrot.slane %v1297, 2
        %v1302 = vsel %vm1134, %v1300, %v1301
        %v1304 = vadd.f32 %v1127, %v1302
        %s1305 = sld [smem:[#allocation2 + $0x7]]
        %v1306 = vstv %s1305
        %v1307 = vmul.f32 %v213, %v1306
        %v1308 = vmul.f32 %v214, %v1306
        %v1311 = vrot.slane %v1307, 2
        %v1312 = vrot.slane %v1308, 2
        %v1313 = vsel %vm1134, %v1311, %v1312
        %1314 = vrot.lane.b32.xlu0 %v1313, 127
        %v1315 = vpop.permute.xlu0 %1314
        %v1317 = vadd.f32 %v1139, %v1315
        %s1318 = sld [smem:[#allocation2 + $0x2b]]
        %v1319 = vstv %s1318
        %v1320 = vmul.f32 %v213, %v1319
        %v1321 = vmul.f32 %v214, %v1319
        %v1324 = vrot.slane %v1320, 2
        %v1325 = vrot.slane %v1321, 2
        %v1326 = vsel %vm1134, %v1324, %v1325
        %1327 = vrot.lane.b32.xlu0 %v1326, 127
        %v1328 = vpop.permute.xlu0 %1327
        %v1330 = vadd.f32 %v1150, %v1328
        %s1331 = sld [smem:[#allocation2 + $0x4f]]
        %v1332 = vstv %s1331
        %v1333 = vmul.f32 %v213, %v1332
        %v1334 = vmul.f32 %v214, %v1332
        %v1337 = vrot.slane %v1333, 2
        %v1338 = vrot.slane %v1334, 2
        %v1339 = vsel %vm1134, %v1337, %v1338
        %1340 = vrot.lane.b32.xlu0 %v1339, 127
        %v1341 = vpop.permute.xlu0 %1340
        %v1343 = vadd.f32 %v1161, %v1341
        %s1344 = sld [smem:[#allocation2 + $0x73]]
        %v1345 = vstv %s1344
        %v1346 = vmul.f32 %v213, %v1345
        %v1347 = vmul.f32 %v214, %v1345
        %v1350 = vrot.slane %v1346, 2
        %v1351 = vrot.slane %v1347, 2
        %v1352 = vsel %vm1134, %v1350, %v1351
        %1353 = vrot.lane.b32.xlu0 %v1352, 127
        %v1354 = vpop.permute.xlu0 %1353
        %v1356 = vadd.f32 %v1172, %v1354
        %s1357 = sld [smem:[#allocation2 + $0x97]]
        %v1358 = vstv %s1357
        %v1359 = vmul.f32 %v213, %v1358
        %v1360 = vmul.f32 %v214, %v1358
        %v1363 = vrot.slane %v1359, 2
        %v1364 = vrot.slane %v1360, 2
        %v1365 = vsel %vm1134, %v1363, %v1364
        %1366 = vrot.lane.b32.xlu0 %v1365, 127
        %v1367 = vpop.permute.xlu0 %1366
        %v1369 = vadd.f32 %v1183, %v1367
        %s1370 = sld [smem:[#allocation2 + $0xbb]]
        %v1371 = vstv %s1370
        %v1372 = vmul.f32 %v213, %v1371
        %v1373 = vmul.f32 %v214, %v1371
        %v1376 = vrot.slane %v1372, 2
        %v1377 = vrot.slane %v1373, 2
        %v1378 = vsel %vm1134, %v1376, %v1377
        %1379 = vrot.lane.b32.xlu0 %v1378, 127
        %v1380 = vpop.permute.xlu0 %1379
        %v1382 = vadd.f32 %v1194, %v1380
        %s1383 = sld [smem:[#allocation2 + $0xdf]]
        %v1384 = vstv %s1383
        %v1385 = vmul.f32 %v213, %v1384
        %v1386 = vmul.f32 %v214, %v1384
        %v1389 = vrot.slane %v1385, 2
        %v1390 = vrot.slane %v1386, 2
        %v1391 = vsel %vm1134, %v1389, %v1390
        %1392 = vrot.lane.b32.xlu0 %v1391, 127
        %v1393 = vpop.permute.xlu0 %1392
        %v1395 = vadd.f32 %v1205, %v1393
        %s1396 = sld [smem:[#allocation2 + $0x103]]
        %v1397 = vstv %s1396
        %v1398 = vmul.f32 %v213, %v1397
        %v1399 = vmul.f32 %v214, %v1397
        %v1402 = vrot.slane %v1398, 2
        %v1403 = vrot.slane %v1399, 2
        %v1404 = vsel %vm1134, %v1402, %v1403
        %1405 = vrot.lane.b32.xlu0 %v1404, 127
        %v1406 = vpop.permute.xlu0 %1405
        %v1408 = vadd.f32 %v1216, %v1406
        %s1409 = sld [smem:[#allocation2 + $0x127]]
        %v1410 = vstv %s1409
        %v1411 = vmul.f32 %v213, %v1410
        %v1412 = vmul.f32 %v214, %v1410
        %v1415 = vrot.slane %v1411, 2
        %v1416 = vrot.slane %v1412, 2
        %v1417 = vsel %vm1134, %v1415, %v1416
        %1418 = vrot.lane.b32.xlu0 %v1417, 127
        %v1419 = vpop.permute.xlu0 %1418
        %v1421 = vadd.f32 %v1227, %v1419
        %s1422 = sld [smem:[#allocation2 + $0x14b]]
        %v1423 = vstv %s1422
        %v1424 = vmul.f32 %v213, %v1423
        %v1425 = vmul.f32 %v214, %v1423
        %v1428 = vrot.slane %v1424, 2
        %v1429 = vrot.slane %v1425, 2
        %v1430 = vsel %vm1134, %v1428, %v1429
        %1431 = vrot.lane.b32.xlu0 %v1430, 127
        %v1432 = vpop.permute.xlu0 %1431
        %v1434 = vadd.f32 %v1238, %v1432
        %s1435 = sld [smem:[#allocation2 + $0x16f]]
        %v1436 = vstv %s1435
        %v1437 = vmul.f32 %v213, %v1436
        %v1438 = vmul.f32 %v214, %v1436
        %v1441 = vrot.slane %v1437, 2
        %v1442 = vrot.slane %v1438, 2
        %v1443 = vsel %vm1134, %v1441, %v1442
        %1444 = vrot.lane.b32.xlu0 %v1443, 127
        %v1445 = vpop.permute.xlu0 %1444
        %v1447 = vadd.f32 %v1249, %v1445
        %s1448 = sld [smem:[#allocation2 + $0x193]]
        %v1449 = vstv %s1448
        %v1450 = vmul.f32 %v213, %v1449
        %v1451 = vmul.f32 %v214, %v1449
        %v1454 = vrot.slane %v1450, 2
        %v1455 = vrot.slane %v1451, 2
        %v1456 = vsel %vm1134, %v1454, %v1455
        %1457 = vrot.lane.b32.xlu0 %v1456, 127
        %v1458 = vpop.permute.xlu0 %1457
        %v1460 = vadd.f32 %v1260, %v1458
        %s1461 = sld [smem:[#allocation2 + $0x1b7]]
        %v1462 = vstv %s1461
        %v1463 = vmul.f32 %v213, %v1462
        %v1464 = vmul.f32 %v214, %v1462
        %v1467 = vrot.slane %v1463, 2
        %v1468 = vrot.slane %v1464, 2
        %v1469 = vsel %vm1134, %v1467, %v1468
        %1470 = vrot.lane.b32.xlu0 %v1469, 127
        %v1471 = vpop.permute.xlu0 %1470
        %v1473 = vadd.f32 %v1271, %v1471
        %s1474 = sld [smem:[#allocation2 + $0x1db]]
        %v1475 = vstv %s1474
        %v1476 = vmul.f32 %v213, %v1475
        %v1477 = vmul.f32 %v214, %v1475
        %v1480 = vrot.slane %v1476, 2
        %v1481 = vrot.slane %v1477, 2
        %v1482 = vsel %vm1134, %v1480, %v1481
        %1483 = vrot.lane.b32.xlu0 %v1482, 127
        %v1484 = vpop.permute.xlu0 %1483
        %v1486 = vadd.f32 %v1282, %v1484
        %s1487 = sld [smem:[#allocation2 + $0x1ff]]
        %v1488 = vstv %s1487
        %v1489 = vmul.f32 %v213, %v1488
        %v1490 = vmul.f32 %v214, %v1488
        %v1493 = vrot.slane %v1489, 2
        %v1494 = vrot.slane %v1490, 2
        %v1495 = vsel %vm1134, %v1493, %v1494
        %1496 = vrot.lane.b32.xlu0 %v1495, 127
        %v1497 = vpop.permute.xlu0 %1496
        %v1499 = vadd.f32 %v1293, %v1497
        %s1500 = sld [smem:[#allocation2 + $0x223]]
        %v1501 = vstv %s1500
        %v1502 = vmul.f32 %v213, %v1501
        %v1503 = vmul.f32 %v214, %v1501
        %v1506 = vrot.slane %v1502, 2
        %v1507 = vrot.slane %v1503, 2
        %v1508 = vsel %vm1134, %v1506, %v1507
        %1509 = vrot.lane.b32.xlu0 %v1508, 127
        %v1510 = vpop.permute.xlu0 %1509
        %v1512 = vadd.f32 %v1304, %v1510
        %s1513 = sld [smem:[#allocation2 + $0x8]]
        %v1514 = vstv %s1513
        %v1515 = vmul.f32 %v213, %v1514
        %v1516 = vmul.f32 %v214, %v1514
        %v1519 = vrot.slane %v1515, 2
        %v1520 = vrot.slane %v1516, 2
        %v1521 = vsel %vm1134, %v1519, %v1520
        %1522 = vrot.lane.b32.xlu0 %v1521, 126
        %v1523 = vpop.permute.xlu0 %1522
        %v1525 = vadd.f32 %v1317, %v1523
        %s1526 = sld [smem:[#allocation2 + $0x2c]]
        %v1527 = vstv %s1526
        %v1528 = vmul.f32 %v213, %v1527
        %v1529 = vmul.f32 %v214, %v1527
        %v1532 = vrot.slane %v1528, 2
        %v1533 = vrot.slane %v1529, 2
        %v1534 = vsel %vm1134, %v1532, %v1533
        %1535 = vrot.lane.b32.xlu0 %v1534, 126
        %v1536 = vpop.permute.xlu0 %1535
        %v1538 = vadd.f32 %v1330, %v1536
        %s1539 = sld [smem:[#allocation2 + $0x50]]
        %v1540 = vstv %s1539
        %v1541 = vmul.f32 %v213, %v1540
        %v1542 = vmul.f32 %v214, %v1540
        %v1545 = vrot.slane %v1541, 2
        %v1546 = vrot.slane %v1542, 2
        %v1547 = vsel %vm1134, %v1545, %v1546
        %1548 = vrot.lane.b32.xlu0 %v1547, 126
        %v1549 = vpop.permute.xlu0 %1548
        %v1551 = vadd.f32 %v1343, %v1549
        %s1552 = sld [smem:[#allocation2 + $0x74]]
        %v1553 = vstv %s1552
        %v1554 = vmul.f32 %v213, %v1553
        %v1555 = vmul.f32 %v214, %v1553
        %v1558 = vrot.slane %v1554, 2
        %v1559 = vrot.slane %v1555, 2
        %v1560 = vsel %vm1134, %v1558, %v1559
        %1561 = vrot.lane.b32.xlu0 %v1560, 126
        %v1562 = vpop.permute.xlu0 %1561
        %v1564 = vadd.f32 %v1356, %v1562
        %s1565 = sld [smem:[#allocation2 + $0x98]]
        %v1566 = vstv %s1565
        %v1567 = vmul.f32 %v213, %v1566
        %v1568 = vmul.f32 %v214, %v1566
        %v1571 = vrot.slane %v1567, 2
        %v1572 = vrot.slane %v1568, 2
        %v1573 = vsel %vm1134, %v1571, %v1572
        %1574 = vrot.lane.b32.xlu0 %v1573, 126
        %v1575 = vpop.permute.xlu0 %1574
        %v1577 = vadd.f32 %v1369, %v1575
        %s1578 = sld [smem:[#allocation2 + $0xbc]]
        %v1579 = vstv %s1578
        %v1580 = vmul.f32 %v213, %v1579
        %v1581 = vmul.f32 %v214, %v1579
        %v1584 = vrot.slane %v1580, 2
        %v1585 = vrot.slane %v1581, 2
        %v1586 = vsel %vm1134, %v1584, %v1585
        %1587 = vrot.lane.b32.xlu0 %v1586, 126
        %v1588 = vpop.permute.xlu0 %1587
        %v1590 = vadd.f32 %v1382, %v1588
        %s1591 = sld [smem:[#allocation2 + $0xe0]]
        %v1592 = vstv %s1591
        %v1593 = vmul.f32 %v213, %v1592
        %v1594 = vmul.f32 %v214, %v1592
        %v1597 = vrot.slane %v1593, 2
        %v1598 = vrot.slane %v1594, 2
        %v1599 = vsel %vm1134, %v1597, %v1598
        %1600 = vrot.lane.b32.xlu0 %v1599, 126
        %v1601 = vpop.permute.xlu0 %1600
        %v1603 = vadd.f32 %v1395, %v1601
        %s1604 = sld [smem:[#allocation2 + $0x104]]
        %v1605 = vstv %s1604
        %v1606 = vmul.f32 %v213, %v1605
        %v1607 = vmul.f32 %v214, %v1605
        %v1610 = vrot.slane %v1606, 2
        %v1611 = vrot.slane %v1607, 2
        %v1612 = vsel %vm1134, %v1610, %v1611
        %1613 = vrot.lane.b32.xlu0 %v1612, 126
        %v1614 = vpop.permute.xlu0 %1613
        %v1616 = vadd.f32 %v1408, %v1614
        %s1617 = sld [smem:[#allocation2 + $0x128]]
        %v1618 = vstv %s1617
        %v1619 = vmul.f32 %v213, %v1618
        %v1620 = vmul.f32 %v214, %v1618
        %v1623 = vrot.slane %v1619, 2
        %v1624 = vrot.slane %v1620, 2
        %v1625 = vsel %vm1134, %v1623, %v1624
        %1626 = vrot.lane.b32.xlu0 %v1625, 126
        %v1627 = vpop.permute.xlu0 %1626
        %v1629 = vadd.f32 %v1421, %v1627
        %s1630 = sld [smem:[#allocation2 + $0x14c]]
        %v1631 = vstv %s1630
        %v1632 = vmul.f32 %v213, %v1631
        %v1633 = vmul.f32 %v214, %v1631
        %v1636 = vrot.slane %v1632, 2
        %v1637 = vrot.slane %v1633, 2
        %v1638 = vsel %vm1134, %v1636, %v1637
        %1639 = vrot.lane.b32.xlu0 %v1638, 126
        %v1640 = vpop.permute.xlu0 %1639
        %v1642 = vadd.f32 %v1434, %v1640
        %s1643 = sld [smem:[#allocation2 + $0x170]]
        %v1644 = vstv %s1643
        %v1645 = vmul.f32 %v213, %v1644
        %v1646 = vmul.f32 %v214, %v1644
        %v1649 = vrot.slane %v1645, 2
        %v1650 = vrot.slane %v1646, 2
        %v1651 = vsel %vm1134, %v1649, %v1650
        %1652 = vrot.lane.b32.xlu0 %v1651, 126
        %v1653 = vpop.permute.xlu0 %1652
        %v1655 = vadd.f32 %v1447, %v1653
        %s1656 = sld [smem:[#allocation2 + $0x194]]
        %v1657 = vstv %s1656
        %v1658 = vmul.f32 %v213, %v1657
        %v1659 = vmul.f32 %v214, %v1657
        %v1662 = vrot.slane %v1658, 2
        %v1663 = vrot.slane %v1659, 2
        %v1664 = vsel %vm1134, %v1662, %v1663
        %1665 = vrot.lane.b32.xlu0 %v1664, 126
        %v1666 = vpop.permute.xlu0 %1665
        %v1668 = vadd.f32 %v1460, %v1666
        %s1669 = sld [smem:[#allocation2 + $0x1b8]]
        %v1670 = vstv %s1669
        %v1671 = vmul.f32 %v213, %v1670
        %v1672 = vmul.f32 %v214, %v1670
        %v1675 = vrot.slane %v1671, 2
        %v1676 = vrot.slane %v1672, 2
        %v1677 = vsel %vm1134, %v1675, %v1676
        %1678 = vrot.lane.b32.xlu0 %v1677, 126
        %v1679 = vpop.permute.xlu0 %1678
        %v1681 = vadd.f32 %v1473, %v1679
        %s1682 = sld [smem:[#allocation2 + $0x1dc]]
        %v1683 = vstv %s1682
        %v1684 = vmul.f32 %v213, %v1683
        %v1685 = vmul.f32 %v214, %v1683
        %v1688 = vrot.slane %v1684, 2
        %v1689 = vrot.slane %v1685, 2
        %v1690 = vsel %vm1134, %v1688, %v1689
        %1691 = vrot.lane.b32.xlu0 %v1690, 126
        %v1692 = vpop.permute.xlu0 %1691
        %v1694 = vadd.f32 %v1486, %v1692
        %s1695 = sld [smem:[#allocation2 + $0x200]]
        %v1696 = vstv %s1695
        %v1697 = vmul.f32 %v213, %v1696
        %v1698 = vmul.f32 %v214, %v1696
        %v1701 = vrot.slane %v1697, 2
        %v1702 = vrot.slane %v1698, 2
        %v1703 = vsel %vm1134, %v1701, %v1702
        %1704 = vrot.lane.b32.xlu0 %v1703, 126
        %v1705 = vpop.permute.xlu0 %1704
        %v1707 = vadd.f32 %v1499, %v1705
        %s1708 = sld [smem:[#allocation2 + $0x224]]
        %v1709 = vstv %s1708
        %v1710 = vmul.f32 %v213, %v1709
        %v1711 = vmul.f32 %v214, %v1709
        %v1714 = vrot.slane %v1710, 2
        %v1715 = vrot.slane %v1711, 2
        %v1716 = vsel %vm1134, %v1714, %v1715
        %1717 = vrot.lane.b32.xlu0 %v1716, 126
        %v1718 = vpop.permute.xlu0 %1717
        %v1720 = vadd.f32 %v1512, %v1718
        %s1721 = sadd.s32 %s211, 24
        %s1722 = scalar_lea.vmem %s209, %s1721
        %v1723 = vld [vmem:[%s1722] sm:$0xff]
        %v1724 = vld [vmem:[%s1722 + $0x8] sm:$0x3]
        %s1725 = sld [smem:[#allocation2 + $0x9]]
        %v1726 = vstv %s1725
        %v1727 = vmul.f32 %v1723, %v1726
        %v1728 = vadd.f32 %v1525, %v1727
        %s1729 = sld [smem:[#allocation2 + $0x2d]]
        %v1730 = vstv %s1729
        %v1731 = vmul.f32 %v1723, %v1730
        %v1732 = vadd.f32 %v1538, %v1731
        %s1733 = sld [smem:[#allocation2 + $0x51]]
        %v1734 = vstv %s1733
        %v1735 = vmul.f32 %v1723, %v1734
        %v1736 = vadd.f32 %v1551, %v1735
        %s1737 = sld [smem:[#allocation2 + $0x75]]
        %v1738 = vstv %s1737
        %v1739 = vmul.f32 %v1723, %v1738
        %v1740 = vadd.f32 %v1564, %v1739
        %s1741 = sld [smem:[#allocation2 + $0x99]]
        %v1742 = vstv %s1741
        %v1743 = vmul.f32 %v1723, %v1742
        %v1744 = vadd.f32 %v1577, %v1743
        %s1745 = sld [smem:[#allocation2 + $0xbd]]
        %v1746 = vstv %s1745
        %v1747 = vmul.f32 %v1723, %v1746
        %v1748 = vadd.f32 %v1590, %v1747
        %s1749 = sld [smem:[#allocation2 + $0xe1]]
        %v1750 = vstv %s1749
        %v1751 = vmul.f32 %v1723, %v1750
        %v1752 = vadd.f32 %v1603, %v1751
        %s1753 = sld [smem:[#allocation2 + $0x105]]
        %v1754 = vstv %s1753
        %v1755 = vmul.f32 %v1723, %v1754
        %v1756 = vadd.f32 %v1616, %v1755
        %s1757 = sld [smem:[#allocation2 + $0x129]]
        %v1758 = vstv %s1757
        %v1759 = vmul.f32 %v1723, %v1758
        %v1760 = vadd.f32 %v1629, %v1759
        %s1761 = sld [smem:[#allocation2 + $0x14d]]
        %v1762 = vstv %s1761
        %v1763 = vmul.f32 %v1723, %v1762
        %v1764 = vadd.f32 %v1642, %v1763
        %s1765 = sld [smem:[#allocation2 + $0x171]]
        %v1766 = vstv %s1765
        %v1767 = vmul.f32 %v1723, %v1766
        %v1768 = vadd.f32 %v1655, %v1767
        %s1769 = sld [smem:[#allocation2 + $0x195]]
        %v1770 = vstv %s1769
        %v1771 = vmul.f32 %v1723, %v1770
        %v1772 = vadd.f32 %v1668, %v1771
        %s1773 = sld [smem:[#allocation2 + $0x1b9]]
        %v1774 = vstv %s1773
        %v1775 = vmul.f32 %v1723, %v1774
        %v1776 = vadd.f32 %v1681, %v1775
        %s1777 = sld [smem:[#allocation2 + $0x1dd]]
        %v1778 = vstv %s1777
        %v1779 = vmul.f32 %v1723, %v1778
        %v1780 = vadd.f32 %v1694, %v1779
        %s1781 = sld [smem:[#allocation2 + $0x201]]
        %v1782 = vstv %s1781
        %v1783 = vmul.f32 %v1723, %v1782
        %v1784 = vadd.f32 %v1707, %v1783
        %s1785 = sld [smem:[#allocation2 + $0x225]]
        %v1786 = vstv %s1785
        %v1787 = vmul.f32 %v1723, %v1786
        %v1788 = vadd.f32 %v1720, %v1787
        %s1789 = sld [smem:[#allocation2 + $0xa]]
        %v1790 = vstv %s1789
        %v1791 = vmul.f32 %v1723, %v1790
        %1793 = vrot.lane.b32.xlu0 %v1791, 127
        %v1794 = vpop.permute.xlu0 %1793
        %v1796 = vadd.f32 %v1728, %v1794
        %s1797 = sld [smem:[#allocation2 + $0x2e]]
        %v1798 = vstv %s1797
        %v1799 = vmul.f32 %v1723, %v1798
        %1801 = vrot.lane.b32.xlu0 %v1799, 127
        %v1802 = vpop.permute.xlu0 %1801
        %v1804 = vadd.f32 %v1732, %v1802
        %s1805 = sld [smem:[#allocation2 + $0x52]]
        %v1806 = vstv %s1805
        %v1807 = vmul.f32 %v1723, %v1806
        %1809 = vrot.lane.b32.xlu0 %v1807, 127
        %v1810 = vpop.permute.xlu0 %1809
        %v1812 = vadd.f32 %v1736, %v1810
        %s1813 = sld [smem:[#allocation2 + $0x76]]
        %v1814 = vstv %s1813
        %v1815 = vmul.f32 %v1723, %v1814
        %1817 = vrot.lane.b32.xlu0 %v1815, 127
        %v1818 = vpop.permute.xlu0 %1817
        %v1820 = vadd.f32 %v1740, %v1818
        %s1821 = sld [smem:[#allocation2 + $0x9a]]
        %v1822 = vstv %s1821
        %v1823 = vmul.f32 %v1723, %v1822
        %1825 = vrot.lane.b32.xlu0 %v1823, 127
        %v1826 = vpop.permute.xlu0 %1825
        %v1828 = vadd.f32 %v1744, %v1826
        %s1829 = sld [smem:[#allocation2 + $0xbe]]
        %v1830 = vstv %s1829
        %v1831 = vmul.f32 %v1723, %v1830
        %1833 = vrot.lane.b32.xlu0 %v1831, 127
        %v1834 = vpop.permute.xlu0 %1833
        %v1836 = vadd.f32 %v1748, %v1834
        %s1837 = sld [smem:[#allocation2 + $0xe2]]
        %v1838 = vstv %s1837
        %v1839 = vmul.f32 %v1723, %v1838
        %1841 = vrot.lane.b32.xlu0 %v1839, 127
        %v1842 = vpop.permute.xlu0 %1841
        %v1844 = vadd.f32 %v1752, %v1842
        %s1845 = sld [smem:[#allocation2 + $0x106]]
        %v1846 = vstv %s1845
        %v1847 = vmul.f32 %v1723, %v1846
        %1849 = vrot.lane.b32.xlu0 %v1847, 127
        %v1850 = vpop.permute.xlu0 %1849
        %v1852 = vadd.f32 %v1756, %v1850
        %s1853 = sld [smem:[#allocation2 + $0x12a]]
        %v1854 = vstv %s1853
        %v1855 = vmul.f32 %v1723, %v1854
        %1857 = vrot.lane.b32.xlu0 %v1855, 127
        %v1858 = vpop.permute.xlu0 %1857
        %v1860 = vadd.f32 %v1760, %v1858
        %s1861 = sld [smem:[#allocation2 + $0x14e]]
        %v1862 = vstv %s1861
        %v1863 = vmul.f32 %v1723, %v1862
        %1865 = vrot.lane.b32.xlu0 %v1863, 127
        %v1866 = vpop.permute.xlu0 %1865
        %v1868 = vadd.f32 %v1764, %v1866
        %s1869 = sld [smem:[#allocation2 + $0x172]]
        %v1870 = vstv %s1869
        %v1871 = vmul.f32 %v1723, %v1870
        %1873 = vrot.lane.b32.xlu0 %v1871, 127
        %v1874 = vpop.permute.xlu0 %1873
        %v1876 = vadd.f32 %v1768, %v1874
        %s1877 = sld [smem:[#allocation2 + $0x196]]
        %v1878 = vstv %s1877
        %v1879 = vmul.f32 %v1723, %v1878
        %1881 = vrot.lane.b32.xlu0 %v1879, 127
        %v1882 = vpop.permute.xlu0 %1881
        %v1884 = vadd.f32 %v1772, %v1882
        %s1885 = sld [smem:[#allocation2 + $0x1ba]]
        %v1886 = vstv %s1885
        %v1887 = vmul.f32 %v1723, %v1886
        %1889 = vrot.lane.b32.xlu0 %v1887, 127
        %v1890 = vpop.permute.xlu0 %1889
        %v1892 = vadd.f32 %v1776, %v1890
        %s1893 = sld [smem:[#allocation2 + $0x1de]]
        %v1894 = vstv %s1893
        %v1895 = vmul.f32 %v1723, %v1894
        %1897 = vrot.lane.b32.xlu0 %v1895, 127
        %v1898 = vpop.permute.xlu0 %1897
        %v1900 = vadd.f32 %v1780, %v1898
        %s1901 = sld [smem:[#allocation2 + $0x202]]
        %v1902 = vstv %s1901
        %v1903 = vmul.f32 %v1723, %v1902
        %1905 = vrot.lane.b32.xlu0 %v1903, 127
        %v1906 = vpop.permute.xlu0 %1905
        %v1908 = vadd.f32 %v1784, %v1906
        %s1909 = sld [smem:[#allocation2 + $0x226]]
        %v1910 = vstv %s1909
        %v1911 = vmul.f32 %v1723, %v1910
        %1913 = vrot.lane.b32.xlu0 %v1911, 127
        %v1914 = vpop.permute.xlu0 %1913
        %v1916 = vadd.f32 %v1788, %v1914
        %s1917 = sld [smem:[#allocation2 + $0xb]]
        %v1918 = vstv %s1917
        %v1919 = vmul.f32 %v1723, %v1918
        %1921 = vrot.lane.b32.xlu0 %v1919, 126
        %v1922 = vpop.permute.xlu0 %1921
        %v1924 = vadd.f32 %v1796, %v1922
        %s1925 = sld [smem:[#allocation2 + $0x2f]]
        %v1926 = vstv %s1925
        %v1927 = vmul.f32 %v1723, %v1926
        %1929 = vrot.lane.b32.xlu0 %v1927, 126
        %v1930 = vpop.permute.xlu0 %1929
        %v1932 = vadd.f32 %v1804, %v1930
        %s1933 = sld [smem:[#allocation2 + $0x53]]
        %v1934 = vstv %s1933
        %v1935 = vmul.f32 %v1723, %v1934
        %1937 = vrot.lane.b32.xlu0 %v1935, 126
        %v1938 = vpop.permute.xlu0 %1937
        %v1940 = vadd.f32 %v1812, %v1938
        %s1941 = sld [smem:[#allocation2 + $0x77]]
        %v1942 = vstv %s1941
        %v1943 = vmul.f32 %v1723, %v1942
        %1945 = vrot.lane.b32.xlu0 %v1943, 126
        %v1946 = vpop.permute.xlu0 %1945
        %v1948 = vadd.f32 %v1820, %v1946
        %s1949 = sld [smem:[#allocation2 + $0x9b]]
        %v1950 = vstv %s1949
        %v1951 = vmul.f32 %v1723, %v1950
        %1953 = vrot.lane.b32.xlu0 %v1951, 126
        %v1954 = vpop.permute.xlu0 %1953
        %v1956 = vadd.f32 %v1828, %v1954
        %s1957 = sld [smem:[#allocation2 + $0xbf]]
        %v1958 = vstv %s1957
        %v1959 = vmul.f32 %v1723, %v1958
        %1961 = vrot.lane.b32.xlu0 %v1959, 126
        %v1962 = vpop.permute.xlu0 %1961
        %v1964 = vadd.f32 %v1836, %v1962
        %s1965 = sld [smem:[#allocation2 + $0xe3]]
        %v1966 = vstv %s1965
        %v1967 = vmul.f32 %v1723, %v1966
        %1969 = vrot.lane.b32.xlu0 %v1967, 126
        %v1970 = vpop.permute.xlu0 %1969
        %v1972 = vadd.f32 %v1844, %v1970
        %s1973 = sld [smem:[#allocation2 + $0x107]]
        %v1974 = vstv %s1973
        %v1975 = vmul.f32 %v1723, %v1974
        %1977 = vrot.lane.b32.xlu0 %v1975, 126
        %v1978 = vpop.permute.xlu0 %1977
        %v1980 = vadd.f32 %v1852, %v1978
        %s1981 = sld [smem:[#allocation2 + $0x12b]]
        %v1982 = vstv %s1981
        %v1983 = vmul.f32 %v1723, %v1982
        %1985 = vrot.lane.b32.xlu0 %v1983, 126
        %v1986 = vpop.permute.xlu0 %1985
        %v1988 = vadd.f32 %v1860, %v1986
        %s1989 = sld [smem:[#allocation2 + $0x14f]]
        %v1990 = vstv %s1989
        %v1991 = vmul.f32 %v1723, %v1990
        %1993 = vrot.lane.b32.xlu0 %v1991, 126
        %v1994 = vpop.permute.xlu0 %1993
        %v1996 = vadd.f32 %v1868, %v1994
        %s1997 = sld [smem:[#allocation2 + $0x173]]
        %v1998 = vstv %s1997
        %v1999 = vmul.f32 %v1723, %v1998
        %2001 = vrot.lane.b32.xlu0 %v1999, 126
        %v2002 = vpop.permute.xlu0 %2001
        %v2004 = vadd.f32 %v1876, %v2002
        %s2005 = sld [smem:[#allocation2 + $0x197]]
        %v2006 = vstv %s2005
        %v2007 = vmul.f32 %v1723, %v2006
        %2009 = vrot.lane.b32.xlu0 %v2007, 126
        %v2010 = vpop.permute.xlu0 %2009
        %v2012 = vadd.f32 %v1884, %v2010
        %s2013 = sld [smem:[#allocation2 + $0x1bb]]
        %v2014 = vstv %s2013
        %v2015 = vmul.f32 %v1723, %v2014
        %2017 = vrot.lane.b32.xlu0 %v2015, 126
        %v2018 = vpop.permute.xlu0 %2017
        %v2020 = vadd.f32 %v1892, %v2018
        %s2021 = sld [smem:[#allocation2 + $0x1df]]
        %v2022 = vstv %s2021
        %v2023 = vmul.f32 %v1723, %v2022
        %2025 = vrot.lane.b32.xlu0 %v2023, 126
        %v2026 = vpop.permute.xlu0 %2025
        %v2028 = vadd.f32 %v1900, %v2026
        %s2029 = sld [smem:[#allocation2 + $0x203]]
        %v2030 = vstv %s2029
        %v2031 = vmul.f32 %v1723, %v2030
        %2033 = vrot.lane.b32.xlu0 %v2031, 126
        %v2034 = vpop.permute.xlu0 %2033
        %v2036 = vadd.f32 %v1908, %v2034
        %s2037 = sld [smem:[#allocation2 + $0x227]]
        %v2038 = vstv %s2037
        %v2039 = vmul.f32 %v1723, %v2038
        %2041 = vrot.lane.b32.xlu0 %v2039, 126
        %v2042 = vpop.permute.xlu0 %2041
        %v2044 = vadd.f32 %v1916, %v2042
        %s2045 = sld [smem:[#allocation2 + $0xc]]
        %v2046 = vstv %s2045
        %v2047 = vmul.f32 %v1723, %v2046
        %v2048 = vmul.f32 %v1724, %v2046
        %v2051 = vrot.slane %v2047, 1
        %v2052 = vrot.slane %v2048, 1
        %v2053 = vsel %vm541, %v2051, %v2052
        %v2055 = vadd.f32 %v1924, %v2053
        %s2056 = sld [smem:[#allocation2 + $0x30]]
        %v2057 = vstv %s2056
        %v2058 = vmul.f32 %v1723, %v2057
        %v2059 = vmul.f32 %v1724, %v2057
        %v2062 = vrot.slane %v2058, 1
        %v2063 = vrot.slane %v2059, 1
        %v2064 = vsel %vm541, %v2062, %v2063
        %v2066 = vadd.f32 %v1932, %v2064
        %s2067 = sld [smem:[#allocation2 + $0x54]]
        %v2068 = vstv %s2067
        %v2069 = vmul.f32 %v1723, %v2068
        %v2070 = vmul.f32 %v1724, %v2068
        %v2073 = vrot.slane %v2069, 1
        %v2074 = vrot.slane %v2070, 1
        %v2075 = vsel %vm541, %v2073, %v2074
        %v2077 = vadd.f32 %v1940, %v2075
        %s2078 = sld [smem:[#allocation2 + $0x78]]
        %v2079 = vstv %s2078
        %v2080 = vmul.f32 %v1723, %v2079
        %v2081 = vmul.f32 %v1724, %v2079
        %v2084 = vrot.slane %v2080, 1
        %v2085 = vrot.slane %v2081, 1
        %v2086 = vsel %vm541, %v2084, %v2085
        %v2088 = vadd.f32 %v1948, %v2086
        %s2089 = sld [smem:[#allocation2 + $0x9c]]
        %v2090 = vstv %s2089
        %v2091 = vmul.f32 %v1723, %v2090
        %v2092 = vmul.f32 %v1724, %v2090
        %v2095 = vrot.slane %v2091, 1
        %v2096 = vrot.slane %v2092, 1
        %v2097 = vsel %vm541, %v2095, %v2096
        %v2099 = vadd.f32 %v1956, %v2097
        %s2100 = sld [smem:[#allocation2 + $0xc0]]
        %v2101 = vstv %s2100
        %v2102 = vmul.f32 %v1723, %v2101
        %v2103 = vmul.f32 %v1724, %v2101
        %v2106 = vrot.slane %v2102, 1
        %v2107 = vrot.slane %v2103, 1
        %v2108 = vsel %vm541, %v2106, %v2107
        %v2110 = vadd.f32 %v1964, %v2108
        %s2111 = sld [smem:[#allocation2 + $0xe4]]
        %v2112 = vstv %s2111
        %v2113 = vmul.f32 %v1723, %v2112
        %v2114 = vmul.f32 %v1724, %v2112
        %v2117 = vrot.slane %v2113, 1
        %v2118 = vrot.slane %v2114, 1
        %v2119 = vsel %vm541, %v2117, %v2118
        %v2121 = vadd.f32 %v1972, %v2119
        %s2122 = sld [smem:[#allocation2 + $0x108]]
        %v2123 = vstv %s2122
        %v2124 = vmul.f32 %v1723, %v2123
        %v2125 = vmul.f32 %v1724, %v2123
        %v2128 = vrot.slane %v2124, 1
        %v2129 = vrot.slane %v2125, 1
        %v2130 = vsel %vm541, %v2128, %v2129
        %v2132 = vadd.f32 %v1980, %v2130
        %s2133 = sld [smem:[#allocation2 + $0x12c]]
        %v2134 = vstv %s2133
        %v2135 = vmul.f32 %v1723, %v2134
        %v2136 = vmul.f32 %v1724, %v2134
        %v2139 = vrot.slane %v2135, 1
        %v2140 = vrot.slane %v2136, 1
        %v2141 = vsel %vm541, %v2139, %v2140
        %v2143 = vadd.f32 %v1988, %v2141
        %s2144 = sld [smem:[#allocation2 + $0x150]]
        %v2145 = vstv %s2144
        %v2146 = vmul.f32 %v1723, %v2145
        %v2147 = vmul.f32 %v1724, %v2145
        %v2150 = vrot.slane %v2146, 1
        %v2151 = vrot.slane %v2147, 1
        %v2152 = vsel %vm541, %v2150, %v2151
        %v2154 = vadd.f32 %v1996, %v2152
        %s2155 = sld [smem:[#allocation2 + $0x174]]
        %v2156 = vstv %s2155
        %v2157 = vmul.f32 %v1723, %v2156
        %v2158 = vmul.f32 %v1724, %v2156
        %v2161 = vrot.slane %v2157, 1
        %v2162 = vrot.slane %v2158, 1
        %v2163 = vsel %vm541, %v2161, %v2162
        %v2165 = vadd.f32 %v2004, %v2163
        %s2166 = sld [smem:[#allocation2 + $0x198]]
        %v2167 = vstv %s2166
        %v2168 = vmul.f32 %v1723, %v2167
        %v2169 = vmul.f32 %v1724, %v2167
        %v2172 = vrot.slane %v2168, 1
        %v2173 = vrot.slane %v2169, 1
        %v2174 = vsel %vm541, %v2172, %v2173
        %v2176 = vadd.f32 %v2012, %v2174
        %s2177 = sld [smem:[#allocation2 + $0x1bc]]
        %v2178 = vstv %s2177
        %v2179 = vmul.f32 %v1723, %v2178
        %v2180 = vmul.f32 %v1724, %v2178
        %v2183 = vrot.slane %v2179, 1
        %v2184 = vrot.slane %v2180, 1
        %v2185 = vsel %vm541, %v2183, %v2184
        %v2187 = vadd.f32 %v2020, %v2185
        %s2188 = sld [smem:[#allocation2 + $0x1e0]]
        %v2189 = vstv %s2188
        %v2190 = vmul.f32 %v1723, %v2189
        %v2191 = vmul.f32 %v1724, %v2189
        %v2194 = vrot.slane %v2190, 1
        %v2195 = vrot.slane %v2191, 1
        %v2196 = vsel %vm541, %v2194, %v2195
        %v2198 = vadd.f32 %v2028, %v2196
        %s2199 = sld [smem:[#allocation2 + $0x204]]
        %v2200 = vstv %s2199
        %v2201 = vmul.f32 %v1723, %v2200
        %v2202 = vmul.f32 %v1724, %v2200
        %v2205 = vrot.slane %v2201, 1
        %v2206 = vrot.slane %v2202, 1
        %v2207 = vsel %vm541, %v2205, %v2206
        %v2209 = vadd.f32 %v2036, %v2207
        %s2210 = sld [smem:[#allocation2 + $0x228]]
        %v2211 = vstv %s2210
        %v2212 = vmul.f32 %v1723, %v2211
        %v2213 = vmul.f32 %v1724, %v2211
        %v2216 = vrot.slane %v2212, 1
        %v2217 = vrot.slane %v2213, 1
        %v2218 = vsel %vm541, %v2216, %v2217
        %v2220 = vadd.f32 %v2044, %v2218
        %s2221 = sld [smem:[#allocation2 + $0xd]]
        %v2222 = vstv %s2221
        %v2223 = vmul.f32 %v1723, %v2222
        %v2224 = vmul.f32 %v1724, %v2222
        %v2227 = vrot.slane %v2223, 1
        %v2228 = vrot.slane %v2224, 1
        %v2229 = vsel %vm541, %v2227, %v2228
        %2230 = vrot.lane.b32.xlu0 %v2229, 127
        %v2231 = vpop.permute.xlu0 %2230
        %v2233 = vadd.f32 %v2055, %v2231
        %s2234 = sld [smem:[#allocation2 + $0x31]]
        %v2235 = vstv %s2234
        %v2236 = vmul.f32 %v1723, %v2235
        %v2237 = vmul.f32 %v1724, %v2235
        %v2240 = vrot.slane %v2236, 1
        %v2241 = vrot.slane %v2237, 1
        %v2242 = vsel %vm541, %v2240, %v2241
        %2243 = vrot.lane.b32.xlu0 %v2242, 127
        %v2244 = vpop.permute.xlu0 %2243
        %v2246 = vadd.f32 %v2066, %v2244
        %s2247 = sld [smem:[#allocation2 + $0x55]]
        %v2248 = vstv %s2247
        %v2249 = vmul.f32 %v1723, %v2248
        %v2250 = vmul.f32 %v1724, %v2248
        %v2253 = vrot.slane %v2249, 1
        %v2254 = vrot.slane %v2250, 1
        %v2255 = vsel %vm541, %v2253, %v2254
        %2256 = vrot.lane.b32.xlu0 %v2255, 127
        %v2257 = vpop.permute.xlu0 %2256
        %v2259 = vadd.f32 %v2077, %v2257
        %s2260 = sld [smem:[#allocation2 + $0x79]]
        %v2261 = vstv %s2260
        %v2262 = vmul.f32 %v1723, %v2261
        %v2263 = vmul.f32 %v1724, %v2261
        %v2266 = vrot.slane %v2262, 1
        %v2267 = vrot.slane %v2263, 1
        %v2268 = vsel %vm541, %v2266, %v2267
        %2269 = vrot.lane.b32.xlu0 %v2268, 127
        %v2270 = vpop.permute.xlu0 %2269
        %v2272 = vadd.f32 %v2088, %v2270
        %s2273 = sld [smem:[#allocation2 + $0x9d]]
        %v2274 = vstv %s2273
        %v2275 = vmul.f32 %v1723, %v2274
        %v2276 = vmul.f32 %v1724, %v2274
        %v2279 = vrot.slane %v2275, 1
        %v2280 = vrot.slane %v2276, 1
        %v2281 = vsel %vm541, %v2279, %v2280
        %2282 = vrot.lane.b32.xlu0 %v2281, 127
        %v2283 = vpop.permute.xlu0 %2282
        %v2285 = vadd.f32 %v2099, %v2283
        %s2286 = sld [smem:[#allocation2 + $0xc1]]
        %v2287 = vstv %s2286
        %v2288 = vmul.f32 %v1723, %v2287
        %v2289 = vmul.f32 %v1724, %v2287
        %v2292 = vrot.slane %v2288, 1
        %v2293 = vrot.slane %v2289, 1
        %v2294 = vsel %vm541, %v2292, %v2293
        %2295 = vrot.lane.b32.xlu0 %v2294, 127
        %v2296 = vpop.permute.xlu0 %2295
        %v2298 = vadd.f32 %v2110, %v2296
        %s2299 = sld [smem:[#allocation2 + $0xe5]]
        %v2300 = vstv %s2299
        %v2301 = vmul.f32 %v1723, %v2300
        %v2302 = vmul.f32 %v1724, %v2300
        %v2305 = vrot.slane %v2301, 1
        %v2306 = vrot.slane %v2302, 1
        %v2307 = vsel %vm541, %v2305, %v2306
        %2308 = vrot.lane.b32.xlu0 %v2307, 127
        %v2309 = vpop.permute.xlu0 %2308
        %v2311 = vadd.f32 %v2121, %v2309
        %s2312 = sld [smem:[#allocation2 + $0x109]]
        %v2313 = vstv %s2312
        %v2314 = vmul.f32 %v1723, %v2313
        %v2315 = vmul.f32 %v1724, %v2313
        %v2318 = vrot.slane %v2314, 1
        %v2319 = vrot.slane %v2315, 1
        %v2320 = vsel %vm541, %v2318, %v2319
        %2321 = vrot.lane.b32.xlu0 %v2320, 127
        %v2322 = vpop.permute.xlu0 %2321
        %v2324 = vadd.f32 %v2132, %v2322
        %s2325 = sld [smem:[#allocation2 + $0x12d]]
        %v2326 = vstv %s2325
        %v2327 = vmul.f32 %v1723, %v2326
        %v2328 = vmul.f32 %v1724, %v2326
        %v2331 = vrot.slane %v2327, 1
        %v2332 = vrot.slane %v2328, 1
        %v2333 = vsel %vm541, %v2331, %v2332
        %2334 = vrot.lane.b32.xlu0 %v2333, 127
        %v2335 = vpop.permute.xlu0 %2334
        %v2337 = vadd.f32 %v2143, %v2335
        %s2338 = sld [smem:[#allocation2 + $0x151]]
        %v2339 = vstv %s2338
        %v2340 = vmul.f32 %v1723, %v2339
        %v2341 = vmul.f32 %v1724, %v2339
        %v2344 = vrot.slane %v2340, 1
        %v2345 = vrot.slane %v2341, 1
        %v2346 = vsel %vm541, %v2344, %v2345
        %2347 = vrot.lane.b32.xlu0 %v2346, 127
        %v2348 = vpop.permute.xlu0 %2347
        %v2350 = vadd.f32 %v2154, %v2348
        %s2351 = sld [smem:[#allocation2 + $0x175]]
        %v2352 = vstv %s2351
        %v2353 = vmul.f32 %v1723, %v2352
        %v2354 = vmul.f32 %v1724, %v2352
        %v2357 = vrot.slane %v2353, 1
        %v2358 = vrot.slane %v2354, 1
        %v2359 = vsel %vm541, %v2357, %v2358
        %2360 = vrot.lane.b32.xlu0 %v2359, 127
        %v2361 = vpop.permute.xlu0 %2360
        %v2363 = vadd.f32 %v2165, %v2361
        %s2364 = sld [smem:[#allocation2 + $0x199]]
        %v2365 = vstv %s2364
        %v2366 = vmul.f32 %v1723, %v2365
        %v2367 = vmul.f32 %v1724, %v2365
        %v2370 = vrot.slane %v2366, 1
        %v2371 = vrot.slane %v2367, 1
        %v2372 = vsel %vm541, %v2370, %v2371
        %2373 = vrot.lane.b32.xlu0 %v2372, 127
        %v2374 = vpop.permute.xlu0 %2373
        %v2376 = vadd.f32 %v2176, %v2374
        %s2377 = sld [smem:[#allocation2 + $0x1bd]]
        %v2378 = vstv %s2377
        %v2379 = vmul.f32 %v1723, %v2378
        %v2380 = vmul.f32 %v1724, %v2378
        %v2383 = vrot.slane %v2379, 1
        %v2384 = vrot.slane %v2380, 1
        %v2385 = vsel %vm541, %v2383, %v2384
        %2386 = vrot.lane.b32.xlu0 %v2385, 127
        %v2387 = vpop.permute.xlu0 %2386
        %v2389 = vadd.f32 %v2187, %v2387
        %s2390 = sld [smem:[#allocation2 + $0x1e1]]
        %v2391 = vstv %s2390
        %v2392 = vmul.f32 %v1723, %v2391
        %v2393 = vmul.f32 %v1724, %v2391
        %v2396 = vrot.slane %v2392, 1
        %v2397 = vrot.slane %v2393, 1
        %v2398 = vsel %vm541, %v2396, %v2397
        %2399 = vrot.lane.b32.xlu0 %v2398, 127
        %v2400 = vpop.permute.xlu0 %2399
        %v2402 = vadd.f32 %v2198, %v2400
        %s2403 = sld [smem:[#allocation2 + $0x205]]
        %v2404 = vstv %s2403
        %v2405 = vmul.f32 %v1723, %v2404
        %v2406 = vmul.f32 %v1724, %v2404
        %v2409 = vrot.slane %v2405, 1
        %v2410 = vrot.slane %v2406, 1
        %v2411 = vsel %vm541, %v2409, %v2410
        %2412 = vrot.lane.b32.xlu0 %v2411, 127
        %v2413 = vpop.permute.xlu0 %2412
        %v2415 = vadd.f32 %v2209, %v2413
        %s2416 = sld [smem:[#allocation2 + $0x229]]
        %v2417 = vstv %s2416
        %v2418 = vmul.f32 %v1723, %v2417
        %v2419 = vmul.f32 %v1724, %v2417
        %v2422 = vrot.slane %v2418, 1
        %v2423 = vrot.slane %v2419, 1
        %v2424 = vsel %vm541, %v2422, %v2423
        %2425 = vrot.lane.b32.xlu0 %v2424, 127
        %v2426 = vpop.permute.xlu0 %2425
        %v2428 = vadd.f32 %v2220, %v2426
        %s2429 = sld [smem:[#allocation2 + $0xe]]
        %v2430 = vstv %s2429
        %v2431 = vmul.f32 %v1723, %v2430
        %v2432 = vmul.f32 %v1724, %v2430
        %v2435 = vrot.slane %v2431, 1
        %v2436 = vrot.slane %v2432, 1
        %v2437 = vsel %vm541, %v2435, %v2436
        %2438 = vrot.lane.b32.xlu0 %v2437, 126
        %v2439 = vpop.permute.xlu0 %2438
        %v2441 = vadd.f32 %v2233, %v2439
        %s2442 = sld [smem:[#allocation2 + $0x32]]
        %v2443 = vstv %s2442
        %v2444 = vmul.f32 %v1723, %v2443
        %v2445 = vmul.f32 %v1724, %v2443
        %v2448 = vrot.slane %v2444, 1
        %v2449 = vrot.slane %v2445, 1
        %v2450 = vsel %vm541, %v2448, %v2449
        %2451 = vrot.lane.b32.xlu0 %v2450, 126
        %v2452 = vpop.permute.xlu0 %2451
        %v2454 = vadd.f32 %v2246, %v2452
        %s2455 = sld [smem:[#allocation2 + $0x56]]
        %v2456 = vstv %s2455
        %v2457 = vmul.f32 %v1723, %v2456
        %v2458 = vmul.f32 %v1724, %v2456
        %v2461 = vrot.slane %v2457, 1
        %v2462 = vrot.slane %v2458, 1
        %v2463 = vsel %vm541, %v2461, %v2462
        %2464 = vrot.lane.b32.xlu0 %v2463, 126
        %v2465 = vpop.permute.xlu0 %2464
        %v2467 = vadd.f32 %v2259, %v2465
        %s2468 = sld [smem:[#allocation2 + $0x7a]]
        %v2469 = vstv %s2468
        %v2470 = vmul.f32 %v1723, %v2469
        %v2471 = vmul.f32 %v1724, %v2469
        %v2474 = vrot.slane %v2470, 1
        %v2475 = vrot.slane %v2471, 1
        %v2476 = vsel %vm541, %v2474, %v2475
        %2477 = vrot.lane.b32.xlu0 %v2476, 126
        %v2478 = vpop.permute.xlu0 %2477
        %v2480 = vadd.f32 %v2272, %v2478
        %s2481 = sld [smem:[#allocation2 + $0x9e]]
        %v2482 = vstv %s2481
        %v2483 = vmul.f32 %v1723, %v2482
        %v2484 = vmul.f32 %v1724, %v2482
        %v2487 = vrot.slane %v2483, 1
        %v2488 = vrot.slane %v2484, 1
        %v2489 = vsel %vm541, %v2487, %v2488
        %2490 = vrot.lane.b32.xlu0 %v2489, 126
        %v2491 = vpop.permute.xlu0 %2490
        %v2493 = vadd.f32 %v2285, %v2491
        %s2494 = sld [smem:[#allocation2 + $0xc2]]
        %v2495 = vstv %s2494
        %v2496 = vmul.f32 %v1723, %v2495
        %v2497 = vmul.f32 %v1724, %v2495
        %v2500 = vrot.slane %v2496, 1
        %v2501 = vrot.slane %v2497, 1
        %v2502 = vsel %vm541, %v2500, %v2501
        %2503 = vrot.lane.b32.xlu0 %v2502, 126
        %v2504 = vpop.permute.xlu0 %2503
        %v2506 = vadd.f32 %v2298, %v2504
        %s2507 = sld [smem:[#allocation2 + $0xe6]]
        %v2508 = vstv %s2507
        %v2509 = vmul.f32 %v1723, %v2508
        %v2510 = vmul.f32 %v1724, %v2508
        %v2513 = vrot.slane %v2509, 1
        %v2514 = vrot.slane %v2510, 1
        %v2515 = vsel %vm541, %v2513, %v2514
        %2516 = vrot.lane.b32.xlu0 %v2515, 126
        %v2517 = vpop.permute.xlu0 %2516
        %v2519 = vadd.f32 %v2311, %v2517
        %s2520 = sld [smem:[#allocation2 + $0x10a]]
        %v2521 = vstv %s2520
        %v2522 = vmul.f32 %v1723, %v2521
        %v2523 = vmul.f32 %v1724, %v2521
        %v2526 = vrot.slane %v2522, 1
        %v2527 = vrot.slane %v2523, 1
        %v2528 = vsel %vm541, %v2526, %v2527
        %2529 = vrot.lane.b32.xlu0 %v2528, 126
        %v2530 = vpop.permute.xlu0 %2529
        %v2532 = vadd.f32 %v2324, %v2530
        %s2533 = sld [smem:[#allocation2 + $0x12e]]
        %v2534 = vstv %s2533
        %v2535 = vmul.f32 %v1723, %v2534
        %v2536 = vmul.f32 %v1724, %v2534
        %v2539 = vrot.slane %v2535, 1
        %v2540 = vrot.slane %v2536, 1
        %v2541 = vsel %vm541, %v2539, %v2540
        %2542 = vrot.lane.b32.xlu0 %v2541, 126
        %v2543 = vpop.permute.xlu0 %2542
        %v2545 = vadd.f32 %v2337, %v2543
        %s2546 = sld [smem:[#allocation2 + $0x152]]
        %v2547 = vstv %s2546
        %v2548 = vmul.f32 %v1723, %v2547
        %v2549 = vmul.f32 %v1724, %v2547
        %v2552 = vrot.slane %v2548, 1
        %v2553 = vrot.slane %v2549, 1
        %v2554 = vsel %vm541, %v2552, %v2553
        %2555 = vrot.lane.b32.xlu0 %v2554, 126
        %v2556 = vpop.permute.xlu0 %2555
        %v2558 = vadd.f32 %v2350, %v2556
        %s2559 = sld [smem:[#allocation2 + $0x176]]
        %v2560 = vstv %s2559
        %v2561 = vmul.f32 %v1723, %v2560
        %v2562 = vmul.f32 %v1724, %v2560
        %v2565 = vrot.slane %v2561, 1
        %v2566 = vrot.slane %v2562, 1
        %v2567 = vsel %vm541, %v2565, %v2566
        %2568 = vrot.lane.b32.xlu0 %v2567, 126
        %v2569 = vpop.permute.xlu0 %2568
        %v2571 = vadd.f32 %v2363, %v2569
        %s2572 = sld [smem:[#allocation2 + $0x19a]]
        %v2573 = vstv %s2572
        %v2574 = vmul.f32 %v1723, %v2573
        %v2575 = vmul.f32 %v1724, %v2573
        %v2578 = vrot.slane %v2574, 1
        %v2579 = vrot.slane %v2575, 1
        %v2580 = vsel %vm541, %v2578, %v2579
        %2581 = vrot.lane.b32.xlu0 %v2580, 126
        %v2582 = vpop.permute.xlu0 %2581
        %v2584 = vadd.f32 %v2376, %v2582
        %s2585 = sld [smem:[#allocation2 + $0x1be]]
        %v2586 = vstv %s2585
        %v2587 = vmul.f32 %v1723, %v2586
        %v2588 = vmul.f32 %v1724, %v2586
        %v2591 = vrot.slane %v2587, 1
        %v2592 = vrot.slane %v2588, 1
        %v2593 = vsel %vm541, %v2591, %v2592
        %2594 = vrot.lane.b32.xlu0 %v2593, 126
        %v2595 = vpop.permute.xlu0 %2594
        %v2597 = vadd.f32 %v2389, %v2595
        %s2598 = sld [smem:[#allocation2 + $0x1e2]]
        %v2599 = vstv %s2598
        %v2600 = vmul.f32 %v1723, %v2599
        %v2601 = vmul.f32 %v1724, %v2599
        %v2604 = vrot.slane %v2600, 1
        %v2605 = vrot.slane %v2601, 1
        %v2606 = vsel %vm541, %v2604, %v2605
        %2607 = vrot.lane.b32.xlu0 %v2606, 126
        %v2608 = vpop.permute.xlu0 %2607
        %v2610 = vadd.f32 %v2402, %v2608
        %s2611 = sld [smem:[#allocation2 + $0x206]]
        %v2612 = vstv %s2611
        %v2613 = vmul.f32 %v1723, %v2612
        %v2614 = vmul.f32 %v1724, %v2612
        %v2617 = vrot.slane %v2613, 1
        %v2618 = vrot.slane %v2614, 1
        %v2619 = vsel %vm541, %v2617, %v2618
        %2620 = vrot.lane.b32.xlu0 %v2619, 126
        %v2621 = vpop.permute.xlu0 %2620
        %v2623 = vadd.f32 %v2415, %v2621
        %s2624 = sld [smem:[#allocation2 + $0x22a]]
        %v2625 = vstv %s2624
        %v2626 = vmul.f32 %v1723, %v2625
        %v2627 = vmul.f32 %v1724, %v2625
        %v2630 = vrot.slane %v2626, 1
        %v2631 = vrot.slane %v2627, 1
        %v2632 = vsel %vm541, %v2630, %v2631
        %2633 = vrot.lane.b32.xlu0 %v2632, 126
        %v2634 = vpop.permute.xlu0 %2633
        %v2636 = vadd.f32 %v2428, %v2634
        %s2637 = sld [smem:[#allocation2 + $0xf]]
        %v2638 = vstv %s2637
        %v2639 = vmul.f32 %v1723, %v2638
        %v2640 = vmul.f32 %v1724, %v2638
        %v2643 = vrot.slane %v2639, 2
        %v2644 = vrot.slane %v2640, 2
        %v2645 = vsel %vm1134, %v2643, %v2644
        %v2647 = vadd.f32 %v2441, %v2645
        %s2648 = sld [smem:[#allocation2 + $0x33]]
        %v2649 = vstv %s2648
        %v2650 = vmul.f32 %v1723, %v2649
        %v2651 = vmul.f32 %v1724, %v2649
        %v2654 = vrot.slane %v2650, 2
        %v2655 = vrot.slane %v2651, 2
        %v2656 = vsel %vm1134, %v2654, %v2655
        %v2658 = vadd.f32 %v2454, %v2656
        %s2659 = sld [smem:[#allocation2 + $0x57]]
        %v2660 = vstv %s2659
        %v2661 = vmul.f32 %v1723, %v2660
        %v2662 = vmul.f32 %v1724, %v2660
        %v2665 = vrot.slane %v2661, 2
        %v2666 = vrot.slane %v2662, 2
        %v2667 = vsel %vm1134, %v2665, %v2666
        %v2669 = vadd.f32 %v2467, %v2667
        %s2670 = sld [smem:[#allocation2 + $0x7b]]
        %v2671 = vstv %s2670
        %v2672 = vmul.f32 %v1723, %v2671
        %v2673 = vmul.f32 %v1724, %v2671
        %v2676 = vrot.slane %v2672, 2
        %v2677 = vrot.slane %v2673, 2
        %v2678 = vsel %vm1134, %v2676, %v2677
        %v2680 = vadd.f32 %v2480, %v2678
        %s2681 = sld [smem:[#allocation2 + $0x9f]]
        %v2682 = vstv %s2681
        %v2683 = vmul.f32 %v1723, %v2682
        %v2684 = vmul.f32 %v1724, %v2682
        %v2687 = vrot.slane %v2683, 2
        %v2688 = vrot.slane %v2684, 2
        %v2689 = vsel %vm1134, %v2687, %v2688
        %v2691 = vadd.f32 %v2493, %v2689
        %s2692 = sld [smem:[#allocation2 + $0xc3]]
        %v2693 = vstv %s2692
        %v2694 = vmul.f32 %v1723, %v2693
        %v2695 = vmul.f32 %v1724, %v2693
        %v2698 = vrot.slane %v2694, 2
        %v2699 = vrot.slane %v2695, 2
        %v2700 = vsel %vm1134, %v2698, %v2699
        %v2702 = vadd.f32 %v2506, %v2700
        %s2703 = sld [smem:[#allocation2 + $0xe7]]
        %v2704 = vstv %s2703
        %v2705 = vmul.f32 %v1723, %v2704
        %v2706 = vmul.f32 %v1724, %v2704
        %v2709 = vrot.slane %v2705, 2
        %v2710 = vrot.slane %v2706, 2
        %v2711 = vsel %vm1134, %v2709, %v2710
        %v2713 = vadd.f32 %v2519, %v2711
        %s2714 = sld [smem:[#allocation2 + $0x10b]]
        %v2715 = vstv %s2714
        %v2716 = vmul.f32 %v1723, %v2715
        %v2717 = vmul.f32 %v1724, %v2715
        %v2720 = vrot.slane %v2716, 2
        %v2721 = vrot.slane %v2717, 2
        %v2722 = vsel %vm1134, %v2720, %v2721
        %v2724 = vadd.f32 %v2532, %v2722
        %s2725 = sld [smem:[#allocation2 + $0x12f]]
        %v2726 = vstv %s2725
        %v2727 = vmul.f32 %v1723, %v2726
        %v2728 = vmul.f32 %v1724, %v2726
        %v2731 = vrot.slane %v2727, 2
        %v2732 = vrot.slane %v2728, 2
        %v2733 = vsel %vm1134, %v2731, %v2732
        %v2735 = vadd.f32 %v2545, %v2733
        %s2736 = sld [smem:[#allocation2 + $0x153]]
        %v2737 = vstv %s2736
        %v2738 = vmul.f32 %v1723, %v2737
        %v2739 = vmul.f32 %v1724, %v2737
        %v2742 = vrot.slane %v2738, 2
        %v2743 = vrot.slane %v2739, 2
        %v2744 = vsel %vm1134, %v2742, %v2743
        %v2746 = vadd.f32 %v2558, %v2744
        %s2747 = sld [smem:[#allocation2 + $0x177]]
        %v2748 = vstv %s2747
        %v2749 = vmul.f32 %v1723, %v2748
        %v2750 = vmul.f32 %v1724, %v2748
        %v2753 = vrot.slane %v2749, 2
        %v2754 = vrot.slane %v2750, 2
        %v2755 = vsel %vm1134, %v2753, %v2754
        %v2757 = vadd.f32 %v2571, %v2755
        %s2758 = sld [smem:[#allocation2 + $0x19b]]
        %v2759 = vstv %s2758
        %v2760 = vmul.f32 %v1723, %v2759
        %v2761 = vmul.f32 %v1724, %v2759
        %v2764 = vrot.slane %v2760, 2
        %v2765 = vrot.slane %v2761, 2
        %v2766 = vsel %vm1134, %v2764, %v2765
        %v2768 = vadd.f32 %v2584, %v2766
        %s2769 = sld [smem:[#allocation2 + $0x1bf]]
        %v2770 = vstv %s2769
        %v2771 = vmul.f32 %v1723, %v2770
        %v2772 = vmul.f32 %v1724, %v2770
        %v2775 = vrot.slane %v2771, 2
        %v2776 = vrot.slane %v2772, 2
        %v2777 = vsel %vm1134, %v2775, %v2776
        %v2779 = vadd.f32 %v2597, %v2777
        %s2780 = sld [smem:[#allocation2 + $0x1e3]]
        %v2781 = vstv %s2780
        %v2782 = vmul.f32 %v1723, %v2781
        %v2783 = vmul.f32 %v1724, %v2781
        %v2786 = vrot.slane %v2782, 2
        %v2787 = vrot.slane %v2783, 2
        %v2788 = vsel %vm1134, %v2786, %v2787
        %v2790 = vadd.f32 %v2610, %v2788
        %s2791 = sld [smem:[#allocation2 + $0x207]]
        %v2792 = vstv %s2791
        %v2793 = vmul.f32 %v1723, %v2792
        %v2794 = vmul.f32 %v1724, %v2792
        %v2797 = vrot.slane %v2793, 2
        %v2798 = vrot.slane %v2794, 2
        %v2799 = vsel %vm1134, %v2797, %v2798
        %v2801 = vadd.f32 %v2623, %v2799
        %s2802 = sld [smem:[#allocation2 + $0x22b]]
        %v2803 = vstv %s2802
        %v2804 = vmul.f32 %v1723, %v2803
        %v2805 = vmul.f32 %v1724, %v2803
        %v2808 = vrot.slane %v2804, 2
        %v2809 = vrot.slane %v2805, 2
        %v2810 = vsel %vm1134, %v2808, %v2809
        %v2812 = vadd.f32 %v2636, %v2810
        %s2813 = sld [smem:[#allocation2 + $0x10]]
        %v2814 = vstv %s2813
        %v2815 = vmul.f32 %v1723, %v2814
        %v2816 = vmul.f32 %v1724, %v2814
        %v2819 = vrot.slane %v2815, 2
        %v2820 = vrot.slane %v2816, 2
        %v2821 = vsel %vm1134, %v2819, %v2820
        %2822 = vrot.lane.b32.xlu0 %v2821, 127
        %v2823 = vpop.permute.xlu0 %2822
        %v2825 = vadd.f32 %v2647, %v2823
        %s2826 = sld [smem:[#allocation2 + $0x34]]
        %v2827 = vstv %s2826
        %v2828 = vmul.f32 %v1723, %v2827
        %v2829 = vmul.f32 %v1724, %v2827
        %v2832 = vrot.slane %v2828, 2
        %v2833 = vrot.slane %v2829, 2
        %v2834 = vsel %vm1134, %v2832, %v2833
        %2835 = vrot.lane.b32.xlu0 %v2834, 127
        %v2836 = vpop.permute.xlu0 %2835
        %v2838 = vadd.f32 %v2658, %v2836
        %s2839 = sld [smem:[#allocation2 + $0x58]]
        %v2840 = vstv %s2839
        %v2841 = vmul.f32 %v1723, %v2840
        %v2842 = vmul.f32 %v1724, %v2840
        %v2845 = vrot.slane %v2841, 2
        %v2846 = vrot.slane %v2842, 2
        %v2847 = vsel %vm1134, %v2845, %v2846
        %2848 = vrot.lane.b32.xlu0 %v2847, 127
        %v2849 = vpop.permute.xlu0 %2848
        %v2851 = vadd.f32 %v2669, %v2849
        %s2852 = sld [smem:[#allocation2 + $0x7c]]
        %v2853 = vstv %s2852
        %v2854 = vmul.f32 %v1723, %v2853
        %v2855 = vmul.f32 %v1724, %v2853
        %v2858 = vrot.slane %v2854, 2
        %v2859 = vrot.slane %v2855, 2
        %v2860 = vsel %vm1134, %v2858, %v2859
        %2861 = vrot.lane.b32.xlu0 %v2860, 127
        %v2862 = vpop.permute.xlu0 %2861
        %v2864 = vadd.f32 %v2680, %v2862
        %s2865 = sld [smem:[#allocation2 + $0xa0]]
        %v2866 = vstv %s2865
        %v2867 = vmul.f32 %v1723, %v2866
        %v2868 = vmul.f32 %v1724, %v2866
        %v2871 = vrot.slane %v2867, 2
        %v2872 = vrot.slane %v2868, 2
        %v2873 = vsel %vm1134, %v2871, %v2872
        %2874 = vrot.lane.b32.xlu0 %v2873, 127
        %v2875 = vpop.permute.xlu0 %2874
        %v2877 = vadd.f32 %v2691, %v2875
        %s2878 = sld [smem:[#allocation2 + $0xc4]]
        %v2879 = vstv %s2878
        %v2880 = vmul.f32 %v1723, %v2879
        %v2881 = vmul.f32 %v1724, %v2879
        %v2884 = vrot.slane %v2880, 2
        %v2885 = vrot.slane %v2881, 2
        %v2886 = vsel %vm1134, %v2884, %v2885
        %2887 = vrot.lane.b32.xlu0 %v2886, 127
        %v2888 = vpop.permute.xlu0 %2887
        %v2890 = vadd.f32 %v2702, %v2888
        %s2891 = sld [smem:[#allocation2 + $0xe8]]
        %v2892 = vstv %s2891
        %v2893 = vmul.f32 %v1723, %v2892
        %v2894 = vmul.f32 %v1724, %v2892
        %v2897 = vrot.slane %v2893, 2
        %v2898 = vrot.slane %v2894, 2
        %v2899 = vsel %vm1134, %v2897, %v2898
        %2900 = vrot.lane.b32.xlu0 %v2899, 127
        %v2901 = vpop.permute.xlu0 %2900
        %v2903 = vadd.f32 %v2713, %v2901
        %s2904 = sld [smem:[#allocation2 + $0x10c]]
        %v2905 = vstv %s2904
        %v2906 = vmul.f32 %v1723, %v2905
        %v2907 = vmul.f32 %v1724, %v2905
        %v2910 = vrot.slane %v2906, 2
        %v2911 = vrot.slane %v2907, 2
        %v2912 = vsel %vm1134, %v2910, %v2911
        %2913 = vrot.lane.b32.xlu0 %v2912, 127
        %v2914 = vpop.permute.xlu0 %2913
        %v2916 = vadd.f32 %v2724, %v2914
        %s2917 = sld [smem:[#allocation2 + $0x130]]
        %v2918 = vstv %s2917
        %v2919 = vmul.f32 %v1723, %v2918
        %v2920 = vmul.f32 %v1724, %v2918
        %v2923 = vrot.slane %v2919, 2
        %v2924 = vrot.slane %v2920, 2
        %v2925 = vsel %vm1134, %v2923, %v2924
        %2926 = vrot.lane.b32.xlu0 %v2925, 127
        %v2927 = vpop.permute.xlu0 %2926
        %v2929 = vadd.f32 %v2735, %v2927
        %s2930 = sld [smem:[#allocation2 + $0x154]]
        %v2931 = vstv %s2930
        %v2932 = vmul.f32 %v1723, %v2931
        %v2933 = vmul.f32 %v1724, %v2931
        %v2936 = vrot.slane %v2932, 2
        %v2937 = vrot.slane %v2933, 2
        %v2938 = vsel %vm1134, %v2936, %v2937
        %2939 = vrot.lane.b32.xlu0 %v2938, 127
        %v2940 = vpop.permute.xlu0 %2939
        %v2942 = vadd.f32 %v2746, %v2940
        %s2943 = sld [smem:[#allocation2 + $0x178]]
        %v2944 = vstv %s2943
        %v2945 = vmul.f32 %v1723, %v2944
        %v2946 = vmul.f32 %v1724, %v2944
        %v2949 = vrot.slane %v2945, 2
        %v2950 = vrot.slane %v2946, 2
        %v2951 = vsel %vm1134, %v2949, %v2950
        %2952 = vrot.lane.b32.xlu0 %v2951, 127
        %v2953 = vpop.permute.xlu0 %2952
        %v2955 = vadd.f32 %v2757, %v2953
        %s2956 = sld [smem:[#allocation2 + $0x19c]]
        %v2957 = vstv %s2956
        %v2958 = vmul.f32 %v1723, %v2957
        %v2959 = vmul.f32 %v1724, %v2957
        %v2962 = vrot.slane %v2958, 2
        %v2963 = vrot.slane %v2959, 2
        %v2964 = vsel %vm1134, %v2962, %v2963
        %2965 = vrot.lane.b32.xlu0 %v2964, 127
        %v2966 = vpop.permute.xlu0 %2965
        %v2968 = vadd.f32 %v2768, %v2966
        %s2969 = sld [smem:[#allocation2 + $0x1c0]]
        %v2970 = vstv %s2969
        %v2971 = vmul.f32 %v1723, %v2970
        %v2972 = vmul.f32 %v1724, %v2970
        %v2975 = vrot.slane %v2971, 2
        %v2976 = vrot.slane %v2972, 2
        %v2977 = vsel %vm1134, %v2975, %v2976
        %2978 = vrot.lane.b32.xlu0 %v2977, 127
        %v2979 = vpop.permute.xlu0 %2978
        %v2981 = vadd.f32 %v2779, %v2979
        %s2982 = sld [smem:[#allocation2 + $0x1e4]]
        %v2983 = vstv %s2982
        %v2984 = vmul.f32 %v1723, %v2983
        %v2985 = vmul.f32 %v1724, %v2983
        %v2988 = vrot.slane %v2984, 2
        %v2989 = vrot.slane %v2985, 2
        %v2990 = vsel %vm1134, %v2988, %v2989
        %2991 = vrot.lane.b32.xlu0 %v2990, 127
        %v2992 = vpop.permute.xlu0 %2991
        %v2994 = vadd.f32 %v2790, %v2992
        %s2995 = sld [smem:[#allocation2 + $0x208]]
        %v2996 = vstv %s2995
        %v2997 = vmul.f32 %v1723, %v2996
        %v2998 = vmul.f32 %v1724, %v2996
        %v3001 = vrot.slane %v2997, 2
        %v3002 = vrot.slane %v2998, 2
        %v3003 = vsel %vm1134, %v3001, %v3002
        %3004 = vrot.lane.b32.xlu0 %v3003, 127
        %v3005 = vpop.permute.xlu0 %3004
        %v3007 = vadd.f32 %v2801, %v3005
        %s3008 = sld [smem:[#allocation2 + $0x22c]]
        %v3009 = vstv %s3008
        %v3010 = vmul.f32 %v1723, %v3009
        %v3011 = vmul.f32 %v1724, %v3009
        %v3014 = vrot.slane %v3010, 2
        %v3015 = vrot.slane %v3011, 2
        %v3016 = vsel %vm1134, %v3014, %v3015
        %3017 = vrot.lane.b32.xlu0 %v3016, 127
        %v3018 = vpop.permute.xlu0 %3017
        %v3020 = vadd.f32 %v2812, %v3018
        %s3021 = sld [smem:[#allocation2 + $0x11]]
        %v3022 = vstv %s3021
        %v3023 = vmul.f32 %v1723, %v3022
        %v3024 = vmul.f32 %v1724, %v3022
        %v3027 = vrot.slane %v3023, 2
        %v3028 = vrot.slane %v3024, 2
        %v3029 = vsel %vm1134, %v3027, %v3028
        %3030 = vrot.lane.b32.xlu0 %v3029, 126
        %v3031 = vpop.permute.xlu0 %3030
        %v3033 = vadd.f32 %v2825, %v3031
        %s3034 = sld [smem:[#allocation2 + $0x35]]
        %v3035 = vstv %s3034
        %v3036 = vmul.f32 %v1723, %v3035
        %v3037 = vmul.f32 %v1724, %v3035
        %v3040 = vrot.slane %v3036, 2
        %v3041 = vrot.slane %v3037, 2
        %v3042 = vsel %vm1134, %v3040, %v3041
        %3043 = vrot.lane.b32.xlu0 %v3042, 126
        %v3044 = vpop.permute.xlu0 %3043
        %v3046 = vadd.f32 %v2838, %v3044
        %s3047 = sld [smem:[#allocation2 + $0x59]]
        %v3048 = vstv %s3047
        %v3049 = vmul.f32 %v1723, %v3048
        %v3050 = vmul.f32 %v1724, %v3048
        %v3053 = vrot.slane %v3049, 2
        %v3054 = vrot.slane %v3050, 2
        %v3055 = vsel %vm1134, %v3053, %v3054
        %3056 = vrot.lane.b32.xlu0 %v3055, 126
        %v3057 = vpop.permute.xlu0 %3056
        %v3059 = vadd.f32 %v2851, %v3057
        %s3060 = sld [smem:[#allocation2 + $0x7d]]
        %v3061 = vstv %s3060
        %v3062 = vmul.f32 %v1723, %v3061
        %v3063 = vmul.f32 %v1724, %v3061
        %v3066 = vrot.slane %v3062, 2
        %v3067 = vrot.slane %v3063, 2
        %v3068 = vsel %vm1134, %v3066, %v3067
        %3069 = vrot.lane.b32.xlu0 %v3068, 126
        %v3070 = vpop.permute.xlu0 %3069
        %v3072 = vadd.f32 %v2864, %v3070
        %s3073 = sld [smem:[#allocation2 + $0xa1]]
        %v3074 = vstv %s3073
        %v3075 = vmul.f32 %v1723, %v3074
        %v3076 = vmul.f32 %v1724, %v3074
        %v3079 = vrot.slane %v3075, 2
        %v3080 = vrot.slane %v3076, 2
        %v3081 = vsel %vm1134, %v3079, %v3080
        %3082 = vrot.lane.b32.xlu0 %v3081, 126
        %v3083 = vpop.permute.xlu0 %3082
        %v3085 = vadd.f32 %v2877, %v3083
        %s3086 = sld [smem:[#allocation2 + $0xc5]]
        %v3087 = vstv %s3086
        %v3088 = vmul.f32 %v1723, %v3087
        %v3089 = vmul.f32 %v1724, %v3087
        %v3092 = vrot.slane %v3088, 2
        %v3093 = vrot.slane %v3089, 2
        %v3094 = vsel %vm1134, %v3092, %v3093
        %3095 = vrot.lane.b32.xlu0 %v3094, 126
        %v3096 = vpop.permute.xlu0 %3095
        %v3098 = vadd.f32 %v2890, %v3096
        %s3099 = sld [smem:[#allocation2 + $0xe9]]
        %v3100 = vstv %s3099
        %v3101 = vmul.f32 %v1723, %v3100
        %v3102 = vmul.f32 %v1724, %v3100
        %v3105 = vrot.slane %v3101, 2
        %v3106 = vrot.slane %v3102, 2
        %v3107 = vsel %vm1134, %v3105, %v3106
        %3108 = vrot.lane.b32.xlu0 %v3107, 126
        %v3109 = vpop.permute.xlu0 %3108
        %v3111 = vadd.f32 %v2903, %v3109
        %s3112 = sld [smem:[#allocation2 + $0x10d]]
        %v3113 = vstv %s3112
        %v3114 = vmul.f32 %v1723, %v3113
        %v3115 = vmul.f32 %v1724, %v3113
        %v3118 = vrot.slane %v3114, 2
        %v3119 = vrot.slane %v3115, 2
        %v3120 = vsel %vm1134, %v3118, %v3119
        %3121 = vrot.lane.b32.xlu0 %v3120, 126
        %v3122 = vpop.permute.xlu0 %3121
        %v3124 = vadd.f32 %v2916, %v3122
        %s3125 = sld [smem:[#allocation2 + $0x131]]
        %v3126 = vstv %s3125
        %v3127 = vmul.f32 %v1723, %v3126
        %v3128 = vmul.f32 %v1724, %v3126
        %v3131 = vrot.slane %v3127, 2
        %v3132 = vrot.slane %v3128, 2
        %v3133 = vsel %vm1134, %v3131, %v3132
        %3134 = vrot.lane.b32.xlu0 %v3133, 126
        %v3135 = vpop.permute.xlu0 %3134
        %v3137 = vadd.f32 %v2929, %v3135
        %s3138 = sld [smem:[#allocation2 + $0x155]]
        %v3139 = vstv %s3138
        %v3140 = vmul.f32 %v1723, %v3139
        %v3141 = vmul.f32 %v1724, %v3139
        %v3144 = vrot.slane %v3140, 2
        %v3145 = vrot.slane %v3141, 2
        %v3146 = vsel %vm1134, %v3144, %v3145
        %3147 = vrot.lane.b32.xlu0 %v3146, 126
        %v3148 = vpop.permute.xlu0 %3147
        %v3150 = vadd.f32 %v2942, %v3148
        %s3151 = sld [smem:[#allocation2 + $0x179]]
        %v3152 = vstv %s3151
        %v3153 = vmul.f32 %v1723, %v3152
        %v3154 = vmul.f32 %v1724, %v3152
        %v3157 = vrot.slane %v3153, 2
        %v3158 = vrot.slane %v3154, 2
        %v3159 = vsel %vm1134, %v3157, %v3158
        %3160 = vrot.lane.b32.xlu0 %v3159, 126
        %v3161 = vpop.permute.xlu0 %3160
        %v3163 = vadd.f32 %v2955, %v3161
        %s3164 = sld [smem:[#allocation2 + $0x19d]]
        %v3165 = vstv %s3164
        %v3166 = vmul.f32 %v1723, %v3165
        %v3167 = vmul.f32 %v1724, %v3165
        %v3170 = vrot.slane %v3166, 2
        %v3171 = vrot.slane %v3167, 2
        %v3172 = vsel %vm1134, %v3170, %v3171
        %3173 = vrot.lane.b32.xlu0 %v3172, 126
        %v3174 = vpop.permute.xlu0 %3173
        %v3176 = vadd.f32 %v2968, %v3174
        %s3177 = sld [smem:[#allocation2 + $0x1c1]]
        %v3178 = vstv %s3177
        %v3179 = vmul.f32 %v1723, %v3178
        %v3180 = vmul.f32 %v1724, %v3178
        %v3183 = vrot.slane %v3179, 2
        %v3184 = vrot.slane %v3180, 2
        %v3185 = vsel %vm1134, %v3183, %v3184
        %3186 = vrot.lane.b32.xlu0 %v3185, 126
        %v3187 = vpop.permute.xlu0 %3186
        %v3189 = vadd.f32 %v2981, %v3187
        %s3190 = sld [smem:[#allocation2 + $0x1e5]]
        %v3191 = vstv %s3190
        %v3192 = vmul.f32 %v1723, %v3191
        %v3193 = vmul.f32 %v1724, %v3191
        %v3196 = vrot.slane %v3192, 2
        %v3197 = vrot.slane %v3193, 2
        %v3198 = vsel %vm1134, %v3196, %v3197
        %3199 = vrot.lane.b32.xlu0 %v3198, 126
        %v3200 = vpop.permute.xlu0 %3199
        %v3202 = vadd.f32 %v2994, %v3200
        %s3203 = sld [smem:[#allocation2 + $0x209]]
        %v3204 = vstv %s3203
        %v3205 = vmul.f32 %v1723, %v3204
        %v3206 = vmul.f32 %v1724, %v3204
        %v3209 = vrot.slane %v3205, 2
        %v3210 = vrot.slane %v3206, 2
        %v3211 = vsel %vm1134, %v3209, %v3210
        %3212 = vrot.lane.b32.xlu0 %v3211, 126
        %v3213 = vpop.permute.xlu0 %3212
        %v3215 = vadd.f32 %v3007, %v3213
        %s3216 = sld [smem:[#allocation2 + $0x22d]]
        %v3217 = vstv %s3216
        %v3218 = vmul.f32 %v1723, %v3217
        %v3219 = vmul.f32 %v1724, %v3217
        %v3222 = vrot.slane %v3218, 2
        %v3223 = vrot.slane %v3219, 2
        %v3224 = vsel %vm1134, %v3222, %v3223
        %3225 = vrot.lane.b32.xlu0 %v3224, 126
        %v3226 = vpop.permute.xlu0 %3225
        %v3228 = vadd.f32 %v3020, %v3226
        %s3229 = sadd.s32 %s211, 48
        %s3230 = scalar_lea.vmem %s209, %s3229
        %v3231 = vld [vmem:[%s3230] sm:$0xff]
        %v3232 = vld [vmem:[%s3230 + $0x8] sm:$0x3]
        %s3233 = sld [smem:[#allocation2 + $0x12]]
        %v3234 = vstv %s3233
        %v3235 = vmul.f32 %v3231, %v3234
        %v3236 = vadd.f32 %v3033, %v3235
        %s3237 = sld [smem:[#allocation2 + $0x36]]
        %v3238 = vstv %s3237
        %v3239 = vmul.f32 %v3231, %v3238
        %v3240 = vadd.f32 %v3046, %v3239
        %s3241 = sld [smem:[#allocation2 + $0x5a]]
        %v3242 = vstv %s3241
        %v3243 = vmul.f32 %v3231, %v3242
        %v3244 = vadd.f32 %v3059, %v3243
        %s3245 = sld [smem:[#allocation2 + $0x7e]]
        %v3246 = vstv %s3245
        %v3247 = vmul.f32 %v3231, %v3246
        %v3248 = vadd.f32 %v3072, %v3247
        %s3249 = sld [smem:[#allocation2 + $0xa2]]
        %v3250 = vstv %s3249
        %v3251 = vmul.f32 %v3231, %v3250
        %v3252 = vadd.f32 %v3085, %v3251
        %s3253 = sld [smem:[#allocation2 + $0xc6]]
        %v3254 = vstv %s3253
        %v3255 = vmul.f32 %v3231, %v3254
        %v3256 = vadd.f32 %v3098, %v3255
        %s3257 = sld [smem:[#allocation2 + $0xea]]
        %v3258 = vstv %s3257
        %v3259 = vmul.f32 %v3231, %v3258
        %v3260 = vadd.f32 %v3111, %v3259
        %s3261 = sld [smem:[#allocation2 + $0x10e]]
        %v3262 = vstv %s3261
        %v3263 = vmul.f32 %v3231, %v3262
        %v3264 = vadd.f32 %v3124, %v3263
        %s3265 = sld [smem:[#allocation2 + $0x132]]
        %v3266 = vstv %s3265
        %v3267 = vmul.f32 %v3231, %v3266
        %v3268 = vadd.f32 %v3137, %v3267
        %s3269 = sld [smem:[#allocation2 + $0x156]]
        %v3270 = vstv %s3269
        %v3271 = vmul.f32 %v3231, %v3270
        %v3272 = vadd.f32 %v3150, %v3271
        %s3273 = sld [smem:[#allocation2 + $0x17a]]
        %v3274 = vstv %s3273
        %v3275 = vmul.f32 %v3231, %v3274
        %v3276 = vadd.f32 %v3163, %v3275
        %s3277 = sld [smem:[#allocation2 + $0x19e]]
        %v3278 = vstv %s3277
        %v3279 = vmul.f32 %v3231, %v3278
        %v3280 = vadd.f32 %v3176, %v3279
        %s3281 = sld [smem:[#allocation2 + $0x1c2]]
        %v3282 = vstv %s3281
        %v3283 = vmul.f32 %v3231, %v3282
        %v3284 = vadd.f32 %v3189, %v3283
        %s3285 = sld [smem:[#allocation2 + $0x1e6]]
        %v3286 = vstv %s3285
        %v3287 = vmul.f32 %v3231, %v3286
        %v3288 = vadd.f32 %v3202, %v3287
        %s3289 = sld [smem:[#allocation2 + $0x20a]]
        %v3290 = vstv %s3289
        %v3291 = vmul.f32 %v3231, %v3290
        %v3292 = vadd.f32 %v3215, %v3291
        %s3293 = sld [smem:[#allocation2 + $0x22e]]
        %v3294 = vstv %s3293
        %v3295 = vmul.f32 %v3231, %v3294
        %v3296 = vadd.f32 %v3228, %v3295
        %s3297 = sld [smem:[#allocation2 + $0x13]]
        %v3298 = vstv %s3297
        %v3299 = vmul.f32 %v3231, %v3298
        %3301 = vrot.lane.b32.xlu0 %v3299, 127
        %v3302 = vpop.permute.xlu0 %3301
        %v3304 = vadd.f32 %v3236, %v3302
        %s3305 = sld [smem:[#allocation2 + $0x37]]
        %v3306 = vstv %s3305
        %v3307 = vmul.f32 %v3231, %v3306
        %3309 = vrot.lane.b32.xlu0 %v3307, 127
        %v3310 = vpop.permute.xlu0 %3309
        %v3312 = vadd.f32 %v3240, %v3310
        %s3313 = sld [smem:[#allocation2 + $0x5b]]
        %v3314 = vstv %s3313
        %v3315 = vmul.f32 %v3231, %v3314
        %3317 = vrot.lane.b32.xlu0 %v3315, 127
        %v3318 = vpop.permute.xlu0 %3317
        %v3320 = vadd.f32 %v3244, %v3318
        %s3321 = sld [smem:[#allocation2 + $0x7f]]
        %v3322 = vstv %s3321
        %v3323 = vmul.f32 %v3231, %v3322
        %3325 = vrot.lane.b32.xlu0 %v3323, 127
        %v3326 = vpop.permute.xlu0 %3325
        %v3328 = vadd.f32 %v3248, %v3326
        %s3329 = sld [smem:[#allocation2 + $0xa3]]
        %v3330 = vstv %s3329
        %v3331 = vmul.f32 %v3231, %v3330
        %3333 = vrot.lane.b32.xlu0 %v3331, 127
        %v3334 = vpop.permute.xlu0 %3333
        %v3336 = vadd.f32 %v3252, %v3334
        %s3337 = sld [smem:[#allocation2 + $0xc7]]
        %v3338 = vstv %s3337
        %v3339 = vmul.f32 %v3231, %v3338
        %3341 = vrot.lane.b32.xlu0 %v3339, 127
        %v3342 = vpop.permute.xlu0 %3341
        %v3344 = vadd.f32 %v3256, %v3342
        %s3345 = sld [smem:[#allocation2 + $0xeb]]
        %v3346 = vstv %s3345
        %v3347 = vmul.f32 %v3231, %v3346
        %3349 = vrot.lane.b32.xlu0 %v3347, 127
        %v3350 = vpop.permute.xlu0 %3349
        %v3352 = vadd.f32 %v3260, %v3350
        %s3353 = sld [smem:[#allocation2 + $0x10f]]
        %v3354 = vstv %s3353
        %v3355 = vmul.f32 %v3231, %v3354
        %3357 = vrot.lane.b32.xlu0 %v3355, 127
        %v3358 = vpop.permute.xlu0 %3357
        %v3360 = vadd.f32 %v3264, %v3358
        %s3361 = sld [smem:[#allocation2 + $0x133]]
        %v3362 = vstv %s3361
        %v3363 = vmul.f32 %v3231, %v3362
        %3365 = vrot.lane.b32.xlu0 %v3363, 127
        %v3366 = vpop.permute.xlu0 %3365
        %v3368 = vadd.f32 %v3268, %v3366
        %s3369 = sld [smem:[#allocation2 + $0x157]]
        %v3370 = vstv %s3369
        %v3371 = vmul.f32 %v3231, %v3370
        %3373 = vrot.lane.b32.xlu0 %v3371, 127
        %v3374 = vpop.permute.xlu0 %3373
        %v3376 = vadd.f32 %v3272, %v3374
        %s3377 = sld [smem:[#allocation2 + $0x17b]]
        %v3378 = vstv %s3377
        %v3379 = vmul.f32 %v3231, %v3378
        %3381 = vrot.lane.b32.xlu0 %v3379, 127
        %v3382 = vpop.permute.xlu0 %3381
        %v3384 = vadd.f32 %v3276, %v3382
        %s3385 = sld [smem:[#allocation2 + $0x19f]]
        %v3386 = vstv %s3385
        %v3387 = vmul.f32 %v3231, %v3386
        %3389 = vrot.lane.b32.xlu0 %v3387, 127
        %v3390 = vpop.permute.xlu0 %3389
        %v3392 = vadd.f32 %v3280, %v3390
        %s3393 = sld [smem:[#allocation2 + $0x1c3]]
        %v3394 = vstv %s3393
        %v3395 = vmul.f32 %v3231, %v3394
        %3397 = vrot.lane.b32.xlu0 %v3395, 127
        %v3398 = vpop.permute.xlu0 %3397
        %v3400 = vadd.f32 %v3284, %v3398
        %s3401 = sld [smem:[#allocation2 + $0x1e7]]
        %v3402 = vstv %s3401
        %v3403 = vmul.f32 %v3231, %v3402
        %3405 = vrot.lane.b32.xlu0 %v3403, 127
        %v3406 = vpop.permute.xlu0 %3405
        %v3408 = vadd.f32 %v3288, %v3406
        %s3409 = sld [smem:[#allocation2 + $0x20b]]
        %v3410 = vstv %s3409
        %v3411 = vmul.f32 %v3231, %v3410
        %3413 = vrot.lane.b32.xlu0 %v3411, 127
        %v3414 = vpop.permute.xlu0 %3413
        %v3416 = vadd.f32 %v3292, %v3414
        %s3417 = sld [smem:[#allocation2 + $0x22f]]
        %v3418 = vstv %s3417
        %v3419 = vmul.f32 %v3231, %v3418
        %3421 = vrot.lane.b32.xlu0 %v3419, 127
        %v3422 = vpop.permute.xlu0 %3421
        %v3424 = vadd.f32 %v3296, %v3422
        %s3425 = sld [smem:[#allocation2 + $0x14]]
        %v3426 = vstv %s3425
        %v3427 = vmul.f32 %v3231, %v3426
        %3429 = vrot.lane.b32.xlu0 %v3427, 126
        %v3430 = vpop.permute.xlu0 %3429
        %v3432 = vadd.f32 %v3304, %v3430
        %s3433 = sld [smem:[#allocation2 + $0x38]]
        %v3434 = vstv %s3433
        %v3435 = vmul.f32 %v3231, %v3434
        %3437 = vrot.lane.b32.xlu0 %v3435, 126
        %v3438 = vpop.permute.xlu0 %3437
        %v3440 = vadd.f32 %v3312, %v3438
        %s3441 = sld [smem:[#allocation2 + $0x5c]]
        %v3442 = vstv %s3441
        %v3443 = vmul.f32 %v3231, %v3442
        %3445 = vrot.lane.b32.xlu0 %v3443, 126
        %v3446 = vpop.permute.xlu0 %3445
        %v3448 = vadd.f32 %v3320, %v3446
        %s3449 = sld [smem:[#allocation2 + $0x80]]
        %v3450 = vstv %s3449
        %v3451 = vmul.f32 %v3231, %v3450
        %3453 = vrot.lane.b32.xlu0 %v3451, 126
        %v3454 = vpop.permute.xlu0 %3453
        %v3456 = vadd.f32 %v3328, %v3454
        %s3457 = sld [smem:[#allocation2 + $0xa4]]
        %v3458 = vstv %s3457
        %v3459 = vmul.f32 %v3231, %v3458
        %3461 = vrot.lane.b32.xlu0 %v3459, 126
        %v3462 = vpop.permute.xlu0 %3461
        %v3464 = vadd.f32 %v3336, %v3462
        %s3465 = sld [smem:[#allocation2 + $0xc8]]
        %v3466 = vstv %s3465
        %v3467 = vmul.f32 %v3231, %v3466
        %3469 = vrot.lane.b32.xlu0 %v3467, 126
        %v3470 = vpop.permute.xlu0 %3469
        %v3472 = vadd.f32 %v3344, %v3470
        %s3473 = sld [smem:[#allocation2 + $0xec]]
        %v3474 = vstv %s3473
        %v3475 = vmul.f32 %v3231, %v3474
        %3477 = vrot.lane.b32.xlu0 %v3475, 126
        %v3478 = vpop.permute.xlu0 %3477
        %v3480 = vadd.f32 %v3352, %v3478
        %s3481 = sld [smem:[#allocation2 + $0x110]]
        %v3482 = vstv %s3481
        %v3483 = vmul.f32 %v3231, %v3482
        %3485 = vrot.lane.b32.xlu0 %v3483, 126
        %v3486 = vpop.permute.xlu0 %3485
        %v3488 = vadd.f32 %v3360, %v3486
        %s3489 = sld [smem:[#allocation2 + $0x134]]
        %v3490 = vstv %s3489
        %v3491 = vmul.f32 %v3231, %v3490
        %3493 = vrot.lane.b32.xlu0 %v3491, 126
        %v3494 = vpop.permute.xlu0 %3493
        %v3496 = vadd.f32 %v3368, %v3494
        %s3497 = sld [smem:[#allocation2 + $0x158]]
        %v3498 = vstv %s3497
        %v3499 = vmul.f32 %v3231, %v3498
        %3501 = vrot.lane.b32.xlu0 %v3499, 126
        %v3502 = vpop.permute.xlu0 %3501
        %v3504 = vadd.f32 %v3376, %v3502
        %s3505 = sld [smem:[#allocation2 + $0x17c]]
        %v3506 = vstv %s3505
        %v3507 = vmul.f32 %v3231, %v3506
        %3509 = vrot.lane.b32.xlu0 %v3507, 126
        %v3510 = vpop.permute.xlu0 %3509
        %v3512 = vadd.f32 %v3384, %v3510
        %s3513 = sld [smem:[#allocation2 + $0x1a0]]
        %v3514 = vstv %s3513
        %v3515 = vmul.f32 %v3231, %v3514
        %3517 = vrot.lane.b32.xlu0 %v3515, 126
        %v3518 = vpop.permute.xlu0 %3517
        %v3520 = vadd.f32 %v3392, %v3518
        %s3521 = sld [smem:[#allocation2 + $0x1c4]]
        %v3522 = vstv %s3521
        %v3523 = vmul.f32 %v3231, %v3522
        %3525 = vrot.lane.b32.xlu0 %v3523, 126
        %v3526 = vpop.permute.xlu0 %3525
        %v3528 = vadd.f32 %v3400, %v3526
        %s3529 = sld [smem:[#allocation2 + $0x1e8]]
        %v3530 = vstv %s3529
        %v3531 = vmul.f32 %v3231, %v3530
        %3533 = vrot.lane.b32.xlu0 %v3531, 126
        %v3534 = vpop.permute.xlu0 %3533
        %v3536 = vadd.f32 %v3408, %v3534
        %s3537 = sld [smem:[#allocation2 + $0x20c]]
        %v3538 = vstv %s3537
        %v3539 = vmul.f32 %v3231, %v3538
        %3541 = vrot.lane.b32.xlu0 %v3539, 126
        %v3542 = vpop.permute.xlu0 %3541
        %v3544 = vadd.f32 %v3416, %v3542
        %s3545 = sld [smem:[#allocation2 + $0x230]]
        %v3546 = vstv %s3545
        %v3547 = vmul.f32 %v3231, %v3546
        %3549 = vrot.lane.b32.xlu0 %v3547, 126
        %v3550 = vpop.permute.xlu0 %3549
        %v3552 = vadd.f32 %v3424, %v3550
        %s3553 = sld [smem:[#allocation2 + $0x15]]
        %v3554 = vstv %s3553
        %v3555 = vmul.f32 %v3231, %v3554
        %v3556 = vmul.f32 %v3232, %v3554
        %v3559 = vrot.slane %v3555, 1
        %v3560 = vrot.slane %v3556, 1
        %v3561 = vsel %vm541, %v3559, %v3560
        %v3563 = vadd.f32 %v3432, %v3561
        %s3564 = sld [smem:[#allocation2 + $0x39]]
        %v3565 = vstv %s3564
        %v3566 = vmul.f32 %v3231, %v3565
        %v3567 = vmul.f32 %v3232, %v3565
        %v3570 = vrot.slane %v3566, 1
        %v3571 = vrot.slane %v3567, 1
        %v3572 = vsel %vm541, %v3570, %v3571
        %v3574 = vadd.f32 %v3440, %v3572
        %s3575 = sld [smem:[#allocation2 + $0x5d]]
        %v3576 = vstv %s3575
        %v3577 = vmul.f32 %v3231, %v3576
        %v3578 = vmul.f32 %v3232, %v3576
        %v3581 = vrot.slane %v3577, 1
        %v3582 = vrot.slane %v3578, 1
        %v3583 = vsel %vm541, %v3581, %v3582
        %v3585 = vadd.f32 %v3448, %v3583
        %s3586 = sld [smem:[#allocation2 + $0x81]]
        %v3587 = vstv %s3586
        %v3588 = vmul.f32 %v3231, %v3587
        %v3589 = vmul.f32 %v3232, %v3587
        %v3592 = vrot.slane %v3588, 1
        %v3593 = vrot.slane %v3589, 1
        %v3594 = vsel %vm541, %v3592, %v3593
        %v3596 = vadd.f32 %v3456, %v3594
        %s3597 = sld [smem:[#allocation2 + $0xa5]]
        %v3598 = vstv %s3597
        %v3599 = vmul.f32 %v3231, %v3598
        %v3600 = vmul.f32 %v3232, %v3598
        %v3603 = vrot.slane %v3599, 1
        %v3604 = vrot.slane %v3600, 1
        %v3605 = vsel %vm541, %v3603, %v3604
        %v3607 = vadd.f32 %v3464, %v3605
        %s3608 = sld [smem:[#allocation2 + $0xc9]]
        %v3609 = vstv %s3608
        %v3610 = vmul.f32 %v3231, %v3609
        %v3611 = vmul.f32 %v3232, %v3609
        %v3614 = vrot.slane %v3610, 1
        %v3615 = vrot.slane %v3611, 1
        %v3616 = vsel %vm541, %v3614, %v3615
        %v3618 = vadd.f32 %v3472, %v3616
        %s3619 = sld [smem:[#allocation2 + $0xed]]
        %v3620 = vstv %s3619
        %v3621 = vmul.f32 %v3231, %v3620
        %v3622 = vmul.f32 %v3232, %v3620
        %v3625 = vrot.slane %v3621, 1
        %v3626 = vrot.slane %v3622, 1
        %v3627 = vsel %vm541, %v3625, %v3626
        %v3629 = vadd.f32 %v3480, %v3627
        %s3630 = sld [smem:[#allocation2 + $0x111]]
        %v3631 = vstv %s3630
        %v3632 = vmul.f32 %v3231, %v3631
        %v3633 = vmul.f32 %v3232, %v3631
        %v3636 = vrot.slane %v3632, 1
        %v3637 = vrot.slane %v3633, 1
        %v3638 = vsel %vm541, %v3636, %v3637
        %v3640 = vadd.f32 %v3488, %v3638
        %s3641 = sld [smem:[#allocation2 + $0x135]]
        %v3642 = vstv %s3641
        %v3643 = vmul.f32 %v3231, %v3642
        %v3644 = vmul.f32 %v3232, %v3642
        %v3647 = vrot.slane %v3643, 1
        %v3648 = vrot.slane %v3644, 1
        %v3649 = vsel %vm541, %v3647, %v3648
        %v3651 = vadd.f32 %v3496, %v3649
        %s3652 = sld [smem:[#allocation2 + $0x159]]
        %v3653 = vstv %s3652
        %v3654 = vmul.f32 %v3231, %v3653
        %v3655 = vmul.f32 %v3232, %v3653
        %v3658 = vrot.slane %v3654, 1
        %v3659 = vrot.slane %v3655, 1
        %v3660 = vsel %vm541, %v3658, %v3659
        %v3662 = vadd.f32 %v3504, %v3660
        %s3663 = sld [smem:[#allocation2 + $0x17d]]
        %v3664 = vstv %s3663
        %v3665 = vmul.f32 %v3231, %v3664
        %v3666 = vmul.f32 %v3232, %v3664
        %v3669 = vrot.slane %v3665, 1
        %v3670 = vrot.slane %v3666, 1
        %v3671 = vsel %vm541, %v3669, %v3670
        %v3673 = vadd.f32 %v3512, %v3671
        %s3674 = sld [smem:[#allocation2 + $0x1a1]]
        %v3675 = vstv %s3674
        %v3676 = vmul.f32 %v3231, %v3675
        %v3677 = vmul.f32 %v3232, %v3675
        %v3680 = vrot.slane %v3676, 1
        %v3681 = vrot.slane %v3677, 1
        %v3682 = vsel %vm541, %v3680, %v3681
        %v3684 = vadd.f32 %v3520, %v3682
        %s3685 = sld [smem:[#allocation2 + $0x1c5]]
        %v3686 = vstv %s3685
        %v3687 = vmul.f32 %v3231, %v3686
        %v3688 = vmul.f32 %v3232, %v3686
        %v3691 = vrot.slane %v3687, 1
        %v3692 = vrot.slane %v3688, 1
        %v3693 = vsel %vm541, %v3691, %v3692
        %v3695 = vadd.f32 %v3528, %v3693
        %s3696 = sld [smem:[#allocation2 + $0x1e9]]
        %v3697 = vstv %s3696
        %v3698 = vmul.f32 %v3231, %v3697
        %v3699 = vmul.f32 %v3232, %v3697
        %v3702 = vrot.slane %v3698, 1
        %v3703 = vrot.slane %v3699, 1
        %v3704 = vsel %vm541, %v3702, %v3703
        %v3706 = vadd.f32 %v3536, %v3704
        %s3707 = sld [smem:[#allocation2 + $0x20d]]
        %v3708 = vstv %s3707
        %v3709 = vmul.f32 %v3231, %v3708
        %v3710 = vmul.f32 %v3232, %v3708
        %v3713 = vrot.slane %v3709, 1
        %v3714 = vrot.slane %v3710, 1
        %v3715 = vsel %vm541, %v3713, %v3714
        %v3717 = vadd.f32 %v3544, %v3715
        %s3718 = sld [smem:[#allocation2 + $0x231]]
        %v3719 = vstv %s3718
        %v3720 = vmul.f32 %v3231, %v3719
        %v3721 = vmul.f32 %v3232, %v3719
        %v3724 = vrot.slane %v3720, 1
        %v3725 = vrot.slane %v3721, 1
        %v3726 = vsel %vm541, %v3724, %v3725
        %v3728 = vadd.f32 %v3552, %v3726
        %s3729 = sld [smem:[#allocation2 + $0x16]]
        %v3730 = vstv %s3729
        %v3731 = vmul.f32 %v3231, %v3730
        %v3732 = vmul.f32 %v3232, %v3730
        %v3735 = vrot.slane %v3731, 1
        %v3736 = vrot.slane %v3732, 1
        %v3737 = vsel %vm541, %v3735, %v3736
        %3738 = vrot.lane.b32.xlu0 %v3737, 127
        %v3739 = vpop.permute.xlu0 %3738
        %v3741 = vadd.f32 %v3563, %v3739
        %s3742 = sld [smem:[#allocation2 + $0x3a]]
        %v3743 = vstv %s3742
        %v3744 = vmul.f32 %v3231, %v3743
        %v3745 = vmul.f32 %v3232, %v3743
        %v3748 = vrot.slane %v3744, 1
        %v3749 = vrot.slane %v3745, 1
        %v3750 = vsel %vm541, %v3748, %v3749
        %3751 = vrot.lane.b32.xlu0 %v3750, 127
        %v3752 = vpop.permute.xlu0 %3751
        %v3754 = vadd.f32 %v3574, %v3752
        %s3755 = sld [smem:[#allocation2 + $0x5e]]
        %v3756 = vstv %s3755
        %v3757 = vmul.f32 %v3231, %v3756
        %v3758 = vmul.f32 %v3232, %v3756
        %v3761 = vrot.slane %v3757, 1
        %v3762 = vrot.slane %v3758, 1
        %v3763 = vsel %vm541, %v3761, %v3762
        %3764 = vrot.lane.b32.xlu0 %v3763, 127
        %v3765 = vpop.permute.xlu0 %3764
        %v3767 = vadd.f32 %v3585, %v3765
        %s3768 = sld [smem:[#allocation2 + $0x82]]
        %v3769 = vstv %s3768
        %v3770 = vmul.f32 %v3231, %v3769
        %v3771 = vmul.f32 %v3232, %v3769
        %v3774 = vrot.slane %v3770, 1
        %v3775 = vrot.slane %v3771, 1
        %v3776 = vsel %vm541, %v3774, %v3775
        %3777 = vrot.lane.b32.xlu0 %v3776, 127
        %v3778 = vpop.permute.xlu0 %3777
        %v3780 = vadd.f32 %v3596, %v3778
        %s3781 = sld [smem:[#allocation2 + $0xa6]]
        %v3782 = vstv %s3781
        %v3783 = vmul.f32 %v3231, %v3782
        %v3784 = vmul.f32 %v3232, %v3782
        %v3787 = vrot.slane %v3783, 1
        %v3788 = vrot.slane %v3784, 1
        %v3789 = vsel %vm541, %v3787, %v3788
        %3790 = vrot.lane.b32.xlu0 %v3789, 127
        %v3791 = vpop.permute.xlu0 %3790
        %v3793 = vadd.f32 %v3607, %v3791
        %s3794 = sld [smem:[#allocation2 + $0xca]]
        %v3795 = vstv %s3794
        %v3796 = vmul.f32 %v3231, %v3795
        %v3797 = vmul.f32 %v3232, %v3795
        %v3800 = vrot.slane %v3796, 1
        %v3801 = vrot.slane %v3797, 1
        %v3802 = vsel %vm541, %v3800, %v3801
        %3803 = vrot.lane.b32.xlu0 %v3802, 127
        %v3804 = vpop.permute.xlu0 %3803
        %v3806 = vadd.f32 %v3618, %v3804
        %s3807 = sld [smem:[#allocation2 + $0xee]]
        %v3808 = vstv %s3807
        %v3809 = vmul.f32 %v3231, %v3808
        %v3810 = vmul.f32 %v3232, %v3808
        %v3813 = vrot.slane %v3809, 1
        %v3814 = vrot.slane %v3810, 1
        %v3815 = vsel %vm541, %v3813, %v3814
        %3816 = vrot.lane.b32.xlu0 %v3815, 127
        %v3817 = vpop.permute.xlu0 %3816
        %v3819 = vadd.f32 %v3629, %v3817
        %s3820 = sld [smem:[#allocation2 + $0x112]]
        %v3821 = vstv %s3820
        %v3822 = vmul.f32 %v3231, %v3821
        %v3823 = vmul.f32 %v3232, %v3821
        %v3826 = vrot.slane %v3822, 1
        %v3827 = vrot.slane %v3823, 1
        %v3828 = vsel %vm541, %v3826, %v3827
        %3829 = vrot.lane.b32.xlu0 %v3828, 127
        %v3830 = vpop.permute.xlu0 %3829
        %v3832 = vadd.f32 %v3640, %v3830
        %s3833 = sld [smem:[#allocation2 + $0x136]]
        %v3834 = vstv %s3833
        %v3835 = vmul.f32 %v3231, %v3834
        %v3836 = vmul.f32 %v3232, %v3834
        %v3839 = vrot.slane %v3835, 1
        %v3840 = vrot.slane %v3836, 1
        %v3841 = vsel %vm541, %v3839, %v3840
        %3842 = vrot.lane.b32.xlu0 %v3841, 127
        %v3843 = vpop.permute.xlu0 %3842
        %v3845 = vadd.f32 %v3651, %v3843
        %s3846 = sld [smem:[#allocation2 + $0x15a]]
        %v3847 = vstv %s3846
        %v3848 = vmul.f32 %v3231, %v3847
        %v3849 = vmul.f32 %v3232, %v3847
        %v3852 = vrot.slane %v3848, 1
        %v3853 = vrot.slane %v3849, 1
        %v3854 = vsel %vm541, %v3852, %v3853
        %3855 = vrot.lane.b32.xlu0 %v3854, 127
        %v3856 = vpop.permute.xlu0 %3855
        %v3858 = vadd.f32 %v3662, %v3856
        %s3859 = sld [smem:[#allocation2 + $0x17e]]
        %v3860 = vstv %s3859
        %v3861 = vmul.f32 %v3231, %v3860
        %v3862 = vmul.f32 %v3232, %v3860
        %v3865 = vrot.slane %v3861, 1
        %v3866 = vrot.slane %v3862, 1
        %v3867 = vsel %vm541, %v3865, %v3866
        %3868 = vrot.lane.b32.xlu0 %v3867, 127
        %v3869 = vpop.permute.xlu0 %3868
        %v3871 = vadd.f32 %v3673, %v3869
        %s3872 = sld [smem:[#allocation2 + $0x1a2]]
        %v3873 = vstv %s3872
        %v3874 = vmul.f32 %v3231, %v3873
        %v3875 = vmul.f32 %v3232, %v3873
        %v3878 = vrot.slane %v3874, 1
        %v3879 = vrot.slane %v3875, 1
        %v3880 = vsel %vm541, %v3878, %v3879
        %3881 = vrot.lane.b32.xlu0 %v3880, 127
        %v3882 = vpop.permute.xlu0 %3881
        %v3884 = vadd.f32 %v3684, %v3882
        %s3885 = sld [smem:[#allocation2 + $0x1c6]]
        %v3886 = vstv %s3885
        %v3887 = vmul.f32 %v3231, %v3886
        %v3888 = vmul.f32 %v3232, %v3886
        %v3891 = vrot.slane %v3887, 1
        %v3892 = vrot.slane %v3888, 1
        %v3893 = vsel %vm541, %v3891, %v3892
        %3894 = vrot.lane.b32.xlu0 %v3893, 127
        %v3895 = vpop.permute.xlu0 %3894
        %v3897 = vadd.f32 %v3695, %v3895
        %s3898 = sld [smem:[#allocation2 + $0x1ea]]
        %v3899 = vstv %s3898
        %v3900 = vmul.f32 %v3231, %v3899
        %v3901 = vmul.f32 %v3232, %v3899
        %v3904 = vrot.slane %v3900, 1
        %v3905 = vrot.slane %v3901, 1
        %v3906 = vsel %vm541, %v3904, %v3905
        %3907 = vrot.lane.b32.xlu0 %v3906, 127
        %v3908 = vpop.permute.xlu0 %3907
        %v3910 = vadd.f32 %v3706, %v3908
        %s3911 = sld [smem:[#allocation2 + $0x20e]]
        %v3912 = vstv %s3911
        %v3913 = vmul.f32 %v3231, %v3912
        %v3914 = vmul.f32 %v3232, %v3912
        %v3917 = vrot.slane %v3913, 1
        %v3918 = vrot.slane %v3914, 1
        %v3919 = vsel %vm541, %v3917, %v3918
        %3920 = vrot.lane.b32.xlu0 %v3919, 127
        %v3921 = vpop.permute.xlu0 %3920
        %v3923 = vadd.f32 %v3717, %v3921
        %s3924 = sld [smem:[#allocation2 + $0x232]]
        %v3925 = vstv %s3924
        %v3926 = vmul.f32 %v3231, %v3925
        %v3927 = vmul.f32 %v3232, %v3925
        %v3930 = vrot.slane %v3926, 1
        %v3931 = vrot.slane %v3927, 1
        %v3932 = vsel %vm541, %v3930, %v3931
        %3933 = vrot.lane.b32.xlu0 %v3932, 127
        %v3934 = vpop.permute.xlu0 %3933
        %v3936 = vadd.f32 %v3728, %v3934
        %s3937 = sld [smem:[#allocation2 + $0x17]]
        %v3938 = vstv %s3937
        %v3939 = vmul.f32 %v3231, %v3938
        %v3940 = vmul.f32 %v3232, %v3938
        %v3943 = vrot.slane %v3939, 1
        %v3944 = vrot.slane %v3940, 1
        %v3945 = vsel %vm541, %v3943, %v3944
        %3946 = vrot.lane.b32.xlu0 %v3945, 126
        %v3947 = vpop.permute.xlu0 %3946
        %v3949 = vadd.f32 %v3741, %v3947
        %s3950 = sld [smem:[#allocation2 + $0x3b]]
        %v3951 = vstv %s3950
        %v3952 = vmul.f32 %v3231, %v3951
        %v3953 = vmul.f32 %v3232, %v3951
        %v3956 = vrot.slane %v3952, 1
        %v3957 = vrot.slane %v3953, 1
        %v3958 = vsel %vm541, %v3956, %v3957
        %3959 = vrot.lane.b32.xlu0 %v3958, 126
        %v3960 = vpop.permute.xlu0 %3959
        %v3962 = vadd.f32 %v3754, %v3960
        %s3963 = sld [smem:[#allocation2 + $0x5f]]
        %v3964 = vstv %s3963
        %v3965 = vmul.f32 %v3231, %v3964
        %v3966 = vmul.f32 %v3232, %v3964
        %v3969 = vrot.slane %v3965, 1
        %v3970 = vrot.slane %v3966, 1
        %v3971 = vsel %vm541, %v3969, %v3970
        %3972 = vrot.lane.b32.xlu0 %v3971, 126
        %v3973 = vpop.permute.xlu0 %3972
        %v3975 = vadd.f32 %v3767, %v3973
        %s3976 = sld [smem:[#allocation2 + $0x83]]
        %v3977 = vstv %s3976
        %v3978 = vmul.f32 %v3231, %v3977
        %v3979 = vmul.f32 %v3232, %v3977
        %v3982 = vrot.slane %v3978, 1
        %v3983 = vrot.slane %v3979, 1
        %v3984 = vsel %vm541, %v3982, %v3983
        %3985 = vrot.lane.b32.xlu0 %v3984, 126
        %v3986 = vpop.permute.xlu0 %3985
        %v3988 = vadd.f32 %v3780, %v3986
        %s3989 = sld [smem:[#allocation2 + $0xa7]]
        %v3990 = vstv %s3989
        %v3991 = vmul.f32 %v3231, %v3990
        %v3992 = vmul.f32 %v3232, %v3990
        %v3995 = vrot.slane %v3991, 1
        %v3996 = vrot.slane %v3992, 1
        %v3997 = vsel %vm541, %v3995, %v3996
        %3998 = vrot.lane.b32.xlu0 %v3997, 126
        %v3999 = vpop.permute.xlu0 %3998
        %v4001 = vadd.f32 %v3793, %v3999
        %s4002 = sld [smem:[#allocation2 + $0xcb]]
        %v4003 = vstv %s4002
        %v4004 = vmul.f32 %v3231, %v4003
        %v4005 = vmul.f32 %v3232, %v4003
        %v4008 = vrot.slane %v4004, 1
        %v4009 = vrot.slane %v4005, 1
        %v4010 = vsel %vm541, %v4008, %v4009
        %4011 = vrot.lane.b32.xlu0 %v4010, 126
        %v4012 = vpop.permute.xlu0 %4011
        %v4014 = vadd.f32 %v3806, %v4012
        %s4015 = sld [smem:[#allocation2 + $0xef]]
        %v4016 = vstv %s4015
        %v4017 = vmul.f32 %v3231, %v4016
        %v4018 = vmul.f32 %v3232, %v4016
        %v4021 = vrot.slane %v4017, 1
        %v4022 = vrot.slane %v4018, 1
        %v4023 = vsel %vm541, %v4021, %v4022
        %4024 = vrot.lane.b32.xlu0 %v4023, 126
        %v4025 = vpop.permute.xlu0 %4024
        %v4027 = vadd.f32 %v3819, %v4025
        %s4028 = sld [smem:[#allocation2 + $0x113]]
        %v4029 = vstv %s4028
        %v4030 = vmul.f32 %v3231, %v4029
        %v4031 = vmul.f32 %v3232, %v4029
        %v4034 = vrot.slane %v4030, 1
        %v4035 = vrot.slane %v4031, 1
        %v4036 = vsel %vm541, %v4034, %v4035
        %4037 = vrot.lane.b32.xlu0 %v4036, 126
        %v4038 = vpop.permute.xlu0 %4037
        %v4040 = vadd.f32 %v3832, %v4038
        %s4041 = sld [smem:[#allocation2 + $0x137]]
        %v4042 = vstv %s4041
        %v4043 = vmul.f32 %v3231, %v4042
        %v4044 = vmul.f32 %v3232, %v4042
        %v4047 = vrot.slane %v4043, 1
        %v4048 = vrot.slane %v4044, 1
        %v4049 = vsel %vm541, %v4047, %v4048
        %4050 = vrot.lane.b32.xlu0 %v4049, 126
        %v4051 = vpop.permute.xlu0 %4050
        %v4053 = vadd.f32 %v3845, %v4051
        %s4054 = sld [smem:[#allocation2 + $0x15b]]
        %v4055 = vstv %s4054
        %v4056 = vmul.f32 %v3231, %v4055
        %v4057 = vmul.f32 %v3232, %v4055
        %v4060 = vrot.slane %v4056, 1
        %v4061 = vrot.slane %v4057, 1
        %v4062 = vsel %vm541, %v4060, %v4061
        %4063 = vrot.lane.b32.xlu0 %v4062, 126
        %v4064 = vpop.permute.xlu0 %4063
        %v4066 = vadd.f32 %v3858, %v4064
        %s4067 = sld [smem:[#allocation2 + $0x17f]]
        %v4068 = vstv %s4067
        %v4069 = vmul.f32 %v3231, %v4068
        %v4070 = vmul.f32 %v3232, %v4068
        %v4073 = vrot.slane %v4069, 1
        %v4074 = vrot.slane %v4070, 1
        %v4075 = vsel %vm541, %v4073, %v4074
        %4076 = vrot.lane.b32.xlu0 %v4075, 126
        %v4077 = vpop.permute.xlu0 %4076
        %v4079 = vadd.f32 %v3871, %v4077
        %s4080 = sld [smem:[#allocation2 + $0x1a3]]
        %v4081 = vstv %s4080
        %v4082 = vmul.f32 %v3231, %v4081
        %v4083 = vmul.f32 %v3232, %v4081
        %v4086 = vrot.slane %v4082, 1
        %v4087 = vrot.slane %v4083, 1
        %v4088 = vsel %vm541, %v4086, %v4087
        %4089 = vrot.lane.b32.xlu0 %v4088, 126
        %v4090 = vpop.permute.xlu0 %4089
        %v4092 = vadd.f32 %v3884, %v4090
        %s4093 = sld [smem:[#allocation2 + $0x1c7]]
        %v4094 = vstv %s4093
        %v4095 = vmul.f32 %v3231, %v4094
        %v4096 = vmul.f32 %v3232, %v4094
        %v4099 = vrot.slane %v4095, 1
        %v4100 = vrot.slane %v4096, 1
        %v4101 = vsel %vm541, %v4099, %v4100
        %4102 = vrot.lane.b32.xlu0 %v4101, 126
        %v4103 = vpop.permute.xlu0 %4102
        %v4105 = vadd.f32 %v3897, %v4103
        %s4106 = sld [smem:[#allocation2 + $0x1eb]]
        %v4107 = vstv %s4106
        %v4108 = vmul.f32 %v3231, %v4107
        %v4109 = vmul.f32 %v3232, %v4107
        %v4112 = vrot.slane %v4108, 1
        %v4113 = vrot.slane %v4109, 1
        %v4114 = vsel %vm541, %v4112, %v4113
        %4115 = vrot.lane.b32.xlu0 %v4114, 126
        %v4116 = vpop.permute.xlu0 %4115
        %v4118 = vadd.f32 %v3910, %v4116
        %s4119 = sld [smem:[#allocation2 + $0x20f]]
        %v4120 = vstv %s4119
        %v4121 = vmul.f32 %v3231, %v4120
        %v4122 = vmul.f32 %v3232, %v4120
        %v4125 = vrot.slane %v4121, 1
        %v4126 = vrot.slane %v4122, 1
        %v4127 = vsel %vm541, %v4125, %v4126
        %4128 = vrot.lane.b32.xlu0 %v4127, 126
        %v4129 = vpop.permute.xlu0 %4128
        %v4131 = vadd.f32 %v3923, %v4129
        %s4132 = sld [smem:[#allocation2 + $0x233]]
        %v4133 = vstv %s4132
        %v4134 = vmul.f32 %v3231, %v4133
        %v4135 = vmul.f32 %v3232, %v4133
        %v4138 = vrot.slane %v4134, 1
        %v4139 = vrot.slane %v4135, 1
        %v4140 = vsel %vm541, %v4138, %v4139
        %4141 = vrot.lane.b32.xlu0 %v4140, 126
        %v4142 = vpop.permute.xlu0 %4141
        %v4144 = vadd.f32 %v3936, %v4142
        %s4145 = sld [smem:[#allocation2 + $0x18]]
        %v4146 = vstv %s4145
        %v4147 = vmul.f32 %v3231, %v4146
        %v4148 = vmul.f32 %v3232, %v4146
        %v4151 = vrot.slane %v4147, 2
        %v4152 = vrot.slane %v4148, 2
        %v4153 = vsel %vm1134, %v4151, %v4152
        %v4155 = vadd.f32 %v3949, %v4153
        %s4156 = sld [smem:[#allocation2 + $0x3c]]
        %v4157 = vstv %s4156
        %v4158 = vmul.f32 %v3231, %v4157
        %v4159 = vmul.f32 %v3232, %v4157
        %v4162 = vrot.slane %v4158, 2
        %v4163 = vrot.slane %v4159, 2
        %v4164 = vsel %vm1134, %v4162, %v4163
        %v4166 = vadd.f32 %v3962, %v4164
        %s4167 = sld [smem:[#allocation2 + $0x60]]
        %v4168 = vstv %s4167
        %v4169 = vmul.f32 %v3231, %v4168
        %v4170 = vmul.f32 %v3232, %v4168
        %v4173 = vrot.slane %v4169, 2
        %v4174 = vrot.slane %v4170, 2
        %v4175 = vsel %vm1134, %v4173, %v4174
        %v4177 = vadd.f32 %v3975, %v4175
        %s4178 = sld [smem:[#allocation2 + $0x84]]
        %v4179 = vstv %s4178
        %v4180 = vmul.f32 %v3231, %v4179
        %v4181 = vmul.f32 %v3232, %v4179
        %v4184 = vrot.slane %v4180, 2
        %v4185 = vrot.slane %v4181, 2
        %v4186 = vsel %vm1134, %v4184, %v4185
        %v4188 = vadd.f32 %v3988, %v4186
        %s4189 = sld [smem:[#allocation2 + $0xa8]]
        %v4190 = vstv %s4189
        %v4191 = vmul.f32 %v3231, %v4190
        %v4192 = vmul.f32 %v3232, %v4190
        %v4195 = vrot.slane %v4191, 2
        %v4196 = vrot.slane %v4192, 2
        %v4197 = vsel %vm1134, %v4195, %v4196
        %v4199 = vadd.f32 %v4001, %v4197
        %s4200 = sld [smem:[#allocation2 + $0xcc]]
        %v4201 = vstv %s4200
        %v4202 = vmul.f32 %v3231, %v4201
        %v4203 = vmul.f32 %v3232, %v4201
        %v4206 = vrot.slane %v4202, 2
        %v4207 = vrot.slane %v4203, 2
        %v4208 = vsel %vm1134, %v4206, %v4207
        %v4210 = vadd.f32 %v4014, %v4208
        %s4211 = sld [smem:[#allocation2 + $0xf0]]
        %v4212 = vstv %s4211
        %v4213 = vmul.f32 %v3231, %v4212
        %v4214 = vmul.f32 %v3232, %v4212
        %v4217 = vrot.slane %v4213, 2
        %v4218 = vrot.slane %v4214, 2
        %v4219 = vsel %vm1134, %v4217, %v4218
        %v4221 = vadd.f32 %v4027, %v4219
        %s4222 = sld [smem:[#allocation2 + $0x114]]
        %v4223 = vstv %s4222
        %v4224 = vmul.f32 %v3231, %v4223
        %v4225 = vmul.f32 %v3232, %v4223
        %v4228 = vrot.slane %v4224, 2
        %v4229 = vrot.slane %v4225, 2
        %v4230 = vsel %vm1134, %v4228, %v4229
        %v4232 = vadd.f32 %v4040, %v4230
        %s4233 = sld [smem:[#allocation2 + $0x138]]
        %v4234 = vstv %s4233
        %v4235 = vmul.f32 %v3231, %v4234
        %v4236 = vmul.f32 %v3232, %v4234
        %v4239 = vrot.slane %v4235, 2
        %v4240 = vrot.slane %v4236, 2
        %v4241 = vsel %vm1134, %v4239, %v4240
        %v4243 = vadd.f32 %v4053, %v4241
        %s4244 = sld [smem:[#allocation2 + $0x15c]]
        %v4245 = vstv %s4244
        %v4246 = vmul.f32 %v3231, %v4245
        %v4247 = vmul.f32 %v3232, %v4245
        %v4250 = vrot.slane %v4246, 2
        %v4251 = vrot.slane %v4247, 2
        %v4252 = vsel %vm1134, %v4250, %v4251
        %v4254 = vadd.f32 %v4066, %v4252
        %s4255 = sld [smem:[#allocation2 + $0x180]]
        %v4256 = vstv %s4255
        %v4257 = vmul.f32 %v3231, %v4256
        %v4258 = vmul.f32 %v3232, %v4256
        %v4261 = vrot.slane %v4257, 2
        %v4262 = vrot.slane %v4258, 2
        %v4263 = vsel %vm1134, %v4261, %v4262
        %v4265 = vadd.f32 %v4079, %v4263
        %s4266 = sld [smem:[#allocation2 + $0x1a4]]
        %v4267 = vstv %s4266
        %v4268 = vmul.f32 %v3231, %v4267
        %v4269 = vmul.f32 %v3232, %v4267
        %v4272 = vrot.slane %v4268, 2
        %v4273 = vrot.slane %v4269, 2
        %v4274 = vsel %vm1134, %v4272, %v4273
        %v4276 = vadd.f32 %v4092, %v4274
        %s4277 = sld [smem:[#allocation2 + $0x1c8]]
        %v4278 = vstv %s4277
        %v4279 = vmul.f32 %v3231, %v4278
        %v4280 = vmul.f32 %v3232, %v4278
        %v4283 = vrot.slane %v4279, 2
        %v4284 = vrot.slane %v4280, 2
        %v4285 = vsel %vm1134, %v4283, %v4284
        %v4287 = vadd.f32 %v4105, %v4285
        %s4288 = sld [smem:[#allocation2 + $0x1ec]]
        %v4289 = vstv %s4288
        %v4290 = vmul.f32 %v3231, %v4289
        %v4291 = vmul.f32 %v3232, %v4289
        %v4294 = vrot.slane %v4290, 2
        %v4295 = vrot.slane %v4291, 2
        %v4296 = vsel %vm1134, %v4294, %v4295
        %v4298 = vadd.f32 %v4118, %v4296
        %s4299 = sld [smem:[#allocation2 + $0x210]]
        %v4300 = vstv %s4299
        %v4301 = vmul.f32 %v3231, %v4300
        %v4302 = vmul.f32 %v3232, %v4300
        %v4305 = vrot.slane %v4301, 2
        %v4306 = vrot.slane %v4302, 2
        %v4307 = vsel %vm1134, %v4305, %v4306
        %v4309 = vadd.f32 %v4131, %v4307
        %s4310 = sld [smem:[#allocation2 + $0x234]]
        %v4311 = vstv %s4310
        %v4312 = vmul.f32 %v3231, %v4311
        %v4313 = vmul.f32 %v3232, %v4311
        %v4316 = vrot.slane %v4312, 2
        %v4317 = vrot.slane %v4313, 2
        %v4318 = vsel %vm1134, %v4316, %v4317
        %v4320 = vadd.f32 %v4144, %v4318
        %s4321 = sld [smem:[#allocation2 + $0x19]]
        %v4322 = vstv %s4321
        %v4323 = vmul.f32 %v3231, %v4322
        %v4324 = vmul.f32 %v3232, %v4322
        %v4327 = vrot.slane %v4323, 2
        %v4328 = vrot.slane %v4324, 2
        %v4329 = vsel %vm1134, %v4327, %v4328
        %4330 = vrot.lane.b32.xlu0 %v4329, 127
        %v4331 = vpop.permute.xlu0 %4330
        %v4333 = vadd.f32 %v4155, %v4331
        %s4334 = sld [smem:[#allocation2 + $0x3d]]
        %v4335 = vstv %s4334
        %v4336 = vmul.f32 %v3231, %v4335
        %v4337 = vmul.f32 %v3232, %v4335
        %v4340 = vrot.slane %v4336, 2
        %v4341 = vrot.slane %v4337, 2
        %v4342 = vsel %vm1134, %v4340, %v4341
        %4343 = vrot.lane.b32.xlu0 %v4342, 127
        %v4344 = vpop.permute.xlu0 %4343
        %v4346 = vadd.f32 %v4166, %v4344
        %s4347 = sld [smem:[#allocation2 + $0x61]]
        %v4348 = vstv %s4347
        %v4349 = vmul.f32 %v3231, %v4348
        %v4350 = vmul.f32 %v3232, %v4348
        %v4353 = vrot.slane %v4349, 2
        %v4354 = vrot.slane %v4350, 2
        %v4355 = vsel %vm1134, %v4353, %v4354
        %4356 = vrot.lane.b32.xlu0 %v4355, 127
        %v4357 = vpop.permute.xlu0 %4356
        %v4359 = vadd.f32 %v4177, %v4357
        %s4360 = sld [smem:[#allocation2 + $0x85]]
        %v4361 = vstv %s4360
        %v4362 = vmul.f32 %v3231, %v4361
        %v4363 = vmul.f32 %v3232, %v4361
        %v4366 = vrot.slane %v4362, 2
        %v4367 = vrot.slane %v4363, 2
        %v4368 = vsel %vm1134, %v4366, %v4367
        %4369 = vrot.lane.b32.xlu0 %v4368, 127
        %v4370 = vpop.permute.xlu0 %4369
        %v4372 = vadd.f32 %v4188, %v4370
        %s4373 = sld [smem:[#allocation2 + $0xa9]]
        %v4374 = vstv %s4373
        %v4375 = vmul.f32 %v3231, %v4374
        %v4376 = vmul.f32 %v3232, %v4374
        %v4379 = vrot.slane %v4375, 2
        %v4380 = vrot.slane %v4376, 2
        %v4381 = vsel %vm1134, %v4379, %v4380
        %4382 = vrot.lane.b32.xlu0 %v4381, 127
        %v4383 = vpop.permute.xlu0 %4382
        %v4385 = vadd.f32 %v4199, %v4383
        %s4386 = sld [smem:[#allocation2 + $0xcd]]
        %v4387 = vstv %s4386
        %v4388 = vmul.f32 %v3231, %v4387
        %v4389 = vmul.f32 %v3232, %v4387
        %v4392 = vrot.slane %v4388, 2
        %v4393 = vrot.slane %v4389, 2
        %v4394 = vsel %vm1134, %v4392, %v4393
        %4395 = vrot.lane.b32.xlu0 %v4394, 127
        %v4396 = vpop.permute.xlu0 %4395
        %v4398 = vadd.f32 %v4210, %v4396
        %s4399 = sld [smem:[#allocation2 + $0xf1]]
        %v4400 = vstv %s4399
        %v4401 = vmul.f32 %v3231, %v4400
        %v4402 = vmul.f32 %v3232, %v4400
        %v4405 = vrot.slane %v4401, 2
        %v4406 = vrot.slane %v4402, 2
        %v4407 = vsel %vm1134, %v4405, %v4406
        %4408 = vrot.lane.b32.xlu0 %v4407, 127
        %v4409 = vpop.permute.xlu0 %4408
        %v4411 = vadd.f32 %v4221, %v4409
        %s4412 = sld [smem:[#allocation2 + $0x115]]
        %v4413 = vstv %s4412
        %v4414 = vmul.f32 %v3231, %v4413
        %v4415 = vmul.f32 %v3232, %v4413
        %v4418 = vrot.slane %v4414, 2
        %v4419 = vrot.slane %v4415, 2
        %v4420 = vsel %vm1134, %v4418, %v4419
        %4421 = vrot.lane.b32.xlu0 %v4420, 127
        %v4422 = vpop.permute.xlu0 %4421
        %v4424 = vadd.f32 %v4232, %v4422
        %s4425 = sld [smem:[#allocation2 + $0x139]]
        %v4426 = vstv %s4425
        %v4427 = vmul.f32 %v3231, %v4426
        %v4428 = vmul.f32 %v3232, %v4426
        %v4431 = vrot.slane %v4427, 2
        %v4432 = vrot.slane %v4428, 2
        %v4433 = vsel %vm1134, %v4431, %v4432
        %4434 = vrot.lane.b32.xlu0 %v4433, 127
        %v4435 = vpop.permute.xlu0 %4434
        %v4437 = vadd.f32 %v4243, %v4435
        %s4438 = sld [smem:[#allocation2 + $0x15d]]
        %v4439 = vstv %s4438
        %v4440 = vmul.f32 %v3231, %v4439
        %v4441 = vmul.f32 %v3232, %v4439
        %v4444 = vrot.slane %v4440, 2
        %v4445 = vrot.slane %v4441, 2
        %v4446 = vsel %vm1134, %v4444, %v4445
        %4447 = vrot.lane.b32.xlu0 %v4446, 127
        %v4448 = vpop.permute.xlu0 %4447
        %v4450 = vadd.f32 %v4254, %v4448
        %s4451 = sld [smem:[#allocation2 + $0x181]]
        %v4452 = vstv %s4451
        %v4453 = vmul.f32 %v3231, %v4452
        %v4454 = vmul.f32 %v3232, %v4452
        %v4457 = vrot.slane %v4453, 2
        %v4458 = vrot.slane %v4454, 2
        %v4459 = vsel %vm1134, %v4457, %v4458
        %4460 = vrot.lane.b32.xlu0 %v4459, 127
        %v4461 = vpop.permute.xlu0 %4460
        %v4463 = vadd.f32 %v4265, %v4461
        %s4464 = sld [smem:[#allocation2 + $0x1a5]]
        %v4465 = vstv %s4464
        %v4466 = vmul.f32 %v3231, %v4465
        %v4467 = vmul.f32 %v3232, %v4465
        %v4470 = vrot.slane %v4466, 2
        %v4471 = vrot.slane %v4467, 2
        %v4472 = vsel %vm1134, %v4470, %v4471
        %4473 = vrot.lane.b32.xlu0 %v4472, 127
        %v4474 = vpop.permute.xlu0 %4473
        %v4476 = vadd.f32 %v4276, %v4474
        %s4477 = sld [smem:[#allocation2 + $0x1c9]]
        %v4478 = vstv %s4477
        %v4479 = vmul.f32 %v3231, %v4478
        %v4480 = vmul.f32 %v3232, %v4478
        %v4483 = vrot.slane %v4479, 2
        %v4484 = vrot.slane %v4480, 2
        %v4485 = vsel %vm1134, %v4483, %v4484
        %4486 = vrot.lane.b32.xlu0 %v4485, 127
        %v4487 = vpop.permute.xlu0 %4486
        %v4489 = vadd.f32 %v4287, %v4487
        %s4490 = sld [smem:[#allocation2 + $0x1ed]]
        %v4491 = vstv %s4490
        %v4492 = vmul.f32 %v3231, %v4491
        %v4493 = vmul.f32 %v3232, %v4491
        %v4496 = vrot.slane %v4492, 2
        %v4497 = vrot.slane %v4493, 2
        %v4498 = vsel %vm1134, %v4496, %v4497
        %4499 = vrot.lane.b32.xlu0 %v4498, 127
        %v4500 = vpop.permute.xlu0 %4499
        %v4502 = vadd.f32 %v4298, %v4500
        %s4503 = sld [smem:[#allocation2 + $0x211]]
        %v4504 = vstv %s4503
        %v4505 = vmul.f32 %v3231, %v4504
        %v4506 = vmul.f32 %v3232, %v4504
        %v4509 = vrot.slane %v4505, 2
        %v4510 = vrot.slane %v4506, 2
        %v4511 = vsel %vm1134, %v4509, %v4510
        %4512 = vrot.lane.b32.xlu0 %v4511, 127
        %v4513 = vpop.permute.xlu0 %4512
        %v4515 = vadd.f32 %v4309, %v4513
        %s4516 = sld [smem:[#allocation2 + $0x235]]
        %v4517 = vstv %s4516
        %v4518 = vmul.f32 %v3231, %v4517
        %v4519 = vmul.f32 %v3232, %v4517
        %v4522 = vrot.slane %v4518, 2
        %v4523 = vrot.slane %v4519, 2
        %v4524 = vsel %vm1134, %v4522, %v4523
        %4525 = vrot.lane.b32.xlu0 %v4524, 127
        %v4526 = vpop.permute.xlu0 %4525
        %v4528 = vadd.f32 %v4320, %v4526
        %s4529 = sld [smem:[#allocation2 + $0x1a]]
        %v4530 = vstv %s4529
        %v4531 = vmul.f32 %v3231, %v4530
        %v4532 = vmul.f32 %v3232, %v4530
        %v4535 = vrot.slane %v4531, 2
        %v4536 = vrot.slane %v4532, 2
        %v4537 = vsel %vm1134, %v4535, %v4536
        %4538 = vrot.lane.b32.xlu0 %v4537, 126
        %v4539 = vpop.permute.xlu0 %4538
        %v4541 = vadd.f32 %v4333, %v4539
        %s4542 = sld [smem:[#allocation2 + $0x3e]]
        %v4543 = vstv %s4542
        %v4544 = vmul.f32 %v3231, %v4543
        %v4545 = vmul.f32 %v3232, %v4543
        %v4548 = vrot.slane %v4544, 2
        %v4549 = vrot.slane %v4545, 2
        %v4550 = vsel %vm1134, %v4548, %v4549
        %4551 = vrot.lane.b32.xlu0 %v4550, 126
        %v4552 = vpop.permute.xlu0 %4551
        %v4554 = vadd.f32 %v4346, %v4552
        %s4555 = sld [smem:[#allocation2 + $0x62]]
        %v4556 = vstv %s4555
        %v4557 = vmul.f32 %v3231, %v4556
        %v4558 = vmul.f32 %v3232, %v4556
        %v4561 = vrot.slane %v4557, 2
        %v4562 = vrot.slane %v4558, 2
        %v4563 = vsel %vm1134, %v4561, %v4562
        %4564 = vrot.lane.b32.xlu0 %v4563, 126
        %v4565 = vpop.permute.xlu0 %4564
        %v4567 = vadd.f32 %v4359, %v4565
        %s4568 = sld [smem:[#allocation2 + $0x86]]
        %v4569 = vstv %s4568
        %v4570 = vmul.f32 %v3231, %v4569
        %v4571 = vmul.f32 %v3232, %v4569
        %v4574 = vrot.slane %v4570, 2
        %v4575 = vrot.slane %v4571, 2
        %v4576 = vsel %vm1134, %v4574, %v4575
        %4577 = vrot.lane.b32.xlu0 %v4576, 126
        %v4578 = vpop.permute.xlu0 %4577
        %v4580 = vadd.f32 %v4372, %v4578
        %s4581 = sld [smem:[#allocation2 + $0xaa]]
        %v4582 = vstv %s4581
        %v4583 = vmul.f32 %v3231, %v4582
        %v4584 = vmul.f32 %v3232, %v4582
        %v4587 = vrot.slane %v4583, 2
        %v4588 = vrot.slane %v4584, 2
        %v4589 = vsel %vm1134, %v4587, %v4588
        %4590 = vrot.lane.b32.xlu0 %v4589, 126
        %v4591 = vpop.permute.xlu0 %4590
        %v4593 = vadd.f32 %v4385, %v4591
        %s4594 = sld [smem:[#allocation2 + $0xce]]
        %v4595 = vstv %s4594
        %v4596 = vmul.f32 %v3231, %v4595
        %v4597 = vmul.f32 %v3232, %v4595
        %v4600 = vrot.slane %v4596, 2
        %v4601 = vrot.slane %v4597, 2
        %v4602 = vsel %vm1134, %v4600, %v4601
        %4603 = vrot.lane.b32.xlu0 %v4602, 126
        %v4604 = vpop.permute.xlu0 %4603
        %v4606 = vadd.f32 %v4398, %v4604
        %s4607 = sld [smem:[#allocation2 + $0xf2]]
        %v4608 = vstv %s4607
        %v4609 = vmul.f32 %v3231, %v4608
        %v4610 = vmul.f32 %v3232, %v4608
        %v4613 = vrot.slane %v4609, 2
        %v4614 = vrot.slane %v4610, 2
        %v4615 = vsel %vm1134, %v4613, %v4614
        %4616 = vrot.lane.b32.xlu0 %v4615, 126
        %v4617 = vpop.permute.xlu0 %4616
        %v4619 = vadd.f32 %v4411, %v4617
        %s4620 = sld [smem:[#allocation2 + $0x116]]
        %v4621 = vstv %s4620
        %v4622 = vmul.f32 %v3231, %v4621
        %v4623 = vmul.f32 %v3232, %v4621
        %v4626 = vrot.slane %v4622, 2
        %v4627 = vrot.slane %v4623, 2
        %v4628 = vsel %vm1134, %v4626, %v4627
        %4629 = vrot.lane.b32.xlu0 %v4628, 126
        %v4630 = vpop.permute.xlu0 %4629
        %v4632 = vadd.f32 %v4424, %v4630
        %s4633 = sld [smem:[#allocation2 + $0x13a]]
        %v4634 = vstv %s4633
        %v4635 = vmul.f32 %v3231, %v4634
        %v4636 = vmul.f32 %v3232, %v4634
        %v4639 = vrot.slane %v4635, 2
        %v4640 = vrot.slane %v4636, 2
        %v4641 = vsel %vm1134, %v4639, %v4640
        %4642 = vrot.lane.b32.xlu0 %v4641, 126
        %v4643 = vpop.permute.xlu0 %4642
        %v4645 = vadd.f32 %v4437, %v4643
        %s4646 = sld [smem:[#allocation2 + $0x15e]]
        %v4647 = vstv %s4646
        %v4648 = vmul.f32 %v3231, %v4647
        %v4649 = vmul.f32 %v3232, %v4647
        %v4652 = vrot.slane %v4648, 2
        %v4653 = vrot.slane %v4649, 2
        %v4654 = vsel %vm1134, %v4652, %v4653
        %4655 = vrot.lane.b32.xlu0 %v4654, 126
        %v4656 = vpop.permute.xlu0 %4655
        %v4658 = vadd.f32 %v4450, %v4656
        %s4659 = sld [smem:[#allocation2 + $0x182]]
        %v4660 = vstv %s4659
        %v4661 = vmul.f32 %v3231, %v4660
        %v4662 = vmul.f32 %v3232, %v4660
        %v4665 = vrot.slane %v4661, 2
        %v4666 = vrot.slane %v4662, 2
        %v4667 = vsel %vm1134, %v4665, %v4666
        %4668 = vrot.lane.b32.xlu0 %v4667, 126
        %v4669 = vpop.permute.xlu0 %4668
        %v4671 = vadd.f32 %v4463, %v4669
        %s4672 = sld [smem:[#allocation2 + $0x1a6]]
        %v4673 = vstv %s4672
        %v4674 = vmul.f32 %v3231, %v4673
        %v4675 = vmul.f32 %v3232, %v4673
        %v4678 = vrot.slane %v4674, 2
        %v4679 = vrot.slane %v4675, 2
        %v4680 = vsel %vm1134, %v4678, %v4679
        %4681 = vrot.lane.b32.xlu0 %v4680, 126
        %v4682 = vpop.permute.xlu0 %4681
        %v4684 = vadd.f32 %v4476, %v4682
        %s4685 = sld [smem:[#allocation2 + $0x1ca]]
        %v4686 = vstv %s4685
        %v4687 = vmul.f32 %v3231, %v4686
        %v4688 = vmul.f32 %v3232, %v4686
        %v4691 = vrot.slane %v4687, 2
        %v4692 = vrot.slane %v4688, 2
        %v4693 = vsel %vm1134, %v4691, %v4692
        %4694 = vrot.lane.b32.xlu0 %v4693, 126
        %v4695 = vpop.permute.xlu0 %4694
        %v4697 = vadd.f32 %v4489, %v4695
        %s4698 = sld [smem:[#allocation2 + $0x1ee]]
        %v4699 = vstv %s4698
        %v4700 = vmul.f32 %v3231, %v4699
        %v4701 = vmul.f32 %v3232, %v4699
        %v4704 = vrot.slane %v4700, 2
        %v4705 = vrot.slane %v4701, 2
        %v4706 = vsel %vm1134, %v4704, %v4705
        %4707 = vrot.lane.b32.xlu0 %v4706, 126
        %v4708 = vpop.permute.xlu0 %4707
        %v4710 = vadd.f32 %v4502, %v4708
        %s4711 = sld [smem:[#allocation2 + $0x212]]
        %v4712 = vstv %s4711
        %v4713 = vmul.f32 %v3231, %v4712
        %v4714 = vmul.f32 %v3232, %v4712
        %v4717 = vrot.slane %v4713, 2
        %v4718 = vrot.slane %v4714, 2
        %v4719 = vsel %vm1134, %v4717, %v4718
        %4720 = vrot.lane.b32.xlu0 %v4719, 126
        %v4721 = vpop.permute.xlu0 %4720
        %v4723 = vadd.f32 %v4515, %v4721
        %s4724 = sld [smem:[#allocation2 + $0x236]]
        %v4725 = vstv %s4724
        %v4726 = vmul.f32 %v3231, %v4725
        %v4727 = vmul.f32 %v3232, %v4725
        %v4730 = vrot.slane %v4726, 2
        %v4731 = vrot.slane %v4727, 2
        %v4732 = vsel %vm1134, %v4730, %v4731
        %4733 = vrot.lane.b32.xlu0 %v4732, 126
        %v4734 = vpop.permute.xlu0 %4733
        %v4736 = vadd.f32 %v4528, %v4734
        %s4737 = sadd.s32 %s211, 72
        %s4738 = scalar_lea.vmem %s209, %s4737
        %v4739 = vld [vmem:[%s4738] sm:$0xff]
        %v4740 = vld [vmem:[%s4738 + $0x8] sm:$0x3]
        %s4741 = sld [smem:[#allocation2 + $0x1b]]
        %v4742 = vstv %s4741
        %v4743 = vmul.f32 %v4739, %v4742
        %v4744 = vadd.f32 %v4541, %v4743
        %s4745 = sld [smem:[#allocation2 + $0x3f]]
        %v4746 = vstv %s4745
        %v4747 = vmul.f32 %v4739, %v4746
        %v4748 = vadd.f32 %v4554, %v4747
        %s4749 = sld [smem:[#allocation2 + $0x63]]
        %v4750 = vstv %s4749
        %v4751 = vmul.f32 %v4739, %v4750
        %v4752 = vadd.f32 %v4567, %v4751
        %s4753 = sld [smem:[#allocation2 + $0x87]]
        %v4754 = vstv %s4753
        %v4755 = vmul.f32 %v4739, %v4754
        %v4756 = vadd.f32 %v4580, %v4755
        %s4757 = sld [smem:[#allocation2 + $0xab]]
        %v4758 = vstv %s4757
        %v4759 = vmul.f32 %v4739, %v4758
        %v4760 = vadd.f32 %v4593, %v4759
        %s4761 = sld [smem:[#allocation2 + $0xcf]]
        %v4762 = vstv %s4761
        %v4763 = vmul.f32 %v4739, %v4762
        %v4764 = vadd.f32 %v4606, %v4763
        %s4765 = sld [smem:[#allocation2 + $0xf3]]
        %v4766 = vstv %s4765
        %v4767 = vmul.f32 %v4739, %v4766
        %v4768 = vadd.f32 %v4619, %v4767
        %s4769 = sld [smem:[#allocation2 + $0x117]]
        %v4770 = vstv %s4769
        %v4771 = vmul.f32 %v4739, %v4770
        %v4772 = vadd.f32 %v4632, %v4771
        %s4773 = sld [smem:[#allocation2 + $0x13b]]
        %v4774 = vstv %s4773
        %v4775 = vmul.f32 %v4739, %v4774
        %v4776 = vadd.f32 %v4645, %v4775
        %s4777 = sld [smem:[#allocation2 + $0x15f]]
        %v4778 = vstv %s4777
        %v4779 = vmul.f32 %v4739, %v4778
        %v4780 = vadd.f32 %v4658, %v4779
        %s4781 = sld [smem:[#allocation2 + $0x183]]
        %v4782 = vstv %s4781
        %v4783 = vmul.f32 %v4739, %v4782
        %v4784 = vadd.f32 %v4671, %v4783
        %s4785 = sld [smem:[#allocation2 + $0x1a7]]
        %v4786 = vstv %s4785
        %v4787 = vmul.f32 %v4739, %v4786
        %v4788 = vadd.f32 %v4684, %v4787
        %s4789 = sld [smem:[#allocation2 + $0x1cb]]
        %v4790 = vstv %s4789
        %v4791 = vmul.f32 %v4739, %v4790
        %v4792 = vadd.f32 %v4697, %v4791
        %s4793 = sld [smem:[#allocation2 + $0x1ef]]
        %v4794 = vstv %s4793
        %v4795 = vmul.f32 %v4739, %v4794
        %v4796 = vadd.f32 %v4710, %v4795
        %s4797 = sld [smem:[#allocation2 + $0x213]]
        %v4798 = vstv %s4797
        %v4799 = vmul.f32 %v4739, %v4798
        %v4800 = vadd.f32 %v4723, %v4799
        %s4801 = sld [smem:[#allocation2 + $0x237]]
        %v4802 = vstv %s4801
        %v4803 = vmul.f32 %v4739, %v4802
        %v4804 = vadd.f32 %v4736, %v4803
        %s4805 = sld [smem:[#allocation2 + $0x1c]]
        %v4806 = vstv %s4805
        %v4807 = vmul.f32 %v4739, %v4806
        %4809 = vrot.lane.b32.xlu0 %v4807, 127
        %v4810 = vpop.permute.xlu0 %4809
        %v4812 = vadd.f32 %v4744, %v4810
        %s4813 = sld [smem:[#allocation2 + $0x40]]
        %v4814 = vstv %s4813
        %v4815 = vmul.f32 %v4739, %v4814
        %4817 = vrot.lane.b32.xlu0 %v4815, 127
        %v4818 = vpop.permute.xlu0 %4817
        %v4820 = vadd.f32 %v4748, %v4818
        %s4821 = sld [smem:[#allocation2 + $0x64]]
        %v4822 = vstv %s4821
        %v4823 = vmul.f32 %v4739, %v4822
        %4825 = vrot.lane.b32.xlu0 %v4823, 127
        %v4826 = vpop.permute.xlu0 %4825
        %v4828 = vadd.f32 %v4752, %v4826
        %s4829 = sld [smem:[#allocation2 + $0x88]]
        %v4830 = vstv %s4829
        %v4831 = vmul.f32 %v4739, %v4830
        %4833 = vrot.lane.b32.xlu0 %v4831, 127
        %v4834 = vpop.permute.xlu0 %4833
        %v4836 = vadd.f32 %v4756, %v4834
        %s4837 = sld [smem:[#allocation2 + $0xac]]
        %v4838 = vstv %s4837
        %v4839 = vmul.f32 %v4739, %v4838
        %4841 = vrot.lane.b32.xlu0 %v4839, 127
        %v4842 = vpop.permute.xlu0 %4841
        %v4844 = vadd.f32 %v4760, %v4842
        %s4845 = sld [smem:[#allocation2 + $0xd0]]
        %v4846 = vstv %s4845
        %v4847 = vmul.f32 %v4739, %v4846
        %4849 = vrot.lane.b32.xlu0 %v4847, 127
        %v4850 = vpop.permute.xlu0 %4849
        %v4852 = vadd.f32 %v4764, %v4850
        %s4853 = sld [smem:[#allocation2 + $0xf4]]
        %v4854 = vstv %s4853
        %v4855 = vmul.f32 %v4739, %v4854
        %4857 = vrot.lane.b32.xlu0 %v4855, 127
        %v4858 = vpop.permute.xlu0 %4857
        %v4860 = vadd.f32 %v4768, %v4858
        %s4861 = sld [smem:[#allocation2 + $0x118]]
        %v4862 = vstv %s4861
        %v4863 = vmul.f32 %v4739, %v4862
        %4865 = vrot.lane.b32.xlu0 %v4863, 127
        %v4866 = vpop.permute.xlu0 %4865
        %v4868 = vadd.f32 %v4772, %v4866
        %s4869 = sld [smem:[#allocation2 + $0x13c]]
        %v4870 = vstv %s4869
        %v4871 = vmul.f32 %v4739, %v4870
        %4873 = vrot.lane.b32.xlu0 %v4871, 127
        %v4874 = vpop.permute.xlu0 %4873
        %v4876 = vadd.f32 %v4776, %v4874
        %s4877 = sld [smem:[#allocation2 + $0x160]]
        %v4878 = vstv %s4877
        %v4879 = vmul.f32 %v4739, %v4878
        %4881 = vrot.lane.b32.xlu0 %v4879, 127
        %v4882 = vpop.permute.xlu0 %4881
        %v4884 = vadd.f32 %v4780, %v4882
        %s4885 = sld [smem:[#allocation2 + $0x184]]
        %v4886 = vstv %s4885
        %v4887 = vmul.f32 %v4739, %v4886
        %4889 = vrot.lane.b32.xlu0 %v4887, 127
        %v4890 = vpop.permute.xlu0 %4889
        %v4892 = vadd.f32 %v4784, %v4890
        %s4893 = sld [smem:[#allocation2 + $0x1a8]]
        %v4894 = vstv %s4893
        %v4895 = vmul.f32 %v4739, %v4894
        %4897 = vrot.lane.b32.xlu0 %v4895, 127
        %v4898 = vpop.permute.xlu0 %4897
        %v4900 = vadd.f32 %v4788, %v4898
        %s4901 = sld [smem:[#allocation2 + $0x1cc]]
        %v4902 = vstv %s4901
        %v4903 = vmul.f32 %v4739, %v4902
        %4905 = vrot.lane.b32.xlu0 %v4903, 127
        %v4906 = vpop.permute.xlu0 %4905
        %v4908 = vadd.f32 %v4792, %v4906
        %s4909 = sld [smem:[#allocation2 + $0x1f0]]
        %v4910 = vstv %s4909
        %v4911 = vmul.f32 %v4739, %v4910
        %4913 = vrot.lane.b32.xlu0 %v4911, 127
        %v4914 = vpop.permute.xlu0 %4913
        %v4916 = vadd.f32 %v4796, %v4914
        %s4917 = sld [smem:[#allocation2 + $0x214]]
        %v4918 = vstv %s4917
        %v4919 = vmul.f32 %v4739, %v4918
        %4921 = vrot.lane.b32.xlu0 %v4919, 127
        %v4922 = vpop.permute.xlu0 %4921
        %v4924 = vadd.f32 %v4800, %v4922
        %s4925 = sld [smem:[#allocation2 + $0x238]]
        %v4926 = vstv %s4925
        %v4927 = vmul.f32 %v4739, %v4926
        %4929 = vrot.lane.b32.xlu0 %v4927, 127
        %v4930 = vpop.permute.xlu0 %4929
        %v4932 = vadd.f32 %v4804, %v4930
        %s4933 = sld [smem:[#allocation2 + $0x1d]]
        %v4934 = vstv %s4933
        %v4935 = vmul.f32 %v4739, %v4934
        %4937 = vrot.lane.b32.xlu0 %v4935, 126
        %v4938 = vpop.permute.xlu0 %4937
        %v4940 = vadd.f32 %v4812, %v4938
        %s4941 = sld [smem:[#allocation2 + $0x41]]
        %v4942 = vstv %s4941
        %v4943 = vmul.f32 %v4739, %v4942
        %4945 = vrot.lane.b32.xlu0 %v4943, 126
        %v4946 = vpop.permute.xlu0 %4945
        %v4948 = vadd.f32 %v4820, %v4946
        %s4949 = sld [smem:[#allocation2 + $0x65]]
        %v4950 = vstv %s4949
        %v4951 = vmul.f32 %v4739, %v4950
        %4953 = vrot.lane.b32.xlu0 %v4951, 126
        %v4954 = vpop.permute.xlu0 %4953
        %v4956 = vadd.f32 %v4828, %v4954
        %s4957 = sld [smem:[#allocation2 + $0x89]]
        %v4958 = vstv %s4957
        %v4959 = vmul.f32 %v4739, %v4958
        %4961 = vrot.lane.b32.xlu0 %v4959, 126
        %v4962 = vpop.permute.xlu0 %4961
        %v4964 = vadd.f32 %v4836, %v4962
        %s4965 = sld [smem:[#allocation2 + $0xad]]
        %v4966 = vstv %s4965
        %v4967 = vmul.f32 %v4739, %v4966
        %4969 = vrot.lane.b32.xlu0 %v4967, 126
        %v4970 = vpop.permute.xlu0 %4969
        %v4972 = vadd.f32 %v4844, %v4970
        %s4973 = sld [smem:[#allocation2 + $0xd1]]
        %v4974 = vstv %s4973
        %v4975 = vmul.f32 %v4739, %v4974
        %4977 = vrot.lane.b32.xlu0 %v4975, 126
        %v4978 = vpop.permute.xlu0 %4977
        %v4980 = vadd.f32 %v4852, %v4978
        %s4981 = sld [smem:[#allocation2 + $0xf5]]
        %v4982 = vstv %s4981
        %v4983 = vmul.f32 %v4739, %v4982
        %4985 = vrot.lane.b32.xlu0 %v4983, 126
        %v4986 = vpop.permute.xlu0 %4985
        %v4988 = vadd.f32 %v4860, %v4986
        %s4989 = sld [smem:[#allocation2 + $0x119]]
        %v4990 = vstv %s4989
        %v4991 = vmul.f32 %v4739, %v4990
        %4993 = vrot.lane.b32.xlu0 %v4991, 126
        %v4994 = vpop.permute.xlu0 %4993
        %v4996 = vadd.f32 %v4868, %v4994
        %s4997 = sld [smem:[#allocation2 + $0x13d]]
        %v4998 = vstv %s4997
        %v4999 = vmul.f32 %v4739, %v4998
        %5001 = vrot.lane.b32.xlu0 %v4999, 126
        %v5002 = vpop.permute.xlu0 %5001
        %v5004 = vadd.f32 %v4876, %v5002
        %s5005 = sld [smem:[#allocation2 + $0x161]]
        %v5006 = vstv %s5005
        %v5007 = vmul.f32 %v4739, %v5006
        %5009 = vrot.lane.b32.xlu0 %v5007, 126
        %v5010 = vpop.permute.xlu0 %5009
        %v5012 = vadd.f32 %v4884, %v5010
        %s5013 = sld [smem:[#allocation2 + $0x185]]
        %v5014 = vstv %s5013
        %v5015 = vmul.f32 %v4739, %v5014
        %5017 = vrot.lane.b32.xlu0 %v5015, 126
        %v5018 = vpop.permute.xlu0 %5017
        %v5020 = vadd.f32 %v4892, %v5018
        %s5021 = sld [smem:[#allocation2 + $0x1a9]]
        %v5022 = vstv %s5021
        %v5023 = vmul.f32 %v4739, %v5022
        %5025 = vrot.lane.b32.xlu0 %v5023, 126
        %v5026 = vpop.permute.xlu0 %5025
        %v5028 = vadd.f32 %v4900, %v5026
        %s5029 = sld [smem:[#allocation2 + $0x1cd]]
        %v5030 = vstv %s5029
        %v5031 = vmul.f32 %v4739, %v5030
        %5033 = vrot.lane.b32.xlu0 %v5031, 126
        %v5034 = vpop.permute.xlu0 %5033
        %v5036 = vadd.f32 %v4908, %v5034
        %s5037 = sld [smem:[#allocation2 + $0x1f1]]
        %v5038 = vstv %s5037
        %v5039 = vmul.f32 %v4739, %v5038
        %5041 = vrot.lane.b32.xlu0 %v5039, 126
        %v5042 = vpop.permute.xlu0 %5041
        %v5044 = vadd.f32 %v4916, %v5042
        %s5045 = sld [smem:[#allocation2 + $0x215]]
        %v5046 = vstv %s5045
        %v5047 = vmul.f32 %v4739, %v5046
        %5049 = vrot.lane.b32.xlu0 %v5047, 126
        %v5050 = vpop.permute.xlu0 %5049
        %v5052 = vadd.f32 %v4924, %v5050
        %s5053 = sld [smem:[#allocation2 + $0x239]]
        %v5054 = vstv %s5053
        %v5055 = vmul.f32 %v4739, %v5054
        %5057 = vrot.lane.b32.xlu0 %v5055, 126
        %v5058 = vpop.permute.xlu0 %5057
        %v5060 = vadd.f32 %v4932, %v5058
        %s5061 = sld [smem:[#allocation2 + $0x1e]]
        %v5062 = vstv %s5061
        %v5063 = vmul.f32 %v4739, %v5062
        %v5064 = vmul.f32 %v4740, %v5062
        %v5067 = vrot.slane %v5063, 1
        %v5068 = vrot.slane %v5064, 1
        %v5069 = vsel %vm541, %v5067, %v5068
        %v5071 = vadd.f32 %v4940, %v5069
        %s5072 = sld [smem:[#allocation2 + $0x42]]
        %v5073 = vstv %s5072
        %v5074 = vmul.f32 %v4739, %v5073
        %v5075 = vmul.f32 %v4740, %v5073
        %v5078 = vrot.slane %v5074, 1
        %v5079 = vrot.slane %v5075, 1
        %v5080 = vsel %vm541, %v5078, %v5079
        %v5082 = vadd.f32 %v4948, %v5080
        %s5083 = sld [smem:[#allocation2 + $0x66]]
        %v5084 = vstv %s5083
        %v5085 = vmul.f32 %v4739, %v5084
        %v5086 = vmul.f32 %v4740, %v5084
        %v5089 = vrot.slane %v5085, 1
        %v5090 = vrot.slane %v5086, 1
        %v5091 = vsel %vm541, %v5089, %v5090
        %v5093 = vadd.f32 %v4956, %v5091
        %s5094 = sld [smem:[#allocation2 + $0x8a]]
        %v5095 = vstv %s5094
        %v5096 = vmul.f32 %v4739, %v5095
        %v5097 = vmul.f32 %v4740, %v5095
        %v5100 = vrot.slane %v5096, 1
        %v5101 = vrot.slane %v5097, 1
        %v5102 = vsel %vm541, %v5100, %v5101
        %v5104 = vadd.f32 %v4964, %v5102
        %s5105 = sld [smem:[#allocation2 + $0xae]]
        %v5106 = vstv %s5105
        %v5107 = vmul.f32 %v4739, %v5106
        %v5108 = vmul.f32 %v4740, %v5106
        %v5111 = vrot.slane %v5107, 1
        %v5112 = vrot.slane %v5108, 1
        %v5113 = vsel %vm541, %v5111, %v5112
        %v5115 = vadd.f32 %v4972, %v5113
        %s5116 = sld [smem:[#allocation2 + $0xd2]]
        %v5117 = vstv %s5116
        %v5118 = vmul.f32 %v4739, %v5117
        %v5119 = vmul.f32 %v4740, %v5117
        %v5122 = vrot.slane %v5118, 1
        %v5123 = vrot.slane %v5119, 1
        %v5124 = vsel %vm541, %v5122, %v5123
        %v5126 = vadd.f32 %v4980, %v5124
        %s5127 = sld [smem:[#allocation2 + $0xf6]]
        %v5128 = vstv %s5127
        %v5129 = vmul.f32 %v4739, %v5128
        %v5130 = vmul.f32 %v4740, %v5128
        %v5133 = vrot.slane %v5129, 1
        %v5134 = vrot.slane %v5130, 1
        %v5135 = vsel %vm541, %v5133, %v5134
        %v5137 = vadd.f32 %v4988, %v5135
        %s5138 = sld [smem:[#allocation2 + $0x11a]]
        %v5139 = vstv %s5138
        %v5140 = vmul.f32 %v4739, %v5139
        %v5141 = vmul.f32 %v4740, %v5139
        %v5144 = vrot.slane %v5140, 1
        %v5145 = vrot.slane %v5141, 1
        %v5146 = vsel %vm541, %v5144, %v5145
        %v5148 = vadd.f32 %v4996, %v5146
        %s5149 = sld [smem:[#allocation2 + $0x13e]]
        %v5150 = vstv %s5149
        %v5151 = vmul.f32 %v4739, %v5150
        %v5152 = vmul.f32 %v4740, %v5150
        %v5155 = vrot.slane %v5151, 1
        %v5156 = vrot.slane %v5152, 1
        %v5157 = vsel %vm541, %v5155, %v5156
        %v5159 = vadd.f32 %v5004, %v5157
        %s5160 = sld [smem:[#allocation2 + $0x162]]
        %v5161 = vstv %s5160
        %v5162 = vmul.f32 %v4739, %v5161
        %v5163 = vmul.f32 %v4740, %v5161
        %v5166 = vrot.slane %v5162, 1
        %v5167 = vrot.slane %v5163, 1
        %v5168 = vsel %vm541, %v5166, %v5167
        %v5170 = vadd.f32 %v5012, %v5168
        %s5171 = sld [smem:[#allocation2 + $0x186]]
        %v5172 = vstv %s5171
        %v5173 = vmul.f32 %v4739, %v5172
        %v5174 = vmul.f32 %v4740, %v5172
        %v5177 = vrot.slane %v5173, 1
        %v5178 = vrot.slane %v5174, 1
        %v5179 = vsel %vm541, %v5177, %v5178
        %v5181 = vadd.f32 %v5020, %v5179
        %s5182 = sld [smem:[#allocation2 + $0x1aa]]
        %v5183 = vstv %s5182
        %v5184 = vmul.f32 %v4739, %v5183
        %v5185 = vmul.f32 %v4740, %v5183
        %v5188 = vrot.slane %v5184, 1
        %v5189 = vrot.slane %v5185, 1
        %v5190 = vsel %vm541, %v5188, %v5189
        %v5192 = vadd.f32 %v5028, %v5190
        %s5193 = sld [smem:[#allocation2 + $0x1ce]]
        %v5194 = vstv %s5193
        %v5195 = vmul.f32 %v4739, %v5194
        %v5196 = vmul.f32 %v4740, %v5194
        %v5199 = vrot.slane %v5195, 1
        %v5200 = vrot.slane %v5196, 1
        %v5201 = vsel %vm541, %v5199, %v5200
        %v5203 = vadd.f32 %v5036, %v5201
        %s5204 = sld [smem:[#allocation2 + $0x1f2]]
        %v5205 = vstv %s5204
        %v5206 = vmul.f32 %v4739, %v5205
        %v5207 = vmul.f32 %v4740, %v5205
        %v5210 = vrot.slane %v5206, 1
        %v5211 = vrot.slane %v5207, 1
        %v5212 = vsel %vm541, %v5210, %v5211
        %v5214 = vadd.f32 %v5044, %v5212
        %s5215 = sld [smem:[#allocation2 + $0x216]]
        %v5216 = vstv %s5215
        %v5217 = vmul.f32 %v4739, %v5216
        %v5218 = vmul.f32 %v4740, %v5216
        %v5221 = vrot.slane %v5217, 1
        %v5222 = vrot.slane %v5218, 1
        %v5223 = vsel %vm541, %v5221, %v5222
        %v5225 = vadd.f32 %v5052, %v5223
        %s5226 = sld [smem:[#allocation2 + $0x23a]]
        %v5227 = vstv %s5226
        %v5228 = vmul.f32 %v4739, %v5227
        %v5229 = vmul.f32 %v4740, %v5227
        %v5232 = vrot.slane %v5228, 1
        %v5233 = vrot.slane %v5229, 1
        %v5234 = vsel %vm541, %v5232, %v5233
        %v5236 = vadd.f32 %v5060, %v5234
        %s5237 = sld [smem:[#allocation2 + $0x1f]]
        %v5238 = vstv %s5237
        %v5239 = vmul.f32 %v4739, %v5238
        %v5240 = vmul.f32 %v4740, %v5238
        %v5243 = vrot.slane %v5239, 1
        %v5244 = vrot.slane %v5240, 1
        %v5245 = vsel %vm541, %v5243, %v5244
        %5246 = vrot.lane.b32.xlu0 %v5245, 127
        %v5247 = vpop.permute.xlu0 %5246
        %v5249 = vadd.f32 %v5071, %v5247
        %s5250 = sld [smem:[#allocation2 + $0x43]]
        %v5251 = vstv %s5250
        %v5252 = vmul.f32 %v4739, %v5251
        %v5253 = vmul.f32 %v4740, %v5251
        %v5256 = vrot.slane %v5252, 1
        %v5257 = vrot.slane %v5253, 1
        %v5258 = vsel %vm541, %v5256, %v5257
        %5259 = vrot.lane.b32.xlu0 %v5258, 127
        %v5260 = vpop.permute.xlu0 %5259
        %v5262 = vadd.f32 %v5082, %v5260
        %s5263 = sld [smem:[#allocation2 + $0x67]]
        %v5264 = vstv %s5263
        %v5265 = vmul.f32 %v4739, %v5264
        %v5266 = vmul.f32 %v4740, %v5264
        %v5269 = vrot.slane %v5265, 1
        %v5270 = vrot.slane %v5266, 1
        %v5271 = vsel %vm541, %v5269, %v5270
        %5272 = vrot.lane.b32.xlu0 %v5271, 127
        %v5273 = vpop.permute.xlu0 %5272
        %v5275 = vadd.f32 %v5093, %v5273
        %s5276 = sld [smem:[#allocation2 + $0x8b]]
        %v5277 = vstv %s5276
        %v5278 = vmul.f32 %v4739, %v5277
        %v5279 = vmul.f32 %v4740, %v5277
        %v5282 = vrot.slane %v5278, 1
        %v5283 = vrot.slane %v5279, 1
        %v5284 = vsel %vm541, %v5282, %v5283
        %5285 = vrot.lane.b32.xlu0 %v5284, 127
        %v5286 = vpop.permute.xlu0 %5285
        %v5288 = vadd.f32 %v5104, %v5286
        %s5289 = sld [smem:[#allocation2 + $0xaf]]
        %v5290 = vstv %s5289
        %v5291 = vmul.f32 %v4739, %v5290
        %v5292 = vmul.f32 %v4740, %v5290
        %v5295 = vrot.slane %v5291, 1
        %v5296 = vrot.slane %v5292, 1
        %v5297 = vsel %vm541, %v5295, %v5296
        %5298 = vrot.lane.b32.xlu0 %v5297, 127
        %v5299 = vpop.permute.xlu0 %5298
        %v5301 = vadd.f32 %v5115, %v5299
        %s5302 = sld [smem:[#allocation2 + $0xd3]]
        %v5303 = vstv %s5302
        %v5304 = vmul.f32 %v4739, %v5303
        %v5305 = vmul.f32 %v4740, %v5303
        %v5308 = vrot.slane %v5304, 1
        %v5309 = vrot.slane %v5305, 1
        %v5310 = vsel %vm541, %v5308, %v5309
        %5311 = vrot.lane.b32.xlu0 %v5310, 127
        %v5312 = vpop.permute.xlu0 %5311
        %v5314 = vadd.f32 %v5126, %v5312
        %s5315 = sld [smem:[#allocation2 + $0xf7]]
        %v5316 = vstv %s5315
        %v5317 = vmul.f32 %v4739, %v5316
        %v5318 = vmul.f32 %v4740, %v5316
        %v5321 = vrot.slane %v5317, 1
        %v5322 = vrot.slane %v5318, 1
        %v5323 = vsel %vm541, %v5321, %v5322
        %5324 = vrot.lane.b32.xlu0 %v5323, 127
        %v5325 = vpop.permute.xlu0 %5324
        %v5327 = vadd.f32 %v5137, %v5325
        %s5328 = sld [smem:[#allocation2 + $0x11b]]
        %v5329 = vstv %s5328
        %v5330 = vmul.f32 %v4739, %v5329
        %v5331 = vmul.f32 %v4740, %v5329
        %v5334 = vrot.slane %v5330, 1
        %v5335 = vrot.slane %v5331, 1
        %v5336 = vsel %vm541, %v5334, %v5335
        %5337 = vrot.lane.b32.xlu0 %v5336, 127
        %v5338 = vpop.permute.xlu0 %5337
        %v5340 = vadd.f32 %v5148, %v5338
        %s5341 = sld [smem:[#allocation2 + $0x13f]]
        %v5342 = vstv %s5341
        %v5343 = vmul.f32 %v4739, %v5342
        %v5344 = vmul.f32 %v4740, %v5342
        %v5347 = vrot.slane %v5343, 1
        %v5348 = vrot.slane %v5344, 1
        %v5349 = vsel %vm541, %v5347, %v5348
        %5350 = vrot.lane.b32.xlu0 %v5349, 127
        %v5351 = vpop.permute.xlu0 %5350
        %v5353 = vadd.f32 %v5159, %v5351
        %s5354 = sld [smem:[#allocation2 + $0x163]]
        %v5355 = vstv %s5354
        %v5356 = vmul.f32 %v4739, %v5355
        %v5357 = vmul.f32 %v4740, %v5355
        %v5360 = vrot.slane %v5356, 1
        %v5361 = vrot.slane %v5357, 1
        %v5362 = vsel %vm541, %v5360, %v5361
        %5363 = vrot.lane.b32.xlu0 %v5362, 127
        %v5364 = vpop.permute.xlu0 %5363
        %v5366 = vadd.f32 %v5170, %v5364
        %s5367 = sld [smem:[#allocation2 + $0x187]]
        %v5368 = vstv %s5367
        %v5369 = vmul.f32 %v4739, %v5368
        %v5370 = vmul.f32 %v4740, %v5368
        %v5373 = vrot.slane %v5369, 1
        %v5374 = vrot.slane %v5370, 1
        %v5375 = vsel %vm541, %v5373, %v5374
        %5376 = vrot.lane.b32.xlu0 %v5375, 127
        %v5377 = vpop.permute.xlu0 %5376
        %v5379 = vadd.f32 %v5181, %v5377
        %s5380 = sld [smem:[#allocation2 + $0x1ab]]
        %v5381 = vstv %s5380
        %v5382 = vmul.f32 %v4739, %v5381
        %v5383 = vmul.f32 %v4740, %v5381
        %v5386 = vrot.slane %v5382, 1
        %v5387 = vrot.slane %v5383, 1
        %v5388 = vsel %vm541, %v5386, %v5387
        %5389 = vrot.lane.b32.xlu0 %v5388, 127
        %v5390 = vpop.permute.xlu0 %5389
        %v5392 = vadd.f32 %v5192, %v5390
        %s5393 = sld [smem:[#allocation2 + $0x1cf]]
        %v5394 = vstv %s5393
        %v5395 = vmul.f32 %v4739, %v5394
        %v5396 = vmul.f32 %v4740, %v5394
        %v5399 = vrot.slane %v5395, 1
        %v5400 = vrot.slane %v5396, 1
        %v5401 = vsel %vm541, %v5399, %v5400
        %5402 = vrot.lane.b32.xlu0 %v5401, 127
        %v5403 = vpop.permute.xlu0 %5402
        %v5405 = vadd.f32 %v5203, %v5403
        %s5406 = sld [smem:[#allocation2 + $0x1f3]]
        %v5407 = vstv %s5406
        %v5408 = vmul.f32 %v4739, %v5407
        %v5409 = vmul.f32 %v4740, %v5407
        %v5412 = vrot.slane %v5408, 1
        %v5413 = vrot.slane %v5409, 1
        %v5414 = vsel %vm541, %v5412, %v5413
        %5415 = vrot.lane.b32.xlu0 %v5414, 127
        %v5416 = vpop.permute.xlu0 %5415
        %v5418 = vadd.f32 %v5214, %v5416
        %s5419 = sld [smem:[#allocation2 + $0x217]]
        %v5420 = vstv %s5419
        %v5421 = vmul.f32 %v4739, %v5420
        %v5422 = vmul.f32 %v4740, %v5420
        %v5425 = vrot.slane %v5421, 1
        %v5426 = vrot.slane %v5422, 1
        %v5427 = vsel %vm541, %v5425, %v5426
        %5428 = vrot.lane.b32.xlu0 %v5427, 127
        %v5429 = vpop.permute.xlu0 %5428
        %v5431 = vadd.f32 %v5225, %v5429
        %s5432 = sld [smem:[#allocation2 + $0x23b]]
        %v5433 = vstv %s5432
        %v5434 = vmul.f32 %v4739, %v5433
        %v5435 = vmul.f32 %v4740, %v5433
        %v5438 = vrot.slane %v5434, 1
        %v5439 = vrot.slane %v5435, 1
        %v5440 = vsel %vm541, %v5438, %v5439
        %5441 = vrot.lane.b32.xlu0 %v5440, 127
        %v5442 = vpop.permute.xlu0 %5441
        %v5444 = vadd.f32 %v5236, %v5442
        %s5445 = sld [smem:[#allocation2 + $0x20]]
        %v5446 = vstv %s5445
        %v5447 = vmul.f32 %v4739, %v5446
        %v5448 = vmul.f32 %v4740, %v5446
        %v5451 = vrot.slane %v5447, 1
        %v5452 = vrot.slane %v5448, 1
        %v5453 = vsel %vm541, %v5451, %v5452
        %5454 = vrot.lane.b32.xlu0 %v5453, 126
        %v5455 = vpop.permute.xlu0 %5454
        %v5457 = vadd.f32 %v5249, %v5455
        %s5458 = sld [smem:[#allocation2 + $0x44]]
        %v5459 = vstv %s5458
        %v5460 = vmul.f32 %v4739, %v5459
        %v5461 = vmul.f32 %v4740, %v5459
        %v5464 = vrot.slane %v5460, 1
        %v5465 = vrot.slane %v5461, 1
        %v5466 = vsel %vm541, %v5464, %v5465
        %5467 = vrot.lane.b32.xlu0 %v5466, 126
        %v5468 = vpop.permute.xlu0 %5467
        %v5470 = vadd.f32 %v5262, %v5468
        %s5471 = sld [smem:[#allocation2 + $0x68]]
        %v5472 = vstv %s5471
        %v5473 = vmul.f32 %v4739, %v5472
        %v5474 = vmul.f32 %v4740, %v5472
        %v5477 = vrot.slane %v5473, 1
        %v5478 = vrot.slane %v5474, 1
        %v5479 = vsel %vm541, %v5477, %v5478
        %5480 = vrot.lane.b32.xlu0 %v5479, 126
        %v5481 = vpop.permute.xlu0 %5480
        %v5483 = vadd.f32 %v5275, %v5481
        %s5484 = sld [smem:[#allocation2 + $0x8c]]
        %v5485 = vstv %s5484
        %v5486 = vmul.f32 %v4739, %v5485
        %v5487 = vmul.f32 %v4740, %v5485
        %v5490 = vrot.slane %v5486, 1
        %v5491 = vrot.slane %v5487, 1
        %v5492 = vsel %vm541, %v5490, %v5491
        %5493 = vrot.lane.b32.xlu0 %v5492, 126
        %v5494 = vpop.permute.xlu0 %5493
        %v5496 = vadd.f32 %v5288, %v5494
        %s5497 = sld [smem:[#allocation2 + $0xb0]]
        %v5498 = vstv %s5497
        %v5499 = vmul.f32 %v4739, %v5498
        %v5500 = vmul.f32 %v4740, %v5498
        %v5503 = vrot.slane %v5499, 1
        %v5504 = vrot.slane %v5500, 1
        %v5505 = vsel %vm541, %v5503, %v5504
        %5506 = vrot.lane.b32.xlu0 %v5505, 126
        %v5507 = vpop.permute.xlu0 %5506
        %v5509 = vadd.f32 %v5301, %v5507
        %s5510 = sld [smem:[#allocation2 + $0xd4]]
        %v5511 = vstv %s5510
        %v5512 = vmul.f32 %v4739, %v5511
        %v5513 = vmul.f32 %v4740, %v5511
        %v5516 = vrot.slane %v5512, 1
        %v5517 = vrot.slane %v5513, 1
        %v5518 = vsel %vm541, %v5516, %v5517
        %5519 = vrot.lane.b32.xlu0 %v5518, 126
        %v5520 = vpop.permute.xlu0 %5519
        %v5522 = vadd.f32 %v5314, %v5520
        %s5523 = sld [smem:[#allocation2 + $0xf8]]
        %v5524 = vstv %s5523
        %v5525 = vmul.f32 %v4739, %v5524
        %v5526 = vmul.f32 %v4740, %v5524
        %v5529 = vrot.slane %v5525, 1
        %v5530 = vrot.slane %v5526, 1
        %v5531 = vsel %vm541, %v5529, %v5530
        %5532 = vrot.lane.b32.xlu0 %v5531, 126
        %v5533 = vpop.permute.xlu0 %5532
        %v5535 = vadd.f32 %v5327, %v5533
        %s5536 = sld [smem:[#allocation2 + $0x11c]]
        %v5537 = vstv %s5536
        %v5538 = vmul.f32 %v4739, %v5537
        %v5539 = vmul.f32 %v4740, %v5537
        %v5542 = vrot.slane %v5538, 1
        %v5543 = vrot.slane %v5539, 1
        %v5544 = vsel %vm541, %v5542, %v5543
        %5545 = vrot.lane.b32.xlu0 %v5544, 126
        %v5546 = vpop.permute.xlu0 %5545
        %v5548 = vadd.f32 %v5340, %v5546
        %s5549 = sld [smem:[#allocation2 + $0x140]]
        %v5550 = vstv %s5549
        %v5551 = vmul.f32 %v4739, %v5550
        %v5552 = vmul.f32 %v4740, %v5550
        %v5555 = vrot.slane %v5551, 1
        %v5556 = vrot.slane %v5552, 1
        %v5557 = vsel %vm541, %v5555, %v5556
        %5558 = vrot.lane.b32.xlu0 %v5557, 126
        %v5559 = vpop.permute.xlu0 %5558
        %v5561 = vadd.f32 %v5353, %v5559
        %s5562 = sld [smem:[#allocation2 + $0x164]]
        %v5563 = vstv %s5562
        %v5564 = vmul.f32 %v4739, %v5563
        %v5565 = vmul.f32 %v4740, %v5563
        %v5568 = vrot.slane %v5564, 1
        %v5569 = vrot.slane %v5565, 1
        %v5570 = vsel %vm541, %v5568, %v5569
        %5571 = vrot.lane.b32.xlu0 %v5570, 126
        %v5572 = vpop.permute.xlu0 %5571
        %v5574 = vadd.f32 %v5366, %v5572
        %s5575 = sld [smem:[#allocation2 + $0x188]]
        %v5576 = vstv %s5575
        %v5577 = vmul.f32 %v4739, %v5576
        %v5578 = vmul.f32 %v4740, %v5576
        %v5581 = vrot.slane %v5577, 1
        %v5582 = vrot.slane %v5578, 1
        %v5583 = vsel %vm541, %v5581, %v5582
        %5584 = vrot.lane.b32.xlu0 %v5583, 126
        %v5585 = vpop.permute.xlu0 %5584
        %v5587 = vadd.f32 %v5379, %v5585
        %s5588 = sld [smem:[#allocation2 + $0x1ac]]
        %v5589 = vstv %s5588
        %v5590 = vmul.f32 %v4739, %v5589
        %v5591 = vmul.f32 %v4740, %v5589
        %v5594 = vrot.slane %v5590, 1
        %v5595 = vrot.slane %v5591, 1
        %v5596 = vsel %vm541, %v5594, %v5595
        %5597 = vrot.lane.b32.xlu0 %v5596, 126
        %v5598 = vpop.permute.xlu0 %5597
        %v5600 = vadd.f32 %v5392, %v5598
        %s5601 = sld [smem:[#allocation2 + $0x1d0]]
        %v5602 = vstv %s5601
        %v5603 = vmul.f32 %v4739, %v5602
        %v5604 = vmul.f32 %v4740, %v5602
        %v5607 = vrot.slane %v5603, 1
        %v5608 = vrot.slane %v5604, 1
        %v5609 = vsel %vm541, %v5607, %v5608
        %5610 = vrot.lane.b32.xlu0 %v5609, 126
        %v5611 = vpop.permute.xlu0 %5610
        %v5613 = vadd.f32 %v5405, %v5611
        %s5614 = sld [smem:[#allocation2 + $0x1f4]]
        %v5615 = vstv %s5614
        %v5616 = vmul.f32 %v4739, %v5615
        %v5617 = vmul.f32 %v4740, %v5615
        %v5620 = vrot.slane %v5616, 1
        %v5621 = vrot.slane %v5617, 1
        %v5622 = vsel %vm541, %v5620, %v5621
        %5623 = vrot.lane.b32.xlu0 %v5622, 126
        %v5624 = vpop.permute.xlu0 %5623
        %v5626 = vadd.f32 %v5418, %v5624
        %s5627 = sld [smem:[#allocation2 + $0x218]]
        %v5628 = vstv %s5627
        %v5629 = vmul.f32 %v4739, %v5628
        %v5630 = vmul.f32 %v4740, %v5628
        %v5633 = vrot.slane %v5629, 1
        %v5634 = vrot.slane %v5630, 1
        %v5635 = vsel %vm541, %v5633, %v5634
        %5636 = vrot.lane.b32.xlu0 %v5635, 126
        %v5637 = vpop.permute.xlu0 %5636
        %v5639 = vadd.f32 %v5431, %v5637
        %s5640 = sld [smem:[#allocation2 + $0x23c]]
        %v5641 = vstv %s5640
        %v5642 = vmul.f32 %v4739, %v5641
        %v5643 = vmul.f32 %v4740, %v5641
        %v5646 = vrot.slane %v5642, 1
        %v5647 = vrot.slane %v5643, 1
        %v5648 = vsel %vm541, %v5646, %v5647
        %5649 = vrot.lane.b32.xlu0 %v5648, 126
        %v5650 = vpop.permute.xlu0 %5649
        %v5652 = vadd.f32 %v5444, %v5650
        %s5653 = sld [smem:[#allocation2 + $0x21]]
        %v5654 = vstv %s5653
        %v5655 = vmul.f32 %v4739, %v5654
        %v5656 = vmul.f32 %v4740, %v5654
        %v5659 = vrot.slane %v5655, 2
        %v5660 = vrot.slane %v5656, 2
        %v5661 = vsel %vm1134, %v5659, %v5660
        %v5663 = vadd.f32 %v5457, %v5661
        %s5664 = sld [smem:[#allocation2 + $0x45]]
        %v5665 = vstv %s5664
        %v5666 = vmul.f32 %v4739, %v5665
        %v5667 = vmul.f32 %v4740, %v5665
        %v5670 = vrot.slane %v5666, 2
        %v5671 = vrot.slane %v5667, 2
        %v5672 = vsel %vm1134, %v5670, %v5671
        %v5674 = vadd.f32 %v5470, %v5672
        %s5675 = sld [smem:[#allocation2 + $0x69]]
        %v5676 = vstv %s5675
        %v5677 = vmul.f32 %v4739, %v5676
        %v5678 = vmul.f32 %v4740, %v5676
        %v5681 = vrot.slane %v5677, 2
        %v5682 = vrot.slane %v5678, 2
        %v5683 = vsel %vm1134, %v5681, %v5682
        %v5685 = vadd.f32 %v5483, %v5683
        %s5686 = sld [smem:[#allocation2 + $0x8d]]
        %v5687 = vstv %s5686
        %v5688 = vmul.f32 %v4739, %v5687
        %v5689 = vmul.f32 %v4740, %v5687
        %v5692 = vrot.slane %v5688, 2
        %v5693 = vrot.slane %v5689, 2
        %v5694 = vsel %vm1134, %v5692, %v5693
        %v5696 = vadd.f32 %v5496, %v5694
        %s5697 = sld [smem:[#allocation2 + $0xb1]]
        %v5698 = vstv %s5697
        %v5699 = vmul.f32 %v4739, %v5698
        %v5700 = vmul.f32 %v4740, %v5698
        %v5703 = vrot.slane %v5699, 2
        %v5704 = vrot.slane %v5700, 2
        %v5705 = vsel %vm1134, %v5703, %v5704
        %v5707 = vadd.f32 %v5509, %v5705
        %s5708 = sld [smem:[#allocation2 + $0xd5]]
        %v5709 = vstv %s5708
        %v5710 = vmul.f32 %v4739, %v5709
        %v5711 = vmul.f32 %v4740, %v5709
        %v5714 = vrot.slane %v5710, 2
        %v5715 = vrot.slane %v5711, 2
        %v5716 = vsel %vm1134, %v5714, %v5715
        %v5718 = vadd.f32 %v5522, %v5716
        %s5719 = sld [smem:[#allocation2 + $0xf9]]
        %v5720 = vstv %s5719
        %v5721 = vmul.f32 %v4739, %v5720
        %v5722 = vmul.f32 %v4740, %v5720
        %v5725 = vrot.slane %v5721, 2
        %v5726 = vrot.slane %v5722, 2
        %v5727 = vsel %vm1134, %v5725, %v5726
        %v5729 = vadd.f32 %v5535, %v5727
        %s5730 = sld [smem:[#allocation2 + $0x11d]]
        %v5731 = vstv %s5730
        %v5732 = vmul.f32 %v4739, %v5731
        %v5733 = vmul.f32 %v4740, %v5731
        %v5736 = vrot.slane %v5732, 2
        %v5737 = vrot.slane %v5733, 2
        %v5738 = vsel %vm1134, %v5736, %v5737
        %v5740 = vadd.f32 %v5548, %v5738
        %s5741 = sld [smem:[#allocation2 + $0x141]]
        %v5742 = vstv %s5741
        %v5743 = vmul.f32 %v4739, %v5742
        %v5744 = vmul.f32 %v4740, %v5742
        %v5747 = vrot.slane %v5743, 2
        %v5748 = vrot.slane %v5744, 2
        %v5749 = vsel %vm1134, %v5747, %v5748
        %v5751 = vadd.f32 %v5561, %v5749
        %s5752 = sld [smem:[#allocation2 + $0x165]]
        %v5753 = vstv %s5752
        %v5754 = vmul.f32 %v4739, %v5753
        %v5755 = vmul.f32 %v4740, %v5753
        %v5758 = vrot.slane %v5754, 2
        %v5759 = vrot.slane %v5755, 2
        %v5760 = vsel %vm1134, %v5758, %v5759
        %v5762 = vadd.f32 %v5574, %v5760
        %s5763 = sld [smem:[#allocation2 + $0x189]]
        %v5764 = vstv %s5763
        %v5765 = vmul.f32 %v4739, %v5764
        %v5766 = vmul.f32 %v4740, %v5764
        %v5769 = vrot.slane %v5765, 2
        %v5770 = vrot.slane %v5766, 2
        %v5771 = vsel %vm1134, %v5769, %v5770
        %v5773 = vadd.f32 %v5587, %v5771
        %s5774 = sld [smem:[#allocation2 + $0x1ad]]
        %v5775 = vstv %s5774
        %v5776 = vmul.f32 %v4739, %v5775
        %v5777 = vmul.f32 %v4740, %v5775
        %v5780 = vrot.slane %v5776, 2
        %v5781 = vrot.slane %v5777, 2
        %v5782 = vsel %vm1134, %v5780, %v5781
        %v5784 = vadd.f32 %v5600, %v5782
        %s5785 = sld [smem:[#allocation2 + $0x1d1]]
        %v5786 = vstv %s5785
        %v5787 = vmul.f32 %v4739, %v5786
        %v5788 = vmul.f32 %v4740, %v5786
        %v5791 = vrot.slane %v5787, 2
        %v5792 = vrot.slane %v5788, 2
        %v5793 = vsel %vm1134, %v5791, %v5792
        %v5795 = vadd.f32 %v5613, %v5793
        %s5796 = sld [smem:[#allocation2 + $0x1f5]]
        %v5797 = vstv %s5796
        %v5798 = vmul.f32 %v4739, %v5797
        %v5799 = vmul.f32 %v4740, %v5797
        %v5802 = vrot.slane %v5798, 2
        %v5803 = vrot.slane %v5799, 2
        %v5804 = vsel %vm1134, %v5802, %v5803
        %v5806 = vadd.f32 %v5626, %v5804
        %s5807 = sld [smem:[#allocation2 + $0x219]]
        %v5808 = vstv %s5807
        %v5809 = vmul.f32 %v4739, %v5808
        %v5810 = vmul.f32 %v4740, %v5808
        %v5813 = vrot.slane %v5809, 2
        %v5814 = vrot.slane %v5810, 2
        %v5815 = vsel %vm1134, %v5813, %v5814
        %v5817 = vadd.f32 %v5639, %v5815
        %s5818 = sld [smem:[#allocation2 + $0x23d]]
        %v5819 = vstv %s5818
        %v5820 = vmul.f32 %v4739, %v5819
        %v5821 = vmul.f32 %v4740, %v5819
        %v5824 = vrot.slane %v5820, 2
        %v5825 = vrot.slane %v5821, 2
        %v5826 = vsel %vm1134, %v5824, %v5825
        %v5828 = vadd.f32 %v5652, %v5826
        %s5829 = sld [smem:[#allocation2 + $0x22]]
        %v5830 = vstv %s5829
        %v5831 = vmul.f32 %v4739, %v5830
        %v5832 = vmul.f32 %v4740, %v5830
        %v5835 = vrot.slane %v5831, 2
        %v5836 = vrot.slane %v5832, 2
        %v5837 = vsel %vm1134, %v5835, %v5836
        %5838 = vrot.lane.b32.xlu0 %v5837, 127
        %v5839 = vpop.permute.xlu0 %5838
        %v5841 = vadd.f32 %v5663, %v5839
        %s5842 = sld [smem:[#allocation2 + $0x46]]
        %v5843 = vstv %s5842
        %v5844 = vmul.f32 %v4739, %v5843
        %v5845 = vmul.f32 %v4740, %v5843
        %v5848 = vrot.slane %v5844, 2
        %v5849 = vrot.slane %v5845, 2
        %v5850 = vsel %vm1134, %v5848, %v5849
        %5851 = vrot.lane.b32.xlu0 %v5850, 127
        %v5852 = vpop.permute.xlu0 %5851
        %v5854 = vadd.f32 %v5674, %v5852
        %s5855 = sld [smem:[#allocation2 + $0x6a]]
        %v5856 = vstv %s5855
        %v5857 = vmul.f32 %v4739, %v5856
        %v5858 = vmul.f32 %v4740, %v5856
        %v5861 = vrot.slane %v5857, 2
        %v5862 = vrot.slane %v5858, 2
        %v5863 = vsel %vm1134, %v5861, %v5862
        %5864 = vrot.lane.b32.xlu0 %v5863, 127
        %v5865 = vpop.permute.xlu0 %5864
        %v5867 = vadd.f32 %v5685, %v5865
        %s5868 = sld [smem:[#allocation2 + $0x8e]]
        %v5869 = vstv %s5868
        %v5870 = vmul.f32 %v4739, %v5869
        %v5871 = vmul.f32 %v4740, %v5869
        %v5874 = vrot.slane %v5870, 2
        %v5875 = vrot.slane %v5871, 2
        %v5876 = vsel %vm1134, %v5874, %v5875
        %5877 = vrot.lane.b32.xlu0 %v5876, 127
        %v5878 = vpop.permute.xlu0 %5877
        %v5880 = vadd.f32 %v5696, %v5878
        %s5881 = sld [smem:[#allocation2 + $0xb2]]
        %v5882 = vstv %s5881
        %v5883 = vmul.f32 %v4739, %v5882
        %v5884 = vmul.f32 %v4740, %v5882
        %v5887 = vrot.slane %v5883, 2
        %v5888 = vrot.slane %v5884, 2
        %v5889 = vsel %vm1134, %v5887, %v5888
        %5890 = vrot.lane.b32.xlu0 %v5889, 127
        %v5891 = vpop.permute.xlu0 %5890
        %v5893 = vadd.f32 %v5707, %v5891
        %s5894 = sld [smem:[#allocation2 + $0xd6]]
        %v5895 = vstv %s5894
        %v5896 = vmul.f32 %v4739, %v5895
        %v5897 = vmul.f32 %v4740, %v5895
        %v5900 = vrot.slane %v5896, 2
        %v5901 = vrot.slane %v5897, 2
        %v5902 = vsel %vm1134, %v5900, %v5901
        %5903 = vrot.lane.b32.xlu0 %v5902, 127
        %v5904 = vpop.permute.xlu0 %5903
        %v5906 = vadd.f32 %v5718, %v5904
        %s5907 = sld [smem:[#allocation2 + $0xfa]]
        %v5908 = vstv %s5907
        %v5909 = vmul.f32 %v4739, %v5908
        %v5910 = vmul.f32 %v4740, %v5908
        %v5913 = vrot.slane %v5909, 2
        %v5914 = vrot.slane %v5910, 2
        %v5915 = vsel %vm1134, %v5913, %v5914
        %5916 = vrot.lane.b32.xlu0 %v5915, 127
        %v5917 = vpop.permute.xlu0 %5916
        %v5919 = vadd.f32 %v5729, %v5917
        %s5920 = sld [smem:[#allocation2 + $0x11e]]
        %v5921 = vstv %s5920
        %v5922 = vmul.f32 %v4739, %v5921
        %v5923 = vmul.f32 %v4740, %v5921
        %v5926 = vrot.slane %v5922, 2
        %v5927 = vrot.slane %v5923, 2
        %v5928 = vsel %vm1134, %v5926, %v5927
        %5929 = vrot.lane.b32.xlu0 %v5928, 127
        %v5930 = vpop.permute.xlu0 %5929
        %v5932 = vadd.f32 %v5740, %v5930
        %s5933 = sld [smem:[#allocation2 + $0x142]]
        %v5934 = vstv %s5933
        %v5935 = vmul.f32 %v4739, %v5934
        %v5936 = vmul.f32 %v4740, %v5934
        %v5939 = vrot.slane %v5935, 2
        %v5940 = vrot.slane %v5936, 2
        %v5941 = vsel %vm1134, %v5939, %v5940
        %5942 = vrot.lane.b32.xlu0 %v5941, 127
        %v5943 = vpop.permute.xlu0 %5942
        %v5945 = vadd.f32 %v5751, %v5943
        %s5946 = sld [smem:[#allocation2 + $0x166]]
        %v5947 = vstv %s5946
        %v5948 = vmul.f32 %v4739, %v5947
        %v5949 = vmul.f32 %v4740, %v5947
        %v5952 = vrot.slane %v5948, 2
        %v5953 = vrot.slane %v5949, 2
        %v5954 = vsel %vm1134, %v5952, %v5953
        %5955 = vrot.lane.b32.xlu0 %v5954, 127
        %v5956 = vpop.permute.xlu0 %5955
        %v5958 = vadd.f32 %v5762, %v5956
        %s5959 = sld [smem:[#allocation2 + $0x18a]]
        %v5960 = vstv %s5959
        %v5961 = vmul.f32 %v4739, %v5960
        %v5962 = vmul.f32 %v4740, %v5960
        %v5965 = vrot.slane %v5961, 2
        %v5966 = vrot.slane %v5962, 2
        %v5967 = vsel %vm1134, %v5965, %v5966
        %5968 = vrot.lane.b32.xlu0 %v5967, 127
        %v5969 = vpop.permute.xlu0 %5968
        %v5971 = vadd.f32 %v5773, %v5969
        %s5972 = sld [smem:[#allocation2 + $0x1ae]]
        %v5973 = vstv %s5972
        %v5974 = vmul.f32 %v4739, %v5973
        %v5975 = vmul.f32 %v4740, %v5973
        %v5978 = vrot.slane %v5974, 2
        %v5979 = vrot.slane %v5975, 2
        %v5980 = vsel %vm1134, %v5978, %v5979
        %5981 = vrot.lane.b32.xlu0 %v5980, 127
        %v5982 = vpop.permute.xlu0 %5981
        %v5984 = vadd.f32 %v5784, %v5982
        %s5985 = sld [smem:[#allocation2 + $0x1d2]]
        %v5986 = vstv %s5985
        %v5987 = vmul.f32 %v4739, %v5986
        %v5988 = vmul.f32 %v4740, %v5986
        %v5991 = vrot.slane %v5987, 2
        %v5992 = vrot.slane %v5988, 2
        %v5993 = vsel %vm1134, %v5991, %v5992
        %5994 = vrot.lane.b32.xlu0 %v5993, 127
        %v5995 = vpop.permute.xlu0 %5994
        %v5997 = vadd.f32 %v5795, %v5995
        %s5998 = sld [smem:[#allocation2 + $0x1f6]]
        %v5999 = vstv %s5998
        %v6000 = vmul.f32 %v4739, %v5999
        %v6001 = vmul.f32 %v4740, %v5999
        %v6004 = vrot.slane %v6000, 2
        %v6005 = vrot.slane %v6001, 2
        %v6006 = vsel %vm1134, %v6004, %v6005
        %6007 = vrot.lane.b32.xlu0 %v6006, 127
        %v6008 = vpop.permute.xlu0 %6007
        %v6010 = vadd.f32 %v5806, %v6008
        %s6011 = sld [smem:[#allocation2 + $0x21a]]
        %v6012 = vstv %s6011
        %v6013 = vmul.f32 %v4739, %v6012
        %v6014 = vmul.f32 %v4740, %v6012
        %v6017 = vrot.slane %v6013, 2
        %v6018 = vrot.slane %v6014, 2
        %v6019 = vsel %vm1134, %v6017, %v6018
        %6020 = vrot.lane.b32.xlu0 %v6019, 127
        %v6021 = vpop.permute.xlu0 %6020
        %v6023 = vadd.f32 %v5817, %v6021
        %s6024 = sld [smem:[#allocation2 + $0x23e]]
        %v6025 = vstv %s6024
        %v6026 = vmul.f32 %v4739, %v6025
        %v6027 = vmul.f32 %v4740, %v6025
        %v6030 = vrot.slane %v6026, 2
        %v6031 = vrot.slane %v6027, 2
        %v6032 = vsel %vm1134, %v6030, %v6031
        %6033 = vrot.lane.b32.xlu0 %v6032, 127
        %v6034 = vpop.permute.xlu0 %6033
        %v6036 = vadd.f32 %v5828, %v6034
        %s6037 = sld [smem:[#allocation2 + $0x23]]
        %v6038 = vstv %s6037
        %v6039 = vmul.f32 %v4739, %v6038
        %v6040 = vmul.f32 %v4740, %v6038
        %v6043 = vrot.slane %v6039, 2
        %v6044 = vrot.slane %v6040, 2
        %v6045 = vsel %vm1134, %v6043, %v6044
        %6046 = vrot.lane.b32.xlu0 %v6045, 126
        %v6047 = vpop.permute.xlu0 %6046
        %v6049 = vadd.f32 %v5841, %v6047
        %s6050 = sld [smem:[#allocation2 + $0x47]]
        %v6051 = vstv %s6050
        %v6052 = vmul.f32 %v4739, %v6051
        %v6053 = vmul.f32 %v4740, %v6051
        %v6056 = vrot.slane %v6052, 2
        %v6057 = vrot.slane %v6053, 2
        %v6058 = vsel %vm1134, %v6056, %v6057
        %6059 = vrot.lane.b32.xlu0 %v6058, 126
        %v6060 = vpop.permute.xlu0 %6059
        %v6062 = vadd.f32 %v5854, %v6060
        %s6063 = sld [smem:[#allocation2 + $0x6b]]
        %v6064 = vstv %s6063
        %v6065 = vmul.f32 %v4739, %v6064
        %v6066 = vmul.f32 %v4740, %v6064
        %v6069 = vrot.slane %v6065, 2
        %v6070 = vrot.slane %v6066, 2
        %v6071 = vsel %vm1134, %v6069, %v6070
        %6072 = vrot.lane.b32.xlu0 %v6071, 126
        %v6073 = vpop.permute.xlu0 %6072
        %v6075 = vadd.f32 %v5867, %v6073
        %s6076 = sld [smem:[#allocation2 + $0x8f]]
        %v6077 = vstv %s6076
        %v6078 = vmul.f32 %v4739, %v6077
        %v6079 = vmul.f32 %v4740, %v6077
        %v6082 = vrot.slane %v6078, 2
        %v6083 = vrot.slane %v6079, 2
        %v6084 = vsel %vm1134, %v6082, %v6083
        %6085 = vrot.lane.b32.xlu0 %v6084, 126
        %v6086 = vpop.permute.xlu0 %6085
        %v6088 = vadd.f32 %v5880, %v6086
        %s6089 = sld [smem:[#allocation2 + $0xb3]]
        %v6090 = vstv %s6089
        %v6091 = vmul.f32 %v4739, %v6090
        %v6092 = vmul.f32 %v4740, %v6090
        %v6095 = vrot.slane %v6091, 2
        %v6096 = vrot.slane %v6092, 2
        %v6097 = vsel %vm1134, %v6095, %v6096
        %6098 = vrot.lane.b32.xlu0 %v6097, 126
        %v6099 = vpop.permute.xlu0 %6098
        %v6101 = vadd.f32 %v5893, %v6099
        %s6102 = sld [smem:[#allocation2 + $0xd7]]
        %v6103 = vstv %s6102
        %v6104 = vmul.f32 %v4739, %v6103
        %v6105 = vmul.f32 %v4740, %v6103
        %v6108 = vrot.slane %v6104, 2
        %v6109 = vrot.slane %v6105, 2
        %v6110 = vsel %vm1134, %v6108, %v6109
        %6111 = vrot.lane.b32.xlu0 %v6110, 126
        %v6112 = vpop.permute.xlu0 %6111
        %v6114 = vadd.f32 %v5906, %v6112
        %s6115 = sld [smem:[#allocation2 + $0xfb]]
        %v6116 = vstv %s6115
        %v6117 = vmul.f32 %v4739, %v6116
        %v6118 = vmul.f32 %v4740, %v6116
        %v6121 = vrot.slane %v6117, 2
        %v6122 = vrot.slane %v6118, 2
        %v6123 = vsel %vm1134, %v6121, %v6122
        %6124 = vrot.lane.b32.xlu0 %v6123, 126
        %v6125 = vpop.permute.xlu0 %6124
        %v6127 = vadd.f32 %v5919, %v6125
        %s6128 = sld [smem:[#allocation2 + $0x11f]]
        %v6129 = vstv %s6128
        %v6130 = vmul.f32 %v4739, %v6129
        %v6131 = vmul.f32 %v4740, %v6129
        %v6134 = vrot.slane %v6130, 2
        %v6135 = vrot.slane %v6131, 2
        %v6136 = vsel %vm1134, %v6134, %v6135
        %6137 = vrot.lane.b32.xlu0 %v6136, 126
        %v6138 = vpop.permute.xlu0 %6137
        %v6140 = vadd.f32 %v5932, %v6138
        %s6141 = sld [smem:[#allocation2 + $0x143]]
        %v6142 = vstv %s6141
        %v6143 = vmul.f32 %v4739, %v6142
        %v6144 = vmul.f32 %v4740, %v6142
        %v6147 = vrot.slane %v6143, 2
        %v6148 = vrot.slane %v6144, 2
        %v6149 = vsel %vm1134, %v6147, %v6148
        %6150 = vrot.lane.b32.xlu0 %v6149, 126
        %v6151 = vpop.permute.xlu0 %6150
        %v6153 = vadd.f32 %v5945, %v6151
        %s6154 = sld [smem:[#allocation2 + $0x167]]
        %v6155 = vstv %s6154
        %v6156 = vmul.f32 %v4739, %v6155
        %v6157 = vmul.f32 %v4740, %v6155
        %v6160 = vrot.slane %v6156, 2
        %v6161 = vrot.slane %v6157, 2
        %v6162 = vsel %vm1134, %v6160, %v6161
        %6163 = vrot.lane.b32.xlu0 %v6162, 126
        %v6164 = vpop.permute.xlu0 %6163
        %v6166 = vadd.f32 %v5958, %v6164
        %s6167 = sld [smem:[#allocation2 + $0x18b]]
        %v6168 = vstv %s6167
        %v6169 = vmul.f32 %v4739, %v6168
        %v6170 = vmul.f32 %v4740, %v6168
        %v6173 = vrot.slane %v6169, 2
        %v6174 = vrot.slane %v6170, 2
        %v6175 = vsel %vm1134, %v6173, %v6174
        %6176 = vrot.lane.b32.xlu0 %v6175, 126
        %v6177 = vpop.permute.xlu0 %6176
        %v6179 = vadd.f32 %v5971, %v6177
        %s6180 = sld [smem:[#allocation2 + $0x1af]]
        %v6181 = vstv %s6180
        %v6182 = vmul.f32 %v4739, %v6181
        %v6183 = vmul.f32 %v4740, %v6181
        %v6186 = vrot.slane %v6182, 2
        %v6187 = vrot.slane %v6183, 2
        %v6188 = vsel %vm1134, %v6186, %v6187
        %6189 = vrot.lane.b32.xlu0 %v6188, 126
        %v6190 = vpop.permute.xlu0 %6189
        %v6192 = vadd.f32 %v5984, %v6190
        %s6193 = sld [smem:[#allocation2 + $0x1d3]]
        %v6194 = vstv %s6193
        %v6195 = vmul.f32 %v4739, %v6194
        %v6196 = vmul.f32 %v4740, %v6194
        %v6199 = vrot.slane %v6195, 2
        %v6200 = vrot.slane %v6196, 2
        %v6201 = vsel %vm1134, %v6199, %v6200
        %6202 = vrot.lane.b32.xlu0 %v6201, 126
        %v6203 = vpop.permute.xlu0 %6202
        %v6205 = vadd.f32 %v5997, %v6203
        %s6206 = sld [smem:[#allocation2 + $0x1f7]]
        %v6207 = vstv %s6206
        %v6208 = vmul.f32 %v4739, %v6207
        %v6209 = vmul.f32 %v4740, %v6207
        %v6212 = vrot.slane %v6208, 2
        %v6213 = vrot.slane %v6209, 2
        %v6214 = vsel %vm1134, %v6212, %v6213
        %6215 = vrot.lane.b32.xlu0 %v6214, 126
        %v6216 = vpop.permute.xlu0 %6215
        %v6218 = vadd.f32 %v6010, %v6216
        %s6219 = sld [smem:[#allocation2 + $0x21b]]
        %v6220 = vstv %s6219
        %v6221 = vmul.f32 %v4739, %v6220
        %v6222 = vmul.f32 %v4740, %v6220
        %v6225 = vrot.slane %v6221, 2
        %v6226 = vrot.slane %v6222, 2
        %v6227 = vsel %vm1134, %v6225, %v6226
        %6228 = vrot.lane.b32.xlu0 %v6227, 126
        %v6229 = vpop.permute.xlu0 %6228
        %v6231 = vadd.f32 %v6023, %v6229
        %s6232 = sld [smem:[#allocation2 + $0x23f]]
        %v6233 = vstv %s6232
        %v6234 = vmul.f32 %v4739, %v6233
        %v6235 = vmul.f32 %v4740, %v6233
        %v6238 = vrot.slane %v6234, 2
        %v6239 = vrot.slane %v6235, 2
        %v6240 = vsel %vm1134, %v6238, %v6239
        %6241 = vrot.lane.b32.xlu0 %v6240, 126
        %v6242 = vpop.permute.xlu0 %6241
        %v6244 = vadd.f32 %v6036, %v6242
        %s6245 = sld [smem:[#allocation5]]
        %v6246 = vstv %s6245
        %v6247 = vadd.f32 %v6049, %v6246
        %vm6248 = vcmp.ge.f32.partialorder %v6247, 0.0
        %v6249 = vmul.f32 %v6247, 0.1
        %v6250 = vsel %vm6248, %v6247, %v6249
        %s6251 = sld [smem:[#allocation5 + $0x1]]
        %v6252 = vstv %s6251
        %v6253 = vadd.f32 %v6062, %v6252
        %vm6254 = vcmp.ge.f32.partialorder %v6253, 0.0
        %v6255 = vmul.f32 %v6253, 0.1
        %v6256 = vsel %vm6254, %v6253, %v6255
        %s6257 = sld [smem:[#allocation5 + $0x2]]
        %v6258 = vstv %s6257
        %v6259 = vadd.f32 %v6075, %v6258
        %vm6260 = vcmp.ge.f32.partialorder %v6259, 0.0
        %v6261 = vmul.f32 %v6259, 0.1
        %v6262 = vsel %vm6260, %v6259, %v6261
        %s6263 = sld [smem:[#allocation5 + $0x3]]
        %v6264 = vstv %s6263
        %v6265 = vadd.f32 %v6088, %v6264
        %vm6266 = vcmp.ge.f32.partialorder %v6265, 0.0
        %v6267 = vmul.f32 %v6265, 0.1
        %v6268 = vsel %vm6266, %v6265, %v6267
        %s6269 = sld [smem:[#allocation5 + $0x4]]
        %v6270 = vstv %s6269
        %v6271 = vadd.f32 %v6101, %v6270
        %vm6272 = vcmp.ge.f32.partialorder %v6271, 0.0
        %v6273 = vmul.f32 %v6271, 0.1
        %v6274 = vsel %vm6272, %v6271, %v6273
        %s6275 = sld [smem:[#allocation5 + $0x5]]
        %v6276 = vstv %s6275
        %v6277 = vadd.f32 %v6114, %v6276
        %vm6278 = vcmp.ge.f32.partialorder %v6277, 0.0
        %v6279 = vmul.f32 %v6277, 0.1
        %v6280 = vsel %vm6278, %v6277, %v6279
        %s6281 = sld [smem:[#allocation5 + $0x6]]
        %v6282 = vstv %s6281
        %v6283 = vadd.f32 %v6127, %v6282
        %vm6284 = vcmp.ge.f32.partialorder %v6283, 0.0
        %v6285 = vmul.f32 %v6283, 0.1
        %v6286 = vsel %vm6284, %v6283, %v6285
        %s6287 = sld [smem:[#allocation5 + $0x7]]
        %v6288 = vstv %s6287
        %v6289 = vadd.f32 %v6140, %v6288
        %vm6290 = vcmp.ge.f32.partialorder %v6289, 0.0
        %v6291 = vmul.f32 %v6289, 0.1
        %v6292 = vsel %vm6290, %v6289, %v6291
        %s6293 = sld [smem:[#allocation5 + $0x8]]
        %v6294 = vstv %s6293
        %v6295 = vadd.f32 %v6153, %v6294
        %vm6296 = vcmp.ge.f32.partialorder %v6295, 0.0
        %v6297 = vmul.f32 %v6295, 0.1
        %v6298 = vsel %vm6296, %v6295, %v6297
        %s6299 = sld [smem:[#allocation5 + $0x9]]
        %v6300 = vstv %s6299
        %v6301 = vadd.f32 %v6166, %v6300
        %vm6302 = vcmp.ge.f32.partialorder %v6301, 0.0
        %v6303 = vmul.f32 %v6301, 0.1
        %v6304 = vsel %vm6302, %v6301, %v6303
        %s6305 = sld [smem:[#allocation5 + $0xa]]
        %v6306 = vstv %s6305
        %v6307 = vadd.f32 %v6179, %v6306
        %vm6308 = vcmp.ge.f32.partialorder %v6307, 0.0
        %v6309 = vmul.f32 %v6307, 0.1
        %v6310 = vsel %vm6308, %v6307, %v6309
        %s6311 = sld [smem:[#allocation5 + $0xb]]
        %v6312 = vstv %s6311
        %v6313 = vadd.f32 %v6192, %v6312
        %vm6314 = vcmp.ge.f32.partialorder %v6313, 0.0
        %v6315 = vmul.f32 %v6313, 0.1
        %v6316 = vsel %vm6314, %v6313, %v6315
        %s6317 = sld [smem:[#allocation5 + $0xc]]
        %v6318 = vstv %s6317
        %v6319 = vadd.f32 %v6205, %v6318
        %vm6320 = vcmp.ge.f32.partialorder %v6319, 0.0
        %v6321 = vmul.f32 %v6319, 0.1
        %v6322 = vsel %vm6320, %v6319, %v6321
        %s6323 = sld [smem:[#allocation5 + $0xd]]
        %v6324 = vstv %s6323
        %v6325 = vadd.f32 %v6218, %v6324
        %vm6326 = vcmp.ge.f32.partialorder %v6325, 0.0
        %v6327 = vmul.f32 %v6325, 0.1
        %v6328 = vsel %vm6326, %v6325, %v6327
        %s6329 = sld [smem:[#allocation5 + $0xe]]
        %v6330 = vstv %s6329
        %v6331 = vadd.f32 %v6231, %v6330
        %vm6332 = vcmp.ge.f32.partialorder %v6331, 0.0
        %v6333 = vmul.f32 %v6331, 0.1
        %v6334 = vsel %vm6332, %v6331, %v6333
        %s6335 = sld [smem:[#allocation5 + $0xf]]
        %v6336 = vstv %s6335
        %v6337 = vadd.f32 %v6244, %v6336
        %vm6338 = vcmp.ge.f32.partialorder %v6337, 0.0
        %v6339 = vmul.f32 %v6337, 0.1
        %v6340 = vsel %vm6338, %v6337, %v6339
        %v6341 = vlaneseq
        %v6342 = vand.u32 %v6341, 127
        %v6343 = vlaneseq
        %v6344 = vshrl.u32 %v6343, 7
        %v6345 = vadd.s32 %v6344, 8
        %v6346 = vmul.u32 %v6344, 2
        %v6347 = vmul.u32 %v6345, 2
        %vm6348 = vcmp.eq.s32.totalorder %v6342, %v6346
        %vm6349 = vcmp.eq.s32.totalorder %v6342, %v6347
        %v6350 = vsel %vm6348, 1, 0
        %v6351 = vsel %vm6349, 1, 0
        %v6352 = vcvt.s32.f32 %v6350
        %v6353 = vcvt.s32.f32 %v6351
        %v6354 = vadd.s32 %v6346, 1
        %v6355 = vadd.s32 %v6347, 1
        %vm6356 = vcmp.eq.s32.totalorder %v6342, %v6354
        %vm6357 = vcmp.eq.s32.totalorder %v6342, %v6355
        %v6358 = vsel %vm6356, 1, 0
        %v6359 = vsel %vm6357, 1, 0
        %v6360 = vcvt.s32.f32 %v6358
        %v6361 = vcvt.s32.f32 %v6359
        %v6362 = vmul.u32 %v6342, 2
        %vm6363 = vcmp.eq.s32.totalorder %v6344, %v6362
        %vm6364 = vcmp.eq.s32.totalorder %v6345, %v6362
        %v6365 = vsel %vm6363, 1, 0
        %v6366 = vsel %vm6364, 1, 0
        %v6367 = vcvt.s32.f32 %v6365
        %v6368 = vcvt.s32.f32 %v6366
        %v6369 = vadd.s32 %v6362, 1
        %vm6370 = vcmp.eq.s32.totalorder %v6344, %v6369
        %vm6371 = vcmp.eq.s32.totalorder %v6345, %v6369
        %v6372 = vsel %vm6370, 1, 0
        %v6373 = vsel %vm6371, 1, 0
        %v6374 = vcvt.s32.f32 %v6372
        %v6375 = vcvt.s32.f32 %v6373
        %vm6376 = vcmask 130048
        %v6378 = vsel %vm6376, %v6256, 0
        %6380 = vmatprep.subr.mxu0 0.0
        %6381 = vmatpush1.msra.mxu0 %v6360
        %6382 = vmatprep.subr.mxu0 0.0
        %6383 = vmatpush1.msra.mxu0 %v6361
        %6384 = vmatprep.subr.mxu0 0.0
        %6385 = vmatpush1.msra.mxu0 0.0
        %6386 = vmatprep.subr.mxu0 0.0
        %6387 = vmatpush1.msra.mxu0 0.0
        %6388 = vmatprep.subr.mxu0 0.0
        %6389 = vmatpush1.msra.mxu0 0.0
        %6390 = vmatprep.subr.mxu0 0.0
        %6391 = vmatpush1.msra.mxu0 0.0
        %6392 = vmatprep.subr.mxu0 0.0
        %6393 = vmatpush1.msra.mxu0 0.0
        %6394 = vmatprep.subr.mxu0 0.0
        %6395 = vmatpush1.msra.mxu0 0.0
        %6396 = vmatprep.subr.mxu0 0.0
        %6397 = vmatpush1.msra.mxu0 0.0
        %6398 = vmatprep.subr.mxu0 0.0
        %6399 = vmatpush1.msra.mxu0 0.0
        %6400 = vmatprep.subr.mxu0 0.0
        %6401 = vmatpush1.msra.mxu0 0.0
        %6402 = vmatprep.subr.mxu0 0.0
        %6403 = vmatpush1.msra.mxu0 0.0
        %6404 = vmatprep.subr.mxu0 0.0
        %6405 = vmatpush1.msra.mxu0 0.0
        %6406 = vmatprep.subr.mxu0 0.0
        %6407 = vmatpush1.msra.mxu0 0.0
        %6408 = vmatprep.subr.mxu0 0.0
        %6409 = vmatpush1.msra.mxu0 0.0
        %6410 = vmatprep.subr.mxu0 0.0
        %6411 = vmatpush1.msra.mxu0 0.0
        %6412 = vmatprep.subr.mxu0 0.0
        %6413 = vmatpush1.msra.mxu0 0.0
        %6414 = vmatprep.subr.mxu0 0.0
        %6415 = vmatpush1.msra.mxu0 0.0
        %6416 = vmatprep.subr.mxu0 0.0
        %6417 = vmatpush1.msra.mxu0 0.0
        %6418 = vmatprep.subr.mxu0 0.0
        %6419 = vmatpush1.msra.mxu0 0.0
        %6420 = vmatprep.subr.mxu0 0.0
        %6421 = vmatpush1.msra.mxu0 0.0
        %6422 = vmatprep.subr.mxu0 0.0
        %6423 = vmatpush1.msra.mxu0 0.0
        %6424 = vmatprep.subr.mxu0 0.0
        %6425 = vmatpush1.msra.mxu0 0.0
        %6426 = vmatprep.subr.mxu0 0.0
        %6427 = vmatpush1.msra.mxu0 0.0
        %6428 = vmatprep.subr.mxu0 0.0
        %6429 = vmatpush1.msra.mxu0 0.0
        %6430 = vmatprep.subr.mxu0 0.0
        %6431 = vmatpush1.msra.mxu0 0.0
        %6432 = vmatprep.subr.mxu0 0.0
        %6433 = vmatpush1.msra.mxu0 0.0
        %6434 = vmatprep.subr.mxu0 0.0
        %6435 = vmatpush1.msra.mxu0 0.0
        %6436 = vmatprep.subr.mxu0 0.0
        %6437 = vmatpush1.msra.mxu0 0.0
        %6438 = vmatprep.subr.mxu0 0.0
        %6439 = vmatpush1.msra.mxu0 0.0
        %6440 = vmatprep.subr.mxu0 0.0
        %6441 = vmatpush1.msra.mxu0 0.0
        %6442 = vmatprep.subr.mxu0 0.0
        %6443 = vmatpush1.msra.mxu0 0.0
        %6444 = vmatprep.mubr.f32.mxu0 0.0
        %6445 = vmatmul.mubr.f32.gmra.mrb[0].mxu0 %v6378
        %v6446 = vpop.f32.mrb[0].mxu0
        %v6447 = vadd.f32 0.0, %v6446
        %v6448 = vpop.f32.mrb[0].mxu0
        %6449 = vdwg.mxu0
        %v6451 = vsel %vm6376, %v6250, 0
        %6453 = vmatprep.subr.mxu0 0.0
        %6454 = vmatpush1.msra.mxu0 %v6352
        %6455 = vmatprep.subr.mxu0 0.0
        %6456 = vmatpush1.msra.mxu0 %v6353
        %6457 = vmatprep.subr.mxu0 0.0
        %6458 = vmatpush1.msra.mxu0 0.0
        %6459 = vmatprep.subr.mxu0 0.0
        %6460 = vmatpush1.msra.mxu0 0.0
        %6461 = vmatprep.subr.mxu0 0.0
        %6462 = vmatpush1.msra.mxu0 0.0
        %6463 = vmatprep.subr.mxu0 0.0
        %6464 = vmatpush1.msra.mxu0 0.0
        %6465 = vmatprep.subr.mxu0 0.0
        %6466 = vmatpush1.msra.mxu0 0.0
        %6467 = vmatprep.subr.mxu0 0.0
        %6468 = vmatpush1.msra.mxu0 0.0
        %6469 = vmatprep.subr.mxu0 0.0
        %6470 = vmatpush1.msra.mxu0 0.0
        %6471 = vmatprep.subr.mxu0 0.0
        %6472 = vmatpush1.msra.mxu0 0.0
        %6473 = vmatprep.subr.mxu0 0.0
        %6474 = vmatpush1.msra.mxu0 0.0
        %6475 = vmatprep.subr.mxu0 0.0
        %6476 = vmatpush1.msra.mxu0 0.0
        %6477 = vmatprep.subr.mxu0 0.0
        %6478 = vmatpush1.msra.mxu0 0.0
        %6479 = vmatprep.subr.mxu0 0.0
        %6480 = vmatpush1.msra.mxu0 0.0
        %6481 = vmatprep.subr.mxu0 0.0
        %6482 = vmatpush1.msra.mxu0 0.0
        %6483 = vmatprep.subr.mxu0 0.0
        %6484 = vmatpush1.msra.mxu0 0.0
        %6485 = vmatprep.subr.mxu0 0.0
        %6486 = vmatpush1.msra.mxu0 0.0
        %6487 = vmatprep.subr.mxu0 0.0
        %6488 = vmatpush1.msra.mxu0 0.0
        %6489 = vmatprep.subr.mxu0 0.0
        %6490 = vmatpush1.msra.mxu0 0.0
        %6491 = vmatprep.subr.mxu0 0.0
        %6492 = vmatpush1.msra.mxu0 0.0
        %6493 = vmatprep.subr.mxu0 0.0
        %6494 = vmatpush1.msra.mxu0 0.0
        %6495 = vmatprep.subr.mxu0 0.0
        %6496 = vmatpush1.msra.mxu0 0.0
        %6497 = vmatprep.subr.mxu0 0.0
        %6498 = vmatpush1.msra.mxu0 0.0
        %6499 = vmatprep.subr.mxu0 0.0
        %6500 = vmatpush1.msra.mxu0 0.0
        %6501 = vmatprep.subr.mxu0 0.0
        %6502 = vmatpush1.msra.mxu0 0.0
        %6503 = vmatprep.subr.mxu0 0.0
        %6504 = vmatpush1.msra.mxu0 0.0
        %6505 = vmatprep.subr.mxu0 0.0
        %6506 = vmatpush1.msra.mxu0 0.0
        %6507 = vmatprep.subr.mxu0 0.0
        %6508 = vmatpush1.msra.mxu0 0.0
        %6509 = vmatprep.subr.mxu0 0.0
        %6510 = vmatpush1.msra.mxu0 0.0
        %6511 = vmatprep.subr.mxu0 0.0
        %6512 = vmatpush1.msra.mxu0 0.0
        %6513 = vmatprep.subr.mxu0 0.0
        %6514 = vmatpush1.msra.mxu0 0.0
        %6515 = vmatprep.subr.mxu0 0.0
        %6516 = vmatpush1.msra.mxu0 0.0
        %6517 = vmatprep.mubr.f32.mxu0 0.0
        %6518 = vmatmul.mubr.f32.gmra.mrb[0].mxu0 %v6451
        %v6519 = vpop.f32.mrb[0].mxu0
        %v6520 = vadd.f32 %v6447, %v6519
        %v6521 = vpop.f32.mrb[0].mxu0
        %6522 = vdwg.mxu0
        %v6524 = vsel %vm6376, %v6268, 0
        %6526 = vmatprep.subr.mxu0 0.0
        %6527 = vmatpush1.msra.mxu0 %v6360
        %6528 = vmatprep.subr.mxu0 0.0
        %6529 = vmatpush1.msra.mxu0 %v6361
        %6530 = vmatprep.subr.mxu0 0.0
        %6531 = vmatpush1.msra.mxu0 0.0
        %6532 = vmatprep.subr.mxu0 0.0
        %6533 = vmatpush1.msra.mxu0 0.0
        %6534 = vmatprep.subr.mxu0 0.0
        %6535 = vmatpush1.msra.mxu0 0.0
        %6536 = vmatprep.subr.mxu0 0.0
        %6537 = vmatpush1.msra.mxu0 0.0
        %6538 = vmatprep.subr.mxu0 0.0
        %6539 = vmatpush1.msra.mxu0 0.0
        %6540 = vmatprep.subr.mxu0 0.0
        %6541 = vmatpush1.msra.mxu0 0.0
        %6542 = vmatprep.subr.mxu0 0.0
        %6543 = vmatpush1.msra.mxu0 0.0
        %6544 = vmatprep.subr.mxu0 0.0
        %6545 = vmatpush1.msra.mxu0 0.0
        %6546 = vmatprep.subr.mxu0 0.0
        %6547 = vmatpush1.msra.mxu0 0.0
        %6548 = vmatprep.subr.mxu0 0.0
        %6549 = vmatpush1.msra.mxu0 0.0
        %6550 = vmatprep.subr.mxu0 0.0
        %6551 = vmatpush1.msra.mxu0 0.0
        %6552 = vmatprep.subr.mxu0 0.0
        %6553 = vmatpush1.msra.mxu0 0.0
        %6554 = vmatprep.subr.mxu0 0.0
        %6555 = vmatpush1.msra.mxu0 0.0
        %6556 = vmatprep.subr.mxu0 0.0
        %6557 = vmatpush1.msra.mxu0 0.0
        %6558 = vmatprep.subr.mxu0 0.0
        %6559 = vmatpush1.msra.mxu0 0.0
        %6560 = vmatprep.subr.mxu0 0.0
        %6561 = vmatpush1.msra.mxu0 0.0
        %6562 = vmatprep.subr.mxu0 0.0
        %6563 = vmatpush1.msra.mxu0 0.0
        %6564 = vmatprep.subr.mxu0 0.0
        %6565 = vmatpush1.msra.mxu0 0.0
        %6566 = vmatprep.subr.mxu0 0.0
        %6567 = vmatpush1.msra.mxu0 0.0
        %6568 = vmatprep.subr.mxu0 0.0
        %6569 = vmatpush1.msra.mxu0 0.0
        %6570 = vmatprep.subr.mxu0 0.0
        %6571 = vmatpush1.msra.mxu0 0.0
        %6572 = vmatprep.subr.mxu0 0.0
        %6573 = vmatpush1.msra.mxu0 0.0
        %6574 = vmatprep.subr.mxu0 0.0
        %6575 = vmatpush1.msra.mxu0 0.0
        %6576 = vmatprep.subr.mxu0 0.0
        %6577 = vmatpush1.msra.mxu0 0.0
        %6578 = vmatprep.subr.mxu0 0.0
        %6579 = vmatpush1.msra.mxu0 0.0
        %6580 = vmatprep.subr.mxu0 0.0
        %6581 = vmatpush1.msra.mxu0 0.0
        %6582 = vmatprep.subr.mxu0 0.0
        %6583 = vmatpush1.msra.mxu0 0.0
        %6584 = vmatprep.subr.mxu0 0.0
        %6585 = vmatpush1.msra.mxu0 0.0
        %6586 = vmatprep.subr.mxu0 0.0
        %6587 = vmatpush1.msra.mxu0 0.0
        %6588 = vmatprep.subr.mxu0 0.0
        %6589 = vmatpush1.msra.mxu0 0.0
        %6590 = vmatprep.mubr.f32.mxu0 0.0
        %6591 = vmatmul.mubr.f32.gmra.mrb[0].mxu0 %v6524
        %v6592 = vpop.f32.mrb[0].mxu0
        %v6593 = vadd.f32 0.0, %v6592
        %v6594 = vpop.f32.mrb[0].mxu0
        %6595 = vdwg.mxu0
        %v6597 = vsel %vm6376, %v6262, 0
        %6599 = vmatprep.subr.mxu0 0.0
        %6600 = vmatpush1.msra.mxu0 %v6352
        %6601 = vmatprep.subr.mxu0 0.0
        %6602 = vmatpush1.msra.mxu0 %v6353
        %6603 = vmatprep.subr.mxu0 0.0
        %6604 = vmatpush1.msra.mxu0 0.0
        %6605 = vmatprep.subr.mxu0 0.0
        %6606 = vmatpush1.msra.mxu0 0.0
        %6607 = vmatprep.subr.mxu0 0.0
        %6608 = vmatpush1.msra.mxu0 0.0
        %6609 = vmatprep.subr.mxu0 0.0
        %6610 = vmatpush1.msra.mxu0 0.0
        %6611 = vmatprep.subr.mxu0 0.0
        %6612 = vmatpush1.msra.mxu0 0.0
        %6613 = vmatprep.subr.mxu0 0.0
        %6614 = vmatpush1.msra.mxu0 0.0
        %6615 = vmatprep.subr.mxu0 0.0
        %6616 = vmatpush1.msra.mxu0 0.0
        %6617 = vmatprep.subr.mxu0 0.0
        %6618 = vmatpush1.msra.mxu0 0.0
        %6619 = vmatprep.subr.mxu0 0.0
        %6620 = vmatpush1.msra.mxu0 0.0
        %6621 = vmatprep.subr.mxu0 0.0
        %6622 = vmatpush1.msra.mxu0 0.0
        %6623 = vmatprep.subr.mxu0 0.0
        %6624 = vmatpush1.msra.mxu0 0.0
        %6625 = vmatprep.subr.mxu0 0.0
        %6626 = vmatpush1.msra.mxu0 0.0
        %6627 = vmatprep.subr.mxu0 0.0
        %6628 = vmatpush1.msra.mxu0 0.0
        %6629 = vmatprep.subr.mxu0 0.0
        %6630 = vmatpush1.msra.mxu0 0.0
        %6631 = vmatprep.subr.mxu0 0.0
        %6632 = vmatpush1.msra.mxu0 0.0
        %6633 = vmatprep.subr.mxu0 0.0
        %6634 = vmatpush1.msra.mxu0 0.0
        %6635 = vmatprep.subr.mxu0 0.0
        %6636 = vmatpush1.msra.mxu0 0.0
        %6637 = vmatprep.subr.mxu0 0.0
        %6638 = vmatpush1.msra.mxu0 0.0
        %6639 = vmatprep.subr.mxu0 0.0
        %6640 = vmatpush1.msra.mxu0 0.0
        %6641 = vmatprep.subr.mxu0 0.0
        %6642 = vmatpush1.msra.mxu0 0.0
        %6643 = vmatprep.subr.mxu0 0.0
        %6644 = vmatpush1.msra.mxu0 0.0
        %6645 = vmatprep.subr.mxu0 0.0
        %6646 = vmatpush1.msra.mxu0 0.0
        %6647 = vmatprep.subr.mxu0 0.0
        %6648 = vmatpush1.msra.mxu0 0.0
        %6649 = vmatprep.subr.mxu0 0.0
        %6650 = vmatpush1.msra.mxu0 0.0
        %6651 = vmatprep.subr.mxu0 0.0
        %6652 = vmatpush1.msra.mxu0 0.0
        %6653 = vmatprep.subr.mxu0 0.0
        %6654 = vmatpush1.msra.mxu0 0.0
        %6655 = vmatprep.subr.mxu0 0.0
        %6656 = vmatpush1.msra.mxu0 0.0
        %6657 = vmatprep.subr.mxu0 0.0
        %6658 = vmatpush1.msra.mxu0 0.0
        %6659 = vmatprep.subr.mxu0 0.0
        %6660 = vmatpush1.msra.mxu0 0.0
        %6661 = vmatprep.subr.mxu0 0.0
        %6662 = vmatpush1.msra.mxu0 0.0
        %6663 = vmatprep.mubr.f32.mxu0 0.0
        %6664 = vmatmul.mubr.f32.gmra.mrb[0].mxu0 %v6597
        %v6665 = vpop.f32.mrb[0].mxu0
        %v6666 = vadd.f32 %v6593, %v6665
        %v6667 = vpop.f32.mrb[0].mxu0
        %6668 = vdwg.mxu0
        %vm6669 = vcmask 64512
        %v6671 = vsel %vm6669, %v6374, 0
        %v6674 = vsel %vm6669, %v6375, 0
        %6676 = vmatprep.subr.mxu0 0.0
        %6677 = vmatpush1.msra.mxu0 %v6666
        %6678 = vmatprep.subr.mxu0 0.0
        %6679 = vmatpush1.msra.mxu0 0.0
        %6680 = vmatprep.subr.mxu0 0.0
        %6681 = vmatpush1.msra.mxu0 0.0
        %6682 = vmatprep.subr.mxu0 0.0
        %6683 = vmatpush1.msra.mxu0 0.0
        %6684 = vmatprep.subr.mxu0 0.0
        %6685 = vmatpush1.msra.mxu0 0.0
        %6686 = vmatprep.subr.mxu0 0.0
        %6687 = vmatpush1.msra.mxu0 0.0
        %6688 = vmatprep.subr.mxu0 0.0
        %6689 = vmatpush1.msra.mxu0 0.0
        %6690 = vmatprep.subr.mxu0 0.0
        %6691 = vmatpush1.msra.mxu0 0.0
        %6692 = vmatprep.subr.mxu0 0.0
        %6693 = vmatpush1.msra.mxu0 0.0
        %6694 = vmatprep.subr.mxu0 0.0
        %6695 = vmatpush1.msra.mxu0 0.0
        %6696 = vmatprep.subr.mxu0 0.0
        %6697 = vmatpush1.msra.mxu0 0.0
        %6698 = vmatprep.subr.mxu0 0.0
        %6699 = vmatpush1.msra.mxu0 0.0
        %6700 = vmatprep.subr.mxu0 0.0
        %6701 = vmatpush1.msra.mxu0 0.0
        %6702 = vmatprep.subr.mxu0 0.0
        %6703 = vmatpush1.msra.mxu0 0.0
        %6704 = vmatprep.subr.mxu0 0.0
        %6705 = vmatpush1.msra.mxu0 0.0
        %6706 = vmatprep.subr.mxu0 0.0
        %6707 = vmatpush1.msra.mxu0 0.0
        %6708 = vmatprep.subr.mxu0 0.0
        %6709 = vmatpush1.msra.mxu0 0.0
        %6710 = vmatprep.subr.mxu0 0.0
        %6711 = vmatpush1.msra.mxu0 0.0
        %6712 = vmatprep.subr.mxu0 0.0
        %6713 = vmatpush1.msra.mxu0 0.0
        %6714 = vmatprep.subr.mxu0 0.0
        %6715 = vmatpush1.msra.mxu0 0.0
        %6716 = vmatprep.subr.mxu0 0.0
        %6717 = vmatpush1.msra.mxu0 0.0
        %6718 = vmatprep.subr.mxu0 0.0
        %6719 = vmatpush1.msra.mxu0 0.0
        %6720 = vmatprep.subr.mxu0 0.0
        %6721 = vmatpush1.msra.mxu0 0.0
        %6722 = vmatprep.subr.mxu0 0.0
        %6723 = vmatpush1.msra.mxu0 0.0
        %6724 = vmatprep.subr.mxu0 0.0
        %6725 = vmatpush1.msra.mxu0 0.0
        %6726 = vmatprep.subr.mxu0 0.0
        %6727 = vmatpush1.msra.mxu0 0.0
        %6728 = vmatprep.subr.mxu0 0.0
        %6729 = vmatpush1.msra.mxu0 0.0
        %6730 = vmatprep.subr.mxu0 0.0
        %6731 = vmatpush1.msra.mxu0 0.0
        %6732 = vmatprep.subr.mxu0 0.0
        %6733 = vmatpush1.msra.mxu0 0.0
        %6734 = vmatprep.subr.mxu0 0.0
        %6735 = vmatpush1.msra.mxu0 0.0
        %6736 = vmatprep.subr.mxu0 0.0
        %6737 = vmatpush1.msra.mxu0 0.0
        %6738 = vmatprep.subr.mxu0 0.0
        %6739 = vmatpush1.msra.mxu0 0.0
        %6740 = vmatprep.mubr.f32.mxu0 0.0
        %6741 = vmatmul.mubr.f32.gmra.mrb[0].mxu0 %v6671
        %v6742 = vpop.f32.mrb[0].mxu0
        %v6743 = vadd.f32 0.0, %v6742
        %v6744 = vpop.f32.mrb[0].mxu0
        %6745 = vmatprep.mubr.f32.mxu0 0.0
        %6746 = vmatmul.mubr.f32.gmra.mrb[0].mxu0 %v6674
        %v6747 = vpop.f32.mrb[0].mxu0
        %v6748 = vadd.f32 0.0, %v6747
        %v6749 = vpop.f32.mrb[0].mxu0
        %6750 = vdwg.mxu0
        %v6752 = vsel %vm6669, %v6367, 0
        %v6755 = vsel %vm6669, %v6368, 0
        %6757 = vmatprep.subr.mxu0 0.0
        %6758 = vmatpush1.msra.mxu0 %v6520
        %6759 = vmatprep.subr.mxu0 0.0
        %6760 = vmatpush1.msra.mxu0 0.0
        %6761 = vmatprep.subr.mxu0 0.0
        %6762 = vmatpush1.msra.mxu0 0.0
        %6763 = vmatprep.subr.mxu0 0.0
        %6764 = vmatpush1.msra.mxu0 0.0
        %6765 = vmatprep.subr.mxu0 0.0
        %6766 = vmatpush1.msra.mxu0 0.0
        %6767 = vmatprep.subr.mxu0 0.0
        %6768 = vmatpush1.msra.mxu0 0.0
        %6769 = vmatprep.subr.mxu0 0.0
        %6770 = vmatpush1.msra.mxu0 0.0
        %6771 = vmatprep.subr.mxu0 0.0
        %6772 = vmatpush1.msra.mxu0 0.0
        %6773 = vmatprep.subr.mxu0 0.0
        %6774 = vmatpush1.msra.mxu0 0.0
        %6775 = vmatprep.subr.mxu0 0.0
        %6776 = vmatpush1.msra.mxu0 0.0
        %6777 = vmatprep.subr.mxu0 0.0
        %6778 = vmatpush1.msra.mxu0 0.0
        %6779 = vmatprep.subr.mxu0 0.0
        %6780 = vmatpush1.msra.mxu0 0.0
        %6781 = vmatprep.subr.mxu0 0.0
        %6782 = vmatpush1.msra.mxu0 0.0
        %6783 = vmatprep.subr.mxu0 0.0
        %6784 = vmatpush1.msra.mxu0 0.0
        %6785 = vmatprep.subr.mxu0 0.0
        %6786 = vmatpush1.msra.mxu0 0.0
        %6787 = vmatprep.subr.mxu0 0.0
        %6788 = vmatpush1.msra.mxu0 0.0
        %6789 = vmatprep.subr.mxu0 0.0
        %6790 = vmatpush1.msra.mxu0 0.0
        %6791 = vmatprep.subr.mxu0 0.0
        %6792 = vmatpush1.msra.mxu0 0.0
        %6793 = vmatprep.subr.mxu0 0.0
        %6794 = vmatpush1.msra.mxu0 0.0
        %6795 = vmatprep.subr.mxu0 0.0
        %6796 = vmatpush1.msra.mxu0 0.0
        %6797 = vmatprep.subr.mxu0 0.0
        %6798 = vmatpush1.msra.mxu0 0.0
        %6799 = vmatprep.subr.mxu0 0.0
        %6800 = vmatpush1.msra.mxu0 0.0
        %6801 = vmatprep.subr.mxu0 0.0
        %6802 = vmatpush1.msra.mxu0 0.0
        %6803 = vmatprep.subr.mxu0 0.0
        %6804 = vmatpush1.msra.mxu0 0.0
        %6805 = vmatprep.subr.mxu0 0.0
        %6806 = vmatpush1.msra.mxu0 0.0
        %6807 = vmatprep.subr.mxu0 0.0
        %6808 = vmatpush1.msra.mxu0 0.0
        %6809 = vmatprep.subr.mxu0 0.0
        %6810 = vmatpush1.msra.mxu0 0.0
        %6811 = vmatprep.subr.mxu0 0.0
        %6812 = vmatpush1.msra.mxu0 0.0
        %6813 = vmatprep.subr.mxu0 0.0
        %6814 = vmatpush1.msra.mxu0 0.0
        %6815 = vmatprep.subr.mxu0 0.0
        %6816 = vmatpush1.msra.mxu0 0.0
        %6817 = vmatprep.subr.mxu0 0.0
        %6818 = vmatpush1.msra.mxu0 0.0
        %6819 = vmatprep.subr.mxu0 0.0
        %6820 = vmatpush1.msra.mxu0 0.0
        %6821 = vmatprep.mubr.f32.mxu0 0.0
        %6822 = vmatmul.mubr.f32.gmra.mrb[0].mxu0 %v6752
        %v6823 = vpop.f32.mrb[0].mxu0
        %v6824 = vadd.f32 %v6743, %v6823
        %v6825 = vpop.f32.mrb[0].mxu0
        %6826 = vmatprep.mubr.f32.mxu0 0.0
        %6827 = vmatmul.mubr.f32.gmra.mrb[0].mxu0 %v6755
        %v6828 = vpop.f32.mrb[0].mxu0
        %v6829 = vadd.f32 %v6748, %v6828
        %v6830 = vpop.f32.mrb[0].mxu0
        %6831 = vdwg.mxu0
        %vm6832 = vcmask 261120
        %6833 = vst.msk [vmem:[%s204] sm:$0xff] %vm6832, %v6824
        %6834 = vst.msk [vmem:[%s204 + $0x8] sm:$0xff] %vm6832, %v6829
        %v6836 = vsel %vm6376, %v6280, 0
        %6838 = vmatprep.subr.mxu0 0.0
        %6839 = vmatpush1.msra.mxu0 %v6360
        %6840 = vmatprep.subr.mxu0 0.0
        %6841 = vmatpush1.msra.mxu0 %v6361
        %6842 = vmatprep.subr.mxu0 0.0
        %6843 = vmatpush1.msra.mxu0 0.0
        %6844 = vmatprep.subr.mxu0 0.0
        %6845 = vmatpush1.msra.mxu0 0.0
        %6846 = vmatprep.subr.mxu0 0.0
        %6847 = vmatpush1.msra.mxu0 0.0
        %6848 = vmatprep.subr.mxu0 0.0
        %6849 = vmatpush1.msra.mxu0 0.0
        %6850 = vmatprep.subr.mxu0 0.0
        %6851 = vmatpush1.msra.mxu0 0.0
        %6852 = vmatprep.subr.mxu0 0.0
        %6853 = vmatpush1.msra.mxu0 0.0
        %6854 = vmatprep.subr.mxu0 0.0
        %6855 = vmatpush1.msra.mxu0 0.0
        %6856 = vmatprep.subr.mxu0 0.0
        %6857 = vmatpush1.msra.mxu0 0.0
        %6858 = vmatprep.subr.mxu0 0.0
        %6859 = vmatpush1.msra.mxu0 0.0
        %6860 = vmatprep.subr.mxu0 0.0
        %6861 = vmatpush1.msra.mxu0 0.0
        %6862 = vmatprep.subr.mxu0 0.0
        %6863 = vmatpush1.msra.mxu0 0.0
        %6864 = vmatprep.subr.mxu0 0.0
        %6865 = vmatpush1.msra.mxu0 0.0
        %6866 = vmatprep.subr.mxu0 0.0
        %6867 = vmatpush1.msra.mxu0 0.0
        %6868 = vmatprep.subr.mxu0 0.0
        %6869 = vmatpush1.msra.mxu0 0.0
        %6870 = vmatprep.subr.mxu0 0.0
        %6871 = vmatpush1.msra.mxu0 0.0
        %6872 = vmatprep.subr.mxu0 0.0
        %6873 = vmatpush1.msra.mxu0 0.0
        %6874 = vmatprep.subr.mxu0 0.0
        %6875 = vmatpush1.msra.mxu0 0.0
        %6876 = vmatprep.subr.mxu0 0.0
        %6877 = vmatpush1.msra.mxu0 0.0
        %6878 = vmatprep.subr.mxu0 0.0
        %6879 = vmatpush1.msra.mxu0 0.0
        %6880 = vmatprep.subr.mxu0 0.0
        %6881 = vmatpush1.msra.mxu0 0.0
        %6882 = vmatprep.subr.mxu0 0.0
        %6883 = vmatpush1.msra.mxu0 0.0
        %6884 = vmatprep.subr.mxu0 0.0
        %6885 = vmatpush1.msra.mxu0 0.0
        %6886 = vmatprep.subr.mxu0 0.0
        %6887 = vmatpush1.msra.mxu0 0.0
        %6888 = vmatprep.subr.mxu0 0.0
        %6889 = vmatpush1.msra.mxu0 0.0
        %6890 = vmatprep.subr.mxu0 0.0
        %6891 = vmatpush1.msra.mxu0 0.0
        %6892 = vmatprep.subr.mxu0 0.0
        %6893 = vmatpush1.msra.mxu0 0.0
        %6894 = vmatprep.subr.mxu0 0.0
        %6895 = vmatpush1.msra.mxu0 0.0
        %6896 = vmatprep.subr.mxu0 0.0
        %6897 = vmatpush1.msra.mxu0 0.0
        %6898 = vmatprep.subr.mxu0 0.0
        %6899 = vmatpush1.msra.mxu0 0.0
        %6900 = vmatprep.subr.mxu0 0.0
        %6901 = vmatpush1.msra.mxu0 0.0
        %6902 = vmatprep.mubr.f32.mxu0 0.0
        %6903 = vmatmul.mubr.f32.gmra.mrb[0].mxu0 %v6836
        %v6904 = vpop.f32.mrb[0].mxu0
        %v6905 = vadd.f32 0.0, %v6904
        %v6906 = vpop.f32.mrb[0].mxu0
        %6907 = vdwg.mxu0
        %v6909 = vsel %vm6376, %v6274, 0
        %6911 = vmatprep.subr.mxu0 0.0
        %6912 = vmatpush1.msra.mxu0 %v6352
        %6913 = vmatprep.subr.mxu0 0.0
        %6914 = vmatpush1.msra.mxu0 %v6353
        %6915 = vmatprep.subr.mxu0 0.0
        %6916 = vmatpush1.msra.mxu0 0.0
        %6917 = vmatprep.subr.mxu0 0.0
        %6918 = vmatpush1.msra.mxu0 0.0
        %6919 = vmatprep.subr.mxu0 0.0
        %6920 = vmatpush1.msra.mxu0 0.0
        %6921 = vmatprep.subr.mxu0 0.0
        %6922 = vmatpush1.msra.mxu0 0.0
        %6923 = vmatprep.subr.mxu0 0.0
        %6924 = vmatpush1.msra.mxu0 0.0
        %6925 = vmatprep.subr.mxu0 0.0
        %6926 = vmatpush1.msra.mxu0 0.0
        %6927 = vmatprep.subr.mxu0 0.0
        %6928 = vmatpush1.msra.mxu0 0.0
        %6929 = vmatprep.subr.mxu0 0.0
        %6930 = vmatpush1.msra.mxu0 0.0
        %6931 = vmatprep.subr.mxu0 0.0
        %6932 = vmatpush1.msra.mxu0 0.0
        %6933 = vmatprep.subr.mxu0 0.0
        %6934 = vmatpush1.msra.mxu0 0.0
        %6935 = vmatprep.subr.mxu0 0.0
        %6936 = vmatpush1.msra.mxu0 0.0
        %6937 = vmatprep.subr.mxu0 0.0
        %6938 = vmatpush1.msra.mxu0 0.0
        %6939 = vmatprep.subr.mxu0 0.0
        %6940 = vmatpush1.msra.mxu0 0.0
        %6941 = vmatprep.subr.mxu0 0.0
        %6942 = vmatpush1.msra.mxu0 0.0
        %6943 = vmatprep.subr.mxu0 0.0
        %6944 = vmatpush1.msra.mxu0 0.0
        %6945 = vmatprep.subr.mxu0 0.0
        %6946 = vmatpush1.msra.mxu0 0.0
        %6947 = vmatprep.subr.mxu0 0.0
        %6948 = vmatpush1.msra.mxu0 0.0
        %6949 = vmatprep.subr.mxu0 0.0
        %6950 = vmatpush1.msra.mxu0 0.0
        %6951 = vmatprep.subr.mxu0 0.0
        %6952 = vmatpush1.msra.mxu0 0.0
        %6953 = vmatprep.subr.mxu0 0.0
        %6954 = vmatpush1.msra.mxu0 0.0
        %6955 = vmatprep.subr.mxu0 0.0
        %6956 = vmatpush1.msra.mxu0 0.0
        %6957 = vmatprep.subr.mxu0 0.0
        %6958 = vmatpush1.msra.mxu0 0.0
        %6959 = vmatprep.subr.mxu0 0.0
        %6960 = vmatpush1.msra.mxu0 0.0
        %6961 = vmatprep.subr.mxu0 0.0
        %6962 = vmatpush1.msra.mxu0 0.0
        %6963 = vmatprep.subr.mxu0 0.0
        %6964 = vmatpush1.msra.mxu0 0.0
        %6965 = vmatprep.subr.mxu0 0.0
        %6966 = vmatpush1.msra.mxu0 0.0
        %6967 = vmatprep.subr.mxu0 0.0
        %6968 = vmatpush1.msra.mxu0 0.0
        %6969 = vmatprep.subr.mxu0 0.0
        %6970 = vmatpush1.msra.mxu0 0.0
        %6971 = vmatprep.subr.mxu0 0.0
        %6972 = vmatpush1.msra.mxu0 0.0
        %6973 = vmatprep.subr.mxu0 0.0
        %6974 = vmatpush1.msra.mxu0 0.0
        %6975 = vmatprep.mubr.f32.mxu0 0.0
        %6976 = vmatmul.mubr.f32.gmra.mrb[0].mxu0 %v6909
        %v6977 = vpop.f32.mrb[0].mxu0
        %v6978 = vadd.f32 %v6905, %v6977
        %v6979 = vpop.f32.mrb[0].mxu0
        %6980 = vdwg.mxu0
        %v6982 = vsel %vm6376, %v6292, 0
        %6984 = vmatprep.subr.mxu0 0.0
        %6985 = vmatpush1.msra.mxu0 %v6360
        %6986 = vmatprep.subr.mxu0 0.0
        %6987 = vmatpush1.msra.mxu0 %v6361
        %6988 = vmatprep.subr.mxu0 0.0
        %6989 = vmatpush1.msra.mxu0 0.0
        %6990 = vmatprep.subr.mxu0 0.0
        %6991 = vmatpush1.msra.mxu0 0.0
        %6992 = vmatprep.subr.mxu0 0.0
        %6993 = vmatpush1.msra.mxu0 0.0
        %6994 = vmatprep.subr.mxu0 0.0
        %6995 = vmatpush1.msra.mxu0 0.0
        %6996 = vmatprep.subr.mxu0 0.0
        %6997 = vmatpush1.msra.mxu0 0.0
        %6998 = vmatprep.subr.mxu0 0.0
        %6999 = vmatpush1.msra.mxu0 0.0
        %7000 = vmatprep.subr.mxu0 0.0
        %7001 = vmatpush1.msra.mxu0 0.0
        %7002 = vmatprep.subr.mxu0 0.0
        %7003 = vmatpush1.msra.mxu0 0.0
        %7004 = vmatprep.subr.mxu0 0.0
        %7005 = vmatpush1.msra.mxu0 0.0
        %7006 = vmatprep.subr.mxu0 0.0
        %7007 = vmatpush1.msra.mxu0 0.0
        %7008 = vmatprep.subr.mxu0 0.0
        %7009 = vmatpush1.msra.mxu0 0.0
        %7010 = vmatprep.subr.mxu0 0.0
        %7011 = vmatpush1.msra.mxu0 0.0
        %7012 = vmatprep.subr.mxu0 0.0
        %7013 = vmatpush1.msra.mxu0 0.0
        %7014 = vmatprep.subr.mxu0 0.0
        %7015 = vmatpush1.msra.mxu0 0.0
        %7016 = vmatprep.subr.mxu0 0.0
        %7017 = vmatpush1.msra.mxu0 0.0
        %7018 = vmatprep.subr.mxu0 0.0
        %7019 = vmatpush1.msra.mxu0 0.0
        %7020 = vmatprep.subr.mxu0 0.0
        %7021 = vmatpush1.msra.mxu0 0.0
        %7022 = vmatprep.subr.mxu0 0.0
        %7023 = vmatpush1.msra.mxu0 0.0
        %7024 = vmatprep.subr.mxu0 0.0
        %7025 = vmatpush1.msra.mxu0 0.0
        %7026 = vmatprep.subr.mxu0 0.0
        %7027 = vmatpush1.msra.mxu0 0.0
        %7028 = vmatprep.subr.mxu0 0.0
        %7029 = vmatpush1.msra.mxu0 0.0
        %7030 = vmatprep.subr.mxu0 0.0
        %7031 = vmatpush1.msra.mxu0 0.0
        %7032 = vmatprep.subr.mxu0 0.0
        %7033 = vmatpush1.msra.mxu0 0.0
        %7034 = vmatprep.subr.mxu0 0.0
        %7035 = vmatpush1.msra.mxu0 0.0
        %7036 = vmatprep.subr.mxu0 0.0
        %7037 = vmatpush1.msra.mxu0 0.0
        %7038 = vmatprep.subr.mxu0 0.0
        %7039 = vmatpush1.msra.mxu0 0.0
        %7040 = vmatprep.subr.mxu0 0.0
        %7041 = vmatpush1.msra.mxu0 0.0
        %7042 = vmatprep.subr.mxu0 0.0
        %7043 = vmatpush1.msra.mxu0 0.0
        %7044 = vmatprep.subr.mxu0 0.0
        %7045 = vmatpush1.msra.mxu0 0.0
        %7046 = vmatprep.subr.mxu0 0.0
        %7047 = vmatpush1.msra.mxu0 0.0
        %7048 = vmatprep.mubr.f32.mxu0 0.0
        %7049 = vmatmul.mubr.f32.gmra.mrb[0].mxu0 %v6982
        %v7050 = vpop.f32.mrb[0].mxu0
        %v7051 = vadd.f32 0.0, %v7050
        %v7052 = vpop.f32.mrb[0].mxu0
        %7053 = vdwg.mxu0
        %v7055 = vsel %vm6376, %v6286, 0
        %7057 = vmatprep.subr.mxu0 0.0
        %7058 = vmatpush1.msra.mxu0 %v6352
        %7059 = vmatprep.subr.mxu0 0.0
        %7060 = vmatpush1.msra.mxu0 %v6353
        %7061 = vmatprep.subr.mxu0 0.0
        %7062 = vmatpush1.msra.mxu0 0.0
        %7063 = vmatprep.subr.mxu0 0.0
        %7064 = vmatpush1.msra.mxu0 0.0
        %7065 = vmatprep.subr.mxu0 0.0
        %7066 = vmatpush1.msra.mxu0 0.0
        %7067 = vmatprep.subr.mxu0 0.0
        %7068 = vmatpush1.msra.mxu0 0.0
        %7069 = vmatprep.subr.mxu0 0.0
        %7070 = vmatpush1.msra.mxu0 0.0
        %7071 = vmatprep.subr.mxu0 0.0
        %7072 = vmatpush1.msra.mxu0 0.0
        %7073 = vmatprep.subr.mxu0 0.0
        %7074 = vmatpush1.msra.mxu0 0.0
        %7075 = vmatprep.subr.mxu0 0.0
        %7076 = vmatpush1.msra.mxu0 0.0
        %7077 = vmatprep.subr.mxu0 0.0
        %7078 = vmatpush1.msra.mxu0 0.0
        %7079 = vmatprep.subr.mxu0 0.0
        %7080 = vmatpush1.msra.mxu0 0.0
        %7081 = vmatprep.subr.mxu0 0.0
        %7082 = vmatpush1.msra.mxu0 0.0
        %7083 = vmatprep.subr.mxu0 0.0
        %7084 = vmatpush1.msra.mxu0 0.0
        %7085 = vmatprep.subr.mxu0 0.0
        %7086 = vmatpush1.msra.mxu0 0.0
        %7087 = vmatprep.subr.mxu0 0.0
        %7088 = vmatpush1.msra.mxu0 0.0
        %7089 = vmatprep.subr.mxu0 0.0
        %7090 = vmatpush1.msra.mxu0 0.0
        %7091 = vmatprep.subr.mxu0 0.0
        %7092 = vmatpush1.msra.mxu0 0.0
        %7093 = vmatprep.subr.mxu0 0.0
        %7094 = vmatpush1.msra.mxu0 0.0
        %7095 = vmatprep.subr.mxu0 0.0
        %7096 = vmatpush1.msra.mxu0 0.0
        %7097 = vmatprep.subr.mxu0 0.0
        %7098 = vmatpush1.msra.mxu0 0.0
        %7099 = vmatprep.subr.mxu0 0.0
        %7100 = vmatpush1.msra.mxu0 0.0
        %7101 = vmatprep.subr.mxu0 0.0
        %7102 = vmatpush1.msra.mxu0 0.0
        %7103 = vmatprep.subr.mxu0 0.0
        %7104 = vmatpush1.msra.mxu0 0.0
        %7105 = vmatprep.subr.mxu0 0.0
        %7106 = vmatpush1.msra.mxu0 0.0
        %7107 = vmatprep.subr.mxu0 0.0
        %7108 = vmatpush1.msra.mxu0 0.0
        %7109 = vmatprep.subr.mxu0 0.0
        %7110 = vmatpush1.msra.mxu0 0.0
        %7111 = vmatprep.subr.mxu0 0.0
        %7112 = vmatpush1.msra.mxu0 0.0
        %7113 = vmatprep.subr.mxu0 0.0
        %7114 = vmatpush1.msra.mxu0 0.0
        %7115 = vmatprep.subr.mxu0 0.0
        %7116 = vmatpush1.msra.mxu0 0.0
        %7117 = vmatprep.subr.mxu0 0.0
        %7118 = vmatpush1.msra.mxu0 0.0
        %7119 = vmatprep.subr.mxu0 0.0
        %7120 = vmatpush1.msra.mxu0 0.0
        %7121 = vmatprep.mubr.f32.mxu0 0.0
        %7122 = vmatmul.mubr.f32.gmra.mrb[0].mxu0 %v7055
        %v7123 = vpop.f32.mrb[0].mxu0
        %v7124 = vadd.f32 %v7051, %v7123
        %v7125 = vpop.f32.mrb[0].mxu0
        %7126 = vdwg.mxu0
        %7127 = vmatprep.subr.mxu0 0.0
        %7128 = vmatpush1.msra.mxu0 %v7124
        %7129 = vmatprep.subr.mxu0 0.0
        %7130 = vmatpush1.msra.mxu0 0.0
        %7131 = vmatprep.subr.mxu0 0.0
        %7132 = vmatpush1.msra.mxu0 0.0
        %7133 = vmatprep.subr.mxu0 0.0
        %7134 = vmatpush1.msra.mxu0 0.0
        %7135 = vmatprep.subr.mxu0 0.0
        %7136 = vmatpush1.msra.mxu0 0.0
        %7137 = vmatprep.subr.mxu0 0.0
        %7138 = vmatpush1.msra.mxu0 0.0
        %7139 = vmatprep.subr.mxu0 0.0
        %7140 = vmatpush1.msra.mxu0 0.0
        %7141 = vmatprep.subr.mxu0 0.0
        %7142 = vmatpush1.msra.mxu0 0.0
        %7143 = vmatprep.subr.mxu0 0.0
        %7144 = vmatpush1.msra.mxu0 0.0
        %7145 = vmatprep.subr.mxu0 0.0
        %7146 = vmatpush1.msra.mxu0 0.0
        %7147 = vmatprep.subr.mxu0 0.0
        %7148 = vmatpush1.msra.mxu0 0.0
        %7149 = vmatprep.subr.mxu0 0.0
        %7150 = vmatpush1.msra.mxu0 0.0
        %7151 = vmatprep.subr.mxu0 0.0
        %7152 = vmatpush1.msra.mxu0 0.0
        %7153 = vmatprep.subr.mxu0 0.0
        %7154 = vmatpush1.msra.mxu0 0.0
        %7155 = vmatprep.subr.mxu0 0.0
        %7156 = vmatpush1.msra.mxu0 0.0
        %7157 = vmatprep.subr.mxu0 0.0
        %7158 = vmatpush1.msra.mxu0 0.0
        %7159 = vmatprep.subr.mxu0 0.0
        %7160 = vmatpush1.msra.mxu0 0.0
        %7161 = vmatprep.subr.mxu0 0.0
        %7162 = vmatpush1.msra.mxu0 0.0
        %7163 = vmatprep.subr.mxu0 0.0
        %7164 = vmatpush1.msra.mxu0 0.0
        %7165 = vmatprep.subr.mxu0 0.0
        %7166 = vmatpush1.msra.mxu0 0.0
        %7167 = vmatprep.subr.mxu0 0.0
        %7168 = vmatpush1.msra.mxu0 0.0
        %7169 = vmatprep.subr.mxu0 0.0
        %7170 = vmatpush1.msra.mxu0 0.0
        %7171 = vmatprep.subr.mxu0 0.0
        %7172 = vmatpush1.msra.mxu0 0.0
        %7173 = vmatprep.subr.mxu0 0.0
        %7174 = vmatpush1.msra.mxu0 0.0
        %7175 = vmatprep.subr.mxu0 0.0
        %7176 = vmatpush1.msra.mxu0 0.0
        %7177 = vmatprep.subr.mxu0 0.0
        %7178 = vmatpush1.msra.mxu0 0.0
        %7179 = vmatprep.subr.mxu0 0.0
        %7180 = vmatpush1.msra.mxu0 0.0
        %7181 = vmatprep.subr.mxu0 0.0
        %7182 = vmatpush1.msra.mxu0 0.0
        %7183 = vmatprep.subr.mxu0 0.0
        %7184 = vmatpush1.msra.mxu0 0.0
        %7185 = vmatprep.subr.mxu0 0.0
        %7186 = vmatpush1.msra.mxu0 0.0
        %7187 = vmatprep.subr.mxu0 0.0
        %7188 = vmatpush1.msra.mxu0 0.0
        %7189 = vmatprep.subr.mxu0 0.0
        %7190 = vmatpush1.msra.mxu0 0.0
        %7191 = vmatprep.mubr.f32.mxu0 0.0
        %7192 = vmatmul.mubr.f32.gmra.mrb[0].mxu0 %v6671
        %v7193 = vpop.f32.mrb[0].mxu0
        %v7194 = vadd.f32 0.0, %v7193
        %v7195 = vpop.f32.mrb[0].mxu0
        %7196 = vmatprep.mubr.f32.mxu0 0.0
        %7197 = vmatmul.mubr.f32.gmra.mrb[0].mxu0 %v6674
        %v7198 = vpop.f32.mrb[0].mxu0
        %v7199 = vadd.f32 0.0, %v7198
        %v7200 = vpop.f32.mrb[0].mxu0
        %7201 = vdwg.mxu0
        %7202 = vmatprep.subr.mxu0 0.0
        %7203 = vmatpush1.msra.mxu0 %v6978
        %7204 = vmatprep.subr.mxu0 0.0
        %7205 = vmatpush1.msra.mxu0 0.0
        %7206 = vmatprep.subr.mxu0 0.0
        %7207 = vmatpush1.msra.mxu0 0.0
        %7208 = vmatprep.subr.mxu0 0.0
        %7209 = vmatpush1.msra.mxu0 0.0
        %7210 = vmatprep.subr.mxu0 0.0
        %7211 = vmatpush1.msra.mxu0 0.0
        %7212 = vmatprep.subr.mxu0 0.0
        %7213 = vmatpush1.msra.mxu0 0.0
        %7214 = vmatprep.subr.mxu0 0.0
        %7215 = vmatpush1.msra.mxu0 0.0
        %7216 = vmatprep.subr.mxu0 0.0
        %7217 = vmatpush1.msra.mxu0 0.0
        %7218 = vmatprep.subr.mxu0 0.0
        %7219 = vmatpush1.msra.mxu0 0.0
        %7220 = vmatprep.subr.mxu0 0.0
        %7221 = vmatpush1.msra.mxu0 0.0
        %7222 = vmatprep.subr.mxu0 0.0
        %7223 = vmatpush1.msra.mxu0 0.0
        %7224 = vmatprep.subr.mxu0 0.0
        %7225 = vmatpush1.msra.mxu0 0.0
        %7226 = vmatprep.subr.mxu0 0.0
        %7227 = vmatpush1.msra.mxu0 0.0
        %7228 = vmatprep.subr.mxu0 0.0
        %7229 = vmatpush1.msra.mxu0 0.0
        %7230 = vmatprep.subr.mxu0 0.0
        %7231 = vmatpush1.msra.mxu0 0.0
        %7232 = vmatprep.subr.mxu0 0.0
        %7233 = vmatpush1.msra.mxu0 0.0
        %7234 = vmatprep.subr.mxu0 0.0
        %7235 = vmatpush1.msra.mxu0 0.0
        %7236 = vmatprep.subr.mxu0 0.0
        %7237 = vmatpush1.msra.mxu0 0.0
        %7238 = vmatprep.subr.mxu0 0.0
        %7239 = vmatpush1.msra.mxu0 0.0
        %7240 = vmatprep.subr.mxu0 0.0
        %7241 = vmatpush1.msra.mxu0 0.0
        %7242 = vmatprep.subr.mxu0 0.0
        %7243 = vmatpush1.msra.mxu0 0.0
        %7244 = vmatprep.subr.mxu0 0.0
        %7245 = vmatpush1.msra.mxu0 0.0
        %7246 = vmatprep.subr.mxu0 0.0
        %7247 = vmatpush1.msra.mxu0 0.0
        %7248 = vmatprep.subr.mxu0 0.0
        %7249 = vmatpush1.msra.mxu0 0.0
        %7250 = vmatprep.subr.mxu0 0.0
        %7251 = vmatpush1.msra.mxu0 0.0
        %7252 = vmatprep.subr.mxu0 0.0
        %7253 = vmatpush1.msra.mxu0 0.0
        %7254 = vmatprep.subr.mxu0 0.0
        %7255 = vmatpush1.msra.mxu0 0.0
        %7256 = vmatprep.subr.mxu0 0.0
        %7257 = vmatpush1.msra.mxu0 0.0
        %7258 = vmatprep.subr.mxu0 0.0
        %7259 = vmatpush1.msra.mxu0 0.0
        %7260 = vmatprep.subr.mxu0 0.0
        %7261 = vmatpush1.msra.mxu0 0.0
        %7262 = vmatprep.subr.mxu0 0.0
        %7263 = vmatpush1.msra.mxu0 0.0
        %7264 = vmatprep.subr.mxu0 0.0
        %7265 = vmatpush1.msra.mxu0 0.0
        %7266 = vmatprep.mubr.f32.mxu0 0.0
        %7267 = vmatmul.mubr.f32.gmra.mrb[0].mxu0 %v6752
        %v7268 = vpop.f32.mrb[0].mxu0
        %v7269 = vadd.f32 %v7194, %v7268
        %v7270 = vpop.f32.mrb[0].mxu0
        %7271 = vmatprep.mubr.f32.mxu0 0.0
        %7272 = vmatmul.mubr.f32.gmra.mrb[0].mxu0 %v6755
        %v7273 = vpop.f32.mrb[0].mxu0
        %v7274 = vadd.f32 %v7199, %v7273
        %v7275 = vpop.f32.mrb[0].mxu0
        %7276 = vdwg.mxu0
        %s7277 = scalar_lea.vmem %s204, 16 [#allocation7]
        %7278 = vst.msk [vmem:[%s7277] sm:$0xff] %vm6832, %v7269
        %7279 = vst.msk [vmem:[%s7277 + $0x8] sm:$0xff] %vm6832, %v7274
        %v7281 = vsel %vm6376, %v6304, 0
        %7283 = vmatprep.subr.mxu0 0.0
        %7284 = vmatpush1.msra.mxu0 %v6360
        %7285 = vmatprep.subr.mxu0 0.0
        %7286 = vmatpush1.msra.mxu0 %v6361
        %7287 = vmatprep.subr.mxu0 0.0
        %7288 = vmatpush1.msra.mxu0 0.0
        %7289 = vmatprep.subr.mxu0 0.0
        %7290 = vmatpush1.msra.mxu0 0.0
        %7291 = vmatprep.subr.mxu0 0.0
        %7292 = vmatpush1.msra.mxu0 0.0
        %7293 = vmatprep.subr.mxu0 0.0
        %7294 = vmatpush1.msra.mxu0 0.0
        %7295 = vmatprep.subr.mxu0 0.0
        %7296 = vmatpush1.msra.mxu0 0.0
        %7297 = vmatprep.subr.mxu0 0.0
        %7298 = vmatpush1.msra.mxu0 0.0
        %7299 = vmatprep.subr.mxu0 0.0
        %7300 = vmatpush1.msra.mxu0 0.0
        %7301 = vmatprep.subr.mxu0 0.0
        %7302 = vmatpush1.msra.mxu0 0.0
        %7303 = vmatprep.subr.mxu0 0.0
        %7304 = vmatpush1.msra.mxu0 0.0
        %7305 = vmatprep.subr.mxu0 0.0
        %7306 = vmatpush1.msra.mxu0 0.0
        %7307 = vmatprep.subr.mxu0 0.0
        %7308 = vmatpush1.msra.mxu0 0.0
        %7309 = vmatprep.subr.mxu0 0.0
        %7310 = vmatpush1.msra.mxu0 0.0
        %7311 = vmatprep.subr.mxu0 0.0
        %7312 = vmatpush1.msra.mxu0 0.0
        %7313 = vmatprep.subr.mxu0 0.0
        %7314 = vmatpush1.msra.mxu0 0.0
        %7315 = vmatprep.subr.mxu0 0.0
        %7316 = vmatpush1.msra.mxu0 0.0
        %7317 = vmatprep.subr.mxu0 0.0
        %7318 = vmatpush1.msra.mxu0 0.0
        %7319 = vmatprep.subr.mxu0 0.0
        %7320 = vmatpush1.msra.mxu0 0.0
        %7321 = vmatprep.subr.mxu0 0.0
        %7322 = vmatpush1.msra.mxu0 0.0
        %7323 = vmatprep.subr.mxu0 0.0
        %7324 = vmatpush1.msra.mxu0 0.0
        %7325 = vmatprep.subr.mxu0 0.0
        %7326 = vmatpush1.msra.mxu0 0.0
        %7327 = vmatprep.subr.mxu0 0.0
        %7328 = vmatpush1.msra.mxu0 0.0
        %7329 = vmatprep.subr.mxu0 0.0
        %7330 = vmatpush1.msra.mxu0 0.0
        %7331 = vmatprep.subr.mxu0 0.0
        %7332 = vmatpush1.msra.mxu0 0.0
        %7333 = vmatprep.subr.mxu0 0.0
        %7334 = vmatpush1.msra.mxu0 0.0
        %7335 = vmatprep.subr.mxu0 0.0
        %7336 = vmatpush1.msra.mxu0 0.0
        %7337 = vmatprep.subr.mxu0 0.0
        %7338 = vmatpush1.msra.mxu0 0.0
        %7339 = vmatprep.subr.mxu0 0.0
        %7340 = vmatpush1.msra.mxu0 0.0
        %7341 = vmatprep.subr.mxu0 0.0
        %7342 = vmatpush1.msra.mxu0 0.0
        %7343 = vmatprep.subr.mxu0 0.0
        %7344 = vmatpush1.msra.mxu0 0.0
        %7345 = vmatprep.subr.mxu0 0.0
        %7346 = vmatpush1.msra.mxu0 0.0
        %7347 = vmatprep.mubr.f32.mxu0 0.0
        %7348 = vmatmul.mubr.f32.gmra.mrb[0].mxu0 %v7281
        %v7349 = vpop.f32.mrb[0].mxu0
        %v7350 = vadd.f32 0.0, %v7349
        %v7351 = vpop.f32.mrb[0].mxu0
        %7352 = vdwg.mxu0
        %v7354 = vsel %vm6376, %v6298, 0
        %7356 = vmatprep.subr.mxu0 0.0
        %7357 = vmatpush1.msra.mxu0 %v6352
        %7358 = vmatprep.subr.mxu0 0.0
        %7359 = vmatpush1.msra.mxu0 %v6353
        %7360 = vmatprep.subr.mxu0 0.0
        %7361 = vmatpush1.msra.mxu0 0.0
        %7362 = vmatprep.subr.mxu0 0.0
        %7363 = vmatpush1.msra.mxu0 0.0
        %7364 = vmatprep.subr.mxu0 0.0
        %7365 = vmatpush1.msra.mxu0 0.0
        %7366 = vmatprep.subr.mxu0 0.0
        %7367 = vmatpush1.msra.mxu0 0.0
        %7368 = vmatprep.subr.mxu0 0.0
        %7369 = vmatpush1.msra.mxu0 0.0
        %7370 = vmatprep.subr.mxu0 0.0
        %7371 = vmatpush1.msra.mxu0 0.0
        %7372 = vmatprep.subr.mxu0 0.0
        %7373 = vmatpush1.msra.mxu0 0.0
        %7374 = vmatprep.subr.mxu0 0.0
        %7375 = vmatpush1.msra.mxu0 0.0
        %7376 = vmatprep.subr.mxu0 0.0
        %7377 = vmatpush1.msra.mxu0 0.0
        %7378 = vmatprep.subr.mxu0 0.0
        %7379 = vmatpush1.msra.mxu0 0.0
        %7380 = vmatprep.subr.mxu0 0.0
        %7381 = vmatpush1.msra.mxu0 0.0
        %7382 = vmatprep.subr.mxu0 0.0
        %7383 = vmatpush1.msra.mxu0 0.0
        %7384 = vmatprep.subr.mxu0 0.0
        %7385 = vmatpush1.msra.mxu0 0.0
        %7386 = vmatprep.subr.mxu0 0.0
        %7387 = vmatpush1.msra.mxu0 0.0
        %7388 = vmatprep.subr.mxu0 0.0
        %7389 = vmatpush1.msra.mxu0 0.0
        %7390 = vmatprep.subr.mxu0 0.0
        %7391 = vmatpush1.msra.mxu0 0.0
        %7392 = vmatprep.subr.mxu0 0.0
        %7393 = vmatpush1.msra.mxu0 0.0
        %7394 = vmatprep.subr.mxu0 0.0
        %7395 = vmatpush1.msra.mxu0 0.0
        %7396 = vmatprep.subr.mxu0 0.0
        %7397 = vmatpush1.msra.mxu0 0.0
        %7398 = vmatprep.subr.mxu0 0.0
        %7399 = vmatpush1.msra.mxu0 0.0
        %7400 = vmatprep.subr.mxu0 0.0
        %7401 = vmatpush1.msra.mxu0 0.0
        %7402 = vmatprep.subr.mxu0 0.0
        %7403 = vmatpush1.msra.mxu0 0.0
        %7404 = vmatprep.subr.mxu0 0.0
        %7405 = vmatpush1.msra.mxu0 0.0
        %7406 = vmatprep.subr.mxu0 0.0
        %7407 = vmatpush1.msra.mxu0 0.0
        %7408 = vmatprep.subr.mxu0 0.0
        %7409 = vmatpush1.msra.mxu0 0.0
        %7410 = vmatprep.subr.mxu0 0.0
        %7411 = vmatpush1.msra.mxu0 0.0
        %7412 = vmatprep.subr.mxu0 0.0
        %7413 = vmatpush1.msra.mxu0 0.0
        %7414 = vmatprep.subr.mxu0 0.0
        %7415 = vmatpush1.msra.mxu0 0.0
        %7416 = vmatprep.subr.mxu0 0.0
        %7417 = vmatpush1.msra.mxu0 0.0
        %7418 = vmatprep.subr.mxu0 0.0
        %7419 = vmatpush1.msra.mxu0 0.0
        %7420 = vmatprep.mubr.f32.mxu0 0.0
        %7421 = vmatmul.mubr.f32.gmra.mrb[0].mxu0 %v7354
        %v7422 = vpop.f32.mrb[0].mxu0
        %v7423 = vadd.f32 %v7350, %v7422
        %v7424 = vpop.f32.mrb[0].mxu0
        %7425 = vdwg.mxu0
        %v7427 = vsel %vm6376, %v6316, 0
        %7429 = vmatprep.subr.mxu0 0.0
        %7430 = vmatpush1.msra.mxu0 %v6360
        %7431 = vmatprep.subr.mxu0 0.0
        %7432 = vmatpush1.msra.mxu0 %v6361
        %7433 = vmatprep.subr.mxu0 0.0
        %7434 = vmatpush1.msra.mxu0 0.0
        %7435 = vmatprep.subr.mxu0 0.0
        %7436 = vmatpush1.msra.mxu0 0.0
        %7437 = vmatprep.subr.mxu0 0.0
        %7438 = vmatpush1.msra.mxu0 0.0
        %7439 = vmatprep.subr.mxu0 0.0
        %7440 = vmatpush1.msra.mxu0 0.0
        %7441 = vmatprep.subr.mxu0 0.0
        %7442 = vmatpush1.msra.mxu0 0.0
        %7443 = vmatprep.subr.mxu0 0.0
        %7444 = vmatpush1.msra.mxu0 0.0
        %7445 = vmatprep.subr.mxu0 0.0
        %7446 = vmatpush1.msra.mxu0 0.0
        %7447 = vmatprep.subr.mxu0 0.0
        %7448 = vmatpush1.msra.mxu0 0.0
        %7449 = vmatprep.subr.mxu0 0.0
        %7450 = vmatpush1.msra.mxu0 0.0
        %7451 = vmatprep.subr.mxu0 0.0
        %7452 = vmatpush1.msra.mxu0 0.0
        %7453 = vmatprep.subr.mxu0 0.0
        %7454 = vmatpush1.msra.mxu0 0.0
        %7455 = vmatprep.subr.mxu0 0.0
        %7456 = vmatpush1.msra.mxu0 0.0
        %7457 = vmatprep.subr.mxu0 0.0
        %7458 = vmatpush1.msra.mxu0 0.0
        %7459 = vmatprep.subr.mxu0 0.0
        %7460 = vmatpush1.msra.mxu0 0.0
        %7461 = vmatprep.subr.mxu0 0.0
        %7462 = vmatpush1.msra.mxu0 0.0
        %7463 = vmatprep.subr.mxu0 0.0
        %7464 = vmatpush1.msra.mxu0 0.0
        %7465 = vmatprep.subr.mxu0 0.0
        %7466 = vmatpush1.msra.mxu0 0.0
        %7467 = vmatprep.subr.mxu0 0.0
        %7468 = vmatpush1.msra.mxu0 0.0
        %7469 = vmatprep.subr.mxu0 0.0
        %7470 = vmatpush1.msra.mxu0 0.0
        %7471 = vmatprep.subr.mxu0 0.0
        %7472 = vmatpush1.msra.mxu0 0.0
        %7473 = vmatprep.subr.mxu0 0.0
        %7474 = vmatpush1.msra.mxu0 0.0
        %7475 = vmatprep.subr.mxu0 0.0
        %7476 = vmatpush1.msra.mxu0 0.0
        %7477 = vmatprep.subr.mxu0 0.0
        %7478 = vmatpush1.msra.mxu0 0.0
        %7479 = vmatprep.subr.mxu0 0.0
        %7480 = vmatpush1.msra.mxu0 0.0
        %7481 = vmatprep.subr.mxu0 0.0
        %7482 = vmatpush1.msra.mxu0 0.0
        %7483 = vmatprep.subr.mxu0 0.0
        %7484 = vmatpush1.msra.mxu0 0.0
        %7485 = vmatprep.subr.mxu0 0.0
        %7486 = vmatpush1.msra.mxu0 0.0
        %7487 = vmatprep.subr.mxu0 0.0
        %7488 = vmatpush1.msra.mxu0 0.0
        %7489 = vmatprep.subr.mxu0 0.0
        %7490 = vmatpush1.msra.mxu0 0.0
        %7491 = vmatprep.subr.mxu0 0.0
        %7492 = vmatpush1.msra.mxu0 0.0
        %7493 = vmatprep.mubr.f32.mxu0 0.0
        %7494 = vmatmul.mubr.f32.gmra.mrb[0].mxu0 %v7427
        %v7495 = vpop.f32.mrb[0].mxu0
        %v7496 = vadd.f32 0.0, %v7495
        %v7497 = vpop.f32.mrb[0].mxu0
        %7498 = vdwg.mxu0
        %v7500 = vsel %vm6376, %v6310, 0
        %7502 = vmatprep.subr.mxu0 0.0
        %7503 = vmatpush1.msra.mxu0 %v6352
        %7504 = vmatprep.subr.mxu0 0.0
        %7505 = vmatpush1.msra.mxu0 %v6353
        %7506 = vmatprep.subr.mxu0 0.0
        %7507 = vmatpush1.msra.mxu0 0.0
        %7508 = vmatprep.subr.mxu0 0.0
        %7509 = vmatpush1.msra.mxu0 0.0
        %7510 = vmatprep.subr.mxu0 0.0
        %7511 = vmatpush1.msra.mxu0 0.0
        %7512 = vmatprep.subr.mxu0 0.0
        %7513 = vmatpush1.msra.mxu0 0.0
        %7514 = vmatprep.subr.mxu0 0.0
        %7515 = vmatpush1.msra.mxu0 0.0
        %7516 = vmatprep.subr.mxu0 0.0
        %7517 = vmatpush1.msra.mxu0 0.0
        %7518 = vmatprep.subr.mxu0 0.0
        %7519 = vmatpush1.msra.mxu0 0.0
        %7520 = vmatprep.subr.mxu0 0.0
        %7521 = vmatpush1.msra.mxu0 0.0
        %7522 = vmatprep.subr.mxu0 0.0
        %7523 = vmatpush1.msra.mxu0 0.0
        %7524 = vmatprep.subr.mxu0 0.0
        %7525 = vmatpush1.msra.mxu0 0.0
        %7526 = vmatprep.subr.mxu0 0.0
        %7527 = vmatpush1.msra.mxu0 0.0
        %7528 = vmatprep.subr.mxu0 0.0
        %7529 = vmatpush1.msra.mxu0 0.0
        %7530 = vmatprep.subr.mxu0 0.0
        %7531 = vmatpush1.msra.mxu0 0.0
        %7532 = vmatprep.subr.mxu0 0.0
        %7533 = vmatpush1.msra.mxu0 0.0
        %7534 = vmatprep.subr.mxu0 0.0
        %7535 = vmatpush1.msra.mxu0 0.0
        %7536 = vmatprep.subr.mxu0 0.0
        %7537 = vmatpush1.msra.mxu0 0.0
        %7538 = vmatprep.subr.mxu0 0.0
        %7539 = vmatpush1.msra.mxu0 0.0
        %7540 = vmatprep.subr.mxu0 0.0
        %7541 = vmatpush1.msra.mxu0 0.0
        %7542 = vmatprep.subr.mxu0 0.0
        %7543 = vmatpush1.msra.mxu0 0.0
        %7544 = vmatprep.subr.mxu0 0.0
        %7545 = vmatpush1.msra.mxu0 0.0
        %7546 = vmatprep.subr.mxu0 0.0
        %7547 = vmatpush1.msra.mxu0 0.0
        %7548 = vmatprep.subr.mxu0 0.0
        %7549 = vmatpush1.msra.mxu0 0.0
        %7550 = vmatprep.subr.mxu0 0.0
        %7551 = vmatpush1.msra.mxu0 0.0
        %7552 = vmatprep.subr.mxu0 0.0
        %7553 = vmatpush1.msra.mxu0 0.0
        %7554 = vmatprep.subr.mxu0 0.0
        %7555 = vmatpush1.msra.mxu0 0.0
        %7556 = vmatprep.subr.mxu0 0.0
        %7557 = vmatpush1.msra.mxu0 0.0
        %7558 = vmatprep.subr.mxu0 0.0
        %7559 = vmatpush1.msra.mxu0 0.0
        %7560 = vmatprep.subr.mxu0 0.0
        %7561 = vmatpush1.msra.mxu0 0.0
        %7562 = vmatprep.subr.mxu0 0.0
        %7563 = vmatpush1.msra.mxu0 0.0
        %7564 = vmatprep.subr.mxu0 0.0
        %7565 = vmatpush1.msra.mxu0 0.0
        %7566 = vmatprep.mubr.f32.mxu0 0.0
        %7567 = vmatmul.mubr.f32.gmra.mrb[0].mxu0 %v7500
        %v7568 = vpop.f32.mrb[0].mxu0
        %v7569 = vadd.f32 %v7496, %v7568
        %v7570 = vpop.f32.mrb[0].mxu0
        %7571 = vdwg.mxu0
        %7572 = vmatprep.subr.mxu0 0.0
        %7573 = vmatpush1.msra.mxu0 %v7569
        %7574 = vmatprep.subr.mxu0 0.0
        %7575 = vmatpush1.msra.mxu0 0.0
        %7576 = vmatprep.subr.mxu0 0.0
        %7577 = vmatpush1.msra.mxu0 0.0
        %7578 = vmatprep.subr.mxu0 0.0
        %7579 = vmatpush1.msra.mxu0 0.0
        %7580 = vmatprep.subr.mxu0 0.0
        %7581 = vmatpush1.msra.mxu0 0.0
        %7582 = vmatprep.subr.mxu0 0.0
        %7583 = vmatpush1.msra.mxu0 0.0
        %7584 = vmatprep.subr.mxu0 0.0
        %7585 = vmatpush1.msra.mxu0 0.0
        %7586 = vmatprep.subr.mxu0 0.0
        %7587 = vmatpush1.msra.mxu0 0.0
        %7588 = vmatprep.subr.mxu0 0.0
        %7589 = vmatpush1.msra.mxu0 0.0
        %7590 = vmatprep.subr.mxu0 0.0
        %7591 = vmatpush1.msra.mxu0 0.0
        %7592 = vmatprep.subr.mxu0 0.0
        %7593 = vmatpush1.msra.mxu0 0.0
        %7594 = vmatprep.subr.mxu0 0.0
        %7595 = vmatpush1.msra.mxu0 0.0
        %7596 = vmatprep.subr.mxu0 0.0
        %7597 = vmatpush1.msra.mxu0 0.0
        %7598 = vmatprep.subr.mxu0 0.0
        %7599 = vmatpush1.msra.mxu0 0.0
        %7600 = vmatprep.subr.mxu0 0.0
        %7601 = vmatpush1.msra.mxu0 0.0
        %7602 = vmatprep.subr.mxu0 0.0
        %7603 = vmatpush1.msra.mxu0 0.0
        %7604 = vmatprep.subr.mxu0 0.0
        %7605 = vmatpush1.msra.mxu0 0.0
        %7606 = vmatprep.subr.mxu0 0.0
        %7607 = vmatpush1.msra.mxu0 0.0
        %7608 = vmatprep.subr.mxu0 0.0
        %7609 = vmatpush1.msra.mxu0 0.0
        %7610 = vmatprep.subr.mxu0 0.0
        %7611 = vmatpush1.msra.mxu0 0.0
        %7612 = vmatprep.subr.mxu0 0.0
        %7613 = vmatpush1.msra.mxu0 0.0
        %7614 = vmatprep.subr.mxu0 0.0
        %7615 = vmatpush1.msra.mxu0 0.0
        %7616 = vmatprep.subr.mxu0 0.0
        %7617 = vmatpush1.msra.mxu0 0.0
        %7618 = vmatprep.subr.mxu0 0.0
        %7619 = vmatpush1.msra.mxu0 0.0
        %7620 = vmatprep.subr.mxu0 0.0
        %7621 = vmatpush1.msra.mxu0 0.0
        %7622 = vmatprep.subr.mxu0 0.0
        %7623 = vmatpush1.msra.mxu0 0.0
        %7624 = vmatprep.subr.mxu0 0.0
        %7625 = vmatpush1.msra.mxu0 0.0
        %7626 = vmatprep.subr.mxu0 0.0
        %7627 = vmatpush1.msra.mxu0 0.0
        %7628 = vmatprep.subr.mxu0 0.0
        %7629 = vmatpush1.msra.mxu0 0.0
        %7630 = vmatprep.subr.mxu0 0.0
        %7631 = vmatpush1.msra.mxu0 0.0
        %7632 = vmatprep.subr.mxu0 0.0
        %7633 = vmatpush1.msra.mxu0 0.0
        %7634 = vmatprep.subr.mxu0 0.0
        %7635 = vmatpush1.msra.mxu0 0.0
        %7636 = vmatprep.mubr.f32.mxu0 0.0
        %7637 = vmatmul.mubr.f32.gmra.mrb[0].mxu0 %v6671
        %v7638 = vpop.f32.mrb[0].mxu0
        %v7639 = vadd.f32 0.0, %v7638
        %v7640 = vpop.f32.mrb[0].mxu0
        %7641 = vmatprep.mubr.f32.mxu0 0.0
        %7642 = vmatmul.mubr.f32.gmra.mrb[0].mxu0 %v6674
        %v7643 = vpop.f32.mrb[0].mxu0
        %v7644 = vadd.f32 0.0, %v7643
        %v7645 = vpop.f32.mrb[0].mxu0
        %7646 = vdwg.mxu0
        %7647 = vmatprep.subr.mxu0 0.0
        %7648 = vmatpush1.msra.mxu0 %v7423
        %7649 = vmatprep.subr.mxu0 0.0
        %7650 = vmatpush1.msra.mxu0 0.0
        %7651 = vmatprep.subr.mxu0 0.0
        %7652 = vmatpush1.msra.mxu0 0.0
        %7653 = vmatprep.subr.mxu0 0.0
        %7654 = vmatpush1.msra.mxu0 0.0
        %7655 = vmatprep.subr.mxu0 0.0
        %7656 = vmatpush1.msra.mxu0 0.0
        %7657 = vmatprep.subr.mxu0 0.0
        %7658 = vmatpush1.msra.mxu0 0.0
        %7659 = vmatprep.subr.mxu0 0.0
        %7660 = vmatpush1.msra.mxu0 0.0
        %7661 = vmatprep.subr.mxu0 0.0
        %7662 = vmatpush1.msra.mxu0 0.0
        %7663 = vmatprep.subr.mxu0 0.0
        %7664 = vmatpush1.msra.mxu0 0.0
        %7665 = vmatprep.subr.mxu0 0.0
        %7666 = vmatpush1.msra.mxu0 0.0
        %7667 = vmatprep.subr.mxu0 0.0
        %7668 = vmatpush1.msra.mxu0 0.0
        %7669 = vmatprep.subr.mxu0 0.0
        %7670 = vmatpush1.msra.mxu0 0.0
        %7671 = vmatprep.subr.mxu0 0.0
        %7672 = vmatpush1.msra.mxu0 0.0
        %7673 = vmatprep.subr.mxu0 0.0
        %7674 = vmatpush1.msra.mxu0 0.0
        %7675 = vmatprep.subr.mxu0 0.0
        %7676 = vmatpush1.msra.mxu0 0.0
        %7677 = vmatprep.subr.mxu0 0.0
        %7678 = vmatpush1.msra.mxu0 0.0
        %7679 = vmatprep.subr.mxu0 0.0
        %7680 = vmatpush1.msra.mxu0 0.0
        %7681 = vmatprep.subr.mxu0 0.0
        %7682 = vmatpush1.msra.mxu0 0.0
        %7683 = vmatprep.subr.mxu0 0.0
        %7684 = vmatpush1.msra.mxu0 0.0
        %7685 = vmatprep.subr.mxu0 0.0
        %7686 = vmatpush1.msra.mxu0 0.0
        %7687 = vmatprep.subr.mxu0 0.0
        %7688 = vmatpush1.msra.mxu0 0.0
        %7689 = vmatprep.subr.mxu0 0.0
        %7690 = vmatpush1.msra.mxu0 0.0
        %7691 = vmatprep.subr.mxu0 0.0
        %7692 = vmatpush1.msra.mxu0 0.0
        %7693 = vmatprep.subr.mxu0 0.0
        %7694 = vmatpush1.msra.mxu0 0.0
        %7695 = vmatprep.subr.mxu0 0.0
        %7696 = vmatpush1.msra.mxu0 0.0
        %7697 = vmatprep.subr.mxu0 0.0
        %7698 = vmatpush1.msra.mxu0 0.0
        %7699 = vmatprep.subr.mxu0 0.0
        %7700 = vmatpush1.msra.mxu0 0.0
        %7701 = vmatprep.subr.mxu0 0.0
        %7702 = vmatpush1.msra.mxu0 0.0
        %7703 = vmatprep.subr.mxu0 0.0
        %7704 = vmatpush1.msra.mxu0 0.0
        %7705 = vmatprep.subr.mxu0 0.0
        %7706 = vmatpush1.msra.mxu0 0.0
        %7707 = vmatprep.subr.mxu0 0.0
        %7708 = vmatpush1.msra.mxu0 0.0
        %7709 = vmatprep.subr.mxu0 0.0
        %7710 = vmatpush1.msra.mxu0 0.0
        %7711 = vmatprep.mubr.f32.mxu0 0.0
        %7712 = vmatmul.mubr.f32.gmra.mrb[0].mxu0 %v6752
        %v7713 = vpop.f32.mrb[0].mxu0
        %v7714 = vadd.f32 %v7639, %v7713
        %v7715 = vpop.f32.mrb[0].mxu0
        %7716 = vmatprep.mubr.f32.mxu0 0.0
        %7717 = vmatmul.mubr.f32.gmra.mrb[0].mxu0 %v6755
        %v7718 = vpop.f32.mrb[0].mxu0
        %v7719 = vadd.f32 %v7644, %v7718
        %v7720 = vpop.f32.mrb[0].mxu0
        %7721 = vdwg.mxu0
        %s7722 = scalar_lea.vmem %s204, 32 [#allocation7]
        %7723 = vst.msk [vmem:[%s7722] sm:$0xff] %vm6832, %v7714
        %7724 = vst.msk [vmem:[%s7722 + $0x8] sm:$0xff] %vm6832, %v7719
        %v7726 = vsel %vm6376, %v6328, 0
        %7728 = vmatprep.subr.mxu0 0.0
        %7729 = vmatpush1.msra.mxu0 %v6360
        %7730 = vmatprep.subr.mxu0 0.0
        %7731 = vmatpush1.msra.mxu0 %v6361
        %7732 = vmatprep.subr.mxu0 0.0
        %7733 = vmatpush1.msra.mxu0 0.0
        %7734 = vmatprep.subr.mxu0 0.0
        %7735 = vmatpush1.msra.mxu0 0.0
        %7736 = vmatprep.subr.mxu0 0.0
        %7737 = vmatpush1.msra.mxu0 0.0
        %7738 = vmatprep.subr.mxu0 0.0
        %7739 = vmatpush1.msra.mxu0 0.0
        %7740 = vmatprep.subr.mxu0 0.0
        %7741 = vmatpush1.msra.mxu0 0.0
        %7742 = vmatprep.subr.mxu0 0.0
        %7743 = vmatpush1.msra.mxu0 0.0
        %7744 = vmatprep.subr.mxu0 0.0
        %7745 = vmatpush1.msra.mxu0 0.0
        %7746 = vmatprep.subr.mxu0 0.0
        %7747 = vmatpush1.msra.mxu0 0.0
        %7748 = vmatprep.subr.mxu0 0.0
        %7749 = vmatpush1.msra.mxu0 0.0
        %7750 = vmatprep.subr.mxu0 0.0
        %7751 = vmatpush1.msra.mxu0 0.0
        %7752 = vmatprep.subr.mxu0 0.0
        %7753 = vmatpush1.msra.mxu0 0.0
        %7754 = vmatprep.subr.mxu0 0.0
        %7755 = vmatpush1.msra.mxu0 0.0
        %7756 = vmatprep.subr.mxu0 0.0
        %7757 = vmatpush1.msra.mxu0 0.0
        %7758 = vmatprep.subr.mxu0 0.0
        %7759 = vmatpush1.msra.mxu0 0.0
        %7760 = vmatprep.subr.mxu0 0.0
        %7761 = vmatpush1.msra.mxu0 0.0
        %7762 = vmatprep.subr.mxu0 0.0
        %7763 = vmatpush1.msra.mxu0 0.0
        %7764 = vmatprep.subr.mxu0 0.0
        %7765 = vmatpush1.msra.mxu0 0.0
        %7766 = vmatprep.subr.mxu0 0.0
        %7767 = vmatpush1.msra.mxu0 0.0
        %7768 = vmatprep.subr.mxu0 0.0
        %7769 = vmatpush1.msra.mxu0 0.0
        %7770 = vmatprep.subr.mxu0 0.0
        %7771 = vmatpush1.msra.mxu0 0.0
        %7772 = vmatprep.subr.mxu0 0.0
        %7773 = vmatpush1.msra.mxu0 0.0
        %7774 = vmatprep.subr.mxu0 0.0
        %7775 = vmatpush1.msra.mxu0 0.0
        %7776 = vmatprep.subr.mxu0 0.0
        %7777 = vmatpush1.msra.mxu0 0.0
        %7778 = vmatprep.subr.mxu0 0.0
        %7779 = vmatpush1.msra.mxu0 0.0
        %7780 = vmatprep.subr.mxu0 0.0
        %7781 = vmatpush1.msra.mxu0 0.0
        %7782 = vmatprep.subr.mxu0 0.0
        %7783 = vmatpush1.msra.mxu0 0.0
        %7784 = vmatprep.subr.mxu0 0.0
        %7785 = vmatpush1.msra.mxu0 0.0
        %7786 = vmatprep.subr.mxu0 0.0
        %7787 = vmatpush1.msra.mxu0 0.0
        %7788 = vmatprep.subr.mxu0 0.0
        %7789 = vmatpush1.msra.mxu0 0.0
        %7790 = vmatprep.subr.mxu0 0.0
        %7791 = vmatpush1.msra.mxu0 0.0
        %7792 = vmatprep.mubr.f32.mxu0 0.0
        %7793 = vmatmul.mubr.f32.gmra.mrb[0].mxu0 %v7726
        %v7794 = vpop.f32.mrb[0].mxu0
        %v7795 = vadd.f32 0.0, %v7794
        %v7796 = vpop.f32.mrb[0].mxu0
        %7797 = vdwg.mxu0
        %v7799 = vsel %vm6376, %v6322, 0
        %7801 = vmatprep.subr.mxu0 0.0
        %7802 = vmatpush1.msra.mxu0 %v6352
        %7803 = vmatprep.subr.mxu0 0.0
        %7804 = vmatpush1.msra.mxu0 %v6353
        %7805 = vmatprep.subr.mxu0 0.0
        %7806 = vmatpush1.msra.mxu0 0.0
        %7807 = vmatprep.subr.mxu0 0.0
        %7808 = vmatpush1.msra.mxu0 0.0
        %7809 = vmatprep.subr.mxu0 0.0
        %7810 = vmatpush1.msra.mxu0 0.0
        %7811 = vmatprep.subr.mxu0 0.0
        %7812 = vmatpush1.msra.mxu0 0.0
        %7813 = vmatprep.subr.mxu0 0.0
        %7814 = vmatpush1.msra.mxu0 0.0
        %7815 = vmatprep.subr.mxu0 0.0
        %7816 = vmatpush1.msra.mxu0 0.0
        %7817 = vmatprep.subr.mxu0 0.0
        %7818 = vmatpush1.msra.mxu0 0.0
        %7819 = vmatprep.subr.mxu0 0.0
        %7820 = vmatpush1.msra.mxu0 0.0
        %7821 = vmatprep.subr.mxu0 0.0
        %7822 = vmatpush1.msra.mxu0 0.0
        %7823 = vmatprep.subr.mxu0 0.0
        %7824 = vmatpush1.msra.mxu0 0.0
        %7825 = vmatprep.subr.mxu0 0.0
        %7826 = vmatpush1.msra.mxu0 0.0
        %7827 = vmatprep.subr.mxu0 0.0
        %7828 = vmatpush1.msra.mxu0 0.0
        %7829 = vmatprep.subr.mxu0 0.0
        %7830 = vmatpush1.msra.mxu0 0.0
        %7831 = vmatprep.subr.mxu0 0.0
        %7832 = vmatpush1.msra.mxu0 0.0
        %7833 = vmatprep.subr.mxu0 0.0
        %7834 = vmatpush1.msra.mxu0 0.0
        %7835 = vmatprep.subr.mxu0 0.0
        %7836 = vmatpush1.msra.mxu0 0.0
        %7837 = vmatprep.subr.mxu0 0.0
        %7838 = vmatpush1.msra.mxu0 0.0
        %7839 = vmatprep.subr.mxu0 0.0
        %7840 = vmatpush1.msra.mxu0 0.0
        %7841 = vmatprep.subr.mxu0 0.0
        %7842 = vmatpush1.msra.mxu0 0.0
        %7843 = vmatprep.subr.mxu0 0.0
        %7844 = vmatpush1.msra.mxu0 0.0
        %7845 = vmatprep.subr.mxu0 0.0
        %7846 = vmatpush1.msra.mxu0 0.0
        %7847 = vmatprep.subr.mxu0 0.0
        %7848 = vmatpush1.msra.mxu0 0.0
        %7849 = vmatprep.subr.mxu0 0.0
        %7850 = vmatpush1.msra.mxu0 0.0
        %7851 = vmatprep.subr.mxu0 0.0
        %7852 = vmatpush1.msra.mxu0 0.0
        %7853 = vmatprep.subr.mxu0 0.0
        %7854 = vmatpush1.msra.mxu0 0.0
        %7855 = vmatprep.subr.mxu0 0.0
        %7856 = vmatpush1.msra.mxu0 0.0
        %7857 = vmatprep.subr.mxu0 0.0
        %7858 = vmatpush1.msra.mxu0 0.0
        %7859 = vmatprep.subr.mxu0 0.0
        %7860 = vmatpush1.msra.mxu0 0.0
        %7861 = vmatprep.subr.mxu0 0.0
        %7862 = vmatpush1.msra.mxu0 0.0
        %7863 = vmatprep.subr.mxu0 0.0
        %7864 = vmatpush1.msra.mxu0 0.0
        %7865 = vmatprep.mubr.f32.mxu0 0.0
        %7866 = vmatmul.mubr.f32.gmra.mrb[0].mxu0 %v7799
        %v7867 = vpop.f32.mrb[0].mxu0
        %v7868 = vadd.f32 %v7795, %v7867
        %v7869 = vpop.f32.mrb[0].mxu0
        %7870 = vdwg.mxu0
        %v7872 = vsel %vm6376, %v6340, 0
        %7874 = vmatprep.subr.mxu0 0.0
        %7875 = vmatpush1.msra.mxu0 %v6360
        %7876 = vmatprep.subr.mxu0 0.0
        %7877 = vmatpush1.msra.mxu0 %v6361
        %7878 = vmatprep.subr.mxu0 0.0
        %7879 = vmatpush1.msra.mxu0 0.0
        %7880 = vmatprep.subr.mxu0 0.0
        %7881 = vmatpush1.msra.mxu0 0.0
        %7882 = vmatprep.subr.mxu0 0.0
        %7883 = vmatpush1.msra.mxu0 0.0
        %7884 = vmatprep.subr.mxu0 0.0
        %7885 = vmatpush1.msra.mxu0 0.0
        %7886 = vmatprep.subr.mxu0 0.0
        %7887 = vmatpush1.msra.mxu0 0.0
        %7888 = vmatprep.subr.mxu0 0.0
        %7889 = vmatpush1.msra.mxu0 0.0
        %7890 = vmatprep.subr.mxu0 0.0
        %7891 = vmatpush1.msra.mxu0 0.0
        %7892 = vmatprep.subr.mxu0 0.0
        %7893 = vmatpush1.msra.mxu0 0.0
        %7894 = vmatprep.subr.mxu0 0.0
        %7895 = vmatpush1.msra.mxu0 0.0
        %7896 = vmatprep.subr.mxu0 0.0
        %7897 = vmatpush1.msra.mxu0 0.0
        %7898 = vmatprep.subr.mxu0 0.0
        %7899 = vmatpush1.msra.mxu0 0.0
        %7900 = vmatprep.subr.mxu0 0.0
        %7901 = vmatpush1.msra.mxu0 0.0
        %7902 = vmatprep.subr.mxu0 0.0
        %7903 = vmatpush1.msra.mxu0 0.0
        %7904 = vmatprep.subr.mxu0 0.0
        %7905 = vmatpush1.msra.mxu0 0.0
        %7906 = vmatprep.subr.mxu0 0.0
        %7907 = vmatpush1.msra.mxu0 0.0
        %7908 = vmatprep.subr.mxu0 0.0
        %7909 = vmatpush1.msra.mxu0 0.0
        %7910 = vmatprep.subr.mxu0 0.0
        %7911 = vmatpush1.msra.mxu0 0.0
        %7912 = vmatprep.subr.mxu0 0.0
        %7913 = vmatpush1.msra.mxu0 0.0
        %7914 = vmatprep.subr.mxu0 0.0
        %7915 = vmatpush1.msra.mxu0 0.0
        %7916 = vmatprep.subr.mxu0 0.0
        %7917 = vmatpush1.msra.mxu0 0.0
        %7918 = vmatprep.subr.mxu0 0.0
        %7919 = vmatpush1.msra.mxu0 0.0
        %7920 = vmatprep.subr.mxu0 0.0
        %7921 = vmatpush1.msra.mxu0 0.0
        %7922 = vmatprep.subr.mxu0 0.0
        %7923 = vmatpush1.msra.mxu0 0.0
        %7924 = vmatprep.subr.mxu0 0.0
        %7925 = vmatpush1.msra.mxu0 0.0
        %7926 = vmatprep.subr.mxu0 0.0
        %7927 = vmatpush1.msra.mxu0 0.0
        %7928 = vmatprep.subr.mxu0 0.0
        %7929 = vmatpush1.msra.mxu0 0.0
        %7930 = vmatprep.subr.mxu0 0.0
        %7931 = vmatpush1.msra.mxu0 0.0
        %7932 = vmatprep.subr.mxu0 0.0
        %7933 = vmatpush1.msra.mxu0 0.0
        %7934 = vmatprep.subr.mxu0 0.0
        %7935 = vmatpush1.msra.mxu0 0.0
        %7936 = vmatprep.subr.mxu0 0.0
        %7937 = vmatpush1.msra.mxu0 0.0
        %7938 = vmatprep.mubr.f32.mxu0 0.0
        %7939 = vmatmul.mubr.f32.gmra.mrb[0].mxu0 %v7872
        %v7940 = vpop.f32.mrb[0].mxu0
        %v7941 = vadd.f32 0.0, %v7940
        %v7942 = vpop.f32.mrb[0].mxu0
        %7943 = vdwg.mxu0
        %v7945 = vsel %vm6376, %v6334, 0
        %7947 = vmatprep.subr.mxu0 0.0
        %7948 = vmatpush1.msra.mxu0 %v6352
        %7949 = vmatprep.subr.mxu0 0.0
        %7950 = vmatpush1.msra.mxu0 %v6353
        %7951 = vmatprep.subr.mxu0 0.0
        %7952 = vmatpush1.msra.mxu0 0.0
        %7953 = vmatprep.subr.mxu0 0.0
        %7954 = vmatpush1.msra.mxu0 0.0
        %7955 = vmatprep.subr.mxu0 0.0
        %7956 = vmatpush1.msra.mxu0 0.0
        %7957 = vmatprep.subr.mxu0 0.0
        %7958 = vmatpush1.msra.mxu0 0.0
        %7959 = vmatprep.subr.mxu0 0.0
        %7960 = vmatpush1.msra.mxu0 0.0
        %7961 = vmatprep.subr.mxu0 0.0
        %7962 = vmatpush1.msra.mxu0 0.0
        %7963 = vmatprep.subr.mxu0 0.0
        %7964 = vmatpush1.msra.mxu0 0.0
        %7965 = vmatprep.subr.mxu0 0.0
        %7966 = vmatpush1.msra.mxu0 0.0
        %7967 = vmatprep.subr.mxu0 0.0
        %7968 = vmatpush1.msra.mxu0 0.0
        %7969 = vmatprep.subr.mxu0 0.0
        %7970 = vmatpush1.msra.mxu0 0.0
        %7971 = vmatprep.subr.mxu0 0.0
        %7972 = vmatpush1.msra.mxu0 0.0
        %7973 = vmatprep.subr.mxu0 0.0
        %7974 = vmatpush1.msra.mxu0 0.0
        %7975 = vmatprep.subr.mxu0 0.0
        %7976 = vmatpush1.msra.mxu0 0.0
        %7977 = vmatprep.subr.mxu0 0.0
        %7978 = vmatpush1.msra.mxu0 0.0
        %7979 = vmatprep.subr.mxu0 0.0
        %7980 = vmatpush1.msra.mxu0 0.0
        %7981 = vmatprep.subr.mxu0 0.0
        %7982 = vmatpush1.msra.mxu0 0.0
        %7983 = vmatprep.subr.mxu0 0.0
        %7984 = vmatpush1.msra.mxu0 0.0
        %7985 = vmatprep.subr.mxu0 0.0
        %7986 = vmatpush1.msra.mxu0 0.0
        %7987 = vmatprep.subr.mxu0 0.0
        %7988 = vmatpush1.msra.mxu0 0.0
        %7989 = vmatprep.subr.mxu0 0.0
        %7990 = vmatpush1.msra.mxu0 0.0
        %7991 = vmatprep.subr.mxu0 0.0
        %7992 = vmatpush1.msra.mxu0 0.0
        %7993 = vmatprep.subr.mxu0 0.0
        %7994 = vmatpush1.msra.mxu0 0.0
        %7995 = vmatprep.subr.mxu0 0.0
        %7996 = vmatpush1.msra.mxu0 0.0
        %7997 = vmatprep.subr.mxu0 0.0
        %7998 = vmatpush1.msra.mxu0 0.0
        %7999 = vmatprep.subr.mxu0 0.0
        %8000 = vmatpush1.msra.mxu0 0.0
        %8001 = vmatprep.subr.mxu0 0.0
        %8002 = vmatpush1.msra.mxu0 0.0
        %8003 = vmatprep.subr.mxu0 0.0
        %8004 = vmatpush1.msra.mxu0 0.0
        %8005 = vmatprep.subr.mxu0 0.0
        %8006 = vmatpush1.msra.mxu0 0.0
        %8007 = vmatprep.subr.mxu0 0.0
        %8008 = vmatpush1.msra.mxu0 0.0
        %8009 = vmatprep.subr.mxu0 0.0
        %8010 = vmatpush1.msra.mxu0 0.0
        %8011 = vmatprep.mubr.f32.mxu0 0.0
        %8012 = vmatmul.mubr.f32.gmra.mrb[0].mxu0 %v7945
        %v8013 = vpop.f32.mrb[0].mxu0
        %v8014 = vadd.f32 %v7941, %v8013
        %v8015 = vpop.f32.mrb[0].mxu0
        %8016 = vdwg.mxu0
        %8017 = vmatprep.subr.mxu0 0.0
        %8018 = vmatpush1.msra.mxu0 %v8014
        %8019 = vmatprep.subr.mxu0 0.0
        %8020 = vmatpush1.msra.mxu0 0.0
        %8021 = vmatprep.subr.mxu0 0.0
        %8022 = vmatpush1.msra.mxu0 0.0
        %8023 = vmatprep.subr.mxu0 0.0
        %8024 = vmatpush1.msra.mxu0 0.0
        %8025 = vmatprep.subr.mxu0 0.0
        %8026 = vmatpush1.msra.mxu0 0.0
        %8027 = vmatprep.subr.mxu0 0.0
        %8028 = vmatpush1.msra.mxu0 0.0
        %8029 = vmatprep.subr.mxu0 0.0
        %8030 = vmatpush1.msra.mxu0 0.0
        %8031 = vmatprep.subr.mxu0 0.0
        %8032 = vmatpush1.msra.mxu0 0.0
        %8033 = vmatprep.subr.mxu0 0.0
        %8034 = vmatpush1.msra.mxu0 0.0
        %8035 = vmatprep.subr.mxu0 0.0
        %8036 = vmatpush1.msra.mxu0 0.0
        %8037 = vmatprep.subr.mxu0 0.0
        %8038 = vmatpush1.msra.mxu0 0.0
        %8039 = vmatprep.subr.mxu0 0.0
        %8040 = vmatpush1.msra.mxu0 0.0
        %8041 = vmatprep.subr.mxu0 0.0
        %8042 = vmatpush1.msra.mxu0 0.0
        %8043 = vmatprep.subr.mxu0 0.0
        %8044 = vmatpush1.msra.mxu0 0.0
        %8045 = vmatprep.subr.mxu0 0.0
        %8046 = vmatpush1.msra.mxu0 0.0
        %8047 = vmatprep.subr.mxu0 0.0
        %8048 = vmatpush1.msra.mxu0 0.0
        %8049 = vmatprep.subr.mxu0 0.0
        %8050 = vmatpush1.msra.mxu0 0.0
        %8051 = vmatprep.subr.mxu0 0.0
        %8052 = vmatpush1.msra.mxu0 0.0
        %8053 = vmatprep.subr.mxu0 0.0
        %8054 = vmatpush1.msra.mxu0 0.0
        %8055 = vmatprep.subr.mxu0 0.0
        %8056 = vmatpush1.msra.mxu0 0.0
        %8057 = vmatprep.subr.mxu0 0.0
        %8058 = vmatpush1.msra.mxu0 0.0
        %8059 = vmatprep.subr.mxu0 0.0
        %8060 = vmatpush1.msra.mxu0 0.0
        %8061 = vmatprep.subr.mxu0 0.0
        %8062 = vmatpush1.msra.mxu0 0.0
        %8063 = vmatprep.subr.mxu0 0.0
        %8064 = vmatpush1.msra.mxu0 0.0
        %8065 = vmatprep.subr.mxu0 0.0
        %8066 = vmatpush1.msra.mxu0 0.0
        %8067 = vmatprep.subr.mxu0 0.0
        %8068 = vmatpush1.msra.mxu0 0.0
        %8069 = vmatprep.subr.mxu0 0.0
        %8070 = vmatpush1.msra.mxu0 0.0
        %8071 = vmatprep.subr.mxu0 0.0
        %8072 = vmatpush1.msra.mxu0 0.0
        %8073 = vmatprep.subr.mxu0 0.0
        %8074 = vmatpush1.msra.mxu0 0.0
        %8075 = vmatprep.subr.mxu0 0.0
        %8076 = vmatpush1.msra.mxu0 0.0
        %8077 = vmatprep.subr.mxu0 0.0
        %8078 = vmatpush1.msra.mxu0 0.0
        %8079 = vmatprep.subr.mxu0 0.0
        %8080 = vmatpush1.msra.mxu0 0.0
        %8081 = vmatprep.mubr.f32.mxu0 0.0
        %8082 = vmatmul.mubr.f32.gmra.mrb[0].mxu0 %v6671
        %v8083 = vpop.f32.mrb[0].mxu0
        %v8084 = vadd.f32 0.0, %v8083
        %v8085 = vpop.f32.mrb[0].mxu0
        %8086 = vmatprep.mubr.f32.mxu0 0.0
        %8087 = vmatmul.mubr.f32.gmra.mrb[0].mxu0 %v6674
        %v8088 = vpop.f32.mrb[0].mxu0
        %v8089 = vadd.f32 0.0, %v8088
        %v8090 = vpop.f32.mrb[0].mxu0
        %8091 = vdwg.mxu0
        %8092 = vmatprep.subr.mxu0 0.0
        %8093 = vmatpush1.msra.mxu0 %v7868
        %8094 = vmatprep.subr.mxu0 0.0
        %8095 = vmatpush1.msra.mxu0 0.0
        %8096 = vmatprep.subr.mxu0 0.0
        %8097 = vmatpush1.msra.mxu0 0.0
        %8098 = vmatprep.subr.mxu0 0.0
        %8099 = vmatpush1.msra.mxu0 0.0
        %8100 = vmatprep.subr.mxu0 0.0
        %8101 = vmatpush1.msra.mxu0 0.0
        %8102 = vmatprep.subr.mxu0 0.0
        %8103 = vmatpush1.msra.mxu0 0.0
        %8104 = vmatprep.subr.mxu0 0.0
        %8105 = vmatpush1.msra.mxu0 0.0
        %8106 = vmatprep.subr.mxu0 0.0
        %8107 = vmatpush1.msra.mxu0 0.0
        %8108 = vmatprep.subr.mxu0 0.0
        %8109 = vmatpush1.msra.mxu0 0.0
        %8110 = vmatprep.subr.mxu0 0.0
        %8111 = vmatpush1.msra.mxu0 0.0
        %8112 = vmatprep.subr.mxu0 0.0
        %8113 = vmatpush1.msra.mxu0 0.0
        %8114 = vmatprep.subr.mxu0 0.0
        %8115 = vmatpush1.msra.mxu0 0.0
        %8116 = vmatprep.subr.mxu0 0.0
        %8117 = vmatpush1.msra.mxu0 0.0
        %8118 = vmatprep.subr.mxu0 0.0
        %8119 = vmatpush1.msra.mxu0 0.0
        %8120 = vmatprep.subr.mxu0 0.0
        %8121 = vmatpush1.msra.mxu0 0.0
        %8122 = vmatprep.subr.mxu0 0.0
        %8123 = vmatpush1.msra.mxu0 0.0
        %8124 = vmatprep.subr.mxu0 0.0
        %8125 = vmatpush1.msra.mxu0 0.0
        %8126 = vmatprep.subr.mxu0 0.0
        %8127 = vmatpush1.msra.mxu0 0.0
        %8128 = vmatprep.subr.mxu0 0.0
        %8129 = vmatpush1.msra.mxu0 0.0
        %8130 = vmatprep.subr.mxu0 0.0
        %8131 = vmatpush1.msra.mxu0 0.0
        %8132 = vmatprep.subr.mxu0 0.0
        %8133 = vmatpush1.msra.mxu0 0.0
        %8134 = vmatprep.subr.mxu0 0.0
        %8135 = vmatpush1.msra.mxu0 0.0
        %8136 = vmatprep.subr.mxu0 0.0
        %8137 = vmatpush1.msra.mxu0 0.0
        %8138 = vmatprep.subr.mxu0 0.0
        %8139 = vmatpush1.msra.mxu0 0.0
        %8140 = vmatprep.subr.mxu0 0.0
        %8141 = vmatpush1.msra.mxu0 0.0
        %8142 = vmatprep.subr.mxu0 0.0
        %8143 = vmatpush1.msra.mxu0 0.0
        %8144 = vmatprep.subr.mxu0 0.0
        %8145 = vmatpush1.msra.mxu0 0.0
        %8146 = vmatprep.subr.mxu0 0.0
        %8147 = vmatpush1.msra.mxu0 0.0
        %8148 = vmatprep.subr.mxu0 0.0
        %8149 = vmatpush1.msra.mxu0 0.0
        %8150 = vmatprep.subr.mxu0 0.0
        %8151 = vmatpush1.msra.mxu0 0.0
        %8152 = vmatprep.subr.mxu0 0.0
        %8153 = vmatpush1.msra.mxu0 0.0
        %8154 = vmatprep.subr.mxu0 0.0
        %8155 = vmatpush1.msra.mxu0 0.0
        %8156 = vmatprep.mubr.f32.mxu0 0.0
        %8157 = vmatmul.mubr.f32.gmra.mrb[0].mxu0 %v6752
        %v8158 = vpop.f32.mrb[0].mxu0
        %v8159 = vadd.f32 %v8084, %v8158
        %v8160 = vpop.f32.mrb[0].mxu0
        %8161 = vmatprep.mubr.f32.mxu0 0.0
        %8162 = vmatmul.mubr.f32.gmra.mrb[0].mxu0 %v6755
        %v8163 = vpop.f32.mrb[0].mxu0
        %v8164 = vadd.f32 %v8089, %v8163
        %v8165 = vpop.f32.mrb[0].mxu0
        %8166 = vdwg.mxu0
        %s8167 = scalar_lea.vmem %s204, 48 [#allocation7]
        %8168 = vst.msk [vmem:[%s8167] sm:$0xff] %vm6832, %v8159
        %8169 = vst.msk [vmem:[%s8167 + $0x8] sm:$0xff] %vm6832, %v8164
        %s8170 = sand.u32 %s109, 1
        %s8171 = scalar_lea.sflag [#allocation3], %s8170
        %s8172 = sand.u32 %s109, 1
        %s8173 = smul.addr %s8172, 64
        %s8174 = scalar_lea.vmem [#allocation7], %s8173
        // Predicated region
        $region41: #{tpu_custom_call.1} parent=31 // pred_check
          %p8175 = pneg %p119
        $region42: #{tpu_custom_call.1} parent=31 // pred_check_branch
          %8177 = sbr.rel (%p8175) target = $region44
        $region43: #{tpu_custom_call.1} parent=31 // pred_region
          #allocation9 [shape = 'u32[6]{0}', space=smem, size = 0x18, scoped, tag = 'DMA stride descriptor']
          %s8178 = smul.u32 2, %s24
          %s8180 = ssub.s32 1024, 1024
          %8181 = vsyncadd %s8171, %s8180
          %s8182 = smul.addr %s23, 16
          %s8183 = sadd.s32 %s8178, %s8182
          %s8184 = smul.addr %s8183, 128
          %s8185 = scalar_lea.hbm %s3, %s8184
          %s8187 = sshll.u32 1, 14
          %s8188 = sxor.u32 4294967295, %s8187
          %s8191 = sshll.u32 7, 18
          %s8192 = sxor.u32 4294967295, %s8191
          %s8193 = sand.u32 0, %s8192
          %s8195 = sor.u32 %s8193, 0
          %s8197 = sshll.u32 3, 24
          %s8198 = sxor.u32 4294967295, %s8197
          %s8199 = sand.u32 %s8195, %s8198
          %s8201 = sor.u32 %s8199, 0
          %s8202 = sshll.u32 %s8174, 4
          %s8203 = int_to_ptr.vmem [resolvable:$true] %s8202
          %8209 = sst [smem:[#allocation9]] 256
          %s8210 = scalar_lea.smem [#allocation9], 1
          %8211 = sst [smem:[%s8210]] 512
          %s8212 = scalar_lea.smem [#allocation9], 2
          %8213 = sst [smem:[%s8212]] 2
          %s8214 = scalar_lea.smem [#allocation9], 3
          %8215 = sst [smem:[%s8214]] 128
          %s8216 = scalar_lea.smem [#allocation9], 4
          %8217 = sst [smem:[%s8216]] 128
          %s8218 = scalar_lea.smem [#allocation9], 5
          %8219 = sst [smem:[%s8218]] 8
          %8221 = dma.general %s8203, 1024, %s8185, %s8171, [#allocation8], [#allocation9], %s8201, 0
        $region44: #{tpu_custom_call.1} parent=31 // pred_fallthru
          _
      $region32: #{tpu_custom_call.1} parent=5 // pred_fallthru
        _
      %p8222 = scmp.le.s32.totalorder 2, %s14
      // Predicated region
      $region45: #{tpu_custom_call.1} parent=5 // pred_check
        %p8223 = pneg %p8222
      $region46: #{tpu_custom_call.1} parent=5 // pred_check_branch
        %8225 = sbr.rel (%p8223) target = $region48
      $region47: #{tpu_custom_call.1} parent=5 // pred_region
        %s8226 = ssub.s32 %s14, 2
        // Predicated region
        $region49: #{tpu_custom_call.1} parent=47 // pred_check
          %p8227 = pneg %p125
        $region50: #{tpu_custom_call.1} parent=47 // pred_check_branch
          %8229 = sbr.rel (%p8227) target = $region52
        $region51: #{tpu_custom_call.1} parent=47 // pred_region
          %s8230 = sand.u32 %s110, 1
          %s8231 = scalar_lea.sflag [#allocation3], %s8230
          %s8232 = sand.u32 %s110, 1
          %s8233 = smul.addr %s8232, 64
          %s8234 = scalar_lea.vmem [#allocation7], %s8233
          %8235 = dma.done %s8231, 1024
        $region52: #{tpu_custom_call.1} parent=47 // pred_fallthru
          _
      $region48: #{tpu_custom_call.1} parent=5 // pred_fallthru
        _
    $region6: #{tpu_custom_call.1} parent=1 // loop_footer
      %s18 = sadd.s32 1, %s14
    $region7: #{tpu_custom_call.1} parent=1 // loop_footer_branch
      %13 = sbr.rel target = $region3
    $region8: #{tpu_custom_call.1} parent=1 // loop_exit
      _
    %8236 = vsyncpa [#allocation3], 1
    %s8237 = scalar_lea.sflag [#allocation3], 1
    %8238 = vsyncpa %s8237, 1
    %8239 = vsyncpa [#allocation4], 1
    %s8240 = scalar_lea.sflag [#allocation4], 1
    %8241 = vsyncpa %s8240, 1
    %8242 = vsyncpa [#allocation6], 1

</llo_original>
